<compile_context>
chip_gen: v7x
topology: tpu7x:2x2x1
jax: 0.10.0
libtpu: 0.0.40
codegen_flags: <defaults>
</compile_context>

<pallas_src>
import math

import jax
import jax.numpy as jnp
from jax import lax
from jax.experimental import pallas as pl
from jax.experimental.pallas import tpu as pltpu

# ------------------------------ configuration -------------------------------
BATCH = 2
SEQ = 8
D_MODEL = 128                     # lane-friendly (multiple of 128)
NUM_HEADS = 4
HEAD_DIM = D_MODEL // NUM_HEADS
FFN_HIDDEN = 256
EPS = 1e-5
SCALE = 1.0 / math.sqrt(HEAD_DIM)

_D = D_MODEL
# Column offsets inside the packed (D, 10*D) bf16 weight slab ("x @ W" layout).
# QKV / KV blocks are host-repacked so Q/K/V-for-all-heads are contiguous,
# lane-tile (128) aligned column blocks.
W_SA_QKV = (0, 3 * _D)                       # self-attn fused QKV      (D, 3D)
W_SA_O   = (3 * _D, 4 * _D)                  # self-attn out proj       (D, D)
W_CA_Q   = (4 * _D, 5 * _D)                  # cross-attn Q             (D, D)
W_CA_KV  = (5 * _D, 7 * _D)                  # cross-attn fused KV      (D, 2D)
W_CA_O   = (7 * _D, 8 * _D)                  # cross-attn out proj      (D, D)
W_FFN1   = (8 * _D, 8 * _D + FFN_HIDDEN)     # FFN linear1              (D, H)

# Column offsets inside the packed (1, ...) f32 bias slab (same order + ffn2).
B_SA_QKV = (0, 3 * _D)
B_SA_O   = (3 * _D, 4 * _D)
B_CA_Q   = (4 * _D, 5 * _D)
B_CA_KV  = (5 * _D, 7 * _D)
B_CA_O   = (7 * _D, 8 * _D)
B_FFN1   = (8 * _D, 8 * _D + FFN_HIDDEN)
B_FFN2   = (8 * _D + FFN_HIDDEN, 8 * _D + FFN_HIDDEN + _D)


# --------------------------------- kernel -----------------------------------
def decoder_layer_kernel(x_ref, y_ref, smask_ref, cmask_ref,
                         w_ref, w_ffn2_ref, b_ref, ln_ref, out_ref):
    Bb = x_ref.shape[0]                 # batches handled by this grid step
    N = Bb * SEQ
    G = Bb * NUM_HEADS                  # batch folded into the head axis

    x = x_ref[...].reshape(N, D_MODEL)  # encoder output -> K/V for cross-attn
    y = y_ref[...].reshape(N, D_MODEL)  # decoder input
    smask = smask_ref[...][None, :, :]  # (1, S, S) additive mask, hoisted broadcast
    cmask = cmask_ref[...][None, :, :]
    w_ffn2 = w_ffn2_ref[...]            # (FFN_HIDDEN, D) bf16

    def wcol(sl):
        return w_ref[:, sl[0]:sl[1]]    # bf16, lane-tile aligned column block

    def bcol(sl):
        return b_ref[:, sl[0]:sl[1]]    # f32

    def mm(a, w):
        """a(f32) @ w(bf16): bf16 MXU operands, f32 accumulation."""
        return jnp.dot(a.astype(jnp.bfloat16), w,
                       preferred_element_type=jnp.float32)

    def layer_norm(v, g, b):
        mean = jnp.mean(v, axis=-1, keepdims=True)
        cent = v - mean
        var = jnp.mean(cent * cent, axis=-1, keepdims=True)
        return g * (cent * lax.rsqrt(var + EPS)) + b

    def split_heads(t):
        """(N, D) f32 with per-head 32-wide lane sub-blocks -> (G, S, HEAD_DIM)."""
        return jnp.stack(
            [t[b * SEQ:(b + 1) * SEQ, h * HEAD_DIM:(h + 1) * HEAD_DIM]
             for b in range(Bb) for h in range(NUM_HEADS)], axis=0)

    def merge_heads(t):
        """(G, S, HEAD_DIM) -> (N, D), heads concatenated along lanes (h0..h3)."""
        rows = [jnp.concatenate([t[b * NUM_HEADS + h] for h in range(NUM_HEADS)],
                                axis=-1) for b in range(Bb)]
        return rows[0] if Bb == 1 else jnp.concatenate(rows, axis=0)

    def attention(q, k, v, mask, w_o, b_o):
        """q,k,v: (G, S, HEAD_DIM) f32 -- single batched einsum over all (b,h)."""
        # Tiny activation-activation matmuls (no weight DMA involved); kept in
        # f32 so the softmax logits are not degraded -- FLOPs are negligible.
        s = jnp.einsum("gqd,gkd->gqk", q, k, preferred_element_type=jnp.float32)
        s = s * SCALE + mask
        m = jnp.max(s, axis=-1, keepdims=True)
        e = jnp.exp(s - m)
        p = e / jnp.sum(e, axis=-1, keepdims=True)          # exact normalisation
        vals = jnp.einsum("gqk,gkd->gqd", p, v,
                          preferred_element_type=jnp.float32)
        # Merge heads and run ONE full-128-contraction output projection.
        return mm(merge_heads(vals), w_o) + b_o             # (N, D)

    def self_attention(inp):
        qkv = mm(inp, wcol(W_SA_QKV)) + bcol(B_SA_QKV)      # (N, 3D)
        q = split_heads(qkv[:, 0:D_MODEL])
        k = split_heads(qkv[:, D_MODEL:2 * D_MODEL])
        v = split_heads(qkv[:, 2 * D_MODEL:3 * D_MODEL])
        return attention(q, k, v, smask, wcol(W_SA_O), bcol(B_SA_O))

    # ---- self attention block (the reference forward applies it TWICE) ----
    residual = y
    a = self_attention(y)
    a = self_attention(a)
    # TODO(synk): nn.Dropout is identity here (eval mode); training dropout is stochastic.
    y1 = layer_norm(a + residual, ln_ref[0:1, :], ln_ref[1:2, :])

    # ---- encoder/decoder cross attention: K,V from x (encoder), Q from y1 ----
    residual = y1
    q_c = mm(y1, wcol(W_CA_Q)) + bcol(B_CA_Q)               # (N, D)
    kv_c = mm(x, wcol(W_CA_KV)) + bcol(B_CA_KV)             # (N, 2D)
    q = split_heads(q_c)
    k = split_heads(kv_c[:, 0:D_MODEL])
    v = split_heads(kv_c[:, D_MODEL:2 * D_MODEL])
    c = attention(q, k, v, cmask, wcol(W_CA_O), bcol(B_CA_O))
    y2 = layer_norm(c + residual, ln_ref[2:3, :], ln_ref[3:4, :])

    # ---- position-wise feed forward ----
    residual = y2
    h1 = jnp.maximum(mm(y2, wcol(W_FFN1)) + bcol(B_FFN1), 0.0)
    f = mm(h1, w_ffn2) + bcol(B_FFN2)
    y3 = layer_norm(f + residual, ln_ref[4:5, :], ln_ref[5:6, :])

    out_ref[...] = y3.reshape(Bb, SEQ, D_MODEL).astype(out_ref.dtype)


# -------------------------------- wrapper ------------------------------------
def decoder_layer(packed, x, y, smask, cmask, num_blocks=1):
    w_all, w_ffn2, b_all, ln_all = packed
    B, S, D = y.shape
    assert B % num_blocks == 0
    bb = B // num_blocks

    data_spec = pl.BlockSpec((bb, S, D), lambda b: (b, 0, 0))

    # Constant-index operands (weights / biases / LN / masks): index_map never
    # changes across the grid.  With num_blocks=1 (the recommended setting at
    # these sizes) they are fetched exactly once; total resident footprint is
    # ~1 MiB, nowhere near the VMEM limit on any generation, so no re-tiling
    # or pipeline_mode override is needed.
    def full_spec(a):
        return pl.BlockSpec(a.shape, lambda b, _n=a.ndim: (0,) * _n)

    return pl.pallas_call(
        decoder_layer_kernel,
        out_shape=jax.ShapeDtypeStruct((B, S, D), jnp.float32),
        grid=(num_blocks,),
        in_specs=[data_spec, data_spec, full_spec(smask), full_spec(cmask),
                  full_spec(w_all), full_spec(w_ffn2),
                  full_spec(b_all), full_spec(ln_all)],
        out_specs=pl.BlockSpec((bb, S, D), lambda b: (b, 0, 0)),
        compiler_params=pltpu.CompilerParams(
            dimension_semantics=("arbitrary",)),
    )(x, y, smask, cmask, w_all, w_ffn2, b_all, ln_all)


# ----------------------------- parameter setup -------------------------------
def init_params(key):
    """Synthetic parameters in native PyTorch nn.Linear layout: W (out, in), b (out,)."""
    D, hid = D_MODEL, FFN_HIDDEN
    ks = jax.random.split(key, 10)

    def lin(k, din, dout):
        k1, k2 = jax.random.split(k)
        w = jax.random.normal(k1, (dout, din), jnp.float32) * (1.0 / math.sqrt(din))
        b = jax.random.normal(k2, (dout,), jnp.float32) * 0.02
        return w, b

    raw = {}
    raw["sa_qkv_w"], raw["sa_qkv_b"] = lin(ks[0], D, 3 * D)   # MultiHeadAttention.qkv_layer
    raw["sa_o_w"], raw["sa_o_b"] = lin(ks[1], D, D)           # MultiHeadAttention.linear_layer
    raw["ca_kv_w"], raw["ca_kv_b"] = lin(ks[2], D, 2 * D)     # MultiHeadCrossAttention.kv_layer
    raw["ca_q_w"], raw["ca_q_b"] = lin(ks[3], D, D)           # MultiHeadCrossAttention.q_layer
    raw["ca_o_w"], raw["ca_o_b"] = lin(ks[4], D, D)           # MultiHeadCrossAttention.linear_layer
    raw["ffn1_w"], raw["ffn1_b"] = lin(ks[5], D, hid)
    raw["ffn2_w"], raw["ffn2_b"] = lin(ks[6], hid, D)
    for i, k in zip((1, 2, 3), (ks[7], ks[8], ks[9])):
        kg, kb = jax.random.split(k)
        raw[f"ln{i}_g"] = 1.0 + 0.1 * jax.random.normal(kg, (D,), jnp.float32)
        raw[f"ln{i}_b"] = 0.1 * jax.random.normal(kb, (D,), jnp.float32)
    return raw


def _qkv_head_perm():
    """Per-head interleaved [Qh|Kh|Vh] (3*hd each) -> [Q_allheads|K_allheads|V_allheads]."""
    idx = []
    for part in range(3):                         # 0=Q, 1=K, 2=V
        for h in range(NUM_HEADS):
            base = h * 3 * HEAD_DIM + part * HEAD_DIM
            idx.extend(range(base, base + HEAD_DIM))
    return jnp.asarray(idx, jnp.int32)


def _kv_head_perm():
    """Per-head interleaved [Kh|Vh] (2*hd each) -> [K_allheads|V_allheads]."""
    idx = []
    for part in range(2):                         # 0=K, 1=V
        for h in range(NUM_HEADS):
            base = h * 2 * HEAD_DIM + part * HEAD_DIM
            idx.extend(range(base, base + HEAD_DIM))
    return jnp.asarray(idx, jnp.int32)


def pack_params(raw):
    """Pack PyTorch-layout weights into the 4 kernel operands.

    * "x @ W" layout; fused QKV / KV columns repacked so Q/K/V-for-all-heads are
      contiguous lane-tile aligned blocks (biases permuted consistently).
    * Weight slabs stored in bfloat16 (halves the dominant weight DMA); biases
      and LayerNorm parameters stay float32.
    """
    qp = _qkv_head_perm()
    kvp = _kv_head_perm()
    w_all = jnp.concatenate(
        [raw["sa_qkv_w"].T[:, qp], raw["sa_o_w"].T, raw["ca_q_w"].T,
         raw["ca_kv_w"].T[:, kvp], raw["ca_o_w"].T, raw["ffn1_w"].T],
        axis=1).astype(jnp.bfloat16)                                     # (D, 10*D) bf16
    w_ffn2 = raw["ffn2_w"].T.astype(jnp.bfloat16)                        # (H, D)  bf16
    b_all = jnp.concatenate(
        [raw["sa_qkv_b"][qp], raw["sa_o_b"], raw["ca_q_b"], raw["ca_kv_b"][kvp],
         raw["ca_o_b"], raw["ffn1_b"], raw["ffn2_b"]])[None, :]          # (1, 11*D) f32
    ln_all = jnp.stack(
        [raw["ln1_g"], raw["ln1_b"], raw["ln2_g"], raw["ln2_b"],
         raw["ln3_g"], raw["ln3_b"]], axis=0)                            # (6, D) f32
    return w_all, w_ffn2, b_all, ln_all


# --------------------------- pure-JAX references ------------------------------
def _ref_lin(a, w, b, cast):
    return jnp.dot(cast(a), cast(w.T), preferred_element_type=jnp.float32) + b


def _ref_sdp(q, k, v, mask):
    d_k = q.shape[-1]
    scaled = jnp.einsum("bhqd,bhkd->bhqk", q, k,
                        preferred_element_type=jnp.float32) / math.sqrt(d_k)
    attn = jax.nn.softmax(scaled + mask, axis=-1)
    return jnp.einsum("bhqk,bhkd->bhqd", attn, v,
                      preferred_element_type=jnp.float32)


def _ref_mha(x, mask, w_qkv, b_qkv, w_o, b_o, cast):
    B, S, D = x.shape
    qkv = _ref_lin(x, w_qkv, b_qkv, cast)
    qkv = qkv.reshape(B, S, NUM_HEADS, 3 * HEAD_DIM).transpose(0, 2, 1, 3)
    q, k, v = jnp.split(qkv, 3, axis=-1)
    vals = _ref_sdp(q, k, v, mask).transpose(0, 2, 1, 3).reshape(B, S, D)
    return _ref_lin(vals, w_o, b_o, cast)


def _ref_cross_mha(x, y, mask, w_kv, b_kv, w_q, b_q, w_o, b_o, cast):
    B, S, D = x.shape
    kv = _ref_lin(x, w_kv, b_kv, cast).reshape(
        B, S, NUM_HEADS, 2 * HEAD_DIM).transpose(0, 2, 1, 3)
    q = _ref_lin(y, w_q, b_q, cast).reshape(
        B, S, NUM_HEADS, HEAD_DIM).transpose(0, 2, 1, 3)
    k, v = jnp.split(kv, 2, axis=-1)
    vals = _ref_sdp(q, k, v, mask).transpose(0, 2, 1, 3).reshape(B, S, D)
    return _ref_lin(vals, w_o, b_o, cast)


def _ref_ln(v, g, b):
    mean = v.mean(-1, keepdims=True)
    var = ((v - mean) ** 2).mean(-1, keepdims=True)
    return g * ((v - mean) / jnp.sqrt(var + EPS)) + b


def ref_forward(raw, x, y, smask, cmask, bf16_matmuls=False):
    """Module-structured reference; bf16_matmuls=True mirrors the kernel's
    bf16 casts at the weight-matmul boundaries (f32 everywhere else)."""
    cast = (lambda t: t.astype(jnp.bfloat16)) if bf16_matmuls else (lambda t: t)
    res = y
    a = _ref_mha(y, smask, raw["sa_qkv_w"], raw["sa_qkv_b"],
                 raw["sa_o_w"], raw["sa_o_b"], cast)
    a = _ref_mha(a, smask, raw["sa_qkv_w"], raw["sa_qkv_b"],
                 raw["sa_o_w"], raw["sa_o_b"], cast)
    y1 = _ref_ln(a + res, raw["ln1_g"], raw["ln1_b"])
    res = y1
    c = _ref_cross_mha(x, y1, cmask, raw["ca_kv_w"], raw["ca_kv_b"],
                       raw["ca_q_w"], raw["ca_q_b"], raw["ca_o_w"], raw["ca_o_b"], cast)
    y2 = _ref_ln(c + res, raw["ln2_g"], raw["ln2_b"])
    res = y2
    h = jnp.maximum(_ref_lin(y2, raw["ffn1_w"], raw["ffn1_b"], cast), 0.0)
    f = _ref_lin(h, raw["ffn2_w"], raw["ffn2_b"], cast)
    return _ref_ln(f + res, raw["ln3_g"], raw["ln3_b"])


# ----------------------------------- main ------------------------------------
if __name__ == "__main__":
    root = jax.random.PRNGKey(0)
    k_par, k_x, k_y = jax.random.split(root, 3)
    raw = init_params(k_par)
    packed = pack_params(raw)

    x = jax.random.normal(k_x, (BATCH, SEQ, D_MODEL), jnp.float32)  # encoder output
    y = jax.random.normal(k_y, (BATCH, SEQ, D_MODEL), jnp.float32)  # decoder input
    # additive masks: causal for self-attention, none for cross-attention
    smask = jnp.where(jnp.tril(jnp.ones((SEQ, SEQ), dtype=bool)),
                      0.0, -1e9).astype(jnp.float32)
    cmask = jnp.zeros((SEQ, SEQ), jnp.float32)

    # Weight-DMA-bound at B=2,S=8: keep a single grid step (do NOT shard the
    # batch across TensorCores -- that would duplicate the weight DMA per core).
    out = decoder_layer(packed, x, y, smask, cmask, num_blocks=1)
    out = jax.block_until_ready(out)
    assert out.shape == (BATCH, SEQ, D_MODEL)

    # Tight check: pure-JAX reference with the SAME bf16 quantisation at matmul
    # boundaries -- validates packing, head permutation, masks, softmax, LNs.
    ref_bf16 = ref_forward(raw, x, y, smask, cmask, bf16_matmuls=True)
    err_bf16 = float(jnp.max(jnp.abs(out - ref_bf16)))
    if not err_bf16 < 5e-3:
        raise AssertionError(
            f"Pallas kernel disagrees with bf16-matched reference (max abs err {err_bf16:.3e})")

    # Loose check against exact float32 module semantics -- the only intended
    # delta is the bf16 storage of the weight slabs / matmul operands.
    ref_f32 = ref_forward(raw, x, y, smask, cmask, bf16_matmuls=False)
    err_f32 = float(jnp.max(jnp.abs(out - ref_f32)))
    if not err_f32 < 2.5e-1:
        raise AssertionError(
            f"Pallas kernel disagrees with exact f32 reference (max abs err {err_f32:.3e})")

    print("KERNEL_OK")
</pallas_src>

<mosaic_0001>
module attributes {stable_mosaic.version = 11 : i64} {
  func.func @decoder_layer_kernel(%arg0: i32, %arg1: memref<2x8x128xf32, #tpu.memory_space<vmem>>, %arg2: memref<2x8x128xf32, #tpu.memory_space<vmem>>, %arg3: memref<8x8xf32, #tpu.memory_space<vmem>>, %arg4: memref<8x8xf32, #tpu.memory_space<vmem>>, %arg5: memref<128x1280xbf16, #tpu.memory_space<vmem>>, %arg6: memref<256x128xbf16, #tpu.memory_space<vmem>>, %arg7: memref<1x1408xf32, #tpu.memory_space<vmem>>, %arg8: memref<6x128xf32, #tpu.memory_space<vmem>>, %arg9: memref<2x8x128xf32, #tpu.memory_space<vmem>>) attributes {dimension_semantics = [#tpu.dimension_semantics<arbitrary>], iteration_bounds = array<i64: 1>, scalar_prefetch = 0 : i64, scratch_operands = 0 : i64, tpu.core_type = #tpu.core_type<tc>, window_params = [{transform_indices = @transform_0, window_bounds = array<i64: 2, 8, 128>}, {transform_indices = @transform_1, window_bounds = array<i64: 2, 8, 128>}, {pipeline_mode = #tpu.pipeline_mode<synchronous>, transform_indices = @transform_2, window_bounds = array<i64: 8, 8>}, {pipeline_mode = #tpu.pipeline_mode<synchronous>, transform_indices = @transform_3, window_bounds = array<i64: 8, 8>}, {pipeline_mode = #tpu.pipeline_mode<synchronous>, transform_indices = @transform_4, window_bounds = array<i64: 128, 1280>}, {pipeline_mode = #tpu.pipeline_mode<synchronous>, transform_indices = @transform_5, window_bounds = array<i64: 256, 128>}, {pipeline_mode = #tpu.pipeline_mode<synchronous>, transform_indices = @transform_6, window_bounds = array<i64: 1, 1408>}, {pipeline_mode = #tpu.pipeline_mode<synchronous>, transform_indices = @transform_7, window_bounds = array<i64: 6, 128>}, {transform_indices = @transform_8, window_bounds = array<i64: 2, 8, 128>}]} {
    %c0 = arith.constant 0 : index
    %c0_0 = arith.constant 0 : index
    %c0_1 = arith.constant 0 : index
    %0 = vector.load %arg1[%c0, %c0_0, %c0_1] : memref<2x8x128xf32, #tpu.memory_space<vmem>>, vector<2x8x128xf32>
    %1 = vector.shape_cast %0 : vector<2x8x128xf32> to vector<16x128xf32>
    %c0_2 = arith.constant 0 : index
    %c0_3 = arith.constant 0 : index
    %c0_4 = arith.constant 0 : index
    %2 = vector.load %arg2[%c0_2, %c0_3, %c0_4] : memref<2x8x128xf32, #tpu.memory_space<vmem>>, vector<2x8x128xf32>
    %3 = vector.shape_cast %2 : vector<2x8x128xf32> to vector<16x128xf32>
    %c0_5 = arith.constant 0 : index
    %c0_6 = arith.constant 0 : index
    %4 = vector.load %arg3[%c0_5, %c0_6] : memref<8x8xf32, #tpu.memory_space<vmem>>, vector<8x8xf32>
    %5 = vector.shape_cast %4 : vector<8x8xf32> to vector<1x8x8xf32>
    %c0_7 = arith.constant 0 : index
    %c0_8 = arith.constant 0 : index
    %6 = vector.load %arg4[%c0_7, %c0_8] : memref<8x8xf32, #tpu.memory_space<vmem>>, vector<8x8xf32>
    %7 = vector.shape_cast %6 : vector<8x8xf32> to vector<1x8x8xf32>
    %c0_9 = arith.constant 0 : index
    %c0_10 = arith.constant 0 : index
    %8 = vector.load %arg6[%c0_9, %c0_10] : memref<256x128xbf16, #tpu.memory_space<vmem>>, vector<256x128xbf16>
    %c0_11 = arith.constant 0 : index
    %c0_12 = arith.constant 0 : index
    %9 = vector.load %arg5[%c0_11, %c0_12] : memref<128x1280xbf16, #tpu.memory_space<vmem>>, vector<128x384xbf16>
    %10 = arith.truncf %3 : vector<16x128xf32> to vector<16x128xbf16>
    %cst = arith.constant dense<0.000000e+00> : vector<16x384xf32>
    %11 = tpu.matmul %10, %9, %cst {dimension_numbers = #tpu.dot_dimension_numbers<[1], [0], [0], [1], [0, 0, 1, 1], [], []>} : vector<16x128xbf16>, vector<128x384xbf16>, vector<16x384xf32> -> vector<16x384xf32>
    %c0_13 = arith.constant 0 : index
    %c0_14 = arith.constant 0 : index
    %12 = vector.load %arg7[%c0_13, %c0_14] : memref<1x1408xf32, #tpu.memory_space<vmem>>, vector<1x384xf32>
    %13 = vector.broadcast %12 : vector<1x384xf32> to vector<16x384xf32>
    %14 = arith.addf %11, %13 : vector<16x384xf32>
    %15 = vector.extract_strided_slice %14 {offsets = [0, 0], sizes = [16, 128], strides = [1, 1]} : vector<16x384xf32> to vector<16x128xf32>
    %16 = vector.extract_strided_slice %15 {offsets = [0, 0], sizes = [8, 32], strides = [1, 1]} : vector<16x128xf32> to vector<8x32xf32>
    %17 = vector.extract_strided_slice %15 {offsets = [0, 32], sizes = [8, 32], strides = [1, 1]} : vector<16x128xf32> to vector<8x32xf32>
    %18 = vector.extract_strided_slice %15 {offsets = [0, 64], sizes = [8, 32], strides = [1, 1]} : vector<16x128xf32> to vector<8x32xf32>
    %19 = vector.extract_strided_slice %15 {offsets = [0, 96], sizes = [8, 32], strides = [1, 1]} : vector<16x128xf32> to vector<8x32xf32>
    %20 = vector.extract_strided_slice %15 {offsets = [8, 0], sizes = [8, 32], strides = [1, 1]} : vector<16x128xf32> to vector<8x32xf32>
    %21 = vector.extract_strided_slice %15 {offsets = [8, 32], sizes = [8, 32], strides = [1, 1]} : vector<16x128xf32> to vector<8x32xf32>
    %22 = vector.extract_strided_slice %15 {offsets = [8, 64], sizes = [8, 32], strides = [1, 1]} : vector<16x128xf32> to vector<8x32xf32>
    %23 = vector.extract_strided_slice %15 {offsets = [8, 96], sizes = [8, 32], strides = [1, 1]} : vector<16x128xf32> to vector<8x32xf32>
    %24 = vector.shape_cast %16 : vector<8x32xf32> to vector<1x8x32xf32>
    %25 = vector.shape_cast %17 : vector<8x32xf32> to vector<1x8x32xf32>
    %26 = vector.shape_cast %18 : vector<8x32xf32> to vector<1x8x32xf32>
    %27 = vector.shape_cast %19 : vector<8x32xf32> to vector<1x8x32xf32>
    %28 = vector.shape_cast %20 : vector<8x32xf32> to vector<1x8x32xf32>
    %29 = vector.shape_cast %21 : vector<8x32xf32> to vector<1x8x32xf32>
    %30 = vector.shape_cast %22 : vector<8x32xf32> to vector<1x8x32xf32>
    %31 = vector.shape_cast %23 : vector<8x32xf32> to vector<1x8x32xf32>
    %32 = tpu.concatenate %24, %25, %26, %27, %28, %29, %30, %31 in 0 : vector<1x8x32xf32>, vector<1x8x32xf32>, vector<1x8x32xf32>, vector<1x8x32xf32>, vector<1x8x32xf32>, vector<1x8x32xf32>, vector<1x8x32xf32>, vector<1x8x32xf32> -> vector<8x8x32xf32>
    %33 = vector.extract_strided_slice %14 {offsets = [0, 128], sizes = [16, 128], strides = [1, 1]} : vector<16x384xf32> to vector<16x128xf32>
    %34 = vector.extract_strided_slice %33 {offsets = [0, 0], sizes = [8, 32], strides = [1, 1]} : vector<16x128xf32> to vector<8x32xf32>
    %35 = vector.extract_strided_slice %33 {offsets = [0, 32], sizes = [8, 32], strides = [1, 1]} : vector<16x128xf32> to vector<8x32xf32>
    %36 = vector.extract_strided_slice %33 {offsets = [0, 64], sizes = [8, 32], strides = [1, 1]} : vector<16x128xf32> to vector<8x32xf32>
    %37 = vector.extract_strided_slice %33 {offsets = [0, 96], sizes = [8, 32], strides = [1, 1]} : vector<16x128xf32> to vector<8x32xf32>
    %38 = vector.extract_strided_slice %33 {offsets = [8, 0], sizes = [8, 32], strides = [1, 1]} : vector<16x128xf32> to vector<8x32xf32>
    %39 = vector.extract_strided_slice %33 {offsets = [8, 32], sizes = [8, 32], strides = [1, 1]} : vector<16x128xf32> to vector<8x32xf32>
    %40 = vector.extract_strided_slice %33 {offsets = [8, 64], sizes = [8, 32], strides = [1, 1]} : vector<16x128xf32> to vector<8x32xf32>
    %41 = vector.extract_strided_slice %33 {offsets = [8, 96], sizes = [8, 32], strides = [1, 1]} : vector<16x128xf32> to vector<8x32xf32>
    %42 = vector.shape_cast %34 : vector<8x32xf32> to vector<1x8x32xf32>
    %43 = vector.shape_cast %35 : vector<8x32xf32> to vector<1x8x32xf32>
    %44 = vector.shape_cast %36 : vector<8x32xf32> to vector<1x8x32xf32>
    %45 = vector.shape_cast %37 : vector<8x32xf32> to vector<1x8x32xf32>
    %46 = vector.shape_cast %38 : vector<8x32xf32> to vector<1x8x32xf32>
    %47 = vector.shape_cast %39 : vector<8x32xf32> to vector<1x8x32xf32>
    %48 = vector.shape_cast %40 : vector<8x32xf32> to vector<1x8x32xf32>
    %49 = vector.shape_cast %41 : vector<8x32xf32> to vector<1x8x32xf32>
    %50 = tpu.concatenate %42, %43, %44, %45, %46, %47, %48, %49 in 0 : vector<1x8x32xf32>, vector<1x8x32xf32>, vector<1x8x32xf32>, vector<1x8x32xf32>, vector<1x8x32xf32>, vector<1x8x32xf32>, vector<1x8x32xf32>, vector<1x8x32xf32> -> vector<8x8x32xf32>
    %51 = vector.extract_strided_slice %14 {offsets = [0, 256], sizes = [16, 128], strides = [1, 1]} : vector<16x384xf32> to vector<16x128xf32>
    %52 = vector.extract_strided_slice %51 {offsets = [0, 0], sizes = [8, 32], strides = [1, 1]} : vector<16x128xf32> to vector<8x32xf32>
    %53 = vector.extract_strided_slice %51 {offsets = [0, 32], sizes = [8, 32], strides = [1, 1]} : vector<16x128xf32> to vector<8x32xf32>
    %54 = vector.extract_strided_slice %51 {offsets = [0, 64], sizes = [8, 32], strides = [1, 1]} : vector<16x128xf32> to vector<8x32xf32>
    %55 = vector.extract_strided_slice %51 {offsets = [0, 96], sizes = [8, 32], strides = [1, 1]} : vector<16x128xf32> to vector<8x32xf32>
    %56 = vector.extract_strided_slice %51 {offsets = [8, 0], sizes = [8, 32], strides = [1, 1]} : vector<16x128xf32> to vector<8x32xf32>
    %57 = vector.extract_strided_slice %51 {offsets = [8, 32], sizes = [8, 32], strides = [1, 1]} : vector<16x128xf32> to vector<8x32xf32>
    %58 = vector.extract_strided_slice %51 {offsets = [8, 64], sizes = [8, 32], strides = [1, 1]} : vector<16x128xf32> to vector<8x32xf32>
    %59 = vector.extract_strided_slice %51 {offsets = [8, 96], sizes = [8, 32], strides = [1, 1]} : vector<16x128xf32> to vector<8x32xf32>
    %60 = vector.shape_cast %52 : vector<8x32xf32> to vector<1x8x32xf32>
    %61 = vector.shape_cast %53 : vector<8x32xf32> to vector<1x8x32xf32>
    %62 = vector.shape_cast %54 : vector<8x32xf32> to vector<1x8x32xf32>
    %63 = vector.shape_cast %55 : vector<8x32xf32> to vector<1x8x32xf32>
    %64 = vector.shape_cast %56 : vector<8x32xf32> to vector<1x8x32xf32>
    %65 = vector.shape_cast %57 : vector<8x32xf32> to vector<1x8x32xf32>
    %66 = vector.shape_cast %58 : vector<8x32xf32> to vector<1x8x32xf32>
    %67 = vector.shape_cast %59 : vector<8x32xf32> to vector<1x8x32xf32>
    %68 = tpu.concatenate %60, %61, %62, %63, %64, %65, %66, %67 in 0 : vector<1x8x32xf32>, vector<1x8x32xf32>, vector<1x8x32xf32>, vector<1x8x32xf32>, vector<1x8x32xf32>, vector<1x8x32xf32>, vector<1x8x32xf32>, vector<1x8x32xf32> -> vector<8x8x32xf32>
    %c0_15 = arith.constant 0 : index
    %c384 = arith.constant 384 : index
    %69 = vector.load %arg5[%c0_15, %c384] : memref<128x1280xbf16, #tpu.memory_space<vmem>>, vector<128x128xbf16>
    %c0_16 = arith.constant 0 : index
    %c384_17 = arith.constant 384 : index
    %70 = vector.load %arg7[%c0_16, %c384_17] : memref<1x1408xf32, #tpu.memory_space<vmem>>, vector<1x128xf32>
    "tpu.trace_start"() <{level = 10 : i32, message = "gqd,gkd->gqk"}> : () -> ()
    %cst_18 = arith.constant dense<0.000000e+00> : vector<8x8x8xf32>
    %71 = tpu.matmul %32, %50, %cst_18 {dimension_numbers = #tpu.dot_dimension_numbers<[2], [2], [1], [1], [0, 0, 0, 1, 1, 1], [0], [0]>} : vector<8x8x32xf32>, vector<8x8x32xf32>, vector<8x8x8xf32> -> vector<8x8x8xf32>
    "tpu.trace_stop"() : () -> ()
    %cst_19 = arith.constant 0.176776692 : f32
    %72 = vector.broadcast %cst_19 : f32 to vector<8x8x8xf32>
    %73 = arith.mulf %71, %72 : vector<8x8x8xf32>
    %74 = vector.broadcast %5 : vector<1x8x8xf32> to vector<8x8x8xf32>
    %75 = arith.addf %73, %74 : vector<8x8x8xf32>
    %cst_20 = arith.constant dense<0xFF800000> : vector<8x8xf32>
    %76 = vector.multi_reduction <maximumf>, %75, %cst_20 [2] : vector<8x8x8xf32> to vector<8x8xf32>
    %77 = vector.shape_cast %76 : vector<8x8xf32> to vector<8x8x1xf32>
    %78 = vector.broadcast %77 : vector<8x8x1xf32> to vector<8x8x8xf32>
    %79 = arith.subf %75, %78 : vector<8x8x8xf32>
    %80 = math.exp %79 : vector<8x8x8xf32>
    %cst_21 = arith.constant dense<0.000000e+00> : vector<8x8xf32>
    %81 = vector.multi_reduction <add>, %80, %cst_21 [2] : vector<8x8x8xf32> to vector<8x8xf32>
    %82 = vector.shape_cast %81 : vector<8x8xf32> to vector<8x8x1xf32>
    %83 = vector.broadcast %82 : vector<8x8x1xf32> to vector<8x8x8xf32>
    %84 = arith.divf %80, %83 : vector<8x8x8xf32>
    "tpu.trace_start"() <{level = 10 : i32, message = "gqk,gkd->gqd"}> : () -> ()
    %cst_22 = arith.constant dense<0.000000e+00> : vector<8x8x32xf32>
    %85 = tpu.matmul %84, %68, %cst_22 {dimension_numbers = #tpu.dot_dimension_numbers<[2], [1], [1], [2], [0, 0, 0, 1, 1, 2], [0], [0]>} : vector<8x8x8xf32>, vector<8x8x32xf32>, vector<8x8x32xf32> -> vector<8x8x32xf32>
    "tpu.trace_stop"() : () -> ()
    %86 = vector.extract_strided_slice %85 {offsets = [0, 0, 0], sizes = [1, 8, 32], strides = [1, 1, 1]} : vector<8x8x32xf32> to vector<1x8x32xf32>
    %87 = vector.shape_cast %86 : vector<1x8x32xf32> to vector<8x32xf32>
    %88 = vector.extract_strided_slice %85 {offsets = [1, 0, 0], sizes = [1, 8, 32], strides = [1, 1, 1]} : vector<8x8x32xf32> to vector<1x8x32xf32>
    %89 = vector.shape_cast %88 : vector<1x8x32xf32> to vector<8x32xf32>
    %90 = vector.extract_strided_slice %85 {offsets = [2, 0, 0], sizes = [1, 8, 32], strides = [1, 1, 1]} : vector<8x8x32xf32> to vector<1x8x32xf32>
    %91 = vector.shape_cast %90 : vector<1x8x32xf32> to vector<8x32xf32>
    %92 = vector.extract_strided_slice %85 {offsets = [3, 0, 0], sizes = [1, 8, 32], strides = [1, 1, 1]} : vector<8x8x32xf32> to vector<1x8x32xf32>
    %93 = vector.shape_cast %92 : vector<1x8x32xf32> to vector<8x32xf32>
    %94 = tpu.concatenate %87, %89, %91, %93 in 1 : vector<8x32xf32>, vector<8x32xf32>, vector<8x32xf32>, vector<8x32xf32> -> vector<8x128xf32>
    %95 = vector.extract_strided_slice %85 {offsets = [4, 0, 0], sizes = [1, 8, 32], strides = [1, 1, 1]} : vector<8x8x32xf32> to vector<1x8x32xf32>
    %96 = vector.shape_cast %95 : vector<1x8x32xf32> to vector<8x32xf32>
    %97 = vector.extract_strided_slice %85 {offsets = [5, 0, 0], sizes = [1, 8, 32], strides = [1, 1, 1]} : vector<8x8x32xf32> to vector<1x8x32xf32>
    %98 = vector.shape_cast %97 : vector<1x8x32xf32> to vector<8x32xf32>
    %99 = vector.extract_strided_slice %85 {offsets = [6, 0, 0], sizes = [1, 8, 32], strides = [1, 1, 1]} : vector<8x8x32xf32> to vector<1x8x32xf32>
    %100 = vector.shape_cast %99 : vector<1x8x32xf32> to vector<8x32xf32>
    %101 = vector.extract_strided_slice %85 {offsets = [7, 0, 0], sizes = [1, 8, 32], strides = [1, 1, 1]} : vector<8x8x32xf32> to vector<1x8x32xf32>
    %102 = vector.shape_cast %101 : vector<1x8x32xf32> to vector<8x32xf32>
    %103 = tpu.concatenate %96, %98, %100, %102 in 1 : vector<8x32xf32>, vector<8x32xf32>, vector<8x32xf32>, vector<8x32xf32> -> vector<8x128xf32>
    %104 = tpu.concatenate %94, %103 in 0 : vector<8x128xf32>, vector<8x128xf32> -> vector<16x128xf32>
    %105 = arith.truncf %104 : vector<16x128xf32> to vector<16x128xbf16>
    %cst_23 = arith.constant dense<0.000000e+00> : vector<16x128xf32>
    %106 = tpu.matmul %105, %69, %cst_23 {dimension_numbers = #tpu.dot_dimension_numbers<[1], [0], [0], [1], [0, 0, 1, 1], [], []>} : vector<16x128xbf16>, vector<128x128xbf16>, vector<16x128xf32> -> vector<16x128xf32>
    %107 = vector.broadcast %70 : vector<1x128xf32> to vector<16x128xf32>
    %108 = arith.addf %106, %107 : vector<16x128xf32>
    %c0_24 = arith.constant 0 : index
    %c0_25 = arith.constant 0 : index
    %109 = vector.load %arg5[%c0_24, %c0_25] : memref<128x1280xbf16, #tpu.memory_space<vmem>>, vector<128x384xbf16>
    %110 = arith.truncf %108 : vector<16x128xf32> to vector<16x128xbf16>
    %cst_26 = arith.constant dense<0.000000e+00> : vector<16x384xf32>
    %111 = tpu.matmul %110, %109, %cst_26 {dimension_numbers = #tpu.dot_dimension_numbers<[1], [0], [0], [1], [0, 0, 1, 1], [], []>} : vector<16x128xbf16>, vector<128x384xbf16>, vector<16x384xf32> -> vector<16x384xf32>
    %c0_27 = arith.constant 0 : index
    %c0_28 = arith.constant 0 : index
    %112 = vector.load %arg7[%c0_27, %c0_28] : memref<1x1408xf32, #tpu.memory_space<vmem>>, vector<1x384xf32>
    %113 = vector.broadcast %112 : vector<1x384xf32> to vector<16x384xf32>
    %114 = arith.addf %111, %113 : vector<16x384xf32>
    %115 = vector.extract_strided_slice %114 {offsets = [0, 0], sizes = [16, 128], strides = [1, 1]} : vector<16x384xf32> to vector<16x128xf32>
    %116 = vector.extract_strided_slice %115 {offsets = [0, 0], sizes = [8, 32], strides = [1, 1]} : vector<16x128xf32> to vector<8x32xf32>
    %117 = vector.extract_strided_slice %115 {offsets = [0, 32], sizes = [8, 32], strides = [1, 1]} : vector<16x128xf32> to vector<8x32xf32>
    %118 = vector.extract_strided_slice %115 {offsets = [0, 64], sizes = [8, 32], strides = [1, 1]} : vector<16x128xf32> to vector<8x32xf32>
    %119 = vector.extract_strided_slice %115 {offsets = [0, 96], sizes = [8, 32], strides = [1, 1]} : vector<16x128xf32> to vector<8x32xf32>
    %120 = vector.extract_strided_slice %115 {offsets = [8, 0], sizes = [8, 32], strides = [1, 1]} : vector<16x128xf32> to vector<8x32xf32>
    %121 = vector.extract_strided_slice %115 {offsets = [8, 32], sizes = [8, 32], strides = [1, 1]} : vector<16x128xf32> to vector<8x32xf32>
    %122 = vector.extract_strided_slice %115 {offsets = [8, 64], sizes = [8, 32], strides = [1, 1]} : vector<16x128xf32> to vector<8x32xf32>
    %123 = vector.extract_strided_slice %115 {offsets = [8, 96], sizes = [8, 32], strides = [1, 1]} : vector<16x128xf32> to vector<8x32xf32>
    %124 = vector.shape_cast %116 : vector<8x32xf32> to vector<1x8x32xf32>
    %125 = vector.shape_cast %117 : vector<8x32xf32> to vector<1x8x32xf32>
    %126 = vector.shape_cast %118 : vector<8x32xf32> to vector<1x8x32xf32>
    %127 = vector.shape_cast %119 : vector<8x32xf32> to vector<1x8x32xf32>
    %128 = vector.shape_cast %120 : vector<8x32xf32> to vector<1x8x32xf32>
    %129 = vector.shape_cast %121 : vector<8x32xf32> to vector<1x8x32xf32>
    %130 = vector.shape_cast %122 : vector<8x32xf32> to vector<1x8x32xf32>
    %131 = vector.shape_cast %123 : vector<8x32xf32> to vector<1x8x32xf32>
    %132 = tpu.concatenate %124, %125, %126, %127, %128, %129, %130, %131 in 0 : vector<1x8x32xf32>, vector<1x8x32xf32>, vector<1x8x32xf32>, vector<1x8x32xf32>, vector<1x8x32xf32>, vector<1x8x32xf32>, vector<1x8x32xf32>, vector<1x8x32xf32> -> vector<8x8x32xf32>
    %133 = vector.extract_strided_slice %114 {offsets = [0, 128], sizes = [16, 128], strides = [1, 1]} : vector<16x384xf32> to vector<16x128xf32>
    %134 = vector.extract_strided_slice %133 {offsets = [0, 0], sizes = [8, 32], strides = [1, 1]} : vector<16x128xf32> to vector<8x32xf32>
    %135 = vector.extract_strided_slice %133 {offsets = [0, 32], sizes = [8, 32], strides = [1, 1]} : vector<16x128xf32> to vector<8x32xf32>
    %136 = vector.extract_strided_slice %133 {offsets = [0, 64], sizes = [8, 32], strides = [1, 1]} : vector<16x128xf32> to vector<8x32xf32>
    %137 = vector.extract_strided_slice %133 {offsets = [0, 96], sizes = [8, 32], strides = [1, 1]} : vector<16x128xf32> to vector<8x32xf32>
    %138 = vector.extract_strided_slice %133 {offsets = [8, 0], sizes = [8, 32], strides = [1, 1]} : vector<16x128xf32> to vector<8x32xf32>
    %139 = vector.extract_strided_slice %133 {offsets = [8, 32], sizes = [8, 32], strides = [1, 1]} : vector<16x128xf32> to vector<8x32xf32>
    %140 = vector.extract_strided_slice %133 {offsets = [8, 64], sizes = [8, 32], strides = [1, 1]} : vector<16x128xf32> to vector<8x32xf32>
    %141 = vector.extract_strided_slice %133 {offsets = [8, 96], sizes = [8, 32], strides = [1, 1]} : vector<16x128xf32> to vector<8x32xf32>
    %142 = vector.shape_cast %134 : vector<8x32xf32> to vector<1x8x32xf32>
    %143 = vector.shape_cast %135 : vector<8x32xf32> to vector<1x8x32xf32>
    %144 = vector.shape_cast %136 : vector<8x32xf32> to vector<1x8x32xf32>
    %145 = vector.shape_cast %137 : vector<8x32xf32> to vector<1x8x32xf32>
    %146 = vector.shape_cast %138 : vector<8x32xf32> to vector<1x8x32xf32>
    %147 = vector.shape_cast %139 : vector<8x32xf32> to vector<1x8x32xf32>
    %148 = vector.shape_cast %140 : vector<8x32xf32> to vector<1x8x32xf32>
    %149 = vector.shape_cast %141 : vector<8x32xf32> to vector<1x8x32xf32>
    %150 = tpu.concatenate %142, %143, %144, %145, %146, %147, %148, %149 in 0 : vector<1x8x32xf32>, vector<1x8x32xf32>, vector<1x8x32xf32>, vector<1x8x32xf32>, vector<1x8x32xf32>, vector<1x8x32xf32>, vector<1x8x32xf32>, vector<1x8x32xf32> -> vector<8x8x32xf32>
    %151 = vector.extract_strided_slice %114 {offsets = [0, 256], sizes = [16, 128], strides = [1, 1]} : vector<16x384xf32> to vector<16x128xf32>
    %152 = vector.extract_strided_slice %151 {offsets = [0, 0], sizes = [8, 32], strides = [1, 1]} : vector<16x128xf32> to vector<8x32xf32>
    %153 = vector.extract_strided_slice %151 {offsets = [0, 32], sizes = [8, 32], strides = [1, 1]} : vector<16x128xf32> to vector<8x32xf32>
    %154 = vector.extract_strided_slice %151 {offsets = [0, 64], sizes = [8, 32], strides = [1, 1]} : vector<16x128xf32> to vector<8x32xf32>
    %155 = vector.extract_strided_slice %151 {offsets = [0, 96], sizes = [8, 32], strides = [1, 1]} : vector<16x128xf32> to vector<8x32xf32>
    %156 = vector.extract_strided_slice %151 {offsets = [8, 0], sizes = [8, 32], strides = [1, 1]} : vector<16x128xf32> to vector<8x32xf32>
    %157 = vector.extract_strided_slice %151 {offsets = [8, 32], sizes = [8, 32], strides = [1, 1]} : vector<16x128xf32> to vector<8x32xf32>
    %158 = vector.extract_strided_slice %151 {offsets = [8, 64], sizes = [8, 32], strides = [1, 1]} : vector<16x128xf32> to vector<8x32xf32>
    %159 = vector.extract_strided_slice %151 {offsets = [8, 96], sizes = [8, 32], strides = [1, 1]} : vector<16x128xf32> to vector<8x32xf32>
    %160 = vector.shape_cast %152 : vector<8x32xf32> to vector<1x8x32xf32>
    %161 = vector.shape_cast %153 : vector<8x32xf32> to vector<1x8x32xf32>
    %162 = vector.shape_cast %154 : vector<8x32xf32> to vector<1x8x32xf32>
    %163 = vector.shape_cast %155 : vector<8x32xf32> to vector<1x8x32xf32>
    %164 = vector.shape_cast %156 : vector<8x32xf32> to vector<1x8x32xf32>
    %165 = vector.shape_cast %157 : vector<8x32xf32> to vector<1x8x32xf32>
    %166 = vector.shape_cast %158 : vector<8x32xf32> to vector<1x8x32xf32>
    %167 = vector.shape_cast %159 : vector<8x32xf32> to vector<1x8x32xf32>
    %168 = tpu.concatenate %160, %161, %162, %163, %164, %165, %166, %167 in 0 : vector<1x8x32xf32>, vector<1x8x32xf32>, vector<1x8x32xf32>, vector<1x8x32xf32>, vector<1x8x32xf32>, vector<1x8x32xf32>, vector<1x8x32xf32>, vector<1x8x32xf32> -> vector<8x8x32xf32>
    %c0_29 = arith.constant 0 : index
    %c384_30 = arith.constant 384 : index
    %169 = vector.load %arg5[%c0_29, %c384_30] : memref<128x1280xbf16, #tpu.memory_space<vmem>>, vector<128x128xbf16>
    %c0_31 = arith.constant 0 : index
    %c384_32 = arith.constant 384 : index
    %170 = vector.load %arg7[%c0_31, %c384_32] : memref<1x1408xf32, #tpu.memory_space<vmem>>, vector<1x128xf32>
    "tpu.trace_start"() <{level = 10 : i32, message = "gqd,gkd->gqk"}> : () -> ()
    %cst_33 = arith.constant dense<0.000000e+00> : vector<8x8x8xf32>
    %171 = tpu.matmul %132, %150, %cst_33 {dimension_numbers = #tpu.dot_dimension_numbers<[2], [2], [1], [1], [0, 0, 0, 1, 1, 1], [0], [0]>} : vector<8x8x32xf32>, vector<8x8x32xf32>, vector<8x8x8xf32> -> vector<8x8x8xf32>
    "tpu.trace_stop"() : () -> ()
    %cst_34 = arith.constant 0.176776692 : f32
    %172 = vector.broadcast %cst_34 : f32 to vector<8x8x8xf32>
    %173 = arith.mulf %171, %172 : vector<8x8x8xf32>
    %174 = vector.broadcast %5 : vector<1x8x8xf32> to vector<8x8x8xf32>
    %175 = arith.addf %173, %174 : vector<8x8x8xf32>
    %cst_35 = arith.constant dense<0xFF800000> : vector<8x8xf32>
    %176 = vector.multi_reduction <maximumf>, %175, %cst_35 [2] : vector<8x8x8xf32> to vector<8x8xf32>
    %177 = vector.shape_cast %176 : vector<8x8xf32> to vector<8x8x1xf32>
    %178 = vector.broadcast %177 : vector<8x8x1xf32> to vector<8x8x8xf32>
    %179 = arith.subf %175, %178 : vector<8x8x8xf32>
    %180 = math.exp %179 : vector<8x8x8xf32>
    %cst_36 = arith.constant dense<0.000000e+00> : vector<8x8xf32>
    %181 = vector.multi_reduction <add>, %180, %cst_36 [2] : vector<8x8x8xf32> to vector<8x8xf32>
    %182 = vector.shape_cast %181 : vector<8x8xf32> to vector<8x8x1xf32>
    %183 = vector.broadcast %182 : vector<8x8x1xf32> to vector<8x8x8xf32>
    %184 = arith.divf %180, %183 : vector<8x8x8xf32>
    "tpu.trace_start"() <{level = 10 : i32, message = "gqk,gkd->gqd"}> : () -> ()
    %cst_37 = arith.constant dense<0.000000e+00> : vector<8x8x32xf32>
    %185 = tpu.matmul %184, %168, %cst_37 {dimension_numbers = #tpu.dot_dimension_numbers<[2], [1], [1], [2], [0, 0, 0, 1, 1, 2], [0], [0]>} : vector<8x8x8xf32>, vector<8x8x32xf32>, vector<8x8x32xf32> -> vector<8x8x32xf32>
    "tpu.trace_stop"() : () -> ()
    %186 = vector.extract_strided_slice %185 {offsets = [0, 0, 0], sizes = [1, 8, 32], strides = [1, 1, 1]} : vector<8x8x32xf32> to vector<1x8x32xf32>
    %187 = vector.shape_cast %186 : vector<1x8x32xf32> to vector<8x32xf32>
    %188 = vector.extract_strided_slice %185 {offsets = [1, 0, 0], sizes = [1, 8, 32], strides = [1, 1, 1]} : vector<8x8x32xf32> to vector<1x8x32xf32>
    %189 = vector.shape_cast %188 : vector<1x8x32xf32> to vector<8x32xf32>
    %190 = vector.extract_strided_slice %185 {offsets = [2, 0, 0], sizes = [1, 8, 32], strides = [1, 1, 1]} : vector<8x8x32xf32> to vector<1x8x32xf32>
    %191 = vector.shape_cast %190 : vector<1x8x32xf32> to vector<8x32xf32>
    %192 = vector.extract_strided_slice %185 {offsets = [3, 0, 0], sizes = [1, 8, 32], strides = [1, 1, 1]} : vector<8x8x32xf32> to vector<1x8x32xf32>
    %193 = vector.shape_cast %192 : vector<1x8x32xf32> to vector<8x32xf32>
    %194 = tpu.concatenate %187, %189, %191, %193 in 1 : vector<8x32xf32>, vector<8x32xf32>, vector<8x32xf32>, vector<8x32xf32> -> vector<8x128xf32>
    %195 = vector.extract_strided_slice %185 {offsets = [4, 0, 0], sizes = [1, 8, 32], strides = [1, 1, 1]} : vector<8x8x32xf32> to vector<1x8x32xf32>
    %196 = vector.shape_cast %195 : vector<1x8x32xf32> to vector<8x32xf32>
    %197 = vector.extract_strided_slice %185 {offsets = [5, 0, 0], sizes = [1, 8, 32], strides = [1, 1, 1]} : vector<8x8x32xf32> to vector<1x8x32xf32>
    %198 = vector.shape_cast %197 : vector<1x8x32xf32> to vector<8x32xf32>
    %199 = vector.extract_strided_slice %185 {offsets = [6, 0, 0], sizes = [1, 8, 32], strides = [1, 1, 1]} : vector<8x8x32xf32> to vector<1x8x32xf32>
    %200 = vector.shape_cast %199 : vector<1x8x32xf32> to vector<8x32xf32>
    %201 = vector.extract_strided_slice %185 {offsets = [7, 0, 0], sizes = [1, 8, 32], strides = [1, 1, 1]} : vector<8x8x32xf32> to vector<1x8x32xf32>
    %202 = vector.shape_cast %201 : vector<1x8x32xf32> to vector<8x32xf32>
    %203 = tpu.concatenate %196, %198, %200, %202 in 1 : vector<8x32xf32>, vector<8x32xf32>, vector<8x32xf32>, vector<8x32xf32> -> vector<8x128xf32>
    %204 = tpu.concatenate %194, %203 in 0 : vector<8x128xf32>, vector<8x128xf32> -> vector<16x128xf32>
    %205 = arith.truncf %204 : vector<16x128xf32> to vector<16x128xbf16>
    %cst_38 = arith.constant dense<0.000000e+00> : vector<16x128xf32>
    %206 = tpu.matmul %205, %169, %cst_38 {dimension_numbers = #tpu.dot_dimension_numbers<[1], [0], [0], [1], [0, 0, 1, 1], [], []>} : vector<16x128xbf16>, vector<128x128xbf16>, vector<16x128xf32> -> vector<16x128xf32>
    %207 = vector.broadcast %170 : vector<1x128xf32> to vector<16x128xf32>
    %208 = arith.addf %206, %207 : vector<16x128xf32>
    %209 = arith.addf %208, %3 : vector<16x128xf32>
    %c0_39 = arith.constant 0 : index
    %c0_40 = arith.constant 0 : index
    %210 = vector.load %arg8[%c0_39, %c0_40] : memref<6x128xf32, #tpu.memory_space<vmem>>, vector<1x128xf32>
    %c1 = arith.constant 1 : index
    %c0_41 = arith.constant 0 : index
    %211 = vector.load %arg8[%c1, %c0_41] : memref<6x128xf32, #tpu.memory_space<vmem>>, vector<1x128xf32>
    %cst_42 = arith.constant dense<0.000000e+00> : vector<16xf32>
    %212 = vector.multi_reduction <add>, %209, %cst_42 [1] : vector<16x128xf32> to vector<16xf32>
    %213 = vector.shape_cast %212 : vector<16xf32> to vector<16x1xf32>
    %cst_43 = arith.constant 1.280000e+02 : f32
    %214 = vector.broadcast %cst_43 : f32 to vector<16x1xf32>
    %215 = arith.divf %213, %214 : vector<16x1xf32>
    %216 = vector.broadcast %215 : vector<16x1xf32> to vector<16x128xf32>
    %217 = arith.subf %209, %216 : vector<16x128xf32>
    %218 = arith.mulf %217, %217 : vector<16x128xf32>
    %cst_44 = arith.constant dense<0.000000e+00> : vector<16xf32>
    %219 = vector.multi_reduction <add>, %218, %cst_44 [1] : vector<16x128xf32> to vector<16xf32>
    %220 = vector.shape_cast %219 : vector<16xf32> to vector<16x1xf32>
    %cst_45 = arith.constant 1.280000e+02 : f32
    %221 = vector.broadcast %cst_45 : f32 to vector<16x1xf32>
    %222 = arith.divf %220, %221 : vector<16x1xf32>
    %cst_46 = arith.constant 9.99999974E-6 : f32
    %223 = vector.broadcast %cst_46 : f32 to vector<16x1xf32>
    %224 = arith.addf %222, %223 : vector<16x1xf32>
    %225 = math.rsqrt %224 : vector<16x1xf32>
    %226 = vector.broadcast %225 : vector<16x1xf32> to vector<16x128xf32>
    %227 = arith.mulf %217, %226 : vector<16x128xf32>
    %228 = vector.broadcast %210 : vector<1x128xf32> to vector<16x128xf32>
    %229 = arith.mulf %228, %227 : vector<16x128xf32>
    %230 = vector.broadcast %211 : vector<1x128xf32> to vector<16x128xf32>
    %231 = arith.addf %229, %230 : vector<16x128xf32>
    %c0_47 = arith.constant 0 : index
    %c512 = arith.constant 512 : index
    %232 = vector.load %arg5[%c0_47, %c512] : memref<128x1280xbf16, #tpu.memory_space<vmem>>, vector<128x128xbf16>
    %233 = arith.truncf %231 : vector<16x128xf32> to vector<16x128xbf16>
    %cst_48 = arith.constant dense<0.000000e+00> : vector<16x128xf32>
    %234 = tpu.matmul %233, %232, %cst_48 {dimension_numbers = #tpu.dot_dimension_numbers<[1], [0], [0], [1], [0, 0, 1, 1], [], []>} : vector<16x128xbf16>, vector<128x128xbf16>, vector<16x128xf32> -> vector<16x128xf32>
    %c0_49 = arith.constant 0 : index
    %c512_50 = arith.constant 512 : index
    %235 = vector.load %arg7[%c0_49, %c512_50] : memref<1x1408xf32, #tpu.memory_space<vmem>>, vector<1x128xf32>
    %236 = vector.broadcast %235 : vector<1x128xf32> to vector<16x128xf32>
    %237 = arith.addf %234, %236 : vector<16x128xf32>
    %c0_51 = arith.constant 0 : index
    %c640 = arith.constant 640 : index
    %238 = vector.load %arg5[%c0_51, %c640] : memref<128x1280xbf16, #tpu.memory_space<vmem>>, vector<128x256xbf16>
    %239 = arith.truncf %1 : vector<16x128xf32> to vector<16x128xbf16>
    %cst_52 = arith.constant dense<0.000000e+00> : vector<16x256xf32>
    %240 = tpu.matmul %239, %238, %cst_52 {dimension_numbers = #tpu.dot_dimension_numbers<[1], [0], [0], [1], [0, 0, 1, 1], [], []>} : vector<16x128xbf16>, vector<128x256xbf16>, vector<16x256xf32> -> vector<16x256xf32>
    %c0_53 = arith.constant 0 : index
    %c640_54 = arith.constant 640 : index
    %241 = vector.load %arg7[%c0_53, %c640_54] : memref<1x1408xf32, #tpu.memory_space<vmem>>, vector<1x256xf32>
    %242 = vector.broadcast %241 : vector<1x256xf32> to vector<16x256xf32>
    %243 = arith.addf %240, %242 : vector<16x256xf32>
    %244 = vector.extract_strided_slice %237 {offsets = [0, 0], sizes = [8, 32], strides = [1, 1]} : vector<16x128xf32> to vector<8x32xf32>
    %245 = vector.extract_strided_slice %237 {offsets = [0, 32], sizes = [8, 32], strides = [1, 1]} : vector<16x128xf32> to vector<8x32xf32>
    %246 = vector.extract_strided_slice %237 {offsets = [0, 64], sizes = [8, 32], strides = [1, 1]} : vector<16x128xf32> to vector<8x32xf32>
    %247 = vector.extract_strided_slice %237 {offsets = [0, 96], sizes = [8, 32], strides = [1, 1]} : vector<16x128xf32> to vector<8x32xf32>
    %248 = vector.extract_strided_slice %237 {offsets = [8, 0], sizes = [8, 32], strides = [1, 1]} : vector<16x128xf32> to vector<8x32xf32>
    %249 = vector.extract_strided_slice %237 {offsets = [8, 32], sizes = [8, 32], strides = [1, 1]} : vector<16x128xf32> to vector<8x32xf32>
    %250 = vector.extract_strided_slice %237 {offsets = [8, 64], sizes = [8, 32], strides = [1, 1]} : vector<16x128xf32> to vector<8x32xf32>
    %251 = vector.extract_strided_slice %237 {offsets = [8, 96], sizes = [8, 32], strides = [1, 1]} : vector<16x128xf32> to vector<8x32xf32>
    %252 = vector.shape_cast %244 : vector<8x32xf32> to vector<1x8x32xf32>
    %253 = vector.shape_cast %245 : vector<8x32xf32> to vector<1x8x32xf32>
    %254 = vector.shape_cast %246 : vector<8x32xf32> to vector<1x8x32xf32>
    %255 = vector.shape_cast %247 : vector<8x32xf32> to vector<1x8x32xf32>
    %256 = vector.shape_cast %248 : vector<8x32xf32> to vector<1x8x32xf32>
    %257 = vector.shape_cast %249 : vector<8x32xf32> to vector<1x8x32xf32>
    %258 = vector.shape_cast %250 : vector<8x32xf32> to vector<1x8x32xf32>
    %259 = vector.shape_cast %251 : vector<8x32xf32> to vector<1x8x32xf32>
    %260 = tpu.concatenate %252, %253, %254, %255, %256, %257, %258, %259 in 0 : vector<1x8x32xf32>, vector<1x8x32xf32>, vector<1x8x32xf32>, vector<1x8x32xf32>, vector<1x8x32xf32>, vector<1x8x32xf32>, vector<1x8x32xf32>, vector<1x8x32xf32> -> vector<8x8x32xf32>
    %261 = vector.extract_strided_slice %243 {offsets = [0, 0], sizes = [16, 128], strides = [1, 1]} : vector<16x256xf32> to vector<16x128xf32>
    %262 = vector.extract_strided_slice %261 {offsets = [0, 0], sizes = [8, 32], strides = [1, 1]} : vector<16x128xf32> to vector<8x32xf32>
    %263 = vector.extract_strided_slice %261 {offsets = [0, 32], sizes = [8, 32], strides = [1, 1]} : vector<16x128xf32> to vector<8x32xf32>
    %264 = vector.extract_strided_slice %261 {offsets = [0, 64], sizes = [8, 32], strides = [1, 1]} : vector<16x128xf32> to vector<8x32xf32>
    %265 = vector.extract_strided_slice %261 {offsets = [0, 96], sizes = [8, 32], strides = [1, 1]} : vector<16x128xf32> to vector<8x32xf32>
    %266 = vector.extract_strided_slice %261 {offsets = [8, 0], sizes = [8, 32], strides = [1, 1]} : vector<16x128xf32> to vector<8x32xf32>
    %267 = vector.extract_strided_slice %261 {offsets = [8, 32], sizes = [8, 32], strides = [1, 1]} : vector<16x128xf32> to vector<8x32xf32>
    %268 = vector.extract_strided_slice %261 {offsets = [8, 64], sizes = [8, 32], strides = [1, 1]} : vector<16x128xf32> to vector<8x32xf32>
    %269 = vector.extract_strided_slice %261 {offsets = [8, 96], sizes = [8, 32], strides = [1, 1]} : vector<16x128xf32> to vector<8x32xf32>
    %270 = vector.shape_cast %262 : vector<8x32xf32> to vector<1x8x32xf32>
    %271 = vector.shape_cast %263 : vector<8x32xf32> to vector<1x8x32xf32>
    %272 = vector.shape_cast %264 : vector<8x32xf32> to vector<1x8x32xf32>
    %273 = vector.shape_cast %265 : vector<8x32xf32> to vector<1x8x32xf32>
    %274 = vector.shape_cast %266 : vector<8x32xf32> to vector<1x8x32xf32>
    %275 = vector.shape_cast %267 : vector<8x32xf32> to vector<1x8x32xf32>
    %276 = vector.shape_cast %268 : vector<8x32xf32> to vector<1x8x32xf32>
    %277 = vector.shape_cast %269 : vector<8x32xf32> to vector<1x8x32xf32>
    %278 = tpu.concatenate %270, %271, %272, %273, %274, %275, %276, %277 in 0 : vector<1x8x32xf32>, vector<1x8x32xf32>, vector<1x8x32xf32>, vector<1x8x32xf32>, vector<1x8x32xf32>, vector<1x8x32xf32>, vector<1x8x32xf32>, vector<1x8x32xf32> -> vector<8x8x32xf32>
    %279 = vector.extract_strided_slice %243 {offsets = [0, 128], sizes = [16, 128], strides = [1, 1]} : vector<16x256xf32> to vector<16x128xf32>
    %280 = vector.extract_strided_slice %279 {offsets = [0, 0], sizes = [8, 32], strides = [1, 1]} : vector<16x128xf32> to vector<8x32xf32>
    %281 = vector.extract_strided_slice %279 {offsets = [0, 32], sizes = [8, 32], strides = [1, 1]} : vector<16x128xf32> to vector<8x32xf32>
    %282 = vector.extract_strided_slice %279 {offsets = [0, 64], sizes = [8, 32], strides = [1, 1]} : vector<16x128xf32> to vector<8x32xf32>
    %283 = vector.extract_strided_slice %279 {offsets = [0, 96], sizes = [8, 32], strides = [1, 1]} : vector<16x128xf32> to vector<8x32xf32>
    %284 = vector.extract_strided_slice %279 {offsets = [8, 0], sizes = [8, 32], strides = [1, 1]} : vector<16x128xf32> to vector<8x32xf32>
    %285 = vector.extract_strided_slice %279 {offsets = [8, 32], sizes = [8, 32], strides = [1, 1]} : vector<16x128xf32> to vector<8x32xf32>
    %286 = vector.extract_strided_slice %279 {offsets = [8, 64], sizes = [8, 32], strides = [1, 1]} : vector<16x128xf32> to vector<8x32xf32>
    %287 = vector.extract_strided_slice %279 {offsets = [8, 96], sizes = [8, 32], strides = [1, 1]} : vector<16x128xf32> to vector<8x32xf32>
    %288 = vector.shape_cast %280 : vector<8x32xf32> to vector<1x8x32xf32>
    %289 = vector.shape_cast %281 : vector<8x32xf32> to vector<1x8x32xf32>
    %290 = vector.shape_cast %282 : vector<8x32xf32> to vector<1x8x32xf32>
    %291 = vector.shape_cast %283 : vector<8x32xf32> to vector<1x8x32xf32>
    %292 = vector.shape_cast %284 : vector<8x32xf32> to vector<1x8x32xf32>
    %293 = vector.shape_cast %285 : vector<8x32xf32> to vector<1x8x32xf32>
    %294 = vector.shape_cast %286 : vector<8x32xf32> to vector<1x8x32xf32>
    %295 = vector.shape_cast %287 : vector<8x32xf32> to vector<1x8x32xf32>
    %296 = tpu.concatenate %288, %289, %290, %291, %292, %293, %294, %295 in 0 : vector<1x8x32xf32>, vector<1x8x32xf32>, vector<1x8x32xf32>, vector<1x8x32xf32>, vector<1x8x32xf32>, vector<1x8x32xf32>, vector<1x8x32xf32>, vector<1x8x32xf32> -> vector<8x8x32xf32>
    %c0_55 = arith.constant 0 : index
    %c896 = arith.constant 896 : index
    %297 = vector.load %arg5[%c0_55, %c896] : memref<128x1280xbf16, #tpu.memory_space<vmem>>, vector<128x128xbf16>
    %c0_56 = arith.constant 0 : index
    %c896_57 = arith.constant 896 : index
    %298 = vector.load %arg7[%c0_56, %c896_57] : memref<1x1408xf32, #tpu.memory_space<vmem>>, vector<1x128xf32>
    "tpu.trace_start"() <{level = 10 : i32, message = "gqd,gkd->gqk"}> : () -> ()
    %cst_58 = arith.constant dense<0.000000e+00> : vector<8x8x8xf32>
    %299 = tpu.matmul %260, %278, %cst_58 {dimension_numbers = #tpu.dot_dimension_numbers<[2], [2], [1], [1], [0, 0, 0, 1, 1, 1], [0], [0]>} : vector<8x8x32xf32>, vector<8x8x32xf32>, vector<8x8x8xf32> -> vector<8x8x8xf32>
    "tpu.trace_stop"() : () -> ()
    %cst_59 = arith.constant 0.176776692 : f32
    %300 = vector.broadcast %cst_59 : f32 to vector<8x8x8xf32>
    %301 = arith.mulf %299, %300 : vector<8x8x8xf32>
    %302 = vector.broadcast %7 : vector<1x8x8xf32> to vector<8x8x8xf32>
    %303 = arith.addf %301, %302 : vector<8x8x8xf32>
    %cst_60 = arith.constant dense<0xFF800000> : vector<8x8xf32>
    %304 = vector.multi_reduction <maximumf>, %303, %cst_60 [2] : vector<8x8x8xf32> to vector<8x8xf32>
    %305 = vector.shape_cast %304 : vector<8x8xf32> to vector<8x8x1xf32>
    %306 = vector.broadcast %305 : vector<8x8x1xf32> to vector<8x8x8xf32>
    %307 = arith.subf %303, %306 : vector<8x8x8xf32>
    %308 = math.exp %307 : vector<8x8x8xf32>
    %cst_61 = arith.constant dense<0.000000e+00> : vector<8x8xf32>
    %309 = vector.multi_reduction <add>, %308, %cst_61 [2] : vector<8x8x8xf32> to vector<8x8xf32>
    %310 = vector.shape_cast %309 : vector<8x8xf32> to vector<8x8x1xf32>
    %311 = vector.broadcast %310 : vector<8x8x1xf32> to vector<8x8x8xf32>
    %312 = arith.divf %308, %311 : vector<8x8x8xf32>
    "tpu.trace_start"() <{level = 10 : i32, message = "gqk,gkd->gqd"}> : () -> ()
    %cst_62 = arith.constant dense<0.000000e+00> : vector<8x8x32xf32>
    %313 = tpu.matmul %312, %296, %cst_62 {dimension_numbers = #tpu.dot_dimension_numbers<[2], [1], [1], [2], [0, 0, 0, 1, 1, 2], [0], [0]>} : vector<8x8x8xf32>, vector<8x8x32xf32>, vector<8x8x32xf32> -> vector<8x8x32xf32>
    "tpu.trace_stop"() : () -> ()
    %314 = vector.extract_strided_slice %313 {offsets = [0, 0, 0], sizes = [1, 8, 32], strides = [1, 1, 1]} : vector<8x8x32xf32> to vector<1x8x32xf32>
    %315 = vector.shape_cast %314 : vector<1x8x32xf32> to vector<8x32xf32>
    %316 = vector.extract_strided_slice %313 {offsets = [1, 0, 0], sizes = [1, 8, 32], strides = [1, 1, 1]} : vector<8x8x32xf32> to vector<1x8x32xf32>
    %317 = vector.shape_cast %316 : vector<1x8x32xf32> to vector<8x32xf32>
    %318 = vector.extract_strided_slice %313 {offsets = [2, 0, 0], sizes = [1, 8, 32], strides = [1, 1, 1]} : vector<8x8x32xf32> to vector<1x8x32xf32>
    %319 = vector.shape_cast %318 : vector<1x8x32xf32> to vector<8x32xf32>
    %320 = vector.extract_strided_slice %313 {offsets = [3, 0, 0], sizes = [1, 8, 32], strides = [1, 1, 1]} : vector<8x8x32xf32> to vector<1x8x32xf32>
    %321 = vector.shape_cast %320 : vector<1x8x32xf32> to vector<8x32xf32>
    %322 = tpu.concatenate %315, %317, %319, %321 in 1 : vector<8x32xf32>, vector<8x32xf32>, vector<8x32xf32>, vector<8x32xf32> -> vector<8x128xf32>
    %323 = vector.extract_strided_slice %313 {offsets = [4, 0, 0], sizes = [1, 8, 32], strides = [1, 1, 1]} : vector<8x8x32xf32> to vector<1x8x32xf32>
    %324 = vector.shape_cast %323 : vector<1x8x32xf32> to vector<8x32xf32>
    %325 = vector.extract_strided_slice %313 {offsets = [5, 0, 0], sizes = [1, 8, 32], strides = [1, 1, 1]} : vector<8x8x32xf32> to vector<1x8x32xf32>
    %326 = vector.shape_cast %325 : vector<1x8x32xf32> to vector<8x32xf32>
    %327 = vector.extract_strided_slice %313 {offsets = [6, 0, 0], sizes = [1, 8, 32], strides = [1, 1, 1]} : vector<8x8x32xf32> to vector<1x8x32xf32>
    %328 = vector.shape_cast %327 : vector<1x8x32xf32> to vector<8x32xf32>
    %329 = vector.extract_strided_slice %313 {offsets = [7, 0, 0], sizes = [1, 8, 32], strides = [1, 1, 1]} : vector<8x8x32xf32> to vector<1x8x32xf32>
    %330 = vector.shape_cast %329 : vector<1x8x32xf32> to vector<8x32xf32>
    %331 = tpu.concatenate %324, %326, %328, %330 in 1 : vector<8x32xf32>, vector<8x32xf32>, vector<8x32xf32>, vector<8x32xf32> -> vector<8x128xf32>
    %332 = tpu.concatenate %322, %331 in 0 : vector<8x128xf32>, vector<8x128xf32> -> vector<16x128xf32>
    %333 = arith.truncf %332 : vector<16x128xf32> to vector<16x128xbf16>
    %cst_63 = arith.constant dense<0.000000e+00> : vector<16x128xf32>
    %334 = tpu.matmul %333, %297, %cst_63 {dimension_numbers = #tpu.dot_dimension_numbers<[1], [0], [0], [1], [0, 0, 1, 1], [], []>} : vector<16x128xbf16>, vector<128x128xbf16>, vector<16x128xf32> -> vector<16x128xf32>
    %335 = vector.broadcast %298 : vector<1x128xf32> to vector<16x128xf32>
    %336 = arith.addf %334, %335 : vector<16x128xf32>
    %337 = arith.addf %336, %231 : vector<16x128xf32>
    %c2 = arith.constant 2 : index
    %c0_64 = arith.constant 0 : index
    %338 = vector.load %arg8[%c2, %c0_64] : memref<6x128xf32, #tpu.memory_space<vmem>>, vector<1x128xf32>
    %c3 = arith.constant 3 : index
    %c0_65 = arith.constant 0 : index
    %339 = vector.load %arg8[%c3, %c0_65] : memref<6x128xf32, #tpu.memory_space<vmem>>, vector<1x128xf32>
    %cst_66 = arith.constant dense<0.000000e+00> : vector<16xf32>
    %340 = vector.multi_reduction <add>, %337, %cst_66 [1] : vector<16x128xf32> to vector<16xf32>
    %341 = vector.shape_cast %340 : vector<16xf32> to vector<16x1xf32>
    %cst_67 = arith.constant 1.280000e+02 : f32
    %342 = vector.broadcast %cst_67 : f32 to vector<16x1xf32>
    %343 = arith.divf %341, %342 : vector<16x1xf32>
    %344 = vector.broadcast %343 : vector<16x1xf32> to vector<16x128xf32>
    %345 = arith.subf %337, %344 : vector<16x128xf32>
    %346 = arith.mulf %345, %345 : vector<16x128xf32>
    %cst_68 = arith.constant dense<0.000000e+00> : vector<16xf32>
    %347 = vector.multi_reduction <add>, %346, %cst_68 [1] : vector<16x128xf32> to vector<16xf32>
    %348 = vector.shape_cast %347 : vector<16xf32> to vector<16x1xf32>
    %cst_69 = arith.constant 1.280000e+02 : f32
    %349 = vector.broadcast %cst_69 : f32 to vector<16x1xf32>
    %350 = arith.divf %348, %349 : vector<16x1xf32>
    %cst_70 = arith.constant 9.99999974E-6 : f32
    %351 = vector.broadcast %cst_70 : f32 to vector<16x1xf32>
    %352 = arith.addf %350, %351 : vector<16x1xf32>
    %353 = math.rsqrt %352 : vector<16x1xf32>
    %354 = vector.broadcast %353 : vector<16x1xf32> to vector<16x128xf32>
    %355 = arith.mulf %345, %354 : vector<16x128xf32>
    %356 = vector.broadcast %338 : vector<1x128xf32> to vector<16x128xf32>
    %357 = arith.mulf %356, %355 : vector<16x128xf32>
    %358 = vector.broadcast %339 : vector<1x128xf32> to vector<16x128xf32>
    %359 = arith.addf %357, %358 : vector<16x128xf32>
    %c0_71 = arith.constant 0 : index
    %c1024 = arith.constant 1024 : index
    %360 = vector.load %arg5[%c0_71, %c1024] : memref<128x1280xbf16, #tpu.memory_space<vmem>>, vector<128x256xbf16>
    %361 = arith.truncf %359 : vector<16x128xf32> to vector<16x128xbf16>
    %cst_72 = arith.constant dense<0.000000e+00> : vector<16x256xf32>
    %362 = tpu.matmul %361, %360, %cst_72 {dimension_numbers = #tpu.dot_dimension_numbers<[1], [0], [0], [1], [0, 0, 1, 1], [], []>} : vector<16x128xbf16>, vector<128x256xbf16>, vector<16x256xf32> -> vector<16x256xf32>
    %c0_73 = arith.constant 0 : index
    %c1024_74 = arith.constant 1024 : index
    %363 = vector.load %arg7[%c0_73, %c1024_74] : memref<1x1408xf32, #tpu.memory_space<vmem>>, vector<1x256xf32>
    %364 = vector.broadcast %363 : vector<1x256xf32> to vector<16x256xf32>
    %365 = arith.addf %362, %364 : vector<16x256xf32>
    %cst_75 = arith.constant 0.000000e+00 : f32
    %366 = vector.broadcast %cst_75 : f32 to vector<16x256xf32>
    %367 = arith.maximumf %365, %366 : vector<16x256xf32>
    %368 = arith.truncf %367 : vector<16x256xf32> to vector<16x256xbf16>
    %cst_76 = arith.constant dense<0.000000e+00> : vector<16x128xf32>
    %369 = tpu.matmul %368, %8, %cst_76 {dimension_numbers = #tpu.dot_dimension_numbers<[1], [0], [0], [1], [0, 0, 1, 1], [], []>} : vector<16x256xbf16>, vector<256x128xbf16>, vector<16x128xf32> -> vector<16x128xf32>
    %c0_77 = arith.constant 0 : index
    %c1280 = arith.constant 1280 : index
    %370 = vector.load %arg7[%c0_77, %c1280] : memref<1x1408xf32, #tpu.memory_space<vmem>>, vector<1x128xf32>
    %371 = vector.broadcast %370 : vector<1x128xf32> to vector<16x128xf32>
    %372 = arith.addf %369, %371 : vector<16x128xf32>
    %373 = arith.addf %372, %359 : vector<16x128xf32>
    %c4 = arith.constant 4 : index
    %c0_78 = arith.constant 0 : index
    %374 = vector.load %arg8[%c4, %c0_78] : memref<6x128xf32, #tpu.memory_space<vmem>>, vector<1x128xf32>
    %c5 = arith.constant 5 : index
    %c0_79 = arith.constant 0 : index
    %375 = vector.load %arg8[%c5, %c0_79] : memref<6x128xf32, #tpu.memory_space<vmem>>, vector<1x128xf32>
    %cst_80 = arith.constant dense<0.000000e+00> : vector<16xf32>
    %376 = vector.multi_reduction <add>, %373, %cst_80 [1] : vector<16x128xf32> to vector<16xf32>
    %377 = vector.shape_cast %376 : vector<16xf32> to vector<16x1xf32>
    %cst_81 = arith.constant 1.280000e+02 : f32
    %378 = vector.broadcast %cst_81 : f32 to vector<16x1xf32>
    %379 = arith.divf %377, %378 : vector<16x1xf32>
    %380 = vector.broadcast %379 : vector<16x1xf32> to vector<16x128xf32>
    %381 = arith.subf %373, %380 : vector<16x128xf32>
    %382 = arith.mulf %381, %381 : vector<16x128xf32>
    %cst_82 = arith.constant dense<0.000000e+00> : vector<16xf32>
    %383 = vector.multi_reduction <add>, %382, %cst_82 [1] : vector<16x128xf32> to vector<16xf32>
    %384 = vector.shape_cast %383 : vector<16xf32> to vector<16x1xf32>
    %cst_83 = arith.constant 1.280000e+02 : f32
    %385 = vector.broadcast %cst_83 : f32 to vector<16x1xf32>
    %386 = arith.divf %384, %385 : vector<16x1xf32>
    %cst_84 = arith.constant 9.99999974E-6 : f32
    %387 = vector.broadcast %cst_84 : f32 to vector<16x1xf32>
    %388 = arith.addf %386, %387 : vector<16x1xf32>
    %389 = math.rsqrt %388 : vector<16x1xf32>
    %390 = vector.broadcast %389 : vector<16x1xf32> to vector<16x128xf32>
    %391 = arith.mulf %381, %390 : vector<16x128xf32>
    %392 = vector.broadcast %374 : vector<1x128xf32> to vector<16x128xf32>
    %393 = arith.mulf %392, %391 : vector<16x128xf32>
    %394 = vector.broadcast %375 : vector<1x128xf32> to vector<16x128xf32>
    %395 = arith.addf %393, %394 : vector<16x128xf32>
    %396 = vector.shape_cast %395 : vector<16x128xf32> to vector<2x8x128xf32>
    %c0_85 = arith.constant 0 : index
    %c0_86 = arith.constant 0 : index
    %c0_87 = arith.constant 0 : index
    %397 = vector.load %arg9[%c0_85, %c0_86, %c0_87] : memref<2x8x128xf32, #tpu.memory_space<vmem>>, vector<2x8x128xf32>
    tpu.vector_store %arg9[%c0_85, %c0_86, %c0_87], %396 {strides = array<i32>} : memref<2x8x128xf32, #tpu.memory_space<vmem>>, vector<2x8x128xf32>,
    return
  }
  func.func @transform_0(%arg0: i32) -> (i32, i32, i32) {
    %c0_i32 = arith.constant 0 : i32
    %c0_i32_0 = arith.constant 0 : i32
    %c0_i32_1 = arith.constant 0 : i32
    return %arg0, %c0_i32, %c0_i32_0 : i32, i32, i32
  }
  func.func @transform_1(%arg0: i32) -> (i32, i32, i32) {
    %c0_i32 = arith.constant 0 : i32
    %c0_i32_0 = arith.constant 0 : i32
    %c0_i32_1 = arith.constant 0 : i32
    return %arg0, %c0_i32, %c0_i32_0 : i32, i32, i32
  }
  func.func @transform_2(%arg0: i32) -> (i32, i32) {
    %c0_i32 = arith.constant 0 : i32
    %c0_i32_0 = arith.constant 0 : i32
    %c0_i32_1 = arith.constant 0 : i32
    return %c0_i32, %c0_i32_0 : i32, i32
  }
  func.func @transform_3(%arg0: i32) -> (i32, i32) {
    %c0_i32 = arith.constant 0 : i32
    %c0_i32_0 = arith.constant 0 : i32
    %c0_i32_1 = arith.constant 0 : i32
    return %c0_i32, %c0_i32_0 : i32, i32
  }
  func.func @transform_4(%arg0: i32) -> (i32, i32) {
    %c0_i32 = arith.constant 0 : i32
    %c0_i32_0 = arith.constant 0 : i32
    %c0_i32_1 = arith.constant 0 : i32
    return %c0_i32, %c0_i32_0 : i32, i32
  }
  func.func @transform_5(%arg0: i32) -> (i32, i32) {
    %c0_i32 = arith.constant 0 : i32
    %c0_i32_0 = arith.constant 0 : i32
    %c0_i32_1 = arith.constant 0 : i32
    return %c0_i32, %c0_i32_0 : i32, i32
  }
  func.func @transform_6(%arg0: i32) -> (i32, i32) {
    %c0_i32 = arith.constant 0 : i32
    %c0_i32_0 = arith.constant 0 : i32
    %c0_i32_1 = arith.constant 0 : i32
    return %c0_i32, %c0_i32_0 : i32, i32
  }
  func.func @transform_7(%arg0: i32) -> (i32, i32) {
    %c0_i32 = arith.constant 0 : i32
    %c0_i32_0 = arith.constant 0 : i32
    %c0_i32_1 = arith.constant 0 : i32
    return %c0_i32, %c0_i32_0 : i32, i32
  }
  func.func @transform_8(%arg0: i32) -> (i32, i32, i32) {
    %c0_i32 = arith.constant 0 : i32
    %c0_i32_0 = arith.constant 0 : i32
    %c0_i32_1 = arith.constant 0 : i32
    return %arg0, %c0_i32, %c0_i32_0 : i32, i32, i32
  }
}

</mosaic_0001>

<llo_original>
// kernel: tpu_custom_call.1
$region0: #{tpu_custom_call.1}
  #allocation0 [shape = 'u32[]', space=smem, size = 0x4, offset = 0x4, fixed_abs, tag = 'smem constant byte address 0x4 - core index']
  #allocation1 [shape = 'u32[144,128]{1,0:T(1,128)}', space=vmem, size = 0x12000, scoped, tag = 'internal scratch']
  %s0 = inlined_call_operand.hbm [shape: f32[2,8,128], index: 0, kind: input, shape index: {}]
  %s1 = inlined_call_operand.hbm [shape: f32[2,8,128], index: 1, kind: input, shape index: {}]
  %s2 = inlined_call_operand.hbm [shape: f32[8,8], index: 2, kind: input, shape index: {}]
  %s3 = inlined_call_operand.vmem [shape: f32[8,8], index: 3, kind: input, shape index: {}]
  %s4 = inlined_call_operand.hbm [shape: bf16[128,1280], index: 4, kind: input, shape index: {}]
  %s5 = inlined_call_operand.hbm [shape: bf16[256,128], index: 5, kind: input, shape index: {}]
  %s6 = inlined_call_operand.vmem [shape: f32[1,1408], index: 6, kind: input, shape index: {}]
  %s7 = inlined_call_operand.hbm [shape: f32[6,128], index: 7, kind: input, shape index: {}]
  %s8 = inlined_call_operand.hbm [shape: f32[2,8,128], index: 8, kind: output, shape index: {}]
  %s9 = sld [smem:[#allocation0]]
  $region66: #{tpu_custom_call.1} parent=0
    _
  %s11 = ssub.s32 1, %s9
  %s12 = scalar_select 0, %s11, %s9
  $region1: #{tpu_custom_call.1} parent=0
    #allocation2 [shape = 'u8[8192]{0}', space=vmem, size = 0x2000, scoped, tag = 'input window, operand 0, single buffered']
    #allocation3 [shape = 's32[1]{0}', space=sflag, size = 0x4, scoped, tag = 'scoped memory for tpu_custom_call.1']
    #allocation4 [shape = 's32[1]{0}', space=sflag, size = 0x4, scoped, tag = 'scoped memory for tpu_custom_call.1']
    #allocation5 [shape = 'u8[8192]{0}', space=vmem, size = 0x2000, scoped, tag = 'input window, operand 1, single buffered']
    #allocation6 [shape = 's32[1]{0}', space=sflag, size = 0x4, scoped, tag = 'scoped memory for tpu_custom_call.1']
    #allocation7 [shape = 'u8[4096]{0}', space=vmem, size = 0x1000, scoped, tag = 'input window, operand 2, single buffered']
    #allocation8 [shape = 'u8[327680]{0}', space=vmem, size = 0x50000, scoped, tag = 'input window, operand 4, single buffered']
    #allocation9 [shape = 's32[1]{0}', space=sflag, size = 0x4, scoped, tag = 'scoped memory for tpu_custom_call.1']
    #allocation10 [shape = 'u8[65536]{0}', space=vmem, size = 0x10000, scoped, tag = 'input window, operand 5, single buffered']
    #allocation11 [shape = 'u8[4096]{0}', space=vmem, size = 0x1000, scoped, tag = 'input window, operand 7, single buffered']
    #allocation12 [shape = 's32[1]{0}', space=sflag, size = 0x4, scoped, tag = 'scoped memory for tpu_custom_call.1']
    #allocation13 [shape = 'u8[8192]{0}', space=vmem, size = 0x2000, scoped, tag = 'output window, operand 0, single buffered']
    %13 = vsyncpa [#allocation3], 0
    %14 = vsyncpa [#allocation6], 0
    %15 = vsyncpa [#allocation9], 0
    %16 = vsyncpa [#allocation12], 0
    %17 = vsyncpa [#allocation4], 0
    // Predicated region
    $region2: #{tpu_custom_call.1} parent=1 // pred_check
      _
    $region3: #{tpu_custom_call.1} parent=1 // pred_check_branch
      %19 = sbr.rel (0) target = $region5
    $region4: #{tpu_custom_call.1} parent=1 // pred_region
      %s21 = ssub.s32 256, 256
      %22 = vsyncadd [#allocation3], %s21
      %s23 = sshll.u32 [#allocation2], 4
      %s24 = int_to_ptr.vmem [resolvable:$true] %s23
      %29 = dma.hbm_to_vmem [thread:$0]  %s0, 256, %s24, [#allocation3], 128, 128, 8
    $region5: #{tpu_custom_call.1} parent=1 // pred_fallthru
      _
    // Predicated region
    $region6: #{tpu_custom_call.1} parent=1 // pred_check
      _
    $region7: #{tpu_custom_call.1} parent=1 // pred_check_branch
      %31 = sbr.rel (0) target = $region9
    $region8: #{tpu_custom_call.1} parent=1 // pred_region
      %s33 = ssub.s32 256, 256
      %34 = vsyncadd [#allocation6], %s33
      %s35 = sshll.u32 [#allocation5], 4
      %s36 = int_to_ptr.vmem [resolvable:$true] %s35
      %41 = dma.hbm_to_vmem [thread:$0]  %s1, 256, %s36, [#allocation6], 128, 128, 8
    $region9: #{tpu_custom_call.1} parent=1 // pred_fallthru
      _
    // Predicated region
    $region10: #{tpu_custom_call.1} parent=1 // pred_check
      _
    $region11: #{tpu_custom_call.1} parent=1 // pred_check_branch
      %43 = sbr.rel (0) target = $region13
    $region12: #{tpu_custom_call.1} parent=1 // pred_region
      %s45 = ssub.s32 128, 128
      %46 = vsyncadd [#allocation6], %s45
      %s48 = sshll.u32 [#allocation7], 4
      %s49 = int_to_ptr.vmem [resolvable:$true] %s48
      %51 = dma.hbm_to_vmem [thread:$0]  %s2, 128, %s49, [#allocation6]
    $region13: #{tpu_custom_call.1} parent=1 // pred_fallthru
      _
    // Predicated region
    $region14: #{tpu_custom_call.1} parent=1 // pred_check
      _
    $region15: #{tpu_custom_call.1} parent=1 // pred_check_branch
      %53 = sbr.rel (0) target = $region17
    $region16: #{tpu_custom_call.1} parent=1 // pred_region
      _
    $region17: #{tpu_custom_call.1} parent=1 // pred_fallthru
      _
    // Predicated region
    $region18: #{tpu_custom_call.1} parent=1 // pred_check
      _
    $region19: #{tpu_custom_call.1} parent=1 // pred_check_branch
      %55 = sbr.rel (0) target = $region21
    $region20: #{tpu_custom_call.1} parent=1 // pred_region
      %s57 = ssub.s32 10240, 10240
      %58 = vsyncadd [#allocation9], %s57
      %s59 = sshll.u32 [#allocation8], 4
      %s60 = int_to_ptr.vmem [resolvable:$true] %s59
      %65 = dma.hbm_to_vmem [thread:$0]  %s4, 10240, %s60, [#allocation9], 640, 640, 40
    $region21: #{tpu_custom_call.1} parent=1 // pred_fallthru
      _
    // Predicated region
    $region22: #{tpu_custom_call.1} parent=1 // pred_check
      _
    $region23: #{tpu_custom_call.1} parent=1 // pred_check_branch
      %67 = sbr.rel (0) target = $region25
    $region24: #{tpu_custom_call.1} parent=1 // pred_region
      %s69 = ssub.s32 2048, 2048
      %70 = vsyncadd [#allocation9], %s69
      %s71 = sshll.u32 [#allocation10], 4
      %s72 = int_to_ptr.vmem [resolvable:$true] %s71
      %77 = dma.hbm_to_vmem [thread:$0]  %s5, 2048, %s72, [#allocation9], 64, 64, 4
    $region25: #{tpu_custom_call.1} parent=1 // pred_fallthru
      _
    // Predicated region
    $region26: #{tpu_custom_call.1} parent=1 // pred_check
      _
    $region27: #{tpu_custom_call.1} parent=1 // pred_check_branch
      %79 = sbr.rel (0) target = $region29
    $region28: #{tpu_custom_call.1} parent=1 // pred_region
      _
    $region29: #{tpu_custom_call.1} parent=1 // pred_fallthru
      _
    // Predicated region
    $region30: #{tpu_custom_call.1} parent=1 // pred_check
      _
    $region31: #{tpu_custom_call.1} parent=1 // pred_check_branch
      %81 = sbr.rel (0) target = $region33
    $region32: #{tpu_custom_call.1} parent=1 // pred_region
      %s83 = ssub.s32 128, 128
      %84 = vsyncadd [#allocation12], %s83
      %s86 = sshll.u32 [#allocation11], 4
      %s87 = int_to_ptr.vmem [resolvable:$true] %s86
      %89 = dma.hbm_to_vmem [thread:$0]  %s7, 128, %s87, [#allocation12]
    $region33: #{tpu_custom_call.1} parent=1 // pred_fallthru
      _
    // Predicated region
    $region34: #{tpu_custom_call.1} parent=1 // pred_check
      _
    $region35: #{tpu_custom_call.1} parent=1 // pred_check_branch
      %91 = sbr.rel (0) target = $region37
    $region36: #{tpu_custom_call.1} parent=1 // pred_region
      %92 = dma.done [#allocation3], 256
    $region37: #{tpu_custom_call.1} parent=1 // pred_fallthru
      _
    // Predicated region
    $region38: #{tpu_custom_call.1} parent=1 // pred_check
      _
    $region39: #{tpu_custom_call.1} parent=1 // pred_check_branch
      %94 = sbr.rel (0) target = $region41
    $region40: #{tpu_custom_call.1} parent=1 // pred_region
      %95 = dma.done [#allocation6], 256
    $region41: #{tpu_custom_call.1} parent=1 // pred_fallthru
      _
    // Predicated region
    $region42: #{tpu_custom_call.1} parent=1 // pred_check
      _
    $region43: #{tpu_custom_call.1} parent=1 // pred_check_branch
      %97 = sbr.rel (0) target = $region45
    $region44: #{tpu_custom_call.1} parent=1 // pred_region
      %98 = dma.done [#allocation6], 128
    $region45: #{tpu_custom_call.1} parent=1 // pred_fallthru
      _
    // Predicated region
    $region46: #{tpu_custom_call.1} parent=1 // pred_check
      _
    $region47: #{tpu_custom_call.1} parent=1 // pred_check_branch
      %100 = sbr.rel (0) target = $region49
    $region48: #{tpu_custom_call.1} parent=1 // pred_region
      %101 = dma.done [#allocation9], 10240
    $region49: #{tpu_custom_call.1} parent=1 // pred_fallthru
      _
    // Predicated region
    $region50: #{tpu_custom_call.1} parent=1 // pred_check
      _
    $region51: #{tpu_custom_call.1} parent=1 // pred_check_branch
      %103 = sbr.rel (0) target = $region53
    $region52: #{tpu_custom_call.1} parent=1 // pred_region
      %104 = dma.done [#allocation9], 2048
    $region53: #{tpu_custom_call.1} parent=1 // pred_fallthru
      _
    // Predicated region
    $region54: #{tpu_custom_call.1} parent=1 // pred_check
      _
    $region55: #{tpu_custom_call.1} parent=1 // pred_check_branch
      %106 = sbr.rel (0) target = $region57
    $region56: #{tpu_custom_call.1} parent=1 // pred_region
      %107 = dma.done [#allocation12], 128
    $region57: #{tpu_custom_call.1} parent=1 // pred_fallthru
      _
    %v109 = vld [vmem:[#allocation2] sm:$0xff]
    %v110 = vld [vmem:[#allocation2 + $0x8] sm:$0xff]
    %v111 = vld [vmem:[#allocation5] sm:$0xff]
    %v112 = vld [vmem:[#allocation5 + $0x8] sm:$0xff]
    %v113 = vld [vmem:[#allocation7] sm:$0xff]
    %v114 = vld [vmem:[%s3] sm:$0xff]
    %v115 = vld [vmem:[#allocation10] sm:$0xf]
    %v116 = vld [vmem:[#allocation10 + $0x4] sm:$0xf]
    %v117 = vld [vmem:[#allocation10 + $0x8] sm:$0xf]
    %v118 = vld [vmem:[#allocation10 + $0xc] sm:$0xf]
    %v119 = vld [vmem:[#allocation10 + $0x10] sm:$0xf]
    %v120 = vld [vmem:[#allocation10 + $0x14] sm:$0xf]
    %v121 = vld [vmem:[#allocation10 + $0x18] sm:$0xf]
    %v122 = vld [vmem:[#allocation10 + $0x1c] sm:$0xf]
    %v123 = vld [vmem:[#allocation10 + $0x20] sm:$0xf]
    %v124 = vld [vmem:[#allocation10 + $0x24] sm:$0xf]
    %v125 = vld [vmem:[#allocation10 + $0x28] sm:$0xf]
    %v126 = vld [vmem:[#allocation10 + $0x2c] sm:$0xf]
    %v127 = vld [vmem:[#allocation10 + $0x30] sm:$0xf]
    %v128 = vld [vmem:[#allocation10 + $0x34] sm:$0xf]
    %v129 = vld [vmem:[#allocation10 + $0x38] sm:$0xf]
    %v130 = vld [vmem:[#allocation10 + $0x3c] sm:$0xf]
    %v131 = vld [vmem:[#allocation10 + $0x40] sm:$0xf]
    %v132 = vld [vmem:[#allocation10 + $0x44] sm:$0xf]
    %v133 = vld [vmem:[#allocation10 + $0x48] sm:$0xf]
    %v134 = vld [vmem:[#allocation10 + $0x4c] sm:$0xf]
    %v135 = vld [vmem:[#allocation10 + $0x50] sm:$0xf]
    %v136 = vld [vmem:[#allocation10 + $0x54] sm:$0xf]
    %v137 = vld [vmem:[#allocation10 + $0x58] sm:$0xf]
    %v138 = vld [vmem:[#allocation10 + $0x5c] sm:$0xf]
    %v139 = vld [vmem:[#allocation10 + $0x60] sm:$0xf]
    %v140 = vld [vmem:[#allocation10 + $0x64] sm:$0xf]
    %v141 = vld [vmem:[#allocation10 + $0x68] sm:$0xf]
    %v142 = vld [vmem:[#allocation10 + $0x6c] sm:$0xf]
    %v143 = vld [vmem:[#allocation10 + $0x70] sm:$0xf]
    %v144 = vld [vmem:[#allocation10 + $0x74] sm:$0xf]
    %v145 = vld [vmem:[#allocation10 + $0x78] sm:$0xf]
    %v146 = vld [vmem:[#allocation10 + $0x7c] sm:$0xf]
    %v147 = vld [vmem:[#allocation8] sm:$0xff]
    %v148 = vld [vmem:[#allocation8 + $0x8] sm:$0xf]
    %v149 = vld [vmem:[#allocation8 + $0x28] sm:$0xff]
    %v150 = vld [vmem:[#allocation8 + $0x30] sm:$0xf]
    %v151 = vld [vmem:[#allocation8 + $0x50] sm:$0xff]
    %v152 = vld [vmem:[#allocation8 + $0x58] sm:$0xf]
    %v153 = vld [vmem:[#allocation8 + $0x78] sm:$0xff]
    %v154 = vld [vmem:[#allocation8 + $0x80] sm:$0xf]
    %v155 = vld [vmem:[#allocation8 + $0xa0] sm:$0xff]
    %v156 = vld [vmem:[#allocation8 + $0xa8] sm:$0xf]
    %v157 = vld [vmem:[#allocation8 + $0xc8] sm:$0xff]
    %v158 = vld [vmem:[#allocation8 + $0xd0] sm:$0xf]
    %v159 = vld [vmem:[#allocation8 + $0xf0] sm:$0xff]
    %v160 = vld [vmem:[#allocation8 + $0xf8] sm:$0xf]
    %v161 = vld [vmem:[#allocation8 + $0x118] sm:$0xff]
    %v162 = vld [vmem:[#allocation8 + $0x120] sm:$0xf]
    %v163 = vld [vmem:[#allocation8 + $0x140] sm:$0xff]
    %v164 = vld [vmem:[#allocation8 + $0x148] sm:$0xf]
    %v165 = vld [vmem:[#allocation8 + $0x168] sm:$0xff]
    %v166 = vld [vmem:[#allocation8 + $0x170] sm:$0xf]
    %v167 = vld [vmem:[#allocation8 + $0x190] sm:$0xff]
    %v168 = vld [vmem:[#allocation8 + $0x198] sm:$0xf]
    %v169 = vld [vmem:[#allocation8 + $0x1b8] sm:$0xff]
    %v170 = vld [vmem:[#allocation8 + $0x1c0] sm:$0xf]
    %v171 = vld [vmem:[#allocation8 + $0x1e0] sm:$0xff]
    %v172 = vld [vmem:[#allocation8 + $0x1e8] sm:$0xf]
    %v173 = vld [vmem:[#allocation8 + $0x208] sm:$0xff]
    %v174 = vld [vmem:[#allocation8 + $0x210] sm:$0xf]
    %v175 = vld [vmem:[#allocation8 + $0x230] sm:$0xff]
    %v176 = vld [vmem:[#allocation8 + $0x238] sm:$0xf]
    %v177 = vld [vmem:[#allocation8 + $0x258] sm:$0xff]
    %v178 = vld [vmem:[#allocation8 + $0x260] sm:$0xf]
    %v179 = vpack.c.bf16 %v112, %v111
    %v180 = vld [vmem:[%s6] sm:$0x7]
    %v182 = vlaneseq
    %v183 = vshrl.u32 %v182, 7
    %v184 = vsub.s32 0, %v183
    %v185 = vrot.slane %v180, %v184
    %v186 = vlaneseq
    %v187 = vshrl.u32 %v186, 7
    %v188 = vsub.s32 1, %v187
    %v189 = vrot.slane %v180, %v188
    %v190 = vlaneseq
    %v191 = vshrl.u32 %v190, 7
    %v192 = vsub.s32 2, %v191
    %v193 = vrot.slane %v180, %v192
    %v229 = vunpack.c.l.b16 %v147
    %v230 = vunpack.c.h.b16 %v147
    %v231 = vunpack.c.l.b16 %v148
    %v232 = vunpack.c.l.b16 %v149
    %v233 = vunpack.c.h.b16 %v149
    %v234 = vunpack.c.l.b16 %v150
    %v235 = vunpack.c.l.b16 %v151
    %v236 = vunpack.c.h.b16 %v151
    %v237 = vunpack.c.l.b16 %v152
    %v238 = vunpack.c.l.b16 %v153
    %v239 = vunpack.c.h.b16 %v153
    %v240 = vunpack.c.l.b16 %v154
    %v241 = vunpack.c.l.b16 %v155
    %v242 = vunpack.c.h.b16 %v155
    %v243 = vunpack.c.l.b16 %v156
    %v244 = vunpack.c.l.b16 %v157
    %v245 = vunpack.c.h.b16 %v157
    %v246 = vunpack.c.l.b16 %v158
    %v247 = vunpack.c.l.b16 %v159
    %v248 = vunpack.c.h.b16 %v159
    %v249 = vunpack.c.l.b16 %v160
    %v250 = vunpack.c.l.b16 %v161
    %v251 = vunpack.c.h.b16 %v161
    %v252 = vunpack.c.l.b16 %v162
    %v253 = vunpack.c.l.b16 %v163
    %v254 = vunpack.c.h.b16 %v163
    %v255 = vunpack.c.l.b16 %v164
    %v256 = vunpack.c.l.b16 %v165
    %v257 = vunpack.c.h.b16 %v165
    %v258 = vunpack.c.l.b16 %v166
    %v259 = vunpack.c.l.b16 %v167
    %v260 = vunpack.c.h.b16 %v167
    %v261 = vunpack.c.l.b16 %v168
    %v262 = vunpack.c.l.b16 %v169
    %v263 = vunpack.c.h.b16 %v169
    %v264 = vunpack.c.l.b16 %v170
    %v265 = vunpack.c.l.b16 %v171
    %v266 = vunpack.c.h.b16 %v171
    %v267 = vunpack.c.l.b16 %v172
    %v268 = vunpack.c.l.b16 %v173
    %v269 = vunpack.c.h.b16 %v173
    %v270 = vunpack.c.l.b16 %v174
    %v271 = vunpack.c.l.b16 %v175
    %v272 = vunpack.c.h.b16 %v175
    %v273 = vunpack.c.l.b16 %v176
    %v274 = vunpack.c.l.b16 %v177
    %v275 = vunpack.c.h.b16 %v177
    %v276 = vunpack.c.l.b16 %v178
    %v277 = vpack.c.b16 %v232, %v229
    %v278 = vpack.c.b16 %v233, %v230
    %v279 = vpack.c.b16 %v234, %v231
    %v280 = vpack.c.b16 %v238, %v235
    %v281 = vpack.c.b16 %v239, %v236
    %v282 = vpack.c.b16 %v240, %v237
    %v283 = vpack.c.b16 %v244, %v241
    %v284 = vpack.c.b16 %v245, %v242
    %v285 = vpack.c.b16 %v246, %v243
    %v286 = vpack.c.b16 %v250, %v247
    %v287 = vpack.c.b16 %v251, %v248
    %v288 = vpack.c.b16 %v252, %v249
    %v289 = vpack.c.b16 %v256, %v253
    %v290 = vpack.c.b16 %v257, %v254
    %v291 = vpack.c.b16 %v258, %v255
    %v292 = vpack.c.b16 %v262, %v259
    %v293 = vpack.c.b16 %v263, %v260
    %v294 = vpack.c.b16 %v264, %v261
    %v295 = vpack.c.b16 %v268, %v265
    %v296 = vpack.c.b16 %v269, %v266
    %v297 = vpack.c.b16 %v270, %v267
    %v298 = vpack.c.b16 %v274, %v271
    %v299 = vpack.c.b16 %v275, %v272
    %v300 = vpack.c.b16 %v276, %v273
    %325 = vmatprep.subr.bf16.mxu0 %v278
    %326 = vmatpush1.bf16.msra.mxu0 %v277
    %327 = vmatprep.subr.bf16.mxu0 %v281
    %328 = vmatpush1.bf16.msra.mxu0 %v280
    %329 = vmatprep.subr.bf16.mxu0 %v284
    %330 = vmatpush1.bf16.msra.mxu0 %v283
    %331 = vmatprep.subr.bf16.mxu0 %v287
    %332 = vmatpush1.bf16.msra.mxu0 %v286
    %333 = vmatprep.subr.bf16.mxu0 %v290
    %334 = vmatpush1.bf16.msra.mxu0 %v289
    %335 = vmatprep.subr.bf16.mxu0 %v293
    %336 = vmatpush1.bf16.msra.mxu0 %v292
    %337 = vmatprep.subr.bf16.mxu0 %v296
    %338 = vmatpush1.bf16.msra.mxu0 %v295
    %339 = vmatprep.subr.bf16.mxu0 %v299
    %340 = vmatpush1.bf16.msra.mxu0 %v298
    %341 = vmatprep.subr.bf16.mxu0 0
    %342 = vmatpush1.bf16.msra.mxu0 0
    %343 = vmatprep.subr.bf16.mxu0 0
    %344 = vmatpush1.bf16.msra.mxu0 0
    %345 = vmatprep.subr.bf16.mxu0 0
    %346 = vmatpush1.bf16.msra.mxu0 0
    %347 = vmatprep.subr.bf16.mxu0 0
    %348 = vmatpush1.bf16.msra.mxu0 0
    %349 = vmatprep.subr.bf16.mxu0 0
    %350 = vmatpush1.bf16.msra.mxu0 0
    %351 = vmatprep.subr.bf16.mxu0 0
    %352 = vmatpush1.bf16.msra.mxu0 0
    %353 = vmatprep.subr.bf16.mxu0 0
    %354 = vmatpush1.bf16.msra.mxu0 0
    %355 = vmatprep.subr.bf16.mxu0 0
    %356 = vmatpush1.bf16.msra.mxu0 0
    %357 = vmatprep.mubr.bf16.mxu0 0
    %358 = vmatmul.mubr.bf16.gmra.mrb[0].mxu0 %v179
    %v359 = vpop.f32.mrb[0].mxu0
    %v360 = vadd.f32 %v185, %v359
    %v361 = vpop.f32.mrb[0].mxu0
    %v362 = vadd.f32 %v189, %v361
    %v363 = vpop.f32.mrb[0].mxu0
    %v364 = vadd.f32 %v185, %v363
    %v365 = vpop.f32.mrb[0].mxu0
    %v366 = vadd.f32 %v189, %v365
    %367 = vdwg.mxu0
    %368 = vmatprep.subr.bf16.mxu0 0
    %369 = vmatpush1.bf16.msra.mxu0 %v279
    %370 = vmatprep.subr.bf16.mxu0 0
    %371 = vmatpush1.bf16.msra.mxu0 %v282
    %372 = vmatprep.subr.bf16.mxu0 0
    %373 = vmatpush1.bf16.msra.mxu0 %v285
    %374 = vmatprep.subr.bf16.mxu0 0
    %375 = vmatpush1.bf16.msra.mxu0 %v288
    %376 = vmatprep.subr.bf16.mxu0 0
    %377 = vmatpush1.bf16.msra.mxu0 %v291
    %378 = vmatprep.subr.bf16.mxu0 0
    %379 = vmatpush1.bf16.msra.mxu0 %v294
    %380 = vmatprep.subr.bf16.mxu0 0
    %381 = vmatpush1.bf16.msra.mxu0 %v297
    %382 = vmatprep.subr.bf16.mxu0 0
    %383 = vmatpush1.bf16.msra.mxu0 %v300
    %384 = vmatprep.subr.bf16.mxu0 0
    %385 = vmatpush1.bf16.msra.mxu0 0
    %386 = vmatprep.subr.bf16.mxu0 0
    %387 = vmatpush1.bf16.msra.mxu0 0
    %388 = vmatprep.subr.bf16.mxu0 0
    %389 = vmatpush1.bf16.msra.mxu0 0
    %390 = vmatprep.subr.bf16.mxu0 0
    %391 = vmatpush1.bf16.msra.mxu0 0
    %392 = vmatprep.subr.bf16.mxu0 0
    %393 = vmatpush1.bf16.msra.mxu0 0
    %394 = vmatprep.subr.bf16.mxu0 0
    %395 = vmatpush1.bf16.msra.mxu0 0
    %396 = vmatprep.subr.bf16.mxu0 0
    %397 = vmatpush1.bf16.msra.mxu0 0
    %398 = vmatprep.subr.bf16.mxu0 0
    %399 = vmatpush1.bf16.msra.mxu0 0
    %400 = vmatprep.mubr.bf16.mxu0 0
    %401 = vmatmul.mubr.bf16.gmra.mrb[0].mxu0 %v179
    %v402 = vpop.f32.mrb[0].mxu0
    %v403 = vadd.f32 %v193, %v402
    %v404 = vpop.f32.mrb[0].mxu0
    %v405 = vpop.f32.mrb[0].mxu0
    %v406 = vadd.f32 %v193, %v405
    %v407 = vpop.f32.mrb[0].mxu0
    %408 = vdwg.mxu0
    %410 = vrot.lane.b32.xlu0 %v360, 96
    %v411 = vpop.permute.xlu0 %410
    %412 = vrot.lane.b32.xlu0 %v360, 64
    %v413 = vpop.permute.xlu0 %412
    %414 = vrot.lane.b32.xlu0 %v360, 32
    %v415 = vpop.permute.xlu0 %414
    %417 = vrot.lane.b32.xlu0 %v364, 96
    %v418 = vpop.permute.xlu0 %417
    %419 = vrot.lane.b32.xlu0 %v364, 64
    %v420 = vpop.permute.xlu0 %419
    %421 = vrot.lane.b32.xlu0 %v364, 32
    %v422 = vpop.permute.xlu0 %421
    %424 = vrot.lane.b32.xlu0 %v362, 96
    %v425 = vpop.permute.xlu0 %424
    %426 = vrot.lane.b32.xlu0 %v362, 64
    %v427 = vpop.permute.xlu0 %426
    %428 = vrot.lane.b32.xlu0 %v362, 32
    %v429 = vpop.permute.xlu0 %428
    %431 = vrot.lane.b32.xlu0 %v366, 96
    %v432 = vpop.permute.xlu0 %431
    %433 = vrot.lane.b32.xlu0 %v366, 64
    %v434 = vpop.permute.xlu0 %433
    %435 = vrot.lane.b32.xlu0 %v366, 32
    %v436 = vpop.permute.xlu0 %435
    %438 = vrot.lane.b32.xlu0 %v403, 96
    %v439 = vpop.permute.xlu0 %438
    %441 = vrot.lane.b32.xlu0 %v403, 64
    %v442 = vpop.permute.xlu0 %441
    %444 = vrot.lane.b32.xlu0 %v403, 32
    %v445 = vpop.permute.xlu0 %444
    %448 = vrot.lane.b32.xlu0 %v406, 96
    %v449 = vpop.permute.xlu0 %448
    %451 = vrot.lane.b32.xlu0 %v406, 64
    %v452 = vpop.permute.xlu0 %451
    %454 = vrot.lane.b32.xlu0 %v406, 32
    %v455 = vpop.permute.xlu0 %454
    %v457 = vld [vmem:[#allocation8 + $0xc] sm:$0xf]
    %v458 = vld [vmem:[#allocation8 + $0x34] sm:$0xf]
    %v459 = vld [vmem:[#allocation8 + $0x5c] sm:$0xf]
    %v460 = vld [vmem:[#allocation8 + $0x84] sm:$0xf]
    %v461 = vld [vmem:[#allocation8 + $0xac] sm:$0xf]
    %v462 = vld [vmem:[#allocation8 + $0xd4] sm:$0xf]
    %v463 = vld [vmem:[#allocation8 + $0xfc] sm:$0xf]
    %v464 = vld [vmem:[#allocation8 + $0x124] sm:$0xf]
    %v465 = vld [vmem:[#allocation8 + $0x14c] sm:$0xf]
    %v466 = vld [vmem:[#allocation8 + $0x174] sm:$0xf]
    %v467 = vld [vmem:[#allocation8 + $0x19c] sm:$0xf]
    %v468 = vld [vmem:[#allocation8 + $0x1c4] sm:$0xf]
    %v469 = vld [vmem:[#allocation8 + $0x1ec] sm:$0xf]
    %v470 = vld [vmem:[#allocation8 + $0x214] sm:$0xf]
    %v471 = vld [vmem:[#allocation8 + $0x23c] sm:$0xf]
    %v472 = vld [vmem:[#allocation8 + $0x264] sm:$0xf]
    %v473 = vld [vmem:[%s6 + $0x3] sm:$0x1]
    %vm474 = vcmask 261120
    %v475 = vsel %vm474, %v360, 0
    %v477 = vsel %vm474, %v362, 0
    %479 = vmatprep.subr.mxu0 0.0
    %480 = vmatpush1.xpose.msra.mxu0 %v477
    %481 = vmatprep.subr.mxu0 0.0
    %482 = vmatpush1.xpose.msra.mxu0 0.0
    %483 = vmatprep.subr.mxu0 0.0
    %484 = vmatpush1.xpose.msra.mxu0 0.0
    %485 = vmatprep.subr.mxu0 0.0
    %486 = vmatpush1.xpose.msra.mxu0 0.0
    %487 = vmatprep.subr.mxu0 0.0
    %488 = vmatpush1.xpose.msra.mxu0 0.0
    %489 = vmatprep.subr.mxu0 0.0
    %490 = vmatpush1.xpose.msra.mxu0 0.0
    %491 = vmatprep.subr.mxu0 0.0
    %492 = vmatpush1.xpose.msra.mxu0 0.0
    %493 = vmatprep.subr.mxu0 0.0
    %494 = vmatpush1.xpose.msra.mxu0 0.0
    %495 = vmatprep.subr.mxu0 0.0
    %496 = vmatpush1.xpose.msra.mxu0 0.0
    %497 = vmatprep.subr.mxu0 0.0
    %498 = vmatpush1.xpose.msra.mxu0 0.0
    %499 = vmatprep.subr.mxu0 0.0
    %500 = vmatpush1.xpose.msra.mxu0 0.0
    %501 = vmatprep.subr.mxu0 0.0
    %502 = vmatpush1.xpose.msra.mxu0 0.0
    %503 = vmatprep.subr.mxu0 0.0
    %504 = vmatpush1.xpose.msra.mxu0 0.0
    %505 = vmatprep.subr.mxu0 0.0
    %506 = vmatpush1.xpose.msra.mxu0 0.0
    %507 = vmatprep.subr.mxu0 0.0
    %508 = vmatpush1.xpose.msra.mxu0 0.0
    %509 = vmatprep.subr.mxu0 0.0
    %510 = vmatpush1.xpose.msra.mxu0 0.0
    %511 = vmatprep.subr.mxu0 0.0
    %512 = vmatpush1.xpose.msra.mxu0 0.0
    %513 = vmatprep.subr.mxu0 0.0
    %514 = vmatpush1.xpose.msra.mxu0 0.0
    %515 = vmatprep.subr.mxu0 0.0
    %516 = vmatpush1.xpose.msra.mxu0 0.0
    %517 = vmatprep.subr.mxu0 0.0
    %518 = vmatpush1.xpose.msra.mxu0 0.0
    %519 = vmatprep.subr.mxu0 0.0
    %520 = vmatpush1.xpose.msra.mxu0 0.0
    %521 = vmatprep.subr.mxu0 0.0
    %522 = vmatpush1.xpose.msra.mxu0 0.0
    %523 = vmatprep.subr.mxu0 0.0
    %524 = vmatpush1.xpose.msra.mxu0 0.0
    %525 = vmatprep.subr.mxu0 0.0
    %526 = vmatpush1.xpose.msra.mxu0 0.0
    %527 = vmatprep.subr.mxu0 0.0
    %528 = vmatpush1.xpose.msra.mxu0 0.0
    %529 = vmatprep.subr.mxu0 0.0
    %530 = vmatpush1.xpose.msra.mxu0 0.0
    %531 = vmatprep.subr.mxu0 0.0
    %532 = vmatpush1.xpose.msra.mxu0 0.0
    %533 = vmatprep.subr.mxu0 0.0
    %534 = vmatpush1.xpose.msra.mxu0 0.0
    %535 = vmatprep.subr.mxu0 0.0
    %536 = vmatpush1.xpose.msra.mxu0 0.0
    %537 = vmatprep.subr.mxu0 0.0
    %538 = vmatpush1.xpose.msra.mxu0 0.0
    %539 = vmatprep.subr.mxu0 0.0
    %540 = vmatpush1.xpose.msra.mxu0 0.0
    %541 = vmatprep.subr.mxu0 0.0
    %542 = vmatpush1.xpose.msra.mxu0 0.0
    %543 = vmatprep.mubr.f32.mxu0 0.0
    %544 = vmatmul.mubr.f32.gmra.mrb[0].mxu0 %v475
    %v545 = vpop.f32.mrb[0].mxu0
    %v546 = vadd.f32 0.0, %v545
    %v547 = vpop.f32.mrb[0].mxu0
    %548 = vdwg.mxu0
    %v549 = vsel %vm474, %v411, 0
    %v551 = vsel %vm474, %v425, 0
    %553 = vmatprep.subr.mxu0 0.0
    %554 = vmatpush1.xpose.msra.mxu0 %v551
    %555 = vmatprep.subr.mxu0 0.0
    %556 = vmatpush1.xpose.msra.mxu0 0.0
    %557 = vmatprep.subr.mxu0 0.0
    %558 = vmatpush1.xpose.msra.mxu0 0.0
    %559 = vmatprep.subr.mxu0 0.0
    %560 = vmatpush1.xpose.msra.mxu0 0.0
    %561 = vmatprep.subr.mxu0 0.0
    %562 = vmatpush1.xpose.msra.mxu0 0.0
    %563 = vmatprep.subr.mxu0 0.0
    %564 = vmatpush1.xpose.msra.mxu0 0.0
    %565 = vmatprep.subr.mxu0 0.0
    %566 = vmatpush1.xpose.msra.mxu0 0.0
    %567 = vmatprep.subr.mxu0 0.0
    %568 = vmatpush1.xpose.msra.mxu0 0.0
    %569 = vmatprep.subr.mxu0 0.0
    %570 = vmatpush1.xpose.msra.mxu0 0.0
    %571 = vmatprep.subr.mxu0 0.0
    %572 = vmatpush1.xpose.msra.mxu0 0.0
    %573 = vmatprep.subr.mxu0 0.0
    %574 = vmatpush1.xpose.msra.mxu0 0.0
    %575 = vmatprep.subr.mxu0 0.0
    %576 = vmatpush1.xpose.msra.mxu0 0.0
    %577 = vmatprep.subr.mxu0 0.0
    %578 = vmatpush1.xpose.msra.mxu0 0.0
    %579 = vmatprep.subr.mxu0 0.0
    %580 = vmatpush1.xpose.msra.mxu0 0.0
    %581 = vmatprep.subr.mxu0 0.0
    %582 = vmatpush1.xpose.msra.mxu0 0.0
    %583 = vmatprep.subr.mxu0 0.0
    %584 = vmatpush1.xpose.msra.mxu0 0.0
    %585 = vmatprep.subr.mxu0 0.0
    %586 = vmatpush1.xpose.msra.mxu0 0.0
    %587 = vmatprep.subr.mxu0 0.0
    %588 = vmatpush1.xpose.msra.mxu0 0.0
    %589 = vmatprep.subr.mxu0 0.0
    %590 = vmatpush1.xpose.msra.mxu0 0.0
    %591 = vmatprep.subr.mxu0 0.0
    %592 = vmatpush1.xpose.msra.mxu0 0.0
    %593 = vmatprep.subr.mxu0 0.0
    %594 = vmatpush1.xpose.msra.mxu0 0.0
    %595 = vmatprep.subr.mxu0 0.0
    %596 = vmatpush1.xpose.msra.mxu0 0.0
    %597 = vmatprep.subr.mxu0 0.0
    %598 = vmatpush1.xpose.msra.mxu0 0.0
    %599 = vmatprep.subr.mxu0 0.0
    %600 = vmatpush1.xpose.msra.mxu0 0.0
    %601 = vmatprep.subr.mxu0 0.0
    %602 = vmatpush1.xpose.msra.mxu0 0.0
    %603 = vmatprep.subr.mxu0 0.0
    %604 = vmatpush1.xpose.msra.mxu0 0.0
    %605 = vmatprep.subr.mxu0 0.0
    %606 = vmatpush1.xpose.msra.mxu0 0.0
    %607 = vmatprep.subr.mxu0 0.0
    %608 = vmatpush1.xpose.msra.mxu0 0.0
    %609 = vmatprep.subr.mxu0 0.0
    %610 = vmatpush1.xpose.msra.mxu0 0.0
    %611 = vmatprep.subr.mxu0 0.0
    %612 = vmatpush1.xpose.msra.mxu0 0.0
    %613 = vmatprep.subr.mxu0 0.0
    %614 = vmatpush1.xpose.msra.mxu0 0.0
    %615 = vmatprep.subr.mxu0 0.0
    %616 = vmatpush1.xpose.msra.mxu0 0.0
    %617 = vmatprep.mubr.f32.mxu0 0.0
    %618 = vmatmul.mubr.f32.gmra.mrb[0].mxu0 %v549
    %v619 = vpop.f32.mrb[0].mxu0
    %v620 = vadd.f32 0.0, %v619
    %v621 = vpop.f32.mrb[0].mxu0
    %622 = vdwg.mxu0
    %v623 = vsel %vm474, %v413, 0
    %v625 = vsel %vm474, %v427, 0
    %627 = vmatprep.subr.mxu0 0.0
    %628 = vmatpush1.xpose.msra.mxu0 %v625
    %629 = vmatprep.subr.mxu0 0.0
    %630 = vmatpush1.xpose.msra.mxu0 0.0
    %631 = vmatprep.subr.mxu0 0.0
    %632 = vmatpush1.xpose.msra.mxu0 0.0
    %633 = vmatprep.subr.mxu0 0.0
    %634 = vmatpush1.xpose.msra.mxu0 0.0
    %635 = vmatprep.subr.mxu0 0.0
    %636 = vmatpush1.xpose.msra.mxu0 0.0
    %637 = vmatprep.subr.mxu0 0.0
    %638 = vmatpush1.xpose.msra.mxu0 0.0
    %639 = vmatprep.subr.mxu0 0.0
    %640 = vmatpush1.xpose.msra.mxu0 0.0
    %641 = vmatprep.subr.mxu0 0.0
    %642 = vmatpush1.xpose.msra.mxu0 0.0
    %643 = vmatprep.subr.mxu0 0.0
    %644 = vmatpush1.xpose.msra.mxu0 0.0
    %645 = vmatprep.subr.mxu0 0.0
    %646 = vmatpush1.xpose.msra.mxu0 0.0
    %647 = vmatprep.subr.mxu0 0.0
    %648 = vmatpush1.xpose.msra.mxu0 0.0
    %649 = vmatprep.subr.mxu0 0.0
    %650 = vmatpush1.xpose.msra.mxu0 0.0
    %651 = vmatprep.subr.mxu0 0.0
    %652 = vmatpush1.xpose.msra.mxu0 0.0
    %653 = vmatprep.subr.mxu0 0.0
    %654 = vmatpush1.xpose.msra.mxu0 0.0
    %655 = vmatprep.subr.mxu0 0.0
    %656 = vmatpush1.xpose.msra.mxu0 0.0
    %657 = vmatprep.subr.mxu0 0.0
    %658 = vmatpush1.xpose.msra.mxu0 0.0
    %659 = vmatprep.subr.mxu0 0.0
    %660 = vmatpush1.xpose.msra.mxu0 0.0
    %661 = vmatprep.subr.mxu0 0.0
    %662 = vmatpush1.xpose.msra.mxu0 0.0
    %663 = vmatprep.subr.mxu0 0.0
    %664 = vmatpush1.xpose.msra.mxu0 0.0
    %665 = vmatprep.subr.mxu0 0.0
    %666 = vmatpush1.xpose.msra.mxu0 0.0
    %667 = vmatprep.subr.mxu0 0.0
    %668 = vmatpush1.xpose.msra.mxu0 0.0
    %669 = vmatprep.subr.mxu0 0.0
    %670 = vmatpush1.xpose.msra.mxu0 0.0
    %671 = vmatprep.subr.mxu0 0.0
    %672 = vmatpush1.xpose.msra.mxu0 0.0
    %673 = vmatprep.subr.mxu0 0.0
    %674 = vmatpush1.xpose.msra.mxu0 0.0
    %675 = vmatprep.subr.mxu0 0.0
    %676 = vmatpush1.xpose.msra.mxu0 0.0
    %677 = vmatprep.subr.mxu0 0.0
    %678 = vmatpush1.xpose.msra.mxu0 0.0
    %679 = vmatprep.subr.mxu0 0.0
    %680 = vmatpush1.xpose.msra.mxu0 0.0
    %681 = vmatprep.subr.mxu0 0.0
    %682 = vmatpush1.xpose.msra.mxu0 0.0
    %683 = vmatprep.subr.mxu0 0.0
    %684 = vmatpush1.xpose.msra.mxu0 0.0
    %685 = vmatprep.subr.mxu0 0.0
    %686 = vmatpush1.xpose.msra.mxu0 0.0
    %687 = vmatprep.subr.mxu0 0.0
    %688 = vmatpush1.xpose.msra.mxu0 0.0
    %689 = vmatprep.subr.mxu0 0.0
    %690 = vmatpush1.xpose.msra.mxu0 0.0
    %691 = vmatprep.mubr.f32.mxu0 0.0
    %692 = vmatmul.mubr.f32.gmra.mrb[0].mxu0 %v623
    %v693 = vpop.f32.mrb[0].mxu0
    %v694 = vadd.f32 0.0, %v693
    %v695 = vpop.f32.mrb[0].mxu0
    %696 = vdwg.mxu0
    %v697 = vsel %vm474, %v415, 0
    %v699 = vsel %vm474, %v429, 0
    %701 = vmatprep.subr.mxu0 0.0
    %702 = vmatpush1.xpose.msra.mxu0 %v699
    %703 = vmatprep.subr.mxu0 0.0
    %704 = vmatpush1.xpose.msra.mxu0 0.0
    %705 = vmatprep.subr.mxu0 0.0
    %706 = vmatpush1.xpose.msra.mxu0 0.0
    %707 = vmatprep.subr.mxu0 0.0
    %708 = vmatpush1.xpose.msra.mxu0 0.0
    %709 = vmatprep.subr.mxu0 0.0
    %710 = vmatpush1.xpose.msra.mxu0 0.0
    %711 = vmatprep.subr.mxu0 0.0
    %712 = vmatpush1.xpose.msra.mxu0 0.0
    %713 = vmatprep.subr.mxu0 0.0
    %714 = vmatpush1.xpose.msra.mxu0 0.0
    %715 = vmatprep.subr.mxu0 0.0
    %716 = vmatpush1.xpose.msra.mxu0 0.0
    %717 = vmatprep.subr.mxu0 0.0
    %718 = vmatpush1.xpose.msra.mxu0 0.0
    %719 = vmatprep.subr.mxu0 0.0
    %720 = vmatpush1.xpose.msra.mxu0 0.0
    %721 = vmatprep.subr.mxu0 0.0
    %722 = vmatpush1.xpose.msra.mxu0 0.0
    %723 = vmatprep.subr.mxu0 0.0
    %724 = vmatpush1.xpose.msra.mxu0 0.0
    %725 = vmatprep.subr.mxu0 0.0
    %726 = vmatpush1.xpose.msra.mxu0 0.0
    %727 = vmatprep.subr.mxu0 0.0
    %728 = vmatpush1.xpose.msra.mxu0 0.0
    %729 = vmatprep.subr.mxu0 0.0
    %730 = vmatpush1.xpose.msra.mxu0 0.0
    %731 = vmatprep.subr.mxu0 0.0
    %732 = vmatpush1.xpose.msra.mxu0 0.0
    %733 = vmatprep.subr.mxu0 0.0
    %734 = vmatpush1.xpose.msra.mxu0 0.0
    %735 = vmatprep.subr.mxu0 0.0
    %736 = vmatpush1.xpose.msra.mxu0 0.0
    %737 = vmatprep.subr.mxu0 0.0
    %738 = vmatpush1.xpose.msra.mxu0 0.0
    %739 = vmatprep.subr.mxu0 0.0
    %740 = vmatpush1.xpose.msra.mxu0 0.0
    %741 = vmatprep.subr.mxu0 0.0
    %742 = vmatpush1.xpose.msra.mxu0 0.0
    %743 = vmatprep.subr.mxu0 0.0
    %744 = vmatpush1.xpose.msra.mxu0 0.0
    %745 = vmatprep.subr.mxu0 0.0
    %746 = vmatpush1.xpose.msra.mxu0 0.0
    %747 = vmatprep.subr.mxu0 0.0
    %748 = vmatpush1.xpose.msra.mxu0 0.0
    %749 = vmatprep.subr.mxu0 0.0
    %750 = vmatpush1.xpose.msra.mxu0 0.0
    %751 = vmatprep.subr.mxu0 0.0
    %752 = vmatpush1.xpose.msra.mxu0 0.0
    %753 = vmatprep.subr.mxu0 0.0
    %754 = vmatpush1.xpose.msra.mxu0 0.0
    %755 = vmatprep.subr.mxu0 0.0
    %756 = vmatpush1.xpose.msra.mxu0 0.0
    %757 = vmatprep.subr.mxu0 0.0
    %758 = vmatpush1.xpose.msra.mxu0 0.0
    %759 = vmatprep.subr.mxu0 0.0
    %760 = vmatpush1.xpose.msra.mxu0 0.0
    %761 = vmatprep.subr.mxu0 0.0
    %762 = vmatpush1.xpose.msra.mxu0 0.0
    %763 = vmatprep.subr.mxu0 0.0
    %764 = vmatpush1.xpose.msra.mxu0 0.0
    %765 = vmatprep.mubr.f32.mxu0 0.0
    %766 = vmatmul.mubr.f32.gmra.mrb[0].mxu0 %v697
    %v767 = vpop.f32.mrb[0].mxu0
    %v768 = vadd.f32 0.0, %v767
    %v769 = vpop.f32.mrb[0].mxu0
    %770 = vdwg.mxu0
    %v771 = vsel %vm474, %v364, 0
    %v773 = vsel %vm474, %v366, 0
    %775 = vmatprep.subr.mxu0 0.0
    %776 = vmatpush1.xpose.msra.mxu0 %v773
    %777 = vmatprep.subr.mxu0 0.0
    %778 = vmatpush1.xpose.msra.mxu0 0.0
    %779 = vmatprep.subr.mxu0 0.0
    %780 = vmatpush1.xpose.msra.mxu0 0.0
    %781 = vmatprep.subr.mxu0 0.0
    %782 = vmatpush1.xpose.msra.mxu0 0.0
    %783 = vmatprep.subr.mxu0 0.0
    %784 = vmatpush1.xpose.msra.mxu0 0.0
    %785 = vmatprep.subr.mxu0 0.0
    %786 = vmatpush1.xpose.msra.mxu0 0.0
    %787 = vmatprep.subr.mxu0 0.0
    %788 = vmatpush1.xpose.msra.mxu0 0.0
    %789 = vmatprep.subr.mxu0 0.0
    %790 = vmatpush1.xpose.msra.mxu0 0.0
    %791 = vmatprep.subr.mxu0 0.0
    %792 = vmatpush1.xpose.msra.mxu0 0.0
    %793 = vmatprep.subr.mxu0 0.0
    %794 = vmatpush1.xpose.msra.mxu0 0.0
    %795 = vmatprep.subr.mxu0 0.0
    %796 = vmatpush1.xpose.msra.mxu0 0.0
    %797 = vmatprep.subr.mxu0 0.0
    %798 = vmatpush1.xpose.msra.mxu0 0.0
    %799 = vmatprep.subr.mxu0 0.0
    %800 = vmatpush1.xpose.msra.mxu0 0.0
    %801 = vmatprep.subr.mxu0 0.0
    %802 = vmatpush1.xpose.msra.mxu0 0.0
    %803 = vmatprep.subr.mxu0 0.0
    %804 = vmatpush1.xpose.msra.mxu0 0.0
    %805 = vmatprep.subr.mxu0 0.0
    %806 = vmatpush1.xpose.msra.mxu0 0.0
    %807 = vmatprep.subr.mxu0 0.0
    %808 = vmatpush1.xpose.msra.mxu0 0.0
    %809 = vmatprep.subr.mxu0 0.0
    %810 = vmatpush1.xpose.msra.mxu0 0.0
    %811 = vmatprep.subr.mxu0 0.0
    %812 = vmatpush1.xpose.msra.mxu0 0.0
    %813 = vmatprep.subr.mxu0 0.0
    %814 = vmatpush1.xpose.msra.mxu0 0.0
    %815 = vmatprep.subr.mxu0 0.0
    %816 = vmatpush1.xpose.msra.mxu0 0.0
    %817 = vmatprep.subr.mxu0 0.0
    %818 = vmatpush1.xpose.msra.mxu0 0.0
    %819 = vmatprep.subr.mxu0 0.0
    %820 = vmatpush1.xpose.msra.mxu0 0.0
    %821 = vmatprep.subr.mxu0 0.0
    %822 = vmatpush1.xpose.msra.mxu0 0.0
    %823 = vmatprep.subr.mxu0 0.0
    %824 = vmatpush1.xpose.msra.mxu0 0.0
    %825 = vmatprep.subr.mxu0 0.0
    %826 = vmatpush1.xpose.msra.mxu0 0.0
    %827 = vmatprep.subr.mxu0 0.0
    %828 = vmatpush1.xpose.msra.mxu0 0.0
    %829 = vmatprep.subr.mxu0 0.0
    %830 = vmatpush1.xpose.msra.mxu0 0.0
    %831 = vmatprep.subr.mxu0 0.0
    %832 = vmatpush1.xpose.msra.mxu0 0.0
    %833 = vmatprep.subr.mxu0 0.0
    %834 = vmatpush1.xpose.msra.mxu0 0.0
    %835 = vmatprep.subr.mxu0 0.0
    %836 = vmatpush1.xpose.msra.mxu0 0.0
    %837 = vmatprep.subr.mxu0 0.0
    %838 = vmatpush1.xpose.msra.mxu0 0.0
    %839 = vmatprep.mubr.f32.mxu0 0.0
    %840 = vmatmul.mubr.f32.gmra.mrb[0].mxu0 %v771
    %v841 = vpop.f32.mrb[0].mxu0
    %v842 = vadd.f32 0.0, %v841
    %v843 = vpop.f32.mrb[0].mxu0
    %844 = vdwg.mxu0
    %v845 = vsel %vm474, %v418, 0
    %v847 = vsel %vm474, %v432, 0
    %849 = vmatprep.subr.mxu0 0.0
    %850 = vmatpush1.xpose.msra.mxu0 %v847
    %851 = vmatprep.subr.mxu0 0.0
    %852 = vmatpush1.xpose.msra.mxu0 0.0
    %853 = vmatprep.subr.mxu0 0.0
    %854 = vmatpush1.xpose.msra.mxu0 0.0
    %855 = vmatprep.subr.mxu0 0.0
    %856 = vmatpush1.xpose.msra.mxu0 0.0
    %857 = vmatprep.subr.mxu0 0.0
    %858 = vmatpush1.xpose.msra.mxu0 0.0
    %859 = vmatprep.subr.mxu0 0.0
    %860 = vmatpush1.xpose.msra.mxu0 0.0
    %861 = vmatprep.subr.mxu0 0.0
    %862 = vmatpush1.xpose.msra.mxu0 0.0
    %863 = vmatprep.subr.mxu0 0.0
    %864 = vmatpush1.xpose.msra.mxu0 0.0
    %865 = vmatprep.subr.mxu0 0.0
    %866 = vmatpush1.xpose.msra.mxu0 0.0
    %867 = vmatprep.subr.mxu0 0.0
    %868 = vmatpush1.xpose.msra.mxu0 0.0
    %869 = vmatprep.subr.mxu0 0.0
    %870 = vmatpush1.xpose.msra.mxu0 0.0
    %871 = vmatprep.subr.mxu0 0.0
    %872 = vmatpush1.xpose.msra.mxu0 0.0
    %873 = vmatprep.subr.mxu0 0.0
    %874 = vmatpush1.xpose.msra.mxu0 0.0
    %875 = vmatprep.subr.mxu0 0.0
    %876 = vmatpush1.xpose.msra.mxu0 0.0
    %877 = vmatprep.subr.mxu0 0.0
    %878 = vmatpush1.xpose.msra.mxu0 0.0
    %879 = vmatprep.subr.mxu0 0.0
    %880 = vmatpush1.xpose.msra.mxu0 0.0
    %881 = vmatprep.subr.mxu0 0.0
    %882 = vmatpush1.xpose.msra.mxu0 0.0
    %883 = vmatprep.subr.mxu0 0.0
    %884 = vmatpush1.xpose.msra.mxu0 0.0
    %885 = vmatprep.subr.mxu0 0.0
    %886 = vmatpush1.xpose.msra.mxu0 0.0
    %887 = vmatprep.subr.mxu0 0.0
    %888 = vmatpush1.xpose.msra.mxu0 0.0
    %889 = vmatprep.subr.mxu0 0.0
    %890 = vmatpush1.xpose.msra.mxu0 0.0
    %891 = vmatprep.subr.mxu0 0.0
    %892 = vmatpush1.xpose.msra.mxu0 0.0
    %893 = vmatprep.subr.mxu0 0.0
    %894 = vmatpush1.xpose.msra.mxu0 0.0
    %895 = vmatprep.subr.mxu0 0.0
    %896 = vmatpush1.xpose.msra.mxu0 0.0
    %897 = vmatprep.subr.mxu0 0.0
    %898 = vmatpush1.xpose.msra.mxu0 0.0
    %899 = vmatprep.subr.mxu0 0.0
    %900 = vmatpush1.xpose.msra.mxu0 0.0
    %901 = vmatprep.subr.mxu0 0.0
    %902 = vmatpush1.xpose.msra.mxu0 0.0
    %903 = vmatprep.subr.mxu0 0.0
    %904 = vmatpush1.xpose.msra.mxu0 0.0
    %905 = vmatprep.subr.mxu0 0.0
    %906 = vmatpush1.xpose.msra.mxu0 0.0
    %907 = vmatprep.subr.mxu0 0.0
    %908 = vmatpush1.xpose.msra.mxu0 0.0
    %909 = vmatprep.subr.mxu0 0.0
    %910 = vmatpush1.xpose.msra.mxu0 0.0
    %911 = vmatprep.subr.mxu0 0.0
    %912 = vmatpush1.xpose.msra.mxu0 0.0
    %913 = vmatprep.mubr.f32.mxu0 0.0
    %914 = vmatmul.mubr.f32.gmra.mrb[0].mxu0 %v845
    %v915 = vpop.f32.mrb[0].mxu0
    %v916 = vadd.f32 0.0, %v915
    %v917 = vpop.f32.mrb[0].mxu0
    %918 = vdwg.mxu0
    %v919 = vsel %vm474, %v420, 0
    %v921 = vsel %vm474, %v434, 0
    %923 = vmatprep.subr.mxu0 0.0
    %924 = vmatpush1.xpose.msra.mxu0 %v921
    %925 = vmatprep.subr.mxu0 0.0
    %926 = vmatpush1.xpose.msra.mxu0 0.0
    %927 = vmatprep.subr.mxu0 0.0
    %928 = vmatpush1.xpose.msra.mxu0 0.0
    %929 = vmatprep.subr.mxu0 0.0
    %930 = vmatpush1.xpose.msra.mxu0 0.0
    %931 = vmatprep.subr.mxu0 0.0
    %932 = vmatpush1.xpose.msra.mxu0 0.0
    %933 = vmatprep.subr.mxu0 0.0
    %934 = vmatpush1.xpose.msra.mxu0 0.0
    %935 = vmatprep.subr.mxu0 0.0
    %936 = vmatpush1.xpose.msra.mxu0 0.0
    %937 = vmatprep.subr.mxu0 0.0
    %938 = vmatpush1.xpose.msra.mxu0 0.0
    %939 = vmatprep.subr.mxu0 0.0
    %940 = vmatpush1.xpose.msra.mxu0 0.0
    %941 = vmatprep.subr.mxu0 0.0
    %942 = vmatpush1.xpose.msra.mxu0 0.0
    %943 = vmatprep.subr.mxu0 0.0
    %944 = vmatpush1.xpose.msra.mxu0 0.0
    %945 = vmatprep.subr.mxu0 0.0
    %946 = vmatpush1.xpose.msra.mxu0 0.0
    %947 = vmatprep.subr.mxu0 0.0
    %948 = vmatpush1.xpose.msra.mxu0 0.0
    %949 = vmatprep.subr.mxu0 0.0
    %950 = vmatpush1.xpose.msra.mxu0 0.0
    %951 = vmatprep.subr.mxu0 0.0
    %952 = vmatpush1.xpose.msra.mxu0 0.0
    %953 = vmatprep.subr.mxu0 0.0
    %954 = vmatpush1.xpose.msra.mxu0 0.0
    %955 = vmatprep.subr.mxu0 0.0
    %956 = vmatpush1.xpose.msra.mxu0 0.0
    %957 = vmatprep.subr.mxu0 0.0
    %958 = vmatpush1.xpose.msra.mxu0 0.0
    %959 = vmatprep.subr.mxu0 0.0
    %960 = vmatpush1.xpose.msra.mxu0 0.0
    %961 = vmatprep.subr.mxu0 0.0
    %962 = vmatpush1.xpose.msra.mxu0 0.0
    %963 = vmatprep.subr.mxu0 0.0
    %964 = vmatpush1.xpose.msra.mxu0 0.0
    %965 = vmatprep.subr.mxu0 0.0
    %966 = vmatpush1.xpose.msra.mxu0 0.0
    %967 = vmatprep.subr.mxu0 0.0
    %968 = vmatpush1.xpose.msra.mxu0 0.0
    %969 = vmatprep.subr.mxu0 0.0
    %970 = vmatpush1.xpose.msra.mxu0 0.0
    %971 = vmatprep.subr.mxu0 0.0
    %972 = vmatpush1.xpose.msra.mxu0 0.0
    %973 = vmatprep.subr.mxu0 0.0
    %974 = vmatpush1.xpose.msra.mxu0 0.0
    %975 = vmatprep.subr.mxu0 0.0
    %976 = vmatpush1.xpose.msra.mxu0 0.0
    %977 = vmatprep.subr.mxu0 0.0
    %978 = vmatpush1.xpose.msra.mxu0 0.0
    %979 = vmatprep.subr.mxu0 0.0
    %980 = vmatpush1.xpose.msra.mxu0 0.0
    %981 = vmatprep.subr.mxu0 0.0
    %982 = vmatpush1.xpose.msra.mxu0 0.0
    %983 = vmatprep.subr.mxu0 0.0
    %984 = vmatpush1.xpose.msra.mxu0 0.0
    %985 = vmatprep.subr.mxu0 0.0
    %986 = vmatpush1.xpose.msra.mxu0 0.0
    %987 = vmatprep.mubr.f32.mxu0 0.0
    %988 = vmatmul.mubr.f32.gmra.mrb[0].mxu0 %v919
    %v989 = vpop.f32.mrb[0].mxu0
    %v990 = vadd.f32 0.0, %v989
    %v991 = vpop.f32.mrb[0].mxu0
    %992 = vdwg.mxu0
    %v993 = vsel %vm474, %v422, 0
    %v995 = vsel %vm474, %v436, 0
    %997 = vmatprep.subr.mxu0 0.0
    %998 = vmatpush1.xpose.msra.mxu0 %v995
    %999 = vmatprep.subr.mxu0 0.0
    %1000 = vmatpush1.xpose.msra.mxu0 0.0
    %1001 = vmatprep.subr.mxu0 0.0
    %1002 = vmatpush1.xpose.msra.mxu0 0.0
    %1003 = vmatprep.subr.mxu0 0.0
    %1004 = vmatpush1.xpose.msra.mxu0 0.0
    %1005 = vmatprep.subr.mxu0 0.0
    %1006 = vmatpush1.xpose.msra.mxu0 0.0
    %1007 = vmatprep.subr.mxu0 0.0
    %1008 = vmatpush1.xpose.msra.mxu0 0.0
    %1009 = vmatprep.subr.mxu0 0.0
    %1010 = vmatpush1.xpose.msra.mxu0 0.0
    %1011 = vmatprep.subr.mxu0 0.0
    %1012 = vmatpush1.xpose.msra.mxu0 0.0
    %1013 = vmatprep.subr.mxu0 0.0
    %1014 = vmatpush1.xpose.msra.mxu0 0.0
    %1015 = vmatprep.subr.mxu0 0.0
    %1016 = vmatpush1.xpose.msra.mxu0 0.0
    %1017 = vmatprep.subr.mxu0 0.0
    %1018 = vmatpush1.xpose.msra.mxu0 0.0
    %1019 = vmatprep.subr.mxu0 0.0
    %1020 = vmatpush1.xpose.msra.mxu0 0.0
    %1021 = vmatprep.subr.mxu0 0.0
    %1022 = vmatpush1.xpose.msra.mxu0 0.0
    %1023 = vmatprep.subr.mxu0 0.0
    %1024 = vmatpush1.xpose.msra.mxu0 0.0
    %1025 = vmatprep.subr.mxu0 0.0
    %1026 = vmatpush1.xpose.msra.mxu0 0.0
    %1027 = vmatprep.subr.mxu0 0.0
    %1028 = vmatpush1.xpose.msra.mxu0 0.0
    %1029 = vmatprep.subr.mxu0 0.0
    %1030 = vmatpush1.xpose.msra.mxu0 0.0
    %1031 = vmatprep.subr.mxu0 0.0
    %1032 = vmatpush1.xpose.msra.mxu0 0.0
    %1033 = vmatprep.subr.mxu0 0.0
    %1034 = vmatpush1.xpose.msra.mxu0 0.0
    %1035 = vmatprep.subr.mxu0 0.0
    %1036 = vmatpush1.xpose.msra.mxu0 0.0
    %1037 = vmatprep.subr.mxu0 0.0
    %1038 = vmatpush1.xpose.msra.mxu0 0.0
    %1039 = vmatprep.subr.mxu0 0.0
    %1040 = vmatpush1.xpose.msra.mxu0 0.0
    %1041 = vmatprep.subr.mxu0 0.0
    %1042 = vmatpush1.xpose.msra.mxu0 0.0
    %1043 = vmatprep.subr.mxu0 0.0
    %1044 = vmatpush1.xpose.msra.mxu0 0.0
    %1045 = vmatprep.subr.mxu0 0.0
    %1046 = vmatpush1.xpose.msra.mxu0 0.0
    %1047 = vmatprep.subr.mxu0 0.0
    %1048 = vmatpush1.xpose.msra.mxu0 0.0
    %1049 = vmatprep.subr.mxu0 0.0
    %1050 = vmatpush1.xpose.msra.mxu0 0.0
    %1051 = vmatprep.subr.mxu0 0.0
    %1052 = vmatpush1.xpose.msra.mxu0 0.0
    %1053 = vmatprep.subr.mxu0 0.0
    %1054 = vmatpush1.xpose.msra.mxu0 0.0
    %1055 = vmatprep.subr.mxu0 0.0
    %1056 = vmatpush1.xpose.msra.mxu0 0.0
    %1057 = vmatprep.subr.mxu0 0.0
    %1058 = vmatpush1.xpose.msra.mxu0 0.0
    %1059 = vmatprep.subr.mxu0 0.0
    %1060 = vmatpush1.xpose.msra.mxu0 0.0
    %1061 = vmatprep.mubr.f32.mxu0 0.0
    %1062 = vmatmul.mubr.f32.gmra.mrb[0].mxu0 %v993
    %v1063 = vpop.f32.mrb[0].mxu0
    %v1064 = vadd.f32 0.0, %v1063
    %v1065 = vpop.f32.mrb[0].mxu0
    %1066 = vdwg.mxu0
    %v1067 = vmul.f32 %v546, 0.17677669
    %v1068 = vmul.f32 %v620, 0.17677669
    %v1069 = vmul.f32 %v694, 0.17677669
    %v1070 = vmul.f32 %v768, 0.17677669
    %v1071 = vmul.f32 %v842, 0.17677669
    %v1072 = vmul.f32 %v916, 0.17677669
    %v1073 = vmul.f32 %v990, 0.17677669
    %v1074 = vmul.f32 %v1064, 0.17677669
    %v1075 = vadd.f32 %v1067, %v113
    %v1076 = vadd.f32 %v1068, %v113
    %v1077 = vadd.f32 %v1069, %v113
    %v1078 = vadd.f32 %v1070, %v113
    %v1079 = vadd.f32 %v1071, %v113
    %v1080 = vadd.f32 %v1072, %v113
    %v1081 = vadd.f32 %v1073, %v113
    %v1082 = vadd.f32 %v1074, %v113
    %vm1083 = vcmask 64512
    %v1084 = vsel %vm1083, %v1075, -inf
    %1085 = vmax.xlane.f32.xlu0 %v1084
    %v1086 = vpop.xlane.xlu0 %1085
    %v1087 = vsel %vm1083, %v1076, -inf
    %1088 = vmax.xlane.f32.xlu0 %v1087
    %v1089 = vpop.xlane.xlu0 %1088
    %v1090 = vsel %vm1083, %v1077, -inf
    %1091 = vmax.xlane.f32.xlu0 %v1090
    %v1092 = vpop.xlane.xlu0 %1091
    %v1093 = vsel %vm1083, %v1078, -inf
    %1094 = vmax.xlane.f32.xlu0 %v1093
    %v1095 = vpop.xlane.xlu0 %1094
    %v1096 = vsel %vm1083, %v1079, -inf
    %1097 = vmax.xlane.f32.xlu0 %v1096
    %v1098 = vpop.xlane.xlu0 %1097
    %v1099 = vsel %vm1083, %v1080, -inf
    %1100 = vmax.xlane.f32.xlu0 %v1099
    %v1101 = vpop.xlane.xlu0 %1100
    %v1102 = vsel %vm1083, %v1081, -inf
    %1103 = vmax.xlane.f32.xlu0 %v1102
    %v1104 = vpop.xlane.xlu0 %1103
    %v1105 = vsel %vm1083, %v1082, -inf
    %1106 = vmax.xlane.f32.xlu0 %v1105
    %v1107 = vpop.xlane.xlu0 %1106
    %v1108 = vsub.f32 %v1075, %v1086
    %v1109 = vsub.f32 %v1076, %v1089
    %v1110 = vsub.f32 %v1077, %v1092
    %v1111 = vsub.f32 %v1078, %v1095
    %v1112 = vsub.f32 %v1079, %v1098
    %v1113 = vsub.f32 %v1080, %v1101
    %v1114 = vsub.f32 %v1081, %v1104
    %v1115 = vsub.f32 %v1082, %v1107
    %v1116 = vmul.f32 %v1108, 1.442695
    %v1117 = vpow.pop %v1116
    %v1118 = vmul.f32 %v1109, 1.442695
    %v1119 = vpow.pop %v1118
    %v1120 = vmul.f32 %v1110, 1.442695
    %v1121 = vpow.pop %v1120
    %v1122 = vmul.f32 %v1111, 1.442695
    %v1123 = vpow.pop %v1122
    %v1124 = vmul.f32 %v1112, 1.442695
    %v1125 = vpow.pop %v1124
    %v1126 = vmul.f32 %v1113, 1.442695
    %v1127 = vpow.pop %v1126
    %v1128 = vmul.f32 %v1114, 1.442695
    %v1129 = vpow.pop %v1128
    %v1130 = vmul.f32 %v1115, 1.442695
    %v1131 = vpow.pop %v1130
    %v1132 = vsel %vm1083, %v1117, 0.0
    %1133 = vadd.xlane.f32.xlu0 %v1132
    %v1134 = vpop.xlane.xlu0 %1133
    %v1135 = vsel %vm1083, %v1119, 0.0
    %1136 = vadd.xlane.f32.xlu0 %v1135
    %v1137 = vpop.xlane.xlu0 %1136
    %v1138 = vsel %vm1083, %v1121, 0.0
    %1139 = vadd.xlane.f32.xlu0 %v1138
    %v1140 = vpop.xlane.xlu0 %1139
    %v1141 = vsel %vm1083, %v1123, 0.0
    %1142 = vadd.xlane.f32.xlu0 %v1141
    %v1143 = vpop.xlane.xlu0 %1142
    %v1144 = vsel %vm1083, %v1125, 0.0
    %1145 = vadd.xlane.f32.xlu0 %v1144
    %v1146 = vpop.xlane.xlu0 %1145
    %v1147 = vsel %vm1083, %v1127, 0.0
    %1148 = vadd.xlane.f32.xlu0 %v1147
    %v1149 = vpop.xlane.xlu0 %1148
    %v1150 = vsel %vm1083, %v1129, 0.0
    %1151 = vadd.xlane.f32.xlu0 %v1150
    %v1152 = vpop.xlane.xlu0 %1151
    %v1153 = vsel %vm1083, %v1131, 0.0
    %1154 = vadd.xlane.f32.xlu0 %v1153
    %v1155 = vpop.xlane.xlu0 %1154
    %v1156 = vrcp.pop %v1134
    %v1157 = vmul.f32 %v1117, %v1156
    %v1158 = vrcp.pop %v1137
    %v1159 = vmul.f32 %v1119, %v1158
    %v1160 = vrcp.pop %v1140
    %v1161 = vmul.f32 %v1121, %v1160
    %v1162 = vrcp.pop %v1143
    %v1163 = vmul.f32 %v1123, %v1162
    %v1164 = vrcp.pop %v1146
    %v1165 = vmul.f32 %v1125, %v1164
    %v1166 = vrcp.pop %v1149
    %v1167 = vmul.f32 %v1127, %v1166
    %v1168 = vrcp.pop %v1152
    %v1169 = vmul.f32 %v1129, %v1168
    %v1170 = vrcp.pop %v1155
    %v1171 = vmul.f32 %v1131, %v1170
    %v1173 = vsel %vm1083, %v1157, 0
    %1175 = vmatprep.subr.mxu0 0.0
    %1176 = vmatpush1.msra.mxu0 %v403
    %1177 = vmatprep.subr.mxu0 0.0
    %1178 = vmatpush1.msra.mxu0 0.0
    %1179 = vmatprep.subr.mxu0 0.0
    %1180 = vmatpush1.msra.mxu0 0.0
    %1181 = vmatprep.subr.mxu0 0.0
    %1182 = vmatpush1.msra.mxu0 0.0
    %1183 = vmatprep.subr.mxu0 0.0
    %1184 = vmatpush1.msra.mxu0 0.0
    %1185 = vmatprep.subr.mxu0 0.0
    %1186 = vmatpush1.msra.mxu0 0.0
    %1187 = vmatprep.subr.mxu0 0.0
    %1188 = vmatpush1.msra.mxu0 0.0
    %1189 = vmatprep.subr.mxu0 0.0
    %1190 = vmatpush1.msra.mxu0 0.0
    %1191 = vmatprep.subr.mxu0 0.0
    %1192 = vmatpush1.msra.mxu0 0.0
    %1193 = vmatprep.subr.mxu0 0.0
    %1194 = vmatpush1.msra.mxu0 0.0
    %1195 = vmatprep.subr.mxu0 0.0
    %1196 = vmatpush1.msra.mxu0 0.0
    %1197 = vmatprep.subr.mxu0 0.0
    %1198 = vmatpush1.msra.mxu0 0.0
    %1199 = vmatprep.subr.mxu0 0.0
    %1200 = vmatpush1.msra.mxu0 0.0
    %1201 = vmatprep.subr.mxu0 0.0
    %1202 = vmatpush1.msra.mxu0 0.0
    %1203 = vmatprep.subr.mxu0 0.0
    %1204 = vmatpush1.msra.mxu0 0.0
    %1205 = vmatprep.subr.mxu0 0.0
    %1206 = vmatpush1.msra.mxu0 0.0
    %1207 = vmatprep.subr.mxu0 0.0
    %1208 = vmatpush1.msra.mxu0 0.0
    %1209 = vmatprep.subr.mxu0 0.0
    %1210 = vmatpush1.msra.mxu0 0.0
    %1211 = vmatprep.subr.mxu0 0.0
    %1212 = vmatpush1.msra.mxu0 0.0
    %1213 = vmatprep.subr.mxu0 0.0
    %1214 = vmatpush1.msra.mxu0 0.0
    %1215 = vmatprep.subr.mxu0 0.0
    %1216 = vmatpush1.msra.mxu0 0.0
    %1217 = vmatprep.subr.mxu0 0.0
    %1218 = vmatpush1.msra.mxu0 0.0
    %1219 = vmatprep.subr.mxu0 0.0
    %1220 = vmatpush1.msra.mxu0 0.0
    %1221 = vmatprep.subr.mxu0 0.0
    %1222 = vmatpush1.msra.mxu0 0.0
    %1223 = vmatprep.subr.mxu0 0.0
    %1224 = vmatpush1.msra.mxu0 0.0
    %1225 = vmatprep.subr.mxu0 0.0
    %1226 = vmatpush1.msra.mxu0 0.0
    %1227 = vmatprep.subr.mxu0 0.0
    %1228 = vmatpush1.msra.mxu0 0.0
    %1229 = vmatprep.subr.mxu0 0.0
    %1230 = vmatpush1.msra.mxu0 0.0
    %1231 = vmatprep.subr.mxu0 0.0
    %1232 = vmatpush1.msra.mxu0 0.0
    %1233 = vmatprep.subr.mxu0 0.0
    %1234 = vmatpush1.msra.mxu0 0.0
    %1235 = vmatprep.subr.mxu0 0.0
    %1236 = vmatpush1.msra.mxu0 0.0
    %1237 = vmatprep.subr.mxu0 0.0
    %1238 = vmatpush1.msra.mxu0 0.0
    %1239 = vmatprep.mubr.f32.mxu0 0.0
    %1240 = vmatmul.mubr.f32.gmra.mrb[0].mxu0 %v1173
    %v1241 = vpop.f32.mrb[0].mxu0
    %v1242 = vadd.f32 0.0, %v1241
    %v1243 = vpop.f32.mrb[0].mxu0
    %1244 = vdwg.mxu0
    %v1246 = vsel %vm1083, %v1159, 0
    %1248 = vmatprep.subr.mxu0 0.0
    %1249 = vmatpush1.msra.mxu0 %v439
    %1250 = vmatprep.subr.mxu0 0.0
    %1251 = vmatpush1.msra.mxu0 0.0
    %1252 = vmatprep.subr.mxu0 0.0
    %1253 = vmatpush1.msra.mxu0 0.0
    %1254 = vmatprep.subr.mxu0 0.0
    %1255 = vmatpush1.msra.mxu0 0.0
    %1256 = vmatprep.subr.mxu0 0.0
    %1257 = vmatpush1.msra.mxu0 0.0
    %1258 = vmatprep.subr.mxu0 0.0
    %1259 = vmatpush1.msra.mxu0 0.0
    %1260 = vmatprep.subr.mxu0 0.0
    %1261 = vmatpush1.msra.mxu0 0.0
    %1262 = vmatprep.subr.mxu0 0.0
    %1263 = vmatpush1.msra.mxu0 0.0
    %1264 = vmatprep.subr.mxu0 0.0
    %1265 = vmatpush1.msra.mxu0 0.0
    %1266 = vmatprep.subr.mxu0 0.0
    %1267 = vmatpush1.msra.mxu0 0.0
    %1268 = vmatprep.subr.mxu0 0.0
    %1269 = vmatpush1.msra.mxu0 0.0
    %1270 = vmatprep.subr.mxu0 0.0
    %1271 = vmatpush1.msra.mxu0 0.0
    %1272 = vmatprep.subr.mxu0 0.0
    %1273 = vmatpush1.msra.mxu0 0.0
    %1274 = vmatprep.subr.mxu0 0.0
    %1275 = vmatpush1.msra.mxu0 0.0
    %1276 = vmatprep.subr.mxu0 0.0
    %1277 = vmatpush1.msra.mxu0 0.0
    %1278 = vmatprep.subr.mxu0 0.0
    %1279 = vmatpush1.msra.mxu0 0.0
    %1280 = vmatprep.subr.mxu0 0.0
    %1281 = vmatpush1.msra.mxu0 0.0
    %1282 = vmatprep.subr.mxu0 0.0
    %1283 = vmatpush1.msra.mxu0 0.0
    %1284 = vmatprep.subr.mxu0 0.0
    %1285 = vmatpush1.msra.mxu0 0.0
    %1286 = vmatprep.subr.mxu0 0.0
    %1287 = vmatpush1.msra.mxu0 0.0
    %1288 = vmatprep.subr.mxu0 0.0
    %1289 = vmatpush1.msra.mxu0 0.0
    %1290 = vmatprep.subr.mxu0 0.0
    %1291 = vmatpush1.msra.mxu0 0.0
    %1292 = vmatprep.subr.mxu0 0.0
    %1293 = vmatpush1.msra.mxu0 0.0
    %1294 = vmatprep.subr.mxu0 0.0
    %1295 = vmatpush1.msra.mxu0 0.0
    %1296 = vmatprep.subr.mxu0 0.0
    %1297 = vmatpush1.msra.mxu0 0.0
    %1298 = vmatprep.subr.mxu0 0.0
    %1299 = vmatpush1.msra.mxu0 0.0
    %1300 = vmatprep.subr.mxu0 0.0
    %1301 = vmatpush1.msra.mxu0 0.0
    %1302 = vmatprep.subr.mxu0 0.0
    %1303 = vmatpush1.msra.mxu0 0.0
    %1304 = vmatprep.subr.mxu0 0.0
    %1305 = vmatpush1.msra.mxu0 0.0
    %1306 = vmatprep.subr.mxu0 0.0
    %1307 = vmatpush1.msra.mxu0 0.0
    %1308 = vmatprep.subr.mxu0 0.0
    %1309 = vmatpush1.msra.mxu0 0.0
    %1310 = vmatprep.subr.mxu0 0.0
    %1311 = vmatpush1.msra.mxu0 0.0
    %1312 = vmatprep.mubr.f32.mxu0 0.0
    %1313 = vmatmul.mubr.f32.gmra.mrb[0].mxu0 %v1246
    %v1314 = vpop.f32.mrb[0].mxu0
    %v1315 = vadd.f32 0.0, %v1314
    %v1316 = vpop.f32.mrb[0].mxu0
    %1317 = vdwg.mxu0
    %v1319 = vsel %vm1083, %v1161, 0
    %1321 = vmatprep.subr.mxu0 0.0
    %1322 = vmatpush1.msra.mxu0 %v442
    %1323 = vmatprep.subr.mxu0 0.0
    %1324 = vmatpush1.msra.mxu0 0.0
    %1325 = vmatprep.subr.mxu0 0.0
    %1326 = vmatpush1.msra.mxu0 0.0
    %1327 = vmatprep.subr.mxu0 0.0
    %1328 = vmatpush1.msra.mxu0 0.0
    %1329 = vmatprep.subr.mxu0 0.0
    %1330 = vmatpush1.msra.mxu0 0.0
    %1331 = vmatprep.subr.mxu0 0.0
    %1332 = vmatpush1.msra.mxu0 0.0
    %1333 = vmatprep.subr.mxu0 0.0
    %1334 = vmatpush1.msra.mxu0 0.0
    %1335 = vmatprep.subr.mxu0 0.0
    %1336 = vmatpush1.msra.mxu0 0.0
    %1337 = vmatprep.subr.mxu0 0.0
    %1338 = vmatpush1.msra.mxu0 0.0
    %1339 = vmatprep.subr.mxu0 0.0
    %1340 = vmatpush1.msra.mxu0 0.0
    %1341 = vmatprep.subr.mxu0 0.0
    %1342 = vmatpush1.msra.mxu0 0.0
    %1343 = vmatprep.subr.mxu0 0.0
    %1344 = vmatpush1.msra.mxu0 0.0
    %1345 = vmatprep.subr.mxu0 0.0
    %1346 = vmatpush1.msra.mxu0 0.0
    %1347 = vmatprep.subr.mxu0 0.0
    %1348 = vmatpush1.msra.mxu0 0.0
    %1349 = vmatprep.subr.mxu0 0.0
    %1350 = vmatpush1.msra.mxu0 0.0
    %1351 = vmatprep.subr.mxu0 0.0
    %1352 = vmatpush1.msra.mxu0 0.0
    %1353 = vmatprep.subr.mxu0 0.0
    %1354 = vmatpush1.msra.mxu0 0.0
    %1355 = vmatprep.subr.mxu0 0.0
    %1356 = vmatpush1.msra.mxu0 0.0
    %1357 = vmatprep.subr.mxu0 0.0
    %1358 = vmatpush1.msra.mxu0 0.0
    %1359 = vmatprep.subr.mxu0 0.0
    %1360 = vmatpush1.msra.mxu0 0.0
    %1361 = vmatprep.subr.mxu0 0.0
    %1362 = vmatpush1.msra.mxu0 0.0
    %1363 = vmatprep.subr.mxu0 0.0
    %1364 = vmatpush1.msra.mxu0 0.0
    %1365 = vmatprep.subr.mxu0 0.0
    %1366 = vmatpush1.msra.mxu0 0.0
    %1367 = vmatprep.subr.mxu0 0.0
    %1368 = vmatpush1.msra.mxu0 0.0
    %1369 = vmatprep.subr.mxu0 0.0
    %1370 = vmatpush1.msra.mxu0 0.0
    %1371 = vmatprep.subr.mxu0 0.0
    %1372 = vmatpush1.msra.mxu0 0.0
    %1373 = vmatprep.subr.mxu0 0.0
    %1374 = vmatpush1.msra.mxu0 0.0
    %1375 = vmatprep.subr.mxu0 0.0
    %1376 = vmatpush1.msra.mxu0 0.0
    %1377 = vmatprep.subr.mxu0 0.0
    %1378 = vmatpush1.msra.mxu0 0.0
    %1379 = vmatprep.subr.mxu0 0.0
    %1380 = vmatpush1.msra.mxu0 0.0
    %1381 = vmatprep.subr.mxu0 0.0
    %1382 = vmatpush1.msra.mxu0 0.0
    %1383 = vmatprep.subr.mxu0 0.0
    %1384 = vmatpush1.msra.mxu0 0.0
    %1385 = vmatprep.mubr.f32.mxu0 0.0
    %1386 = vmatmul.mubr.f32.gmra.mrb[0].mxu0 %v1319
    %v1387 = vpop.f32.mrb[0].mxu0
    %v1388 = vadd.f32 0.0, %v1387
    %v1389 = vpop.f32.mrb[0].mxu0
    %1390 = vdwg.mxu0
    %v1392 = vsel %vm1083, %v1163, 0
    %1394 = vmatprep.subr.mxu0 0.0
    %1395 = vmatpush1.msra.mxu0 %v445
    %1396 = vmatprep.subr.mxu0 0.0
    %1397 = vmatpush1.msra.mxu0 0.0
    %1398 = vmatprep.subr.mxu0 0.0
    %1399 = vmatpush1.msra.mxu0 0.0
    %1400 = vmatprep.subr.mxu0 0.0
    %1401 = vmatpush1.msra.mxu0 0.0
    %1402 = vmatprep.subr.mxu0 0.0
    %1403 = vmatpush1.msra.mxu0 0.0
    %1404 = vmatprep.subr.mxu0 0.0
    %1405 = vmatpush1.msra.mxu0 0.0
    %1406 = vmatprep.subr.mxu0 0.0
    %1407 = vmatpush1.msra.mxu0 0.0
    %1408 = vmatprep.subr.mxu0 0.0
    %1409 = vmatpush1.msra.mxu0 0.0
    %1410 = vmatprep.subr.mxu0 0.0
    %1411 = vmatpush1.msra.mxu0 0.0
    %1412 = vmatprep.subr.mxu0 0.0
    %1413 = vmatpush1.msra.mxu0 0.0
    %1414 = vmatprep.subr.mxu0 0.0
    %1415 = vmatpush1.msra.mxu0 0.0
    %1416 = vmatprep.subr.mxu0 0.0
    %1417 = vmatpush1.msra.mxu0 0.0
    %1418 = vmatprep.subr.mxu0 0.0
    %1419 = vmatpush1.msra.mxu0 0.0
    %1420 = vmatprep.subr.mxu0 0.0
    %1421 = vmatpush1.msra.mxu0 0.0
    %1422 = vmatprep.subr.mxu0 0.0
    %1423 = vmatpush1.msra.mxu0 0.0
    %1424 = vmatprep.subr.mxu0 0.0
    %1425 = vmatpush1.msra.mxu0 0.0
    %1426 = vmatprep.subr.mxu0 0.0
    %1427 = vmatpush1.msra.mxu0 0.0
    %1428 = vmatprep.subr.mxu0 0.0
    %1429 = vmatpush1.msra.mxu0 0.0
    %1430 = vmatprep.subr.mxu0 0.0
    %1431 = vmatpush1.msra.mxu0 0.0
    %1432 = vmatprep.subr.mxu0 0.0
    %1433 = vmatpush1.msra.mxu0 0.0
    %1434 = vmatprep.subr.mxu0 0.0
    %1435 = vmatpush1.msra.mxu0 0.0
    %1436 = vmatprep.subr.mxu0 0.0
    %1437 = vmatpush1.msra.mxu0 0.0
    %1438 = vmatprep.subr.mxu0 0.0
    %1439 = vmatpush1.msra.mxu0 0.0
    %1440 = vmatprep.subr.mxu0 0.0
    %1441 = vmatpush1.msra.mxu0 0.0
    %1442 = vmatprep.subr.mxu0 0.0
    %1443 = vmatpush1.msra.mxu0 0.0
    %1444 = vmatprep.subr.mxu0 0.0
    %1445 = vmatpush1.msra.mxu0 0.0
    %1446 = vmatprep.subr.mxu0 0.0
    %1447 = vmatpush1.msra.mxu0 0.0
    %1448 = vmatprep.subr.mxu0 0.0
    %1449 = vmatpush1.msra.mxu0 0.0
    %1450 = vmatprep.subr.mxu0 0.0
    %1451 = vmatpush1.msra.mxu0 0.0
    %1452 = vmatprep.subr.mxu0 0.0
    %1453 = vmatpush1.msra.mxu0 0.0
    %1454 = vmatprep.subr.mxu0 0.0
    %1455 = vmatpush1.msra.mxu0 0.0
    %1456 = vmatprep.subr.mxu0 0.0
    %1457 = vmatpush1.msra.mxu0 0.0
    %1458 = vmatprep.mubr.f32.mxu0 0.0
    %1459 = vmatmul.mubr.f32.gmra.mrb[0].mxu0 %v1392
    %v1460 = vpop.f32.mrb[0].mxu0
    %v1461 = vadd.f32 0.0, %v1460
    %v1462 = vpop.f32.mrb[0].mxu0
    %1463 = vdwg.mxu0
    %v1465 = vsel %vm1083, %v1165, 0
    %1467 = vmatprep.subr.mxu0 0.0
    %1468 = vmatpush1.msra.mxu0 %v406
    %1469 = vmatprep.subr.mxu0 0.0
    %1470 = vmatpush1.msra.mxu0 0.0
    %1471 = vmatprep.subr.mxu0 0.0
    %1472 = vmatpush1.msra.mxu0 0.0
    %1473 = vmatprep.subr.mxu0 0.0
    %1474 = vmatpush1.msra.mxu0 0.0
    %1475 = vmatprep.subr.mxu0 0.0
    %1476 = vmatpush1.msra.mxu0 0.0
    %1477 = vmatprep.subr.mxu0 0.0
    %1478 = vmatpush1.msra.mxu0 0.0
    %1479 = vmatprep.subr.mxu0 0.0
    %1480 = vmatpush1.msra.mxu0 0.0
    %1481 = vmatprep.subr.mxu0 0.0
    %1482 = vmatpush1.msra.mxu0 0.0
    %1483 = vmatprep.subr.mxu0 0.0
    %1484 = vmatpush1.msra.mxu0 0.0
    %1485 = vmatprep.subr.mxu0 0.0
    %1486 = vmatpush1.msra.mxu0 0.0
    %1487 = vmatprep.subr.mxu0 0.0
    %1488 = vmatpush1.msra.mxu0 0.0
    %1489 = vmatprep.subr.mxu0 0.0
    %1490 = vmatpush1.msra.mxu0 0.0
    %1491 = vmatprep.subr.mxu0 0.0
    %1492 = vmatpush1.msra.mxu0 0.0
    %1493 = vmatprep.subr.mxu0 0.0
    %1494 = vmatpush1.msra.mxu0 0.0
    %1495 = vmatprep.subr.mxu0 0.0
    %1496 = vmatpush1.msra.mxu0 0.0
    %1497 = vmatprep.subr.mxu0 0.0
    %1498 = vmatpush1.msra.mxu0 0.0
    %1499 = vmatprep.subr.mxu0 0.0
    %1500 = vmatpush1.msra.mxu0 0.0
    %1501 = vmatprep.subr.mxu0 0.0
    %1502 = vmatpush1.msra.mxu0 0.0
    %1503 = vmatprep.subr.mxu0 0.0
    %1504 = vmatpush1.msra.mxu0 0.0
    %1505 = vmatprep.subr.mxu0 0.0
    %1506 = vmatpush1.msra.mxu0 0.0
    %1507 = vmatprep.subr.mxu0 0.0
    %1508 = vmatpush1.msra.mxu0 0.0
    %1509 = vmatprep.subr.mxu0 0.0
    %1510 = vmatpush1.msra.mxu0 0.0
    %1511 = vmatprep.subr.mxu0 0.0
    %1512 = vmatpush1.msra.mxu0 0.0
    %1513 = vmatprep.subr.mxu0 0.0
    %1514 = vmatpush1.msra.mxu0 0.0
    %1515 = vmatprep.subr.mxu0 0.0
    %1516 = vmatpush1.msra.mxu0 0.0
    %1517 = vmatprep.subr.mxu0 0.0
    %1518 = vmatpush1.msra.mxu0 0.0
    %1519 = vmatprep.subr.mxu0 0.0
    %1520 = vmatpush1.msra.mxu0 0.0
    %1521 = vmatprep.subr.mxu0 0.0
    %1522 = vmatpush1.msra.mxu0 0.0
    %1523 = vmatprep.subr.mxu0 0.0
    %1524 = vmatpush1.msra.mxu0 0.0
    %1525 = vmatprep.subr.mxu0 0.0
    %1526 = vmatpush1.msra.mxu0 0.0
    %1527 = vmatprep.subr.mxu0 0.0
    %1528 = vmatpush1.msra.mxu0 0.0
    %1529 = vmatprep.subr.mxu0 0.0
    %1530 = vmatpush1.msra.mxu0 0.0
    %1531 = vmatprep.mubr.f32.mxu0 0.0
    %1532 = vmatmul.mubr.f32.gmra.mrb[0].mxu0 %v1465
    %v1533 = vpop.f32.mrb[0].mxu0
    %v1534 = vadd.f32 0.0, %v1533
    %v1535 = vpop.f32.mrb[0].mxu0
    %1536 = vdwg.mxu0
    %v1538 = vsel %vm1083, %v1167, 0
    %1540 = vmatprep.subr.mxu0 0.0
    %1541 = vmatpush1.msra.mxu0 %v449
    %1542 = vmatprep.subr.mxu0 0.0
    %1543 = vmatpush1.msra.mxu0 0.0
    %1544 = vmatprep.subr.mxu0 0.0
    %1545 = vmatpush1.msra.mxu0 0.0
    %1546 = vmatprep.subr.mxu0 0.0
    %1547 = vmatpush1.msra.mxu0 0.0
    %1548 = vmatprep.subr.mxu0 0.0
    %1549 = vmatpush1.msra.mxu0 0.0
    %1550 = vmatprep.subr.mxu0 0.0
    %1551 = vmatpush1.msra.mxu0 0.0
    %1552 = vmatprep.subr.mxu0 0.0
    %1553 = vmatpush1.msra.mxu0 0.0
    %1554 = vmatprep.subr.mxu0 0.0
    %1555 = vmatpush1.msra.mxu0 0.0
    %1556 = vmatprep.subr.mxu0 0.0
    %1557 = vmatpush1.msra.mxu0 0.0
    %1558 = vmatprep.subr.mxu0 0.0
    %1559 = vmatpush1.msra.mxu0 0.0
    %1560 = vmatprep.subr.mxu0 0.0
    %1561 = vmatpush1.msra.mxu0 0.0
    %1562 = vmatprep.subr.mxu0 0.0
    %1563 = vmatpush1.msra.mxu0 0.0
    %1564 = vmatprep.subr.mxu0 0.0
    %1565 = vmatpush1.msra.mxu0 0.0
    %1566 = vmatprep.subr.mxu0 0.0
    %1567 = vmatpush1.msra.mxu0 0.0
    %1568 = vmatprep.subr.mxu0 0.0
    %1569 = vmatpush1.msra.mxu0 0.0
    %1570 = vmatprep.subr.mxu0 0.0
    %1571 = vmatpush1.msra.mxu0 0.0
    %1572 = vmatprep.subr.mxu0 0.0
    %1573 = vmatpush1.msra.mxu0 0.0
    %1574 = vmatprep.subr.mxu0 0.0
    %1575 = vmatpush1.msra.mxu0 0.0
    %1576 = vmatprep.subr.mxu0 0.0
    %1577 = vmatpush1.msra.mxu0 0.0
    %1578 = vmatprep.subr.mxu0 0.0
    %1579 = vmatpush1.msra.mxu0 0.0
    %1580 = vmatprep.subr.mxu0 0.0
    %1581 = vmatpush1.msra.mxu0 0.0
    %1582 = vmatprep.subr.mxu0 0.0
    %1583 = vmatpush1.msra.mxu0 0.0
    %1584 = vmatprep.subr.mxu0 0.0
    %1585 = vmatpush1.msra.mxu0 0.0
    %1586 = vmatprep.subr.mxu0 0.0
    %1587 = vmatpush1.msra.mxu0 0.0
    %1588 = vmatprep.subr.mxu0 0.0
    %1589 = vmatpush1.msra.mxu0 0.0
    %1590 = vmatprep.subr.mxu0 0.0
    %1591 = vmatpush1.msra.mxu0 0.0
    %1592 = vmatprep.subr.mxu0 0.0
    %1593 = vmatpush1.msra.mxu0 0.0
    %1594 = vmatprep.subr.mxu0 0.0
    %1595 = vmatpush1.msra.mxu0 0.0
    %1596 = vmatprep.subr.mxu0 0.0
    %1597 = vmatpush1.msra.mxu0 0.0
    %1598 = vmatprep.subr.mxu0 0.0
    %1599 = vmatpush1.msra.mxu0 0.0
    %1600 = vmatprep.subr.mxu0 0.0
    %1601 = vmatpush1.msra.mxu0 0.0
    %1602 = vmatprep.subr.mxu0 0.0
    %1603 = vmatpush1.msra.mxu0 0.0
    %1604 = vmatprep.mubr.f32.mxu0 0.0
    %1605 = vmatmul.mubr.f32.gmra.mrb[0].mxu0 %v1538
    %v1606 = vpop.f32.mrb[0].mxu0
    %v1607 = vadd.f32 0.0, %v1606
    %v1608 = vpop.f32.mrb[0].mxu0
    %1609 = vdwg.mxu0
    %v1611 = vsel %vm1083, %v1169, 0
    %1613 = vmatprep.subr.mxu0 0.0
    %1614 = vmatpush1.msra.mxu0 %v452
    %1615 = vmatprep.subr.mxu0 0.0
    %1616 = vmatpush1.msra.mxu0 0.0
    %1617 = vmatprep.subr.mxu0 0.0
    %1618 = vmatpush1.msra.mxu0 0.0
    %1619 = vmatprep.subr.mxu0 0.0
    %1620 = vmatpush1.msra.mxu0 0.0
    %1621 = vmatprep.subr.mxu0 0.0
    %1622 = vmatpush1.msra.mxu0 0.0
    %1623 = vmatprep.subr.mxu0 0.0
    %1624 = vmatpush1.msra.mxu0 0.0
    %1625 = vmatprep.subr.mxu0 0.0
    %1626 = vmatpush1.msra.mxu0 0.0
    %1627 = vmatprep.subr.mxu0 0.0
    %1628 = vmatpush1.msra.mxu0 0.0
    %1629 = vmatprep.subr.mxu0 0.0
    %1630 = vmatpush1.msra.mxu0 0.0
    %1631 = vmatprep.subr.mxu0 0.0
    %1632 = vmatpush1.msra.mxu0 0.0
    %1633 = vmatprep.subr.mxu0 0.0
    %1634 = vmatpush1.msra.mxu0 0.0
    %1635 = vmatprep.subr.mxu0 0.0
    %1636 = vmatpush1.msra.mxu0 0.0
    %1637 = vmatprep.subr.mxu0 0.0
    %1638 = vmatpush1.msra.mxu0 0.0
    %1639 = vmatprep.subr.mxu0 0.0
    %1640 = vmatpush1.msra.mxu0 0.0
    %1641 = vmatprep.subr.mxu0 0.0
    %1642 = vmatpush1.msra.mxu0 0.0
    %1643 = vmatprep.subr.mxu0 0.0
    %1644 = vmatpush1.msra.mxu0 0.0
    %1645 = vmatprep.subr.mxu0 0.0
    %1646 = vmatpush1.msra.mxu0 0.0
    %1647 = vmatprep.subr.mxu0 0.0
    %1648 = vmatpush1.msra.mxu0 0.0
    %1649 = vmatprep.subr.mxu0 0.0
    %1650 = vmatpush1.msra.mxu0 0.0
    %1651 = vmatprep.subr.mxu0 0.0
    %1652 = vmatpush1.msra.mxu0 0.0
    %1653 = vmatprep.subr.mxu0 0.0
    %1654 = vmatpush1.msra.mxu0 0.0
    %1655 = vmatprep.subr.mxu0 0.0
    %1656 = vmatpush1.msra.mxu0 0.0
    %1657 = vmatprep.subr.mxu0 0.0
    %1658 = vmatpush1.msra.mxu0 0.0
    %1659 = vmatprep.subr.mxu0 0.0
    %1660 = vmatpush1.msra.mxu0 0.0
    %1661 = vmatprep.subr.mxu0 0.0
    %1662 = vmatpush1.msra.mxu0 0.0
    %1663 = vmatprep.subr.mxu0 0.0
    %1664 = vmatpush1.msra.mxu0 0.0
    %1665 = vmatprep.subr.mxu0 0.0
    %1666 = vmatpush1.msra.mxu0 0.0
    %1667 = vmatprep.subr.mxu0 0.0
    %1668 = vmatpush1.msra.mxu0 0.0
    %1669 = vmatprep.subr.mxu0 0.0
    %1670 = vmatpush1.msra.mxu0 0.0
    %1671 = vmatprep.subr.mxu0 0.0
    %1672 = vmatpush1.msra.mxu0 0.0
    %1673 = vmatprep.subr.mxu0 0.0
    %1674 = vmatpush1.msra.mxu0 0.0
    %1675 = vmatprep.subr.mxu0 0.0
    %1676 = vmatpush1.msra.mxu0 0.0
    %1677 = vmatprep.mubr.f32.mxu0 0.0
    %1678 = vmatmul.mubr.f32.gmra.mrb[0].mxu0 %v1611
    %v1679 = vpop.f32.mrb[0].mxu0
    %v1680 = vadd.f32 0.0, %v1679
    %v1681 = vpop.f32.mrb[0].mxu0
    %1682 = vdwg.mxu0
    %v1684 = vsel %vm1083, %v1171, 0
    %1686 = vmatprep.subr.mxu0 0.0
    %1687 = vmatpush1.msra.mxu0 %v455
    %1688 = vmatprep.subr.mxu0 0.0
    %1689 = vmatpush1.msra.mxu0 0.0
    %1690 = vmatprep.subr.mxu0 0.0
    %1691 = vmatpush1.msra.mxu0 0.0
    %1692 = vmatprep.subr.mxu0 0.0
    %1693 = vmatpush1.msra.mxu0 0.0
    %1694 = vmatprep.subr.mxu0 0.0
    %1695 = vmatpush1.msra.mxu0 0.0
    %1696 = vmatprep.subr.mxu0 0.0
    %1697 = vmatpush1.msra.mxu0 0.0
    %1698 = vmatprep.subr.mxu0 0.0
    %1699 = vmatpush1.msra.mxu0 0.0
    %1700 = vmatprep.subr.mxu0 0.0
    %1701 = vmatpush1.msra.mxu0 0.0
    %1702 = vmatprep.subr.mxu0 0.0
    %1703 = vmatpush1.msra.mxu0 0.0
    %1704 = vmatprep.subr.mxu0 0.0
    %1705 = vmatpush1.msra.mxu0 0.0
    %1706 = vmatprep.subr.mxu0 0.0
    %1707 = vmatpush1.msra.mxu0 0.0
    %1708 = vmatprep.subr.mxu0 0.0
    %1709 = vmatpush1.msra.mxu0 0.0
    %1710 = vmatprep.subr.mxu0 0.0
    %1711 = vmatpush1.msra.mxu0 0.0
    %1712 = vmatprep.subr.mxu0 0.0
    %1713 = vmatpush1.msra.mxu0 0.0
    %1714 = vmatprep.subr.mxu0 0.0
    %1715 = vmatpush1.msra.mxu0 0.0
    %1716 = vmatprep.subr.mxu0 0.0
    %1717 = vmatpush1.msra.mxu0 0.0
    %1718 = vmatprep.subr.mxu0 0.0
    %1719 = vmatpush1.msra.mxu0 0.0
    %1720 = vmatprep.subr.mxu0 0.0
    %1721 = vmatpush1.msra.mxu0 0.0
    %1722 = vmatprep.subr.mxu0 0.0
    %1723 = vmatpush1.msra.mxu0 0.0
    %1724 = vmatprep.subr.mxu0 0.0
    %1725 = vmatpush1.msra.mxu0 0.0
    %1726 = vmatprep.subr.mxu0 0.0
    %1727 = vmatpush1.msra.mxu0 0.0
    %1728 = vmatprep.subr.mxu0 0.0
    %1729 = vmatpush1.msra.mxu0 0.0
    %1730 = vmatprep.subr.mxu0 0.0
    %1731 = vmatpush1.msra.mxu0 0.0
    %1732 = vmatprep.subr.mxu0 0.0
    %1733 = vmatpush1.msra.mxu0 0.0
    %1734 = vmatprep.subr.mxu0 0.0
    %1735 = vmatpush1.msra.mxu0 0.0
    %1736 = vmatprep.subr.mxu0 0.0
    %1737 = vmatpush1.msra.mxu0 0.0
    %1738 = vmatprep.subr.mxu0 0.0
    %1739 = vmatpush1.msra.mxu0 0.0
    %1740 = vmatprep.subr.mxu0 0.0
    %1741 = vmatpush1.msra.mxu0 0.0
    %1742 = vmatprep.subr.mxu0 0.0
    %1743 = vmatpush1.msra.mxu0 0.0
    %1744 = vmatprep.subr.mxu0 0.0
    %1745 = vmatpush1.msra.mxu0 0.0
    %1746 = vmatprep.subr.mxu0 0.0
    %1747 = vmatpush1.msra.mxu0 0.0
    %1748 = vmatprep.subr.mxu0 0.0
    %1749 = vmatpush1.msra.mxu0 0.0
    %1750 = vmatprep.mubr.f32.mxu0 0.0
    %1751 = vmatmul.mubr.f32.gmra.mrb[0].mxu0 %v1684
    %v1752 = vpop.f32.mrb[0].mxu0
    %v1753 = vadd.f32 0.0, %v1752
    %v1754 = vpop.f32.mrb[0].mxu0
    %1755 = vdwg.mxu0
    %1757 = vrot.lane.b32.xlu0 %v1315, 32
    %v1758 = vpop.permute.xlu0 %1757
    %1761 = vrot.lane.b32.xlu0 %v1388, 64
    %v1762 = vpop.permute.xlu0 %1761
    %1765 = vrot.lane.b32.xlu0 %v1461, 96
    %v1766 = vpop.permute.xlu0 %1765
    %v1768 = vsel %vm474, %v1242, %v1758
    %vm1769 = vcmask 523264
    %v1770 = vsel %vm1769, %v1768, %v1762
    %vm1771 = vcmask 785408
    %v1772 = vsel %vm1771, %v1770, %v1766
    %1774 = vrot.lane.b32.xlu0 %v1607, 32
    %v1775 = vpop.permute.xlu0 %1774
    %1778 = vrot.lane.b32.xlu0 %v1680, 64
    %v1779 = vpop.permute.xlu0 %1778
    %1782 = vrot.lane.b32.xlu0 %v1753, 96
    %v1783 = vpop.permute.xlu0 %1782
    %v1785 = vsel %vm474, %v1534, %v1775
    %v1786 = vsel %vm1769, %v1785, %v1779
    %v1787 = vsel %vm1771, %v1786, %v1783
    %v1788 = vpack.c.bf16 %v1787, %v1772
    %v1790 = vlaneseq
    %v1791 = vshrl.u32 %v1790, 7
    %v1792 = vsub.s32 0, %v1791
    %v1793 = vrot.slane %v473, %v1792
    %v1811 = vunpack.c.l.b16 %v457
    %v1812 = vunpack.c.l.b16 %v458
    %v1813 = vunpack.c.l.b16 %v459
    %v1814 = vunpack.c.l.b16 %v460
    %v1815 = vunpack.c.l.b16 %v461
    %v1816 = vunpack.c.l.b16 %v462
    %v1817 = vunpack.c.l.b16 %v463
    %v1818 = vunpack.c.l.b16 %v464
    %v1819 = vunpack.c.l.b16 %v465
    %v1820 = vunpack.c.l.b16 %v466
    %v1821 = vunpack.c.l.b16 %v467
    %v1822 = vunpack.c.l.b16 %v468
    %v1823 = vunpack.c.l.b16 %v469
    %v1824 = vunpack.c.l.b16 %v470
    %v1825 = vunpack.c.l.b16 %v471
    %v1826 = vunpack.c.l.b16 %v472
    %v1827 = vpack.c.b16 %v1812, %v1811
    %v1828 = vpack.c.b16 %v1814, %v1813
    %v1829 = vpack.c.b16 %v1816, %v1815
    %v1830 = vpack.c.b16 %v1818, %v1817
    %v1831 = vpack.c.b16 %v1820, %v1819
    %v1832 = vpack.c.b16 %v1822, %v1821
    %v1833 = vpack.c.b16 %v1824, %v1823
    %v1834 = vpack.c.b16 %v1826, %v1825
    %1843 = vmatprep.subr.bf16.mxu0 0
    %1844 = vmatpush1.bf16.msra.mxu0 %v1827
    %1845 = vmatprep.subr.bf16.mxu0 0
    %1846 = vmatpush1.bf16.msra.mxu0 %v1828
    %1847 = vmatprep.subr.bf16.mxu0 0
    %1848 = vmatpush1.bf16.msra.mxu0 %v1829
    %1849 = vmatprep.subr.bf16.mxu0 0
    %1850 = vmatpush1.bf16.msra.mxu0 %v1830
    %1851 = vmatprep.subr.bf16.mxu0 0
    %1852 = vmatpush1.bf16.msra.mxu0 %v1831
    %1853 = vmatprep.subr.bf16.mxu0 0
    %1854 = vmatpush1.bf16.msra.mxu0 %v1832
    %1855 = vmatprep.subr.bf16.mxu0 0
    %1856 = vmatpush1.bf16.msra.mxu0 %v1833
    %1857 = vmatprep.subr.bf16.mxu0 0
    %1858 = vmatpush1.bf16.msra.mxu0 %v1834
    %1859 = vmatprep.subr.bf16.mxu0 0
    %1860 = vmatpush1.bf16.msra.mxu0 0
    %1861 = vmatprep.subr.bf16.mxu0 0
    %1862 = vmatpush1.bf16.msra.mxu0 0
    %1863 = vmatprep.subr.bf16.mxu0 0
    %1864 = vmatpush1.bf16.msra.mxu0 0
    %1865 = vmatprep.subr.bf16.mxu0 0
    %1866 = vmatpush1.bf16.msra.mxu0 0
    %1867 = vmatprep.subr.bf16.mxu0 0
    %1868 = vmatpush1.bf16.msra.mxu0 0
    %1869 = vmatprep.subr.bf16.mxu0 0
    %1870 = vmatpush1.bf16.msra.mxu0 0
    %1871 = vmatprep.subr.bf16.mxu0 0
    %1872 = vmatpush1.bf16.msra.mxu0 0
    %1873 = vmatprep.subr.bf16.mxu0 0
    %1874 = vmatpush1.bf16.msra.mxu0 0
    %1875 = vmatprep.mubr.bf16.mxu0 0
    %1876 = vmatmul.mubr.bf16.gmra.mrb[0].mxu0 %v1788
    %v1877 = vpop.f32.mrb[0].mxu0
    %v1878 = vadd.f32 %v1793, %v1877
    %v1879 = vpop.f32.mrb[0].mxu0
    %v1880 = vpop.f32.mrb[0].mxu0
    %v1881 = vadd.f32 %v1793, %v1880
    %v1882 = vpop.f32.mrb[0].mxu0
    %1883 = vdwg.mxu0
    %v1884 = vld [vmem:[#allocation8] sm:$0xff]
    %v1885 = vld [vmem:[#allocation8 + $0x8] sm:$0xf]
    %v1886 = vld [vmem:[#allocation8 + $0x28] sm:$0xff]
    %v1887 = vld [vmem:[#allocation8 + $0x30] sm:$0xf]
    %v1888 = vld [vmem:[#allocation8 + $0x50] sm:$0xff]
    %v1889 = vld [vmem:[#allocation8 + $0x58] sm:$0xf]
    %v1890 = vld [vmem:[#allocation8 + $0x78] sm:$0xff]
    %v1891 = vld [vmem:[#allocation8 + $0x80] sm:$0xf]
    %v1892 = vld [vmem:[#allocation8 + $0xa0] sm:$0xff]
    %v1893 = vld [vmem:[#allocation8 + $0xa8] sm:$0xf]
    %v1894 = vld [vmem:[#allocation8 + $0xc8] sm:$0xff]
    %v1895 = vld [vmem:[#allocation8 + $0xd0] sm:$0xf]
    %v1896 = vld [vmem:[#allocation8 + $0xf0] sm:$0xff]
    %v1897 = vld [vmem:[#allocation8 + $0xf8] sm:$0xf]
    %v1898 = vld [vmem:[#allocation8 + $0x118] sm:$0xff]
    %v1899 = vld [vmem:[#allocation8 + $0x120] sm:$0xf]
    %v1900 = vld [vmem:[#allocation8 + $0x140] sm:$0xff]
    %v1901 = vld [vmem:[#allocation8 + $0x148] sm:$0xf]
    %v1902 = vld [vmem:[#allocation8 + $0x168] sm:$0xff]
    %v1903 = vld [vmem:[#allocation8 + $0x170] sm:$0xf]
    %v1904 = vld [vmem:[#allocation8 + $0x190] sm:$0xff]
    %v1905 = vld [vmem:[#allocation8 + $0x198] sm:$0xf]
    %v1906 = vld [vmem:[#allocation8 + $0x1b8] sm:$0xff]
    %v1907 = vld [vmem:[#allocation8 + $0x1c0] sm:$0xf]
    %v1908 = vld [vmem:[#allocation8 + $0x1e0] sm:$0xff]
    %v1909 = vld [vmem:[#allocation8 + $0x1e8] sm:$0xf]
    %v1910 = vld [vmem:[#allocation8 + $0x208] sm:$0xff]
    %v1911 = vld [vmem:[#allocation8 + $0x210] sm:$0xf]
    %v1912 = vld [vmem:[#allocation8 + $0x230] sm:$0xff]
    %v1913 = vld [vmem:[#allocation8 + $0x238] sm:$0xf]
    %v1914 = vld [vmem:[#allocation8 + $0x258] sm:$0xff]
    %v1915 = vld [vmem:[#allocation8 + $0x260] sm:$0xf]
    %v1916 = vpack.c.bf16 %v1881, %v1878
    %v1917 = vld [vmem:[%s6] sm:$0x7]
    %v1919 = vlaneseq
    %v1920 = vshrl.u32 %v1919, 7
    %v1921 = vsub.s32 0, %v1920
    %v1922 = vrot.slane %v1917, %v1921
    %v1923 = vlaneseq
    %v1924 = vshrl.u32 %v1923, 7
    %v1925 = vsub.s32 1, %v1924
    %v1926 = vrot.slane %v1917, %v1925
    %v1927 = vlaneseq
    %v1928 = vshrl.u32 %v1927, 7
    %v1929 = vsub.s32 2, %v1928
    %v1930 = vrot.slane %v1917, %v1929
    %v1966 = vunpack.c.l.b16 %v1884
    %v1967 = vunpack.c.h.b16 %v1884
    %v1968 = vunpack.c.l.b16 %v1885
    %v1969 = vunpack.c.l.b16 %v1886
    %v1970 = vunpack.c.h.b16 %v1886
    %v1971 = vunpack.c.l.b16 %v1887
    %v1972 = vunpack.c.l.b16 %v1888
    %v1973 = vunpack.c.h.b16 %v1888
    %v1974 = vunpack.c.l.b16 %v1889
    %v1975 = vunpack.c.l.b16 %v1890
    %v1976 = vunpack.c.h.b16 %v1890
    %v1977 = vunpack.c.l.b16 %v1891
    %v1978 = vunpack.c.l.b16 %v1892
    %v1979 = vunpack.c.h.b16 %v1892
    %v1980 = vunpack.c.l.b16 %v1893
    %v1981 = vunpack.c.l.b16 %v1894
    %v1982 = vunpack.c.h.b16 %v1894
    %v1983 = vunpack.c.l.b16 %v1895
    %v1984 = vunpack.c.l.b16 %v1896
    %v1985 = vunpack.c.h.b16 %v1896
    %v1986 = vunpack.c.l.b16 %v1897
    %v1987 = vunpack.c.l.b16 %v1898
    %v1988 = vunpack.c.h.b16 %v1898
    %v1989 = vunpack.c.l.b16 %v1899
    %v1990 = vunpack.c.l.b16 %v1900
    %v1991 = vunpack.c.h.b16 %v1900
    %v1992 = vunpack.c.l.b16 %v1901
    %v1993 = vunpack.c.l.b16 %v1902
    %v1994 = vunpack.c.h.b16 %v1902
    %v1995 = vunpack.c.l.b16 %v1903
    %v1996 = vunpack.c.l.b16 %v1904
    %v1997 = vunpack.c.h.b16 %v1904
    %v1998 = vunpack.c.l.b16 %v1905
    %v1999 = vunpack.c.l.b16 %v1906
    %v2000 = vunpack.c.h.b16 %v1906
    %v2001 = vunpack.c.l.b16 %v1907
    %v2002 = vunpack.c.l.b16 %v1908
    %v2003 = vunpack.c.h.b16 %v1908
    %v2004 = vunpack.c.l.b16 %v1909
    %v2005 = vunpack.c.l.b16 %v1910
    %v2006 = vunpack.c.h.b16 %v1910
    %v2007 = vunpack.c.l.b16 %v1911
    %v2008 = vunpack.c.l.b16 %v1912
    %v2009 = vunpack.c.h.b16 %v1912
    %v2010 = vunpack.c.l.b16 %v1913
    %v2011 = vunpack.c.l.b16 %v1914
    %v2012 = vunpack.c.h.b16 %v1914
    %v2013 = vunpack.c.l.b16 %v1915
    %v2014 = vpack.c.b16 %v1969, %v1966
    %v2015 = vpack.c.b16 %v1970, %v1967
    %v2016 = vpack.c.b16 %v1971, %v1968
    %v2017 = vpack.c.b16 %v1975, %v1972
    %v2018 = vpack.c.b16 %v1976, %v1973
    %v2019 = vpack.c.b16 %v1977, %v1974
    %v2020 = vpack.c.b16 %v1981, %v1978
    %v2021 = vpack.c.b16 %v1982, %v1979
    %v2022 = vpack.c.b16 %v1983, %v1980
    %v2023 = vpack.c.b16 %v1987, %v1984
    %v2024 = vpack.c.b16 %v1988, %v1985
    %v2025 = vpack.c.b16 %v1989, %v1986
    %v2026 = vpack.c.b16 %v1993, %v1990
    %v2027 = vpack.c.b16 %v1994, %v1991
    %v2028 = vpack.c.b16 %v1995, %v1992
    %v2029 = vpack.c.b16 %v1999, %v1996
    %v2030 = vpack.c.b16 %v2000, %v1997
    %v2031 = vpack.c.b16 %v2001, %v1998
    %v2032 = vpack.c.b16 %v2005, %v2002
    %v2033 = vpack.c.b16 %v2006, %v2003
    %v2034 = vpack.c.b16 %v2007, %v2004
    %v2035 = vpack.c.b16 %v2011, %v2008
    %v2036 = vpack.c.b16 %v2012, %v2009
    %v2037 = vpack.c.b16 %v2013, %v2010
    %2062 = vmatprep.subr.bf16.mxu0 %v2015
    %2063 = vmatpush1.bf16.msra.mxu0 %v2014
    %2064 = vmatprep.subr.bf16.mxu0 %v2018
    %2065 = vmatpush1.bf16.msra.mxu0 %v2017
    %2066 = vmatprep.subr.bf16.mxu0 %v2021
    %2067 = vmatpush1.bf16.msra.mxu0 %v2020
    %2068 = vmatprep.subr.bf16.mxu0 %v2024
    %2069 = vmatpush1.bf16.msra.mxu0 %v2023
    %2070 = vmatprep.subr.bf16.mxu0 %v2027
    %2071 = vmatpush1.bf16.msra.mxu0 %v2026
    %2072 = vmatprep.subr.bf16.mxu0 %v2030
    %2073 = vmatpush1.bf16.msra.mxu0 %v2029
    %2074 = vmatprep.subr.bf16.mxu0 %v2033
    %2075 = vmatpush1.bf16.msra.mxu0 %v2032
    %2076 = vmatprep.subr.bf16.mxu0 %v2036
    %2077 = vmatpush1.bf16.msra.mxu0 %v2035
    %2078 = vmatprep.subr.bf16.mxu0 0
    %2079 = vmatpush1.bf16.msra.mxu0 0
    %2080 = vmatprep.subr.bf16.mxu0 0
    %2081 = vmatpush1.bf16.msra.mxu0 0
    %2082 = vmatprep.subr.bf16.mxu0 0
    %2083 = vmatpush1.bf16.msra.mxu0 0
    %2084 = vmatprep.subr.bf16.mxu0 0
    %2085 = vmatpush1.bf16.msra.mxu0 0
    %2086 = vmatprep.subr.bf16.mxu0 0
    %2087 = vmatpush1.bf16.msra.mxu0 0
    %2088 = vmatprep.subr.bf16.mxu0 0
    %2089 = vmatpush1.bf16.msra.mxu0 0
    %2090 = vmatprep.subr.bf16.mxu0 0
    %2091 = vmatpush1.bf16.msra.mxu0 0
    %2092 = vmatprep.subr.bf16.mxu0 0
    %2093 = vmatpush1.bf16.msra.mxu0 0
    %2094 = vmatprep.mubr.bf16.mxu0 0
    %2095 = vmatmul.mubr.bf16.gmra.mrb[0].mxu0 %v1916
    %v2096 = vpop.f32.mrb[0].mxu0
    %v2097 = vadd.f32 %v1922, %v2096
    %v2098 = vpop.f32.mrb[0].mxu0
    %v2099 = vadd.f32 %v1926, %v2098
    %v2100 = vpop.f32.mrb[0].mxu0
    %v2101 = vadd.f32 %v1922, %v2100
    %v2102 = vpop.f32.mrb[0].mxu0
    %v2103 = vadd.f32 %v1926, %v2102
    %2104 = vdwg.mxu0
    %2105 = vmatprep.subr.bf16.mxu0 0
    %2106 = vmatpush1.bf16.msra.mxu0 %v2016
    %2107 = vmatprep.subr.bf16.mxu0 0
    %2108 = vmatpush1.bf16.msra.mxu0 %v2019
    %2109 = vmatprep.subr.bf16.mxu0 0
    %2110 = vmatpush1.bf16.msra.mxu0 %v2022
    %2111 = vmatprep.subr.bf16.mxu0 0
    %2112 = vmatpush1.bf16.msra.mxu0 %v2025
    %2113 = vmatprep.subr.bf16.mxu0 0
    %2114 = vmatpush1.bf16.msra.mxu0 %v2028
    %2115 = vmatprep.subr.bf16.mxu0 0
    %2116 = vmatpush1.bf16.msra.mxu0 %v2031
    %2117 = vmatprep.subr.bf16.mxu0 0
    %2118 = vmatpush1.bf16.msra.mxu0 %v2034
    %2119 = vmatprep.subr.bf16.mxu0 0
    %2120 = vmatpush1.bf16.msra.mxu0 %v2037
    %2121 = vmatprep.subr.bf16.mxu0 0
    %2122 = vmatpush1.bf16.msra.mxu0 0
    %2123 = vmatprep.subr.bf16.mxu0 0
    %2124 = vmatpush1.bf16.msra.mxu0 0
    %2125 = vmatprep.subr.bf16.mxu0 0
    %2126 = vmatpush1.bf16.msra.mxu0 0
    %2127 = vmatprep.subr.bf16.mxu0 0
    %2128 = vmatpush1.bf16.msra.mxu0 0
    %2129 = vmatprep.subr.bf16.mxu0 0
    %2130 = vmatpush1.bf16.msra.mxu0 0
    %2131 = vmatprep.subr.bf16.mxu0 0
    %2132 = vmatpush1.bf16.msra.mxu0 0
    %2133 = vmatprep.subr.bf16.mxu0 0
    %2134 = vmatpush1.bf16.msra.mxu0 0
    %2135 = vmatprep.subr.bf16.mxu0 0
    %2136 = vmatpush1.bf16.msra.mxu0 0
    %2137 = vmatprep.mubr.bf16.mxu0 0
    %2138 = vmatmul.mubr.bf16.gmra.mrb[0].mxu0 %v1916
    %v2139 = vpop.f32.mrb[0].mxu0
    %v2140 = vadd.f32 %v1930, %v2139
    %v2141 = vpop.f32.mrb[0].mxu0
    %v2142 = vpop.f32.mrb[0].mxu0
    %v2143 = vadd.f32 %v1930, %v2142
    %v2144 = vpop.f32.mrb[0].mxu0
    %2145 = vdwg.mxu0
    %2147 = vrot.lane.b32.xlu0 %v2097, 96
    %v2148 = vpop.permute.xlu0 %2147
    %2149 = vrot.lane.b32.xlu0 %v2097, 64
    %v2150 = vpop.permute.xlu0 %2149
    %2151 = vrot.lane.b32.xlu0 %v2097, 32
    %v2152 = vpop.permute.xlu0 %2151
    %2154 = vrot.lane.b32.xlu0 %v2101, 96
    %v2155 = vpop.permute.xlu0 %2154
    %2156 = vrot.lane.b32.xlu0 %v2101, 64
    %v2157 = vpop.permute.xlu0 %2156
    %2158 = vrot.lane.b32.xlu0 %v2101, 32
    %v2159 = vpop.permute.xlu0 %2158
    %2161 = vrot.lane.b32.xlu0 %v2099, 96
    %v2162 = vpop.permute.xlu0 %2161
    %2163 = vrot.lane.b32.xlu0 %v2099, 64
    %v2164 = vpop.permute.xlu0 %2163
    %2165 = vrot.lane.b32.xlu0 %v2099, 32
    %v2166 = vpop.permute.xlu0 %2165
    %2168 = vrot.lane.b32.xlu0 %v2103, 96
    %v2169 = vpop.permute.xlu0 %2168
    %2170 = vrot.lane.b32.xlu0 %v2103, 64
    %v2171 = vpop.permute.xlu0 %2170
    %2172 = vrot.lane.b32.xlu0 %v2103, 32
    %v2173 = vpop.permute.xlu0 %2172
    %2175 = vrot.lane.b32.xlu0 %v2140, 96
    %v2176 = vpop.permute.xlu0 %2175
    %2178 = vrot.lane.b32.xlu0 %v2140, 64
    %v2179 = vpop.permute.xlu0 %2178
    %2181 = vrot.lane.b32.xlu0 %v2140, 32
    %v2182 = vpop.permute.xlu0 %2181
    %2185 = vrot.lane.b32.xlu0 %v2143, 96
    %v2186 = vpop.permute.xlu0 %2185
    %2188 = vrot.lane.b32.xlu0 %v2143, 64
    %v2189 = vpop.permute.xlu0 %2188
    %2191 = vrot.lane.b32.xlu0 %v2143, 32
    %v2192 = vpop.permute.xlu0 %2191
    %v2194 = vld [vmem:[#allocation8 + $0xc] sm:$0xf]
    %v2195 = vld [vmem:[#allocation8 + $0x34] sm:$0xf]
    %v2196 = vld [vmem:[#allocation8 + $0x5c] sm:$0xf]
    %v2197 = vld [vmem:[#allocation8 + $0x84] sm:$0xf]
    %v2198 = vld [vmem:[#allocation8 + $0xac] sm:$0xf]
    %v2199 = vld [vmem:[#allocation8 + $0xd4] sm:$0xf]
    %v2200 = vld [vmem:[#allocation8 + $0xfc] sm:$0xf]
    %v2201 = vld [vmem:[#allocation8 + $0x124] sm:$0xf]
    %v2202 = vld [vmem:[#allocation8 + $0x14c] sm:$0xf]
    %v2203 = vld [vmem:[#allocation8 + $0x174] sm:$0xf]
    %v2204 = vld [vmem:[#allocation8 + $0x19c] sm:$0xf]
    %v2205 = vld [vmem:[#allocation8 + $0x1c4] sm:$0xf]
    %v2206 = vld [vmem:[#allocation8 + $0x1ec] sm:$0xf]
    %v2207 = vld [vmem:[#allocation8 + $0x214] sm:$0xf]
    %v2208 = vld [vmem:[#allocation8 + $0x23c] sm:$0xf]
    %v2209 = vld [vmem:[#allocation8 + $0x264] sm:$0xf]
    %v2210 = vld [vmem:[%s6 + $0x3] sm:$0x1]
    %v2211 = vsel %vm474, %v2097, 0
    %v2213 = vsel %vm474, %v2099, 0
    %2215 = vmatprep.subr.mxu0 0.0
    %2216 = vmatpush1.xpose.msra.mxu0 %v2213
    %2217 = vmatprep.subr.mxu0 0.0
    %2218 = vmatpush1.xpose.msra.mxu0 0.0
    %2219 = vmatprep.subr.mxu0 0.0
    %2220 = vmatpush1.xpose.msra.mxu0 0.0
    %2221 = vmatprep.subr.mxu0 0.0
    %2222 = vmatpush1.xpose.msra.mxu0 0.0
    %2223 = vmatprep.subr.mxu0 0.0
    %2224 = vmatpush1.xpose.msra.mxu0 0.0
    %2225 = vmatprep.subr.mxu0 0.0
    %2226 = vmatpush1.xpose.msra.mxu0 0.0
    %2227 = vmatprep.subr.mxu0 0.0
    %2228 = vmatpush1.xpose.msra.mxu0 0.0
    %2229 = vmatprep.subr.mxu0 0.0
    %2230 = vmatpush1.xpose.msra.mxu0 0.0
    %2231 = vmatprep.subr.mxu0 0.0
    %2232 = vmatpush1.xpose.msra.mxu0 0.0
    %2233 = vmatprep.subr.mxu0 0.0
    %2234 = vmatpush1.xpose.msra.mxu0 0.0
    %2235 = vmatprep.subr.mxu0 0.0
    %2236 = vmatpush1.xpose.msra.mxu0 0.0
    %2237 = vmatprep.subr.mxu0 0.0
    %2238 = vmatpush1.xpose.msra.mxu0 0.0
    %2239 = vmatprep.subr.mxu0 0.0
    %2240 = vmatpush1.xpose.msra.mxu0 0.0
    %2241 = vmatprep.subr.mxu0 0.0
    %2242 = vmatpush1.xpose.msra.mxu0 0.0
    %2243 = vmatprep.subr.mxu0 0.0
    %2244 = vmatpush1.xpose.msra.mxu0 0.0
    %2245 = vmatprep.subr.mxu0 0.0
    %2246 = vmatpush1.xpose.msra.mxu0 0.0
    %2247 = vmatprep.subr.mxu0 0.0
    %2248 = vmatpush1.xpose.msra.mxu0 0.0
    %2249 = vmatprep.subr.mxu0 0.0
    %2250 = vmatpush1.xpose.msra.mxu0 0.0
    %2251 = vmatprep.subr.mxu0 0.0
    %2252 = vmatpush1.xpose.msra.mxu0 0.0
    %2253 = vmatprep.subr.mxu0 0.0
    %2254 = vmatpush1.xpose.msra.mxu0 0.0
    %2255 = vmatprep.subr.mxu0 0.0
    %2256 = vmatpush1.xpose.msra.mxu0 0.0
    %2257 = vmatprep.subr.mxu0 0.0
    %2258 = vmatpush1.xpose.msra.mxu0 0.0
    %2259 = vmatprep.subr.mxu0 0.0
    %2260 = vmatpush1.xpose.msra.mxu0 0.0
    %2261 = vmatprep.subr.mxu0 0.0
    %2262 = vmatpush1.xpose.msra.mxu0 0.0
    %2263 = vmatprep.subr.mxu0 0.0
    %2264 = vmatpush1.xpose.msra.mxu0 0.0
    %2265 = vmatprep.subr.mxu0 0.0
    %2266 = vmatpush1.xpose.msra.mxu0 0.0
    %2267 = vmatprep.subr.mxu0 0.0
    %2268 = vmatpush1.xpose.msra.mxu0 0.0
    %2269 = vmatprep.subr.mxu0 0.0
    %2270 = vmatpush1.xpose.msra.mxu0 0.0
    %2271 = vmatprep.subr.mxu0 0.0
    %2272 = vmatpush1.xpose.msra.mxu0 0.0
    %2273 = vmatprep.subr.mxu0 0.0
    %2274 = vmatpush1.xpose.msra.mxu0 0.0
    %2275 = vmatprep.subr.mxu0 0.0
    %2276 = vmatpush1.xpose.msra.mxu0 0.0
    %2277 = vmatprep.subr.mxu0 0.0
    %2278 = vmatpush1.xpose.msra.mxu0 0.0
    %2279 = vmatprep.mubr.f32.mxu0 0.0
    %2280 = vmatmul.mubr.f32.gmra.mrb[0].mxu0 %v2211
    %v2281 = vpop.f32.mrb[0].mxu0
    %v2282 = vadd.f32 0.0, %v2281
    %v2283 = vpop.f32.mrb[0].mxu0
    %2284 = vdwg.mxu0
    %v2285 = vsel %vm474, %v2148, 0
    %v2287 = vsel %vm474, %v2162, 0
    %2289 = vmatprep.subr.mxu0 0.0
    %2290 = vmatpush1.xpose.msra.mxu0 %v2287
    %2291 = vmatprep.subr.mxu0 0.0
    %2292 = vmatpush1.xpose.msra.mxu0 0.0
    %2293 = vmatprep.subr.mxu0 0.0
    %2294 = vmatpush1.xpose.msra.mxu0 0.0
    %2295 = vmatprep.subr.mxu0 0.0
    %2296 = vmatpush1.xpose.msra.mxu0 0.0
    %2297 = vmatprep.subr.mxu0 0.0
    %2298 = vmatpush1.xpose.msra.mxu0 0.0
    %2299 = vmatprep.subr.mxu0 0.0
    %2300 = vmatpush1.xpose.msra.mxu0 0.0
    %2301 = vmatprep.subr.mxu0 0.0
    %2302 = vmatpush1.xpose.msra.mxu0 0.0
    %2303 = vmatprep.subr.mxu0 0.0
    %2304 = vmatpush1.xpose.msra.mxu0 0.0
    %2305 = vmatprep.subr.mxu0 0.0
    %2306 = vmatpush1.xpose.msra.mxu0 0.0
    %2307 = vmatprep.subr.mxu0 0.0
    %2308 = vmatpush1.xpose.msra.mxu0 0.0
    %2309 = vmatprep.subr.mxu0 0.0
    %2310 = vmatpush1.xpose.msra.mxu0 0.0
    %2311 = vmatprep.subr.mxu0 0.0
    %2312 = vmatpush1.xpose.msra.mxu0 0.0
    %2313 = vmatprep.subr.mxu0 0.0
    %2314 = vmatpush1.xpose.msra.mxu0 0.0
    %2315 = vmatprep.subr.mxu0 0.0
    %2316 = vmatpush1.xpose.msra.mxu0 0.0
    %2317 = vmatprep.subr.mxu0 0.0
    %2318 = vmatpush1.xpose.msra.mxu0 0.0
    %2319 = vmatprep.subr.mxu0 0.0
    %2320 = vmatpush1.xpose.msra.mxu0 0.0
    %2321 = vmatprep.subr.mxu0 0.0
    %2322 = vmatpush1.xpose.msra.mxu0 0.0
    %2323 = vmatprep.subr.mxu0 0.0
    %2324 = vmatpush1.xpose.msra.mxu0 0.0
    %2325 = vmatprep.subr.mxu0 0.0
    %2326 = vmatpush1.xpose.msra.mxu0 0.0
    %2327 = vmatprep.subr.mxu0 0.0
    %2328 = vmatpush1.xpose.msra.mxu0 0.0
    %2329 = vmatprep.subr.mxu0 0.0
    %2330 = vmatpush1.xpose.msra.mxu0 0.0
    %2331 = vmatprep.subr.mxu0 0.0
    %2332 = vmatpush1.xpose.msra.mxu0 0.0
    %2333 = vmatprep.subr.mxu0 0.0
    %2334 = vmatpush1.xpose.msra.mxu0 0.0
    %2335 = vmatprep.subr.mxu0 0.0
    %2336 = vmatpush1.xpose.msra.mxu0 0.0
    %2337 = vmatprep.subr.mxu0 0.0
    %2338 = vmatpush1.xpose.msra.mxu0 0.0
    %2339 = vmatprep.subr.mxu0 0.0
    %2340 = vmatpush1.xpose.msra.mxu0 0.0
    %2341 = vmatprep.subr.mxu0 0.0
    %2342 = vmatpush1.xpose.msra.mxu0 0.0
    %2343 = vmatprep.subr.mxu0 0.0
    %2344 = vmatpush1.xpose.msra.mxu0 0.0
    %2345 = vmatprep.subr.mxu0 0.0
    %2346 = vmatpush1.xpose.msra.mxu0 0.0
    %2347 = vmatprep.subr.mxu0 0.0
    %2348 = vmatpush1.xpose.msra.mxu0 0.0
    %2349 = vmatprep.subr.mxu0 0.0
    %2350 = vmatpush1.xpose.msra.mxu0 0.0
    %2351 = vmatprep.subr.mxu0 0.0
    %2352 = vmatpush1.xpose.msra.mxu0 0.0
    %2353 = vmatprep.mubr.f32.mxu0 0.0
    %2354 = vmatmul.mubr.f32.gmra.mrb[0].mxu0 %v2285
    %v2355 = vpop.f32.mrb[0].mxu0
    %v2356 = vadd.f32 0.0, %v2355
    %v2357 = vpop.f32.mrb[0].mxu0
    %2358 = vdwg.mxu0
    %v2359 = vsel %vm474, %v2150, 0
    %v2361 = vsel %vm474, %v2164, 0
    %2363 = vmatprep.subr.mxu0 0.0
    %2364 = vmatpush1.xpose.msra.mxu0 %v2361
    %2365 = vmatprep.subr.mxu0 0.0
    %2366 = vmatpush1.xpose.msra.mxu0 0.0
    %2367 = vmatprep.subr.mxu0 0.0
    %2368 = vmatpush1.xpose.msra.mxu0 0.0
    %2369 = vmatprep.subr.mxu0 0.0
    %2370 = vmatpush1.xpose.msra.mxu0 0.0
    %2371 = vmatprep.subr.mxu0 0.0
    %2372 = vmatpush1.xpose.msra.mxu0 0.0
    %2373 = vmatprep.subr.mxu0 0.0
    %2374 = vmatpush1.xpose.msra.mxu0 0.0
    %2375 = vmatprep.subr.mxu0 0.0
    %2376 = vmatpush1.xpose.msra.mxu0 0.0
    %2377 = vmatprep.subr.mxu0 0.0
    %2378 = vmatpush1.xpose.msra.mxu0 0.0
    %2379 = vmatprep.subr.mxu0 0.0
    %2380 = vmatpush1.xpose.msra.mxu0 0.0
    %2381 = vmatprep.subr.mxu0 0.0
    %2382 = vmatpush1.xpose.msra.mxu0 0.0
    %2383 = vmatprep.subr.mxu0 0.0
    %2384 = vmatpush1.xpose.msra.mxu0 0.0
    %2385 = vmatprep.subr.mxu0 0.0
    %2386 = vmatpush1.xpose.msra.mxu0 0.0
    %2387 = vmatprep.subr.mxu0 0.0
    %2388 = vmatpush1.xpose.msra.mxu0 0.0
    %2389 = vmatprep.subr.mxu0 0.0
    %2390 = vmatpush1.xpose.msra.mxu0 0.0
    %2391 = vmatprep.subr.mxu0 0.0
    %2392 = vmatpush1.xpose.msra.mxu0 0.0
    %2393 = vmatprep.subr.mxu0 0.0
    %2394 = vmatpush1.xpose.msra.mxu0 0.0
    %2395 = vmatprep.subr.mxu0 0.0
    %2396 = vmatpush1.xpose.msra.mxu0 0.0
    %2397 = vmatprep.subr.mxu0 0.0
    %2398 = vmatpush1.xpose.msra.mxu0 0.0
    %2399 = vmatprep.subr.mxu0 0.0
    %2400 = vmatpush1.xpose.msra.mxu0 0.0
    %2401 = vmatprep.subr.mxu0 0.0
    %2402 = vmatpush1.xpose.msra.mxu0 0.0
    %2403 = vmatprep.subr.mxu0 0.0
    %2404 = vmatpush1.xpose.msra.mxu0 0.0
    %2405 = vmatprep.subr.mxu0 0.0
    %2406 = vmatpush1.xpose.msra.mxu0 0.0
    %2407 = vmatprep.subr.mxu0 0.0
    %2408 = vmatpush1.xpose.msra.mxu0 0.0
    %2409 = vmatprep.subr.mxu0 0.0
    %2410 = vmatpush1.xpose.msra.mxu0 0.0
    %2411 = vmatprep.subr.mxu0 0.0
    %2412 = vmatpush1.xpose.msra.mxu0 0.0
    %2413 = vmatprep.subr.mxu0 0.0
    %2414 = vmatpush1.xpose.msra.mxu0 0.0
    %2415 = vmatprep.subr.mxu0 0.0
    %2416 = vmatpush1.xpose.msra.mxu0 0.0
    %2417 = vmatprep.subr.mxu0 0.0
    %2418 = vmatpush1.xpose.msra.mxu0 0.0
    %2419 = vmatprep.subr.mxu0 0.0
    %2420 = vmatpush1.xpose.msra.mxu0 0.0
    %2421 = vmatprep.subr.mxu0 0.0
    %2422 = vmatpush1.xpose.msra.mxu0 0.0
    %2423 = vmatprep.subr.mxu0 0.0
    %2424 = vmatpush1.xpose.msra.mxu0 0.0
    %2425 = vmatprep.subr.mxu0 0.0
    %2426 = vmatpush1.xpose.msra.mxu0 0.0
    %2427 = vmatprep.mubr.f32.mxu0 0.0
    %2428 = vmatmul.mubr.f32.gmra.mrb[0].mxu0 %v2359
    %v2429 = vpop.f32.mrb[0].mxu0
    %v2430 = vadd.f32 0.0, %v2429
    %v2431 = vpop.f32.mrb[0].mxu0
    %2432 = vdwg.mxu0
    %v2433 = vsel %vm474, %v2152, 0
    %v2435 = vsel %vm474, %v2166, 0
    %2437 = vmatprep.subr.mxu0 0.0
    %2438 = vmatpush1.xpose.msra.mxu0 %v2435
    %2439 = vmatprep.subr.mxu0 0.0
    %2440 = vmatpush1.xpose.msra.mxu0 0.0
    %2441 = vmatprep.subr.mxu0 0.0
    %2442 = vmatpush1.xpose.msra.mxu0 0.0
    %2443 = vmatprep.subr.mxu0 0.0
    %2444 = vmatpush1.xpose.msra.mxu0 0.0
    %2445 = vmatprep.subr.mxu0 0.0
    %2446 = vmatpush1.xpose.msra.mxu0 0.0
    %2447 = vmatprep.subr.mxu0 0.0
    %2448 = vmatpush1.xpose.msra.mxu0 0.0
    %2449 = vmatprep.subr.mxu0 0.0
    %2450 = vmatpush1.xpose.msra.mxu0 0.0
    %2451 = vmatprep.subr.mxu0 0.0
    %2452 = vmatpush1.xpose.msra.mxu0 0.0
    %2453 = vmatprep.subr.mxu0 0.0
    %2454 = vmatpush1.xpose.msra.mxu0 0.0
    %2455 = vmatprep.subr.mxu0 0.0
    %2456 = vmatpush1.xpose.msra.mxu0 0.0
    %2457 = vmatprep.subr.mxu0 0.0
    %2458 = vmatpush1.xpose.msra.mxu0 0.0
    %2459 = vmatprep.subr.mxu0 0.0
    %2460 = vmatpush1.xpose.msra.mxu0 0.0
    %2461 = vmatprep.subr.mxu0 0.0
    %2462 = vmatpush1.xpose.msra.mxu0 0.0
    %2463 = vmatprep.subr.mxu0 0.0
    %2464 = vmatpush1.xpose.msra.mxu0 0.0
    %2465 = vmatprep.subr.mxu0 0.0
    %2466 = vmatpush1.xpose.msra.mxu0 0.0
    %2467 = vmatprep.subr.mxu0 0.0
    %2468 = vmatpush1.xpose.msra.mxu0 0.0
    %2469 = vmatprep.subr.mxu0 0.0
    %2470 = vmatpush1.xpose.msra.mxu0 0.0
    %2471 = vmatprep.subr.mxu0 0.0
    %2472 = vmatpush1.xpose.msra.mxu0 0.0
    %2473 = vmatprep.subr.mxu0 0.0
    %2474 = vmatpush1.xpose.msra.mxu0 0.0
    %2475 = vmatprep.subr.mxu0 0.0
    %2476 = vmatpush1.xpose.msra.mxu0 0.0
    %2477 = vmatprep.subr.mxu0 0.0
    %2478 = vmatpush1.xpose.msra.mxu0 0.0
    %2479 = vmatprep.subr.mxu0 0.0
    %2480 = vmatpush1.xpose.msra.mxu0 0.0
    %2481 = vmatprep.subr.mxu0 0.0
    %2482 = vmatpush1.xpose.msra.mxu0 0.0
    %2483 = vmatprep.subr.mxu0 0.0
    %2484 = vmatpush1.xpose.msra.mxu0 0.0
    %2485 = vmatprep.subr.mxu0 0.0
    %2486 = vmatpush1.xpose.msra.mxu0 0.0
    %2487 = vmatprep.subr.mxu0 0.0
    %2488 = vmatpush1.xpose.msra.mxu0 0.0
    %2489 = vmatprep.subr.mxu0 0.0
    %2490 = vmatpush1.xpose.msra.mxu0 0.0
    %2491 = vmatprep.subr.mxu0 0.0
    %2492 = vmatpush1.xpose.msra.mxu0 0.0
    %2493 = vmatprep.subr.mxu0 0.0
    %2494 = vmatpush1.xpose.msra.mxu0 0.0
    %2495 = vmatprep.subr.mxu0 0.0
    %2496 = vmatpush1.xpose.msra.mxu0 0.0
    %2497 = vmatprep.subr.mxu0 0.0
    %2498 = vmatpush1.xpose.msra.mxu0 0.0
    %2499 = vmatprep.subr.mxu0 0.0
    %2500 = vmatpush1.xpose.msra.mxu0 0.0
    %2501 = vmatprep.mubr.f32.mxu0 0.0
    %2502 = vmatmul.mubr.f32.gmra.mrb[0].mxu0 %v2433
    %v2503 = vpop.f32.mrb[0].mxu0
    %v2504 = vadd.f32 0.0, %v2503
    %v2505 = vpop.f32.mrb[0].mxu0
    %2506 = vdwg.mxu0
    %v2507 = vsel %vm474, %v2101, 0
    %v2509 = vsel %vm474, %v2103, 0
    %2511 = vmatprep.subr.mxu0 0.0
    %2512 = vmatpush1.xpose.msra.mxu0 %v2509
    %2513 = vmatprep.subr.mxu0 0.0
    %2514 = vmatpush1.xpose.msra.mxu0 0.0
    %2515 = vmatprep.subr.mxu0 0.0
    %2516 = vmatpush1.xpose.msra.mxu0 0.0
    %2517 = vmatprep.subr.mxu0 0.0
    %2518 = vmatpush1.xpose.msra.mxu0 0.0
    %2519 = vmatprep.subr.mxu0 0.0
    %2520 = vmatpush1.xpose.msra.mxu0 0.0
    %2521 = vmatprep.subr.mxu0 0.0
    %2522 = vmatpush1.xpose.msra.mxu0 0.0
    %2523 = vmatprep.subr.mxu0 0.0
    %2524 = vmatpush1.xpose.msra.mxu0 0.0
    %2525 = vmatprep.subr.mxu0 0.0
    %2526 = vmatpush1.xpose.msra.mxu0 0.0
    %2527 = vmatprep.subr.mxu0 0.0
    %2528 = vmatpush1.xpose.msra.mxu0 0.0
    %2529 = vmatprep.subr.mxu0 0.0
    %2530 = vmatpush1.xpose.msra.mxu0 0.0
    %2531 = vmatprep.subr.mxu0 0.0
    %2532 = vmatpush1.xpose.msra.mxu0 0.0
    %2533 = vmatprep.subr.mxu0 0.0
    %2534 = vmatpush1.xpose.msra.mxu0 0.0
    %2535 = vmatprep.subr.mxu0 0.0
    %2536 = vmatpush1.xpose.msra.mxu0 0.0
    %2537 = vmatprep.subr.mxu0 0.0
    %2538 = vmatpush1.xpose.msra.mxu0 0.0
    %2539 = vmatprep.subr.mxu0 0.0
    %2540 = vmatpush1.xpose.msra.mxu0 0.0
    %2541 = vmatprep.subr.mxu0 0.0
    %2542 = vmatpush1.xpose.msra.mxu0 0.0
    %2543 = vmatprep.subr.mxu0 0.0
    %2544 = vmatpush1.xpose.msra.mxu0 0.0
    %2545 = vmatprep.subr.mxu0 0.0
    %2546 = vmatpush1.xpose.msra.mxu0 0.0
    %2547 = vmatprep.subr.mxu0 0.0
    %2548 = vmatpush1.xpose.msra.mxu0 0.0
    %2549 = vmatprep.subr.mxu0 0.0
    %2550 = vmatpush1.xpose.msra.mxu0 0.0
    %2551 = vmatprep.subr.mxu0 0.0
    %2552 = vmatpush1.xpose.msra.mxu0 0.0
    %2553 = vmatprep.subr.mxu0 0.0
    %2554 = vmatpush1.xpose.msra.mxu0 0.0
    %2555 = vmatprep.subr.mxu0 0.0
    %2556 = vmatpush1.xpose.msra.mxu0 0.0
    %2557 = vmatprep.subr.mxu0 0.0
    %2558 = vmatpush1.xpose.msra.mxu0 0.0
    %2559 = vmatprep.subr.mxu0 0.0
    %2560 = vmatpush1.xpose.msra.mxu0 0.0
    %2561 = vmatprep.subr.mxu0 0.0
    %2562 = vmatpush1.xpose.msra.mxu0 0.0
    %2563 = vmatprep.subr.mxu0 0.0
    %2564 = vmatpush1.xpose.msra.mxu0 0.0
    %2565 = vmatprep.subr.mxu0 0.0
    %2566 = vmatpush1.xpose.msra.mxu0 0.0
    %2567 = vmatprep.subr.mxu0 0.0
    %2568 = vmatpush1.xpose.msra.mxu0 0.0
    %2569 = vmatprep.subr.mxu0 0.0
    %2570 = vmatpush1.xpose.msra.mxu0 0.0
    %2571 = vmatprep.subr.mxu0 0.0
    %2572 = vmatpush1.xpose.msra.mxu0 0.0
    %2573 = vmatprep.subr.mxu0 0.0
    %2574 = vmatpush1.xpose.msra.mxu0 0.0
    %2575 = vmatprep.mubr.f32.mxu0 0.0
    %2576 = vmatmul.mubr.f32.gmra.mrb[0].mxu0 %v2507
    %v2577 = vpop.f32.mrb[0].mxu0
    %v2578 = vadd.f32 0.0, %v2577
    %v2579 = vpop.f32.mrb[0].mxu0
    %2580 = vdwg.mxu0
    %v2581 = vsel %vm474, %v2155, 0
    %v2583 = vsel %vm474, %v2169, 0
    %2585 = vmatprep.subr.mxu0 0.0
    %2586 = vmatpush1.xpose.msra.mxu0 %v2583
    %2587 = vmatprep.subr.mxu0 0.0
    %2588 = vmatpush1.xpose.msra.mxu0 0.0
    %2589 = vmatprep.subr.mxu0 0.0
    %2590 = vmatpush1.xpose.msra.mxu0 0.0
    %2591 = vmatprep.subr.mxu0 0.0
    %2592 = vmatpush1.xpose.msra.mxu0 0.0
    %2593 = vmatprep.subr.mxu0 0.0
    %2594 = vmatpush1.xpose.msra.mxu0 0.0
    %2595 = vmatprep.subr.mxu0 0.0
    %2596 = vmatpush1.xpose.msra.mxu0 0.0
    %2597 = vmatprep.subr.mxu0 0.0
    %2598 = vmatpush1.xpose.msra.mxu0 0.0
    %2599 = vmatprep.subr.mxu0 0.0
    %2600 = vmatpush1.xpose.msra.mxu0 0.0
    %2601 = vmatprep.subr.mxu0 0.0
    %2602 = vmatpush1.xpose.msra.mxu0 0.0
    %2603 = vmatprep.subr.mxu0 0.0
    %2604 = vmatpush1.xpose.msra.mxu0 0.0
    %2605 = vmatprep.subr.mxu0 0.0
    %2606 = vmatpush1.xpose.msra.mxu0 0.0
    %2607 = vmatprep.subr.mxu0 0.0
    %2608 = vmatpush1.xpose.msra.mxu0 0.0
    %2609 = vmatprep.subr.mxu0 0.0
    %2610 = vmatpush1.xpose.msra.mxu0 0.0
    %2611 = vmatprep.subr.mxu0 0.0
    %2612 = vmatpush1.xpose.msra.mxu0 0.0
    %2613 = vmatprep.subr.mxu0 0.0
    %2614 = vmatpush1.xpose.msra.mxu0 0.0
    %2615 = vmatprep.subr.mxu0 0.0
    %2616 = vmatpush1.xpose.msra.mxu0 0.0
    %2617 = vmatprep.subr.mxu0 0.0
    %2618 = vmatpush1.xpose.msra.mxu0 0.0
    %2619 = vmatprep.subr.mxu0 0.0
    %2620 = vmatpush1.xpose.msra.mxu0 0.0
    %2621 = vmatprep.subr.mxu0 0.0
    %2622 = vmatpush1.xpose.msra.mxu0 0.0
    %2623 = vmatprep.subr.mxu0 0.0
    %2624 = vmatpush1.xpose.msra.mxu0 0.0
    %2625 = vmatprep.subr.mxu0 0.0
    %2626 = vmatpush1.xpose.msra.mxu0 0.0
    %2627 = vmatprep.subr.mxu0 0.0
    %2628 = vmatpush1.xpose.msra.mxu0 0.0
    %2629 = vmatprep.subr.mxu0 0.0
    %2630 = vmatpush1.xpose.msra.mxu0 0.0
    %2631 = vmatprep.subr.mxu0 0.0
    %2632 = vmatpush1.xpose.msra.mxu0 0.0
    %2633 = vmatprep.subr.mxu0 0.0
    %2634 = vmatpush1.xpose.msra.mxu0 0.0
    %2635 = vmatprep.subr.mxu0 0.0
    %2636 = vmatpush1.xpose.msra.mxu0 0.0
    %2637 = vmatprep.subr.mxu0 0.0
    %2638 = vmatpush1.xpose.msra.mxu0 0.0
    %2639 = vmatprep.subr.mxu0 0.0
    %2640 = vmatpush1.xpose.msra.mxu0 0.0
    %2641 = vmatprep.subr.mxu0 0.0
    %2642 = vmatpush1.xpose.msra.mxu0 0.0
    %2643 = vmatprep.subr.mxu0 0.0
    %2644 = vmatpush1.xpose.msra.mxu0 0.0
    %2645 = vmatprep.subr.mxu0 0.0
    %2646 = vmatpush1.xpose.msra.mxu0 0.0
    %2647 = vmatprep.subr.mxu0 0.0
    %2648 = vmatpush1.xpose.msra.mxu0 0.0
    %2649 = vmatprep.mubr.f32.mxu0 0.0
    %2650 = vmatmul.mubr.f32.gmra.mrb[0].mxu0 %v2581
    %v2651 = vpop.f32.mrb[0].mxu0
    %v2652 = vadd.f32 0.0, %v2651
    %v2653 = vpop.f32.mrb[0].mxu0
    %2654 = vdwg.mxu0
    %v2655 = vsel %vm474, %v2157, 0
    %v2657 = vsel %vm474, %v2171, 0
    %2659 = vmatprep.subr.mxu0 0.0
    %2660 = vmatpush1.xpose.msra.mxu0 %v2657
    %2661 = vmatprep.subr.mxu0 0.0
    %2662 = vmatpush1.xpose.msra.mxu0 0.0
    %2663 = vmatprep.subr.mxu0 0.0
    %2664 = vmatpush1.xpose.msra.mxu0 0.0
    %2665 = vmatprep.subr.mxu0 0.0
    %2666 = vmatpush1.xpose.msra.mxu0 0.0
    %2667 = vmatprep.subr.mxu0 0.0
    %2668 = vmatpush1.xpose.msra.mxu0 0.0
    %2669 = vmatprep.subr.mxu0 0.0
    %2670 = vmatpush1.xpose.msra.mxu0 0.0
    %2671 = vmatprep.subr.mxu0 0.0
    %2672 = vmatpush1.xpose.msra.mxu0 0.0
    %2673 = vmatprep.subr.mxu0 0.0
    %2674 = vmatpush1.xpose.msra.mxu0 0.0
    %2675 = vmatprep.subr.mxu0 0.0
    %2676 = vmatpush1.xpose.msra.mxu0 0.0
    %2677 = vmatprep.subr.mxu0 0.0
    %2678 = vmatpush1.xpose.msra.mxu0 0.0
    %2679 = vmatprep.subr.mxu0 0.0
    %2680 = vmatpush1.xpose.msra.mxu0 0.0
    %2681 = vmatprep.subr.mxu0 0.0
    %2682 = vmatpush1.xpose.msra.mxu0 0.0
    %2683 = vmatprep.subr.mxu0 0.0
    %2684 = vmatpush1.xpose.msra.mxu0 0.0
    %2685 = vmatprep.subr.mxu0 0.0
    %2686 = vmatpush1.xpose.msra.mxu0 0.0
    %2687 = vmatprep.subr.mxu0 0.0
    %2688 = vmatpush1.xpose.msra.mxu0 0.0
    %2689 = vmatprep.subr.mxu0 0.0
    %2690 = vmatpush1.xpose.msra.mxu0 0.0
    %2691 = vmatprep.subr.mxu0 0.0
    %2692 = vmatpush1.xpose.msra.mxu0 0.0
    %2693 = vmatprep.subr.mxu0 0.0
    %2694 = vmatpush1.xpose.msra.mxu0 0.0
    %2695 = vmatprep.subr.mxu0 0.0
    %2696 = vmatpush1.xpose.msra.mxu0 0.0
    %2697 = vmatprep.subr.mxu0 0.0
    %2698 = vmatpush1.xpose.msra.mxu0 0.0
    %2699 = vmatprep.subr.mxu0 0.0
    %2700 = vmatpush1.xpose.msra.mxu0 0.0
    %2701 = vmatprep.subr.mxu0 0.0
    %2702 = vmatpush1.xpose.msra.mxu0 0.0
    %2703 = vmatprep.subr.mxu0 0.0
    %2704 = vmatpush1.xpose.msra.mxu0 0.0
    %2705 = vmatprep.subr.mxu0 0.0
    %2706 = vmatpush1.xpose.msra.mxu0 0.0
    %2707 = vmatprep.subr.mxu0 0.0
    %2708 = vmatpush1.xpose.msra.mxu0 0.0
    %2709 = vmatprep.subr.mxu0 0.0
    %2710 = vmatpush1.xpose.msra.mxu0 0.0
    %2711 = vmatprep.subr.mxu0 0.0
    %2712 = vmatpush1.xpose.msra.mxu0 0.0
    %2713 = vmatprep.subr.mxu0 0.0
    %2714 = vmatpush1.xpose.msra.mxu0 0.0
    %2715 = vmatprep.subr.mxu0 0.0
    %2716 = vmatpush1.xpose.msra.mxu0 0.0
    %2717 = vmatprep.subr.mxu0 0.0
    %2718 = vmatpush1.xpose.msra.mxu0 0.0
    %2719 = vmatprep.subr.mxu0 0.0
    %2720 = vmatpush1.xpose.msra.mxu0 0.0
    %2721 = vmatprep.subr.mxu0 0.0
    %2722 = vmatpush1.xpose.msra.mxu0 0.0
    %2723 = vmatprep.mubr.f32.mxu0 0.0
    %2724 = vmatmul.mubr.f32.gmra.mrb[0].mxu0 %v2655
    %v2725 = vpop.f32.mrb[0].mxu0
    %v2726 = vadd.f32 0.0, %v2725
    %v2727 = vpop.f32.mrb[0].mxu0
    %2728 = vdwg.mxu0
    %v2729 = vsel %vm474, %v2159, 0
    %v2731 = vsel %vm474, %v2173, 0
    %2733 = vmatprep.subr.mxu0 0.0
    %2734 = vmatpush1.xpose.msra.mxu0 %v2731
    %2735 = vmatprep.subr.mxu0 0.0
    %2736 = vmatpush1.xpose.msra.mxu0 0.0
    %2737 = vmatprep.subr.mxu0 0.0
    %2738 = vmatpush1.xpose.msra.mxu0 0.0
    %2739 = vmatprep.subr.mxu0 0.0
    %2740 = vmatpush1.xpose.msra.mxu0 0.0
    %2741 = vmatprep.subr.mxu0 0.0
    %2742 = vmatpush1.xpose.msra.mxu0 0.0
    %2743 = vmatprep.subr.mxu0 0.0
    %2744 = vmatpush1.xpose.msra.mxu0 0.0
    %2745 = vmatprep.subr.mxu0 0.0
    %2746 = vmatpush1.xpose.msra.mxu0 0.0
    %2747 = vmatprep.subr.mxu0 0.0
    %2748 = vmatpush1.xpose.msra.mxu0 0.0
    %2749 = vmatprep.subr.mxu0 0.0
    %2750 = vmatpush1.xpose.msra.mxu0 0.0
    %2751 = vmatprep.subr.mxu0 0.0
    %2752 = vmatpush1.xpose.msra.mxu0 0.0
    %2753 = vmatprep.subr.mxu0 0.0
    %2754 = vmatpush1.xpose.msra.mxu0 0.0
    %2755 = vmatprep.subr.mxu0 0.0
    %2756 = vmatpush1.xpose.msra.mxu0 0.0
    %2757 = vmatprep.subr.mxu0 0.0
    %2758 = vmatpush1.xpose.msra.mxu0 0.0
    %2759 = vmatprep.subr.mxu0 0.0
    %2760 = vmatpush1.xpose.msra.mxu0 0.0
    %2761 = vmatprep.subr.mxu0 0.0
    %2762 = vmatpush1.xpose.msra.mxu0 0.0
    %2763 = vmatprep.subr.mxu0 0.0
    %2764 = vmatpush1.xpose.msra.mxu0 0.0
    %2765 = vmatprep.subr.mxu0 0.0
    %2766 = vmatpush1.xpose.msra.mxu0 0.0
    %2767 = vmatprep.subr.mxu0 0.0
    %2768 = vmatpush1.xpose.msra.mxu0 0.0
    %2769 = vmatprep.subr.mxu0 0.0
    %2770 = vmatpush1.xpose.msra.mxu0 0.0
    %2771 = vmatprep.subr.mxu0 0.0
    %2772 = vmatpush1.xpose.msra.mxu0 0.0
    %2773 = vmatprep.subr.mxu0 0.0
    %2774 = vmatpush1.xpose.msra.mxu0 0.0
    %2775 = vmatprep.subr.mxu0 0.0
    %2776 = vmatpush1.xpose.msra.mxu0 0.0
    %2777 = vmatprep.subr.mxu0 0.0
    %2778 = vmatpush1.xpose.msra.mxu0 0.0
    %2779 = vmatprep.subr.mxu0 0.0
    %2780 = vmatpush1.xpose.msra.mxu0 0.0
    %2781 = vmatprep.subr.mxu0 0.0
    %2782 = vmatpush1.xpose.msra.mxu0 0.0
    %2783 = vmatprep.subr.mxu0 0.0
    %2784 = vmatpush1.xpose.msra.mxu0 0.0
    %2785 = vmatprep.subr.mxu0 0.0
    %2786 = vmatpush1.xpose.msra.mxu0 0.0
    %2787 = vmatprep.subr.mxu0 0.0
    %2788 = vmatpush1.xpose.msra.mxu0 0.0
    %2789 = vmatprep.subr.mxu0 0.0
    %2790 = vmatpush1.xpose.msra.mxu0 0.0
    %2791 = vmatprep.subr.mxu0 0.0
    %2792 = vmatpush1.xpose.msra.mxu0 0.0
    %2793 = vmatprep.subr.mxu0 0.0
    %2794 = vmatpush1.xpose.msra.mxu0 0.0
    %2795 = vmatprep.subr.mxu0 0.0
    %2796 = vmatpush1.xpose.msra.mxu0 0.0
    %2797 = vmatprep.mubr.f32.mxu0 0.0
    %2798 = vmatmul.mubr.f32.gmra.mrb[0].mxu0 %v2729
    %v2799 = vpop.f32.mrb[0].mxu0
    %v2800 = vadd.f32 0.0, %v2799
    %v2801 = vpop.f32.mrb[0].mxu0
    %2802 = vdwg.mxu0
    %v2803 = vmul.f32 %v2282, 0.17677669
    %v2804 = vmul.f32 %v2356, 0.17677669
    %v2805 = vmul.f32 %v2430, 0.17677669
    %v2806 = vmul.f32 %v2504, 0.17677669
    %v2807 = vmul.f32 %v2578, 0.17677669
    %v2808 = vmul.f32 %v2652, 0.17677669
    %v2809 = vmul.f32 %v2726, 0.17677669
    %v2810 = vmul.f32 %v2800, 0.17677669
    %v2811 = vadd.f32 %v2803, %v113
    %v2812 = vadd.f32 %v2804, %v113
    %v2813 = vadd.f32 %v2805, %v113
    %v2814 = vadd.f32 %v2806, %v113
    %v2815 = vadd.f32 %v2807, %v113
    %v2816 = vadd.f32 %v2808, %v113
    %v2817 = vadd.f32 %v2809, %v113
    %v2818 = vadd.f32 %v2810, %v113
    %v2819 = vsel %vm1083, %v2811, -inf
    %2820 = vmax.xlane.f32.xlu0 %v2819
    %v2821 = vpop.xlane.xlu0 %2820
    %v2822 = vsel %vm1083, %v2812, -inf
    %2823 = vmax.xlane.f32.xlu0 %v2822
    %v2824 = vpop.xlane.xlu0 %2823
    %v2825 = vsel %vm1083, %v2813, -inf
    %2826 = vmax.xlane.f32.xlu0 %v2825
    %v2827 = vpop.xlane.xlu0 %2826
    %v2828 = vsel %vm1083, %v2814, -inf
    %2829 = vmax.xlane.f32.xlu0 %v2828
    %v2830 = vpop.xlane.xlu0 %2829
    %v2831 = vsel %vm1083, %v2815, -inf
    %2832 = vmax.xlane.f32.xlu0 %v2831
    %v2833 = vpop.xlane.xlu0 %2832
    %v2834 = vsel %vm1083, %v2816, -inf
    %2835 = vmax.xlane.f32.xlu0 %v2834
    %v2836 = vpop.xlane.xlu0 %2835
    %v2837 = vsel %vm1083, %v2817, -inf
    %2838 = vmax.xlane.f32.xlu0 %v2837
    %v2839 = vpop.xlane.xlu0 %2838
    %v2840 = vsel %vm1083, %v2818, -inf
    %2841 = vmax.xlane.f32.xlu0 %v2840
    %v2842 = vpop.xlane.xlu0 %2841
    %v2843 = vsub.f32 %v2811, %v2821
    %v2844 = vsub.f32 %v2812, %v2824
    %v2845 = vsub.f32 %v2813, %v2827
    %v2846 = vsub.f32 %v2814, %v2830
    %v2847 = vsub.f32 %v2815, %v2833
    %v2848 = vsub.f32 %v2816, %v2836
    %v2849 = vsub.f32 %v2817, %v2839
    %v2850 = vsub.f32 %v2818, %v2842
    %v2851 = vmul.f32 %v2843, 1.442695
    %v2852 = vpow.pop %v2851
    %v2853 = vmul.f32 %v2844, 1.442695
    %v2854 = vpow.pop %v2853
    %v2855 = vmul.f32 %v2845, 1.442695
    %v2856 = vpow.pop %v2855
    %v2857 = vmul.f32 %v2846, 1.442695
    %v2858 = vpow.pop %v2857
    %v2859 = vmul.f32 %v2847, 1.442695
    %v2860 = vpow.pop %v2859
    %v2861 = vmul.f32 %v2848, 1.442695
    %v2862 = vpow.pop %v2861
    %v2863 = vmul.f32 %v2849, 1.442695
    %v2864 = vpow.pop %v2863
    %v2865 = vmul.f32 %v2850, 1.442695
    %v2866 = vpow.pop %v2865
    %v2867 = vsel %vm1083, %v2852, 0.0
    %2868 = vadd.xlane.f32.xlu0 %v2867
    %v2869 = vpop.xlane.xlu0 %2868
    %v2870 = vsel %vm1083, %v2854, 0.0
    %2871 = vadd.xlane.f32.xlu0 %v2870
    %v2872 = vpop.xlane.xlu0 %2871
    %v2873 = vsel %vm1083, %v2856, 0.0
    %2874 = vadd.xlane.f32.xlu0 %v2873
    %v2875 = vpop.xlane.xlu0 %2874
    %v2876 = vsel %vm1083, %v2858, 0.0
    %2877 = vadd.xlane.f32.xlu0 %v2876
    %v2878 = vpop.xlane.xlu0 %2877
    %v2879 = vsel %vm1083, %v2860, 0.0
    %2880 = vadd.xlane.f32.xlu0 %v2879
    %v2881 = vpop.xlane.xlu0 %2880
    %v2882 = vsel %vm1083, %v2862, 0.0
    %2883 = vadd.xlane.f32.xlu0 %v2882
    %v2884 = vpop.xlane.xlu0 %2883
    %v2885 = vsel %vm1083, %v2864, 0.0
    %2886 = vadd.xlane.f32.xlu0 %v2885
    %v2887 = vpop.xlane.xlu0 %2886
    %v2888 = vsel %vm1083, %v2866, 0.0
    %2889 = vadd.xlane.f32.xlu0 %v2888
    %v2890 = vpop.xlane.xlu0 %2889
    %v2891 = vrcp.pop %v2869
    %v2892 = vmul.f32 %v2852, %v2891
    %v2893 = vrcp.pop %v2872
    %v2894 = vmul.f32 %v2854, %v2893
    %v2895 = vrcp.pop %v2875
    %v2896 = vmul.f32 %v2856, %v2895
    %v2897 = vrcp.pop %v2878
    %v2898 = vmul.f32 %v2858, %v2897
    %v2899 = vrcp.pop %v2881
    %v2900 = vmul.f32 %v2860, %v2899
    %v2901 = vrcp.pop %v2884
    %v2902 = vmul.f32 %v2862, %v2901
    %v2903 = vrcp.pop %v2887
    %v2904 = vmul.f32 %v2864, %v2903
    %v2905 = vrcp.pop %v2890
    %v2906 = vmul.f32 %v2866, %v2905
    %v2908 = vsel %vm1083, %v2892, 0
    %2910 = vmatprep.subr.mxu0 0.0
    %2911 = vmatpush1.msra.mxu0 %v2140
    %2912 = vmatprep.subr.mxu0 0.0
    %2913 = vmatpush1.msra.mxu0 0.0
    %2914 = vmatprep.subr.mxu0 0.0
    %2915 = vmatpush1.msra.mxu0 0.0
    %2916 = vmatprep.subr.mxu0 0.0
    %2917 = vmatpush1.msra.mxu0 0.0
    %2918 = vmatprep.subr.mxu0 0.0
    %2919 = vmatpush1.msra.mxu0 0.0
    %2920 = vmatprep.subr.mxu0 0.0
    %2921 = vmatpush1.msra.mxu0 0.0
    %2922 = vmatprep.subr.mxu0 0.0
    %2923 = vmatpush1.msra.mxu0 0.0
    %2924 = vmatprep.subr.mxu0 0.0
    %2925 = vmatpush1.msra.mxu0 0.0
    %2926 = vmatprep.subr.mxu0 0.0
    %2927 = vmatpush1.msra.mxu0 0.0
    %2928 = vmatprep.subr.mxu0 0.0
    %2929 = vmatpush1.msra.mxu0 0.0
    %2930 = vmatprep.subr.mxu0 0.0
    %2931 = vmatpush1.msra.mxu0 0.0
    %2932 = vmatprep.subr.mxu0 0.0
    %2933 = vmatpush1.msra.mxu0 0.0
    %2934 = vmatprep.subr.mxu0 0.0
    %2935 = vmatpush1.msra.mxu0 0.0
    %2936 = vmatprep.subr.mxu0 0.0
    %2937 = vmatpush1.msra.mxu0 0.0
    %2938 = vmatprep.subr.mxu0 0.0
    %2939 = vmatpush1.msra.mxu0 0.0
    %2940 = vmatprep.subr.mxu0 0.0
    %2941 = vmatpush1.msra.mxu0 0.0
    %2942 = vmatprep.subr.mxu0 0.0
    %2943 = vmatpush1.msra.mxu0 0.0
    %2944 = vmatprep.subr.mxu0 0.0
    %2945 = vmatpush1.msra.mxu0 0.0
    %2946 = vmatprep.subr.mxu0 0.0
    %2947 = vmatpush1.msra.mxu0 0.0
    %2948 = vmatprep.subr.mxu0 0.0
    %2949 = vmatpush1.msra.mxu0 0.0
    %2950 = vmatprep.subr.mxu0 0.0
    %2951 = vmatpush1.msra.mxu0 0.0
    %2952 = vmatprep.subr.mxu0 0.0
    %2953 = vmatpush1.msra.mxu0 0.0
    %2954 = vmatprep.subr.mxu0 0.0
    %2955 = vmatpush1.msra.mxu0 0.0
    %2956 = vmatprep.subr.mxu0 0.0
    %2957 = vmatpush1.msra.mxu0 0.0
    %2958 = vmatprep.subr.mxu0 0.0
    %2959 = vmatpush1.msra.mxu0 0.0
    %2960 = vmatprep.subr.mxu0 0.0
    %2961 = vmatpush1.msra.mxu0 0.0
    %2962 = vmatprep.subr.mxu0 0.0
    %2963 = vmatpush1.msra.mxu0 0.0
    %2964 = vmatprep.subr.mxu0 0.0
    %2965 = vmatpush1.msra.mxu0 0.0
    %2966 = vmatprep.subr.mxu0 0.0
    %2967 = vmatpush1.msra.mxu0 0.0
    %2968 = vmatprep.subr.mxu0 0.0
    %2969 = vmatpush1.msra.mxu0 0.0
    %2970 = vmatprep.subr.mxu0 0.0
    %2971 = vmatpush1.msra.mxu0 0.0
    %2972 = vmatprep.subr.mxu0 0.0
    %2973 = vmatpush1.msra.mxu0 0.0
    %2974 = vmatprep.mubr.f32.mxu0 0.0
    %2975 = vmatmul.mubr.f32.gmra.mrb[0].mxu0 %v2908
    %v2976 = vpop.f32.mrb[0].mxu0
    %v2977 = vadd.f32 0.0, %v2976
    %v2978 = vpop.f32.mrb[0].mxu0
    %2979 = vdwg.mxu0
    %v2981 = vsel %vm1083, %v2894, 0
    %2983 = vmatprep.subr.mxu0 0.0
    %2984 = vmatpush1.msra.mxu0 %v2176
    %2985 = vmatprep.subr.mxu0 0.0
    %2986 = vmatpush1.msra.mxu0 0.0
    %2987 = vmatprep.subr.mxu0 0.0
    %2988 = vmatpush1.msra.mxu0 0.0
    %2989 = vmatprep.subr.mxu0 0.0
    %2990 = vmatpush1.msra.mxu0 0.0
    %2991 = vmatprep.subr.mxu0 0.0
    %2992 = vmatpush1.msra.mxu0 0.0
    %2993 = vmatprep.subr.mxu0 0.0
    %2994 = vmatpush1.msra.mxu0 0.0
    %2995 = vmatprep.subr.mxu0 0.0
    %2996 = vmatpush1.msra.mxu0 0.0
    %2997 = vmatprep.subr.mxu0 0.0
    %2998 = vmatpush1.msra.mxu0 0.0
    %2999 = vmatprep.subr.mxu0 0.0
    %3000 = vmatpush1.msra.mxu0 0.0
    %3001 = vmatprep.subr.mxu0 0.0
    %3002 = vmatpush1.msra.mxu0 0.0
    %3003 = vmatprep.subr.mxu0 0.0
    %3004 = vmatpush1.msra.mxu0 0.0
    %3005 = vmatprep.subr.mxu0 0.0
    %3006 = vmatpush1.msra.mxu0 0.0
    %3007 = vmatprep.subr.mxu0 0.0
    %3008 = vmatpush1.msra.mxu0 0.0
    %3009 = vmatprep.subr.mxu0 0.0
    %3010 = vmatpush1.msra.mxu0 0.0
    %3011 = vmatprep.subr.mxu0 0.0
    %3012 = vmatpush1.msra.mxu0 0.0
    %3013 = vmatprep.subr.mxu0 0.0
    %3014 = vmatpush1.msra.mxu0 0.0
    %3015 = vmatprep.subr.mxu0 0.0
    %3016 = vmatpush1.msra.mxu0 0.0
    %3017 = vmatprep.subr.mxu0 0.0
    %3018 = vmatpush1.msra.mxu0 0.0
    %3019 = vmatprep.subr.mxu0 0.0
    %3020 = vmatpush1.msra.mxu0 0.0
    %3021 = vmatprep.subr.mxu0 0.0
    %3022 = vmatpush1.msra.mxu0 0.0
    %3023 = vmatprep.subr.mxu0 0.0
    %3024 = vmatpush1.msra.mxu0 0.0
    %3025 = vmatprep.subr.mxu0 0.0
    %3026 = vmatpush1.msra.mxu0 0.0
    %3027 = vmatprep.subr.mxu0 0.0
    %3028 = vmatpush1.msra.mxu0 0.0
    %3029 = vmatprep.subr.mxu0 0.0
    %3030 = vmatpush1.msra.mxu0 0.0
    %3031 = vmatprep.subr.mxu0 0.0
    %3032 = vmatpush1.msra.mxu0 0.0
    %3033 = vmatprep.subr.mxu0 0.0
    %3034 = vmatpush1.msra.mxu0 0.0
    %3035 = vmatprep.subr.mxu0 0.0
    %3036 = vmatpush1.msra.mxu0 0.0
    %3037 = vmatprep.subr.mxu0 0.0
    %3038 = vmatpush1.msra.mxu0 0.0
    %3039 = vmatprep.subr.mxu0 0.0
    %3040 = vmatpush1.msra.mxu0 0.0
    %3041 = vmatprep.subr.mxu0 0.0
    %3042 = vmatpush1.msra.mxu0 0.0
    %3043 = vmatprep.subr.mxu0 0.0
    %3044 = vmatpush1.msra.mxu0 0.0
    %3045 = vmatprep.subr.mxu0 0.0
    %3046 = vmatpush1.msra.mxu0 0.0
    %3047 = vmatprep.mubr.f32.mxu0 0.0
    %3048 = vmatmul.mubr.f32.gmra.mrb[0].mxu0 %v2981
    %v3049 = vpop.f32.mrb[0].mxu0
    %v3050 = vadd.f32 0.0, %v3049
    %v3051 = vpop.f32.mrb[0].mxu0
    %3052 = vdwg.mxu0
    %v3054 = vsel %vm1083, %v2896, 0
    %3056 = vmatprep.subr.mxu0 0.0
    %3057 = vmatpush1.msra.mxu0 %v2179
    %3058 = vmatprep.subr.mxu0 0.0
    %3059 = vmatpush1.msra.mxu0 0.0
    %3060 = vmatprep.subr.mxu0 0.0
    %3061 = vmatpush1.msra.mxu0 0.0
    %3062 = vmatprep.subr.mxu0 0.0
    %3063 = vmatpush1.msra.mxu0 0.0
    %3064 = vmatprep.subr.mxu0 0.0
    %3065 = vmatpush1.msra.mxu0 0.0
    %3066 = vmatprep.subr.mxu0 0.0
    %3067 = vmatpush1.msra.mxu0 0.0
    %3068 = vmatprep.subr.mxu0 0.0
    %3069 = vmatpush1.msra.mxu0 0.0
    %3070 = vmatprep.subr.mxu0 0.0
    %3071 = vmatpush1.msra.mxu0 0.0
    %3072 = vmatprep.subr.mxu0 0.0
    %3073 = vmatpush1.msra.mxu0 0.0
    %3074 = vmatprep.subr.mxu0 0.0
    %3075 = vmatpush1.msra.mxu0 0.0
    %3076 = vmatprep.subr.mxu0 0.0
    %3077 = vmatpush1.msra.mxu0 0.0
    %3078 = vmatprep.subr.mxu0 0.0
    %3079 = vmatpush1.msra.mxu0 0.0
    %3080 = vmatprep.subr.mxu0 0.0
    %3081 = vmatpush1.msra.mxu0 0.0
    %3082 = vmatprep.subr.mxu0 0.0
    %3083 = vmatpush1.msra.mxu0 0.0
    %3084 = vmatprep.subr.mxu0 0.0
    %3085 = vmatpush1.msra.mxu0 0.0
    %3086 = vmatprep.subr.mxu0 0.0
    %3087 = vmatpush1.msra.mxu0 0.0
    %3088 = vmatprep.subr.mxu0 0.0
    %3089 = vmatpush1.msra.mxu0 0.0
    %3090 = vmatprep.subr.mxu0 0.0
    %3091 = vmatpush1.msra.mxu0 0.0
    %3092 = vmatprep.subr.mxu0 0.0
    %3093 = vmatpush1.msra.mxu0 0.0
    %3094 = vmatprep.subr.mxu0 0.0
    %3095 = vmatpush1.msra.mxu0 0.0
    %3096 = vmatprep.subr.mxu0 0.0
    %3097 = vmatpush1.msra.mxu0 0.0
    %3098 = vmatprep.subr.mxu0 0.0
    %3099 = vmatpush1.msra.mxu0 0.0
    %3100 = vmatprep.subr.mxu0 0.0
    %3101 = vmatpush1.msra.mxu0 0.0
    %3102 = vmatprep.subr.mxu0 0.0
    %3103 = vmatpush1.msra.mxu0 0.0
    %3104 = vmatprep.subr.mxu0 0.0
    %3105 = vmatpush1.msra.mxu0 0.0
    %3106 = vmatprep.subr.mxu0 0.0
    %3107 = vmatpush1.msra.mxu0 0.0
    %3108 = vmatprep.subr.mxu0 0.0
    %3109 = vmatpush1.msra.mxu0 0.0
    %3110 = vmatprep.subr.mxu0 0.0
    %3111 = vmatpush1.msra.mxu0 0.0
    %3112 = vmatprep.subr.mxu0 0.0
    %3113 = vmatpush1.msra.mxu0 0.0
    %3114 = vmatprep.subr.mxu0 0.0
    %3115 = vmatpush1.msra.mxu0 0.0
    %3116 = vmatprep.subr.mxu0 0.0
    %3117 = vmatpush1.msra.mxu0 0.0
    %3118 = vmatprep.subr.mxu0 0.0
    %3119 = vmatpush1.msra.mxu0 0.0
    %3120 = vmatprep.mubr.f32.mxu0 0.0
    %3121 = vmatmul.mubr.f32.gmra.mrb[0].mxu0 %v3054
    %v3122 = vpop.f32.mrb[0].mxu0
    %v3123 = vadd.f32 0.0, %v3122
    %v3124 = vpop.f32.mrb[0].mxu0
    %3125 = vdwg.mxu0
    %v3127 = vsel %vm1083, %v2898, 0
    %3129 = vmatprep.subr.mxu0 0.0
    %3130 = vmatpush1.msra.mxu0 %v2182
    %3131 = vmatprep.subr.mxu0 0.0
    %3132 = vmatpush1.msra.mxu0 0.0
    %3133 = vmatprep.subr.mxu0 0.0
    %3134 = vmatpush1.msra.mxu0 0.0
    %3135 = vmatprep.subr.mxu0 0.0
    %3136 = vmatpush1.msra.mxu0 0.0
    %3137 = vmatprep.subr.mxu0 0.0
    %3138 = vmatpush1.msra.mxu0 0.0
    %3139 = vmatprep.subr.mxu0 0.0
    %3140 = vmatpush1.msra.mxu0 0.0
    %3141 = vmatprep.subr.mxu0 0.0
    %3142 = vmatpush1.msra.mxu0 0.0
    %3143 = vmatprep.subr.mxu0 0.0
    %3144 = vmatpush1.msra.mxu0 0.0
    %3145 = vmatprep.subr.mxu0 0.0
    %3146 = vmatpush1.msra.mxu0 0.0
    %3147 = vmatprep.subr.mxu0 0.0
    %3148 = vmatpush1.msra.mxu0 0.0
    %3149 = vmatprep.subr.mxu0 0.0
    %3150 = vmatpush1.msra.mxu0 0.0
    %3151 = vmatprep.subr.mxu0 0.0
    %3152 = vmatpush1.msra.mxu0 0.0
    %3153 = vmatprep.subr.mxu0 0.0
    %3154 = vmatpush1.msra.mxu0 0.0
    %3155 = vmatprep.subr.mxu0 0.0
    %3156 = vmatpush1.msra.mxu0 0.0
    %3157 = vmatprep.subr.mxu0 0.0
    %3158 = vmatpush1.msra.mxu0 0.0
    %3159 = vmatprep.subr.mxu0 0.0
    %3160 = vmatpush1.msra.mxu0 0.0
    %3161 = vmatprep.subr.mxu0 0.0
    %3162 = vmatpush1.msra.mxu0 0.0
    %3163 = vmatprep.subr.mxu0 0.0
    %3164 = vmatpush1.msra.mxu0 0.0
    %3165 = vmatprep.subr.mxu0 0.0
    %3166 = vmatpush1.msra.mxu0 0.0
    %3167 = vmatprep.subr.mxu0 0.0
    %3168 = vmatpush1.msra.mxu0 0.0
    %3169 = vmatprep.subr.mxu0 0.0
    %3170 = vmatpush1.msra.mxu0 0.0
    %3171 = vmatprep.subr.mxu0 0.0
    %3172 = vmatpush1.msra.mxu0 0.0
    %3173 = vmatprep.subr.mxu0 0.0
    %3174 = vmatpush1.msra.mxu0 0.0
    %3175 = vmatprep.subr.mxu0 0.0
    %3176 = vmatpush1.msra.mxu0 0.0
    %3177 = vmatprep.subr.mxu0 0.0
    %3178 = vmatpush1.msra.mxu0 0.0
    %3179 = vmatprep.subr.mxu0 0.0
    %3180 = vmatpush1.msra.mxu0 0.0
    %3181 = vmatprep.subr.mxu0 0.0
    %3182 = vmatpush1.msra.mxu0 0.0
    %3183 = vmatprep.subr.mxu0 0.0
    %3184 = vmatpush1.msra.mxu0 0.0
    %3185 = vmatprep.subr.mxu0 0.0
    %3186 = vmatpush1.msra.mxu0 0.0
    %3187 = vmatprep.subr.mxu0 0.0
    %3188 = vmatpush1.msra.mxu0 0.0
    %3189 = vmatprep.subr.mxu0 0.0
    %3190 = vmatpush1.msra.mxu0 0.0
    %3191 = vmatprep.subr.mxu0 0.0
    %3192 = vmatpush1.msra.mxu0 0.0
    %3193 = vmatprep.mubr.f32.mxu0 0.0
    %3194 = vmatmul.mubr.f32.gmra.mrb[0].mxu0 %v3127
    %v3195 = vpop.f32.mrb[0].mxu0
    %v3196 = vadd.f32 0.0, %v3195
    %v3197 = vpop.f32.mrb[0].mxu0
    %3198 = vdwg.mxu0
    %v3200 = vsel %vm1083, %v2900, 0
    %3202 = vmatprep.subr.mxu0 0.0
    %3203 = vmatpush1.msra.mxu0 %v2143
    %3204 = vmatprep.subr.mxu0 0.0
    %3205 = vmatpush1.msra.mxu0 0.0
    %3206 = vmatprep.subr.mxu0 0.0
    %3207 = vmatpush1.msra.mxu0 0.0
    %3208 = vmatprep.subr.mxu0 0.0
    %3209 = vmatpush1.msra.mxu0 0.0
    %3210 = vmatprep.subr.mxu0 0.0
    %3211 = vmatpush1.msra.mxu0 0.0
    %3212 = vmatprep.subr.mxu0 0.0
    %3213 = vmatpush1.msra.mxu0 0.0
    %3214 = vmatprep.subr.mxu0 0.0
    %3215 = vmatpush1.msra.mxu0 0.0
    %3216 = vmatprep.subr.mxu0 0.0
    %3217 = vmatpush1.msra.mxu0 0.0
    %3218 = vmatprep.subr.mxu0 0.0
    %3219 = vmatpush1.msra.mxu0 0.0
    %3220 = vmatprep.subr.mxu0 0.0
    %3221 = vmatpush1.msra.mxu0 0.0
    %3222 = vmatprep.subr.mxu0 0.0
    %3223 = vmatpush1.msra.mxu0 0.0
    %3224 = vmatprep.subr.mxu0 0.0
    %3225 = vmatpush1.msra.mxu0 0.0
    %3226 = vmatprep.subr.mxu0 0.0
    %3227 = vmatpush1.msra.mxu0 0.0
    %3228 = vmatprep.subr.mxu0 0.0
    %3229 = vmatpush1.msra.mxu0 0.0
    %3230 = vmatprep.subr.mxu0 0.0
    %3231 = vmatpush1.msra.mxu0 0.0
    %3232 = vmatprep.subr.mxu0 0.0
    %3233 = vmatpush1.msra.mxu0 0.0
    %3234 = vmatprep.subr.mxu0 0.0
    %3235 = vmatpush1.msra.mxu0 0.0
    %3236 = vmatprep.subr.mxu0 0.0
    %3237 = vmatpush1.msra.mxu0 0.0
    %3238 = vmatprep.subr.mxu0 0.0
    %3239 = vmatpush1.msra.mxu0 0.0
    %3240 = vmatprep.subr.mxu0 0.0
    %3241 = vmatpush1.msra.mxu0 0.0
    %3242 = vmatprep.subr.mxu0 0.0
    %3243 = vmatpush1.msra.mxu0 0.0
    %3244 = vmatprep.subr.mxu0 0.0
    %3245 = vmatpush1.msra.mxu0 0.0
    %3246 = vmatprep.subr.mxu0 0.0
    %3247 = vmatpush1.msra.mxu0 0.0
    %3248 = vmatprep.subr.mxu0 0.0
    %3249 = vmatpush1.msra.mxu0 0.0
    %3250 = vmatprep.subr.mxu0 0.0
    %3251 = vmatpush1.msra.mxu0 0.0
    %3252 = vmatprep.subr.mxu0 0.0
    %3253 = vmatpush1.msra.mxu0 0.0
    %3254 = vmatprep.subr.mxu0 0.0
    %3255 = vmatpush1.msra.mxu0 0.0
    %3256 = vmatprep.subr.mxu0 0.0
    %3257 = vmatpush1.msra.mxu0 0.0
    %3258 = vmatprep.subr.mxu0 0.0
    %3259 = vmatpush1.msra.mxu0 0.0
    %3260 = vmatprep.subr.mxu0 0.0
    %3261 = vmatpush1.msra.mxu0 0.0
    %3262 = vmatprep.subr.mxu0 0.0
    %3263 = vmatpush1.msra.mxu0 0.0
    %3264 = vmatprep.subr.mxu0 0.0
    %3265 = vmatpush1.msra.mxu0 0.0
    %3266 = vmatprep.mubr.f32.mxu0 0.0
    %3267 = vmatmul.mubr.f32.gmra.mrb[0].mxu0 %v3200
    %v3268 = vpop.f32.mrb[0].mxu0
    %v3269 = vadd.f32 0.0, %v3268
    %v3270 = vpop.f32.mrb[0].mxu0
    %3271 = vdwg.mxu0
    %v3273 = vsel %vm1083, %v2902, 0
    %3275 = vmatprep.subr.mxu0 0.0
    %3276 = vmatpush1.msra.mxu0 %v2186
    %3277 = vmatprep.subr.mxu0 0.0
    %3278 = vmatpush1.msra.mxu0 0.0
    %3279 = vmatprep.subr.mxu0 0.0
    %3280 = vmatpush1.msra.mxu0 0.0
    %3281 = vmatprep.subr.mxu0 0.0
    %3282 = vmatpush1.msra.mxu0 0.0
    %3283 = vmatprep.subr.mxu0 0.0
    %3284 = vmatpush1.msra.mxu0 0.0
    %3285 = vmatprep.subr.mxu0 0.0
    %3286 = vmatpush1.msra.mxu0 0.0
    %3287 = vmatprep.subr.mxu0 0.0
    %3288 = vmatpush1.msra.mxu0 0.0
    %3289 = vmatprep.subr.mxu0 0.0
    %3290 = vmatpush1.msra.mxu0 0.0
    %3291 = vmatprep.subr.mxu0 0.0
    %3292 = vmatpush1.msra.mxu0 0.0
    %3293 = vmatprep.subr.mxu0 0.0
    %3294 = vmatpush1.msra.mxu0 0.0
    %3295 = vmatprep.subr.mxu0 0.0
    %3296 = vmatpush1.msra.mxu0 0.0
    %3297 = vmatprep.subr.mxu0 0.0
    %3298 = vmatpush1.msra.mxu0 0.0
    %3299 = vmatprep.subr.mxu0 0.0
    %3300 = vmatpush1.msra.mxu0 0.0
    %3301 = vmatprep.subr.mxu0 0.0
    %3302 = vmatpush1.msra.mxu0 0.0
    %3303 = vmatprep.subr.mxu0 0.0
    %3304 = vmatpush1.msra.mxu0 0.0
    %3305 = vmatprep.subr.mxu0 0.0
    %3306 = vmatpush1.msra.mxu0 0.0
    %3307 = vmatprep.subr.mxu0 0.0
    %3308 = vmatpush1.msra.mxu0 0.0
    %3309 = vmatprep.subr.mxu0 0.0
    %3310 = vmatpush1.msra.mxu0 0.0
    %3311 = vmatprep.subr.mxu0 0.0
    %3312 = vmatpush1.msra.mxu0 0.0
    %3313 = vmatprep.subr.mxu0 0.0
    %3314 = vmatpush1.msra.mxu0 0.0
    %3315 = vmatprep.subr.mxu0 0.0
    %3316 = vmatpush1.msra.mxu0 0.0
    %3317 = vmatprep.subr.mxu0 0.0
    %3318 = vmatpush1.msra.mxu0 0.0
    %3319 = vmatprep.subr.mxu0 0.0
    %3320 = vmatpush1.msra.mxu0 0.0
    %3321 = vmatprep.subr.mxu0 0.0
    %3322 = vmatpush1.msra.mxu0 0.0
    %3323 = vmatprep.subr.mxu0 0.0
    %3324 = vmatpush1.msra.mxu0 0.0
    %3325 = vmatprep.subr.mxu0 0.0
    %3326 = vmatpush1.msra.mxu0 0.0
    %3327 = vmatprep.subr.mxu0 0.0
    %3328 = vmatpush1.msra.mxu0 0.0
    %3329 = vmatprep.subr.mxu0 0.0
    %3330 = vmatpush1.msra.mxu0 0.0
    %3331 = vmatprep.subr.mxu0 0.0
    %3332 = vmatpush1.msra.mxu0 0.0
    %3333 = vmatprep.subr.mxu0 0.0
    %3334 = vmatpush1.msra.mxu0 0.0
    %3335 = vmatprep.subr.mxu0 0.0
    %3336 = vmatpush1.msra.mxu0 0.0
    %3337 = vmatprep.subr.mxu0 0.0
    %3338 = vmatpush1.msra.mxu0 0.0
    %3339 = vmatprep.mubr.f32.mxu0 0.0
    %3340 = vmatmul.mubr.f32.gmra.mrb[0].mxu0 %v3273
    %v3341 = vpop.f32.mrb[0].mxu0
    %v3342 = vadd.f32 0.0, %v3341
    %v3343 = vpop.f32.mrb[0].mxu0
    %3344 = vdwg.mxu0
    %v3346 = vsel %vm1083, %v2904, 0
    %3348 = vmatprep.subr.mxu0 0.0
    %3349 = vmatpush1.msra.mxu0 %v2189
    %3350 = vmatprep.subr.mxu0 0.0
    %3351 = vmatpush1.msra.mxu0 0.0
    %3352 = vmatprep.subr.mxu0 0.0
    %3353 = vmatpush1.msra.mxu0 0.0
    %3354 = vmatprep.subr.mxu0 0.0
    %3355 = vmatpush1.msra.mxu0 0.0
    %3356 = vmatprep.subr.mxu0 0.0
    %3357 = vmatpush1.msra.mxu0 0.0
    %3358 = vmatprep.subr.mxu0 0.0
    %3359 = vmatpush1.msra.mxu0 0.0
    %3360 = vmatprep.subr.mxu0 0.0
    %3361 = vmatpush1.msra.mxu0 0.0
    %3362 = vmatprep.subr.mxu0 0.0
    %3363 = vmatpush1.msra.mxu0 0.0
    %3364 = vmatprep.subr.mxu0 0.0
    %3365 = vmatpush1.msra.mxu0 0.0
    %3366 = vmatprep.subr.mxu0 0.0
    %3367 = vmatpush1.msra.mxu0 0.0
    %3368 = vmatprep.subr.mxu0 0.0
    %3369 = vmatpush1.msra.mxu0 0.0
    %3370 = vmatprep.subr.mxu0 0.0
    %3371 = vmatpush1.msra.mxu0 0.0
    %3372 = vmatprep.subr.mxu0 0.0
    %3373 = vmatpush1.msra.mxu0 0.0
    %3374 = vmatprep.subr.mxu0 0.0
    %3375 = vmatpush1.msra.mxu0 0.0
    %3376 = vmatprep.subr.mxu0 0.0
    %3377 = vmatpush1.msra.mxu0 0.0
    %3378 = vmatprep.subr.mxu0 0.0
    %3379 = vmatpush1.msra.mxu0 0.0
    %3380 = vmatprep.subr.mxu0 0.0
    %3381 = vmatpush1.msra.mxu0 0.0
    %3382 = vmatprep.subr.mxu0 0.0
    %3383 = vmatpush1.msra.mxu0 0.0
    %3384 = vmatprep.subr.mxu0 0.0
    %3385 = vmatpush1.msra.mxu0 0.0
    %3386 = vmatprep.subr.mxu0 0.0
    %3387 = vmatpush1.msra.mxu0 0.0
    %3388 = vmatprep.subr.mxu0 0.0
    %3389 = vmatpush1.msra.mxu0 0.0
    %3390 = vmatprep.subr.mxu0 0.0
    %3391 = vmatpush1.msra.mxu0 0.0
    %3392 = vmatprep.subr.mxu0 0.0
    %3393 = vmatpush1.msra.mxu0 0.0
    %3394 = vmatprep.subr.mxu0 0.0
    %3395 = vmatpush1.msra.mxu0 0.0
    %3396 = vmatprep.subr.mxu0 0.0
    %3397 = vmatpush1.msra.mxu0 0.0
    %3398 = vmatprep.subr.mxu0 0.0
    %3399 = vmatpush1.msra.mxu0 0.0
    %3400 = vmatprep.subr.mxu0 0.0
    %3401 = vmatpush1.msra.mxu0 0.0
    %3402 = vmatprep.subr.mxu0 0.0
    %3403 = vmatpush1.msra.mxu0 0.0
    %3404 = vmatprep.subr.mxu0 0.0
    %3405 = vmatpush1.msra.mxu0 0.0
    %3406 = vmatprep.subr.mxu0 0.0
    %3407 = vmatpush1.msra.mxu0 0.0
    %3408 = vmatprep.subr.mxu0 0.0
    %3409 = vmatpush1.msra.mxu0 0.0
    %3410 = vmatprep.subr.mxu0 0.0
    %3411 = vmatpush1.msra.mxu0 0.0
    %3412 = vmatprep.mubr.f32.mxu0 0.0
    %3413 = vmatmul.mubr.f32.gmra.mrb[0].mxu0 %v3346
    %v3414 = vpop.f32.mrb[0].mxu0
    %v3415 = vadd.f32 0.0, %v3414
    %v3416 = vpop.f32.mrb[0].mxu0
    %3417 = vdwg.mxu0
    %v3419 = vsel %vm1083, %v2906, 0
    %3421 = vmatprep.subr.mxu0 0.0
    %3422 = vmatpush1.msra.mxu0 %v2192
    %3423 = vmatprep.subr.mxu0 0.0
    %3424 = vmatpush1.msra.mxu0 0.0
    %3425 = vmatprep.subr.mxu0 0.0
    %3426 = vmatpush1.msra.mxu0 0.0
    %3427 = vmatprep.subr.mxu0 0.0
    %3428 = vmatpush1.msra.mxu0 0.0
    %3429 = vmatprep.subr.mxu0 0.0
    %3430 = vmatpush1.msra.mxu0 0.0
    %3431 = vmatprep.subr.mxu0 0.0
    %3432 = vmatpush1.msra.mxu0 0.0
    %3433 = vmatprep.subr.mxu0 0.0
    %3434 = vmatpush1.msra.mxu0 0.0
    %3435 = vmatprep.subr.mxu0 0.0
    %3436 = vmatpush1.msra.mxu0 0.0
    %3437 = vmatprep.subr.mxu0 0.0
    %3438 = vmatpush1.msra.mxu0 0.0
    %3439 = vmatprep.subr.mxu0 0.0
    %3440 = vmatpush1.msra.mxu0 0.0
    %3441 = vmatprep.subr.mxu0 0.0
    %3442 = vmatpush1.msra.mxu0 0.0
    %3443 = vmatprep.subr.mxu0 0.0
    %3444 = vmatpush1.msra.mxu0 0.0
    %3445 = vmatprep.subr.mxu0 0.0
    %3446 = vmatpush1.msra.mxu0 0.0
    %3447 = vmatprep.subr.mxu0 0.0
    %3448 = vmatpush1.msra.mxu0 0.0
    %3449 = vmatprep.subr.mxu0 0.0
    %3450 = vmatpush1.msra.mxu0 0.0
    %3451 = vmatprep.subr.mxu0 0.0
    %3452 = vmatpush1.msra.mxu0 0.0
    %3453 = vmatprep.subr.mxu0 0.0
    %3454 = vmatpush1.msra.mxu0 0.0
    %3455 = vmatprep.subr.mxu0 0.0
    %3456 = vmatpush1.msra.mxu0 0.0
    %3457 = vmatprep.subr.mxu0 0.0
    %3458 = vmatpush1.msra.mxu0 0.0
    %3459 = vmatprep.subr.mxu0 0.0
    %3460 = vmatpush1.msra.mxu0 0.0
    %3461 = vmatprep.subr.mxu0 0.0
    %3462 = vmatpush1.msra.mxu0 0.0
    %3463 = vmatprep.subr.mxu0 0.0
    %3464 = vmatpush1.msra.mxu0 0.0
    %3465 = vmatprep.subr.mxu0 0.0
    %3466 = vmatpush1.msra.mxu0 0.0
    %3467 = vmatprep.subr.mxu0 0.0
    %3468 = vmatpush1.msra.mxu0 0.0
    %3469 = vmatprep.subr.mxu0 0.0
    %3470 = vmatpush1.msra.mxu0 0.0
    %3471 = vmatprep.subr.mxu0 0.0
    %3472 = vmatpush1.msra.mxu0 0.0
    %3473 = vmatprep.subr.mxu0 0.0
    %3474 = vmatpush1.msra.mxu0 0.0
    %3475 = vmatprep.subr.mxu0 0.0
    %3476 = vmatpush1.msra.mxu0 0.0
    %3477 = vmatprep.subr.mxu0 0.0
    %3478 = vmatpush1.msra.mxu0 0.0
    %3479 = vmatprep.subr.mxu0 0.0
    %3480 = vmatpush1.msra.mxu0 0.0
    %3481 = vmatprep.subr.mxu0 0.0
    %3482 = vmatpush1.msra.mxu0 0.0
    %3483 = vmatprep.subr.mxu0 0.0
    %3484 = vmatpush1.msra.mxu0 0.0
    %3485 = vmatprep.mubr.f32.mxu0 0.0
    %3486 = vmatmul.mubr.f32.gmra.mrb[0].mxu0 %v3419
    %v3487 = vpop.f32.mrb[0].mxu0
    %v3488 = vadd.f32 0.0, %v3487
    %v3489 = vpop.f32.mrb[0].mxu0
    %3490 = vdwg.mxu0
    %3492 = vrot.lane.b32.xlu0 %v3050, 32
    %v3493 = vpop.permute.xlu0 %3492
    %3496 = vrot.lane.b32.xlu0 %v3123, 64
    %v3497 = vpop.permute.xlu0 %3496
    %3500 = vrot.lane.b32.xlu0 %v3196, 96
    %v3501 = vpop.permute.xlu0 %3500
    %v3503 = vsel %vm474, %v2977, %v3493
    %v3504 = vsel %vm1769, %v3503, %v3497
    %v3505 = vsel %vm1771, %v3504, %v3501
    %3507 = vrot.lane.b32.xlu0 %v3342, 32
    %v3508 = vpop.permute.xlu0 %3507
    %3511 = vrot.lane.b32.xlu0 %v3415, 64
    %v3512 = vpop.permute.xlu0 %3511
    %3515 = vrot.lane.b32.xlu0 %v3488, 96
    %v3516 = vpop.permute.xlu0 %3515
    %v3518 = vsel %vm474, %v3269, %v3508
    %v3519 = vsel %vm1769, %v3518, %v3512
    %v3520 = vsel %vm1771, %v3519, %v3516
    %v3521 = vpack.c.bf16 %v3520, %v3505
    %v3523 = vlaneseq
    %v3524 = vshrl.u32 %v3523, 7
    %v3525 = vsub.s32 0, %v3524
    %v3526 = vrot.slane %v2210, %v3525
    %v3544 = vunpack.c.l.b16 %v2194
    %v3545 = vunpack.c.l.b16 %v2195
    %v3546 = vunpack.c.l.b16 %v2196
    %v3547 = vunpack.c.l.b16 %v2197
    %v3548 = vunpack.c.l.b16 %v2198
    %v3549 = vunpack.c.l.b16 %v2199
    %v3550 = vunpack.c.l.b16 %v2200
    %v3551 = vunpack.c.l.b16 %v2201
    %v3552 = vunpack.c.l.b16 %v2202
    %v3553 = vunpack.c.l.b16 %v2203
    %v3554 = vunpack.c.l.b16 %v2204
    %v3555 = vunpack.c.l.b16 %v2205
    %v3556 = vunpack.c.l.b16 %v2206
    %v3557 = vunpack.c.l.b16 %v2207
    %v3558 = vunpack.c.l.b16 %v2208
    %v3559 = vunpack.c.l.b16 %v2209
    %v3560 = vpack.c.b16 %v3545, %v3544
    %v3561 = vpack.c.b16 %v3547, %v3546
    %v3562 = vpack.c.b16 %v3549, %v3548
    %v3563 = vpack.c.b16 %v3551, %v3550
    %v3564 = vpack.c.b16 %v3553, %v3552
    %v3565 = vpack.c.b16 %v3555, %v3554
    %v3566 = vpack.c.b16 %v3557, %v3556
    %v3567 = vpack.c.b16 %v3559, %v3558
    %3576 = vmatprep.subr.bf16.mxu0 0
    %3577 = vmatpush1.bf16.msra.mxu0 %v3560
    %3578 = vmatprep.subr.bf16.mxu0 0
    %3579 = vmatpush1.bf16.msra.mxu0 %v3561
    %3580 = vmatprep.subr.bf16.mxu0 0
    %3581 = vmatpush1.bf16.msra.mxu0 %v3562
    %3582 = vmatprep.subr.bf16.mxu0 0
    %3583 = vmatpush1.bf16.msra.mxu0 %v3563
    %3584 = vmatprep.subr.bf16.mxu0 0
    %3585 = vmatpush1.bf16.msra.mxu0 %v3564
    %3586 = vmatprep.subr.bf16.mxu0 0
    %3587 = vmatpush1.bf16.msra.mxu0 %v3565
    %3588 = vmatprep.subr.bf16.mxu0 0
    %3589 = vmatpush1.bf16.msra.mxu0 %v3566
    %3590 = vmatprep.subr.bf16.mxu0 0
    %3591 = vmatpush1.bf16.msra.mxu0 %v3567
    %3592 = vmatprep.subr.bf16.mxu0 0
    %3593 = vmatpush1.bf16.msra.mxu0 0
    %3594 = vmatprep.subr.bf16.mxu0 0
    %3595 = vmatpush1.bf16.msra.mxu0 0
    %3596 = vmatprep.subr.bf16.mxu0 0
    %3597 = vmatpush1.bf16.msra.mxu0 0
    %3598 = vmatprep.subr.bf16.mxu0 0
    %3599 = vmatpush1.bf16.msra.mxu0 0
    %3600 = vmatprep.subr.bf16.mxu0 0
    %3601 = vmatpush1.bf16.msra.mxu0 0
    %3602 = vmatprep.subr.bf16.mxu0 0
    %3603 = vmatpush1.bf16.msra.mxu0 0
    %3604 = vmatprep.subr.bf16.mxu0 0
    %3605 = vmatpush1.bf16.msra.mxu0 0
    %3606 = vmatprep.subr.bf16.mxu0 0
    %3607 = vmatpush1.bf16.msra.mxu0 0
    %3608 = vmatprep.mubr.bf16.mxu0 0
    %3609 = vmatmul.mubr.bf16.gmra.mrb[0].mxu0 %v3521
    %v3610 = vpop.f32.mrb[0].mxu0
    %v3611 = vadd.f32 %v3526, %v3610
    %v3612 = vpop.f32.mrb[0].mxu0
    %v3613 = vpop.f32.mrb[0].mxu0
    %v3614 = vadd.f32 %v3526, %v3613
    %v3615 = vpop.f32.mrb[0].mxu0
    %3616 = vdwg.mxu0
    %v3617 = vadd.f32 %v3611, %v111
    %v3618 = vadd.f32 %v3614, %v112
    %v3619 = vld [vmem:[#allocation11] sm:$0x1]
    %v3620 = vld [vmem:[#allocation11 + $0x1] sm:$0x1]
    %3621 = vadd.xlane.f32.xlu0 %v3617
    %v3622 = vpop.xlane.xlu0 %3621
    %3623 = vadd.xlane.f32.xlu0 %v3618
    %v3624 = vpop.xlane.xlu0 %3623
    %v3625 = vrcp.pop 128.0
    %v3626 = vmul.f32 %v3622, %v3625
    %v3627 = vmul.f32 %v3624, %v3625
    %v3628 = vsub.f32 %v3617, %v3626
    %v3629 = vsub.f32 %v3618, %v3627
    %v3630 = vmul.f32 %v3628, %v3628
    %v3631 = vmul.f32 %v3629, %v3629
    %3632 = vadd.xlane.f32.xlu0 %v3630
    %v3633 = vpop.xlane.xlu0 %3632
    %3634 = vadd.xlane.f32.xlu0 %v3631
    %v3635 = vpop.xlane.xlu0 %3634
    %v3636 = vmul.f32 %v3633, %v3625
    %v3637 = vmul.f32 %v3635, %v3625
    %v3638 = vadd.f32 %v3636, 1e-05
    %v3639 = vadd.f32 %v3637, 1e-05
    %v3640 = vrsqrt.pop %v3638
    %v3641 = vrsqrt.pop %v3639
    %v3642 = vmul.f32 %v3628, %v3640
    %v3643 = vmul.f32 %v3629, %v3641
    %v3644 = vlaneseq
    %v3645 = vshrl.u32 %v3644, 7
    %v3646 = vsub.s32 0, %v3645
    %v3647 = vrot.slane %v3619, %v3646
    %v3648 = vmul.f32 %v3647, %v3642
    %v3649 = vmul.f32 %v3647, %v3643
    %v3650 = vlaneseq
    %v3651 = vshrl.u32 %v3650, 7
    %v3652 = vsub.s32 0, %v3651
    %v3653 = vrot.slane %v3620, %v3652
    %v3654 = vadd.f32 %v3648, %v3653
    %v3655 = vadd.f32 %v3649, %v3653
    %v3656 = vld [vmem:[#allocation8 + $0x10] sm:$0xf]
    %v3657 = vld [vmem:[#allocation8 + $0x38] sm:$0xf]
    %v3658 = vld [vmem:[#allocation8 + $0x60] sm:$0xf]
    %v3659 = vld [vmem:[#allocation8 + $0x88] sm:$0xf]
    %v3660 = vld [vmem:[#allocation8 + $0xb0] sm:$0xf]
    %v3661 = vld [vmem:[#allocation8 + $0xd8] sm:$0xf]
    %v3662 = vld [vmem:[#allocation8 + $0x100] sm:$0xf]
    %v3663 = vld [vmem:[#allocation8 + $0x128] sm:$0xf]
    %v3664 = vld [vmem:[#allocation8 + $0x150] sm:$0xf]
    %v3665 = vld [vmem:[#allocation8 + $0x178] sm:$0xf]
    %v3666 = vld [vmem:[#allocation8 + $0x1a0] sm:$0xf]
    %v3667 = vld [vmem:[#allocation8 + $0x1c8] sm:$0xf]
    %v3668 = vld [vmem:[#allocation8 + $0x1f0] sm:$0xf]
    %v3669 = vld [vmem:[#allocation8 + $0x218] sm:$0xf]
    %v3670 = vld [vmem:[#allocation8 + $0x240] sm:$0xf]
    %v3671 = vld [vmem:[#allocation8 + $0x268] sm:$0xf]
    %v3672 = vpack.c.bf16 %v3655, %v3654
    %v3673 = vld [vmem:[%s6 + $0x4] sm:$0x1]
    %v3675 = vlaneseq
    %v3676 = vshrl.u32 %v3675, 7
    %v3677 = vsub.s32 0, %v3676
    %v3678 = vrot.slane %v3673, %v3677
    %v3696 = vunpack.c.l.b16 %v3656
    %v3697 = vunpack.c.l.b16 %v3657
    %v3698 = vunpack.c.l.b16 %v3658
    %v3699 = vunpack.c.l.b16 %v3659
    %v3700 = vunpack.c.l.b16 %v3660
    %v3701 = vunpack.c.l.b16 %v3661
    %v3702 = vunpack.c.l.b16 %v3662
    %v3703 = vunpack.c.l.b16 %v3663
    %v3704 = vunpack.c.l.b16 %v3664
    %v3705 = vunpack.c.l.b16 %v3665
    %v3706 = vunpack.c.l.b16 %v3666
    %v3707 = vunpack.c.l.b16 %v3667
    %v3708 = vunpack.c.l.b16 %v3668
    %v3709 = vunpack.c.l.b16 %v3669
    %v3710 = vunpack.c.l.b16 %v3670
    %v3711 = vunpack.c.l.b16 %v3671
    %v3712 = vpack.c.b16 %v3697, %v3696
    %v3713 = vpack.c.b16 %v3699, %v3698
    %v3714 = vpack.c.b16 %v3701, %v3700
    %v3715 = vpack.c.b16 %v3703, %v3702
    %v3716 = vpack.c.b16 %v3705, %v3704
    %v3717 = vpack.c.b16 %v3707, %v3706
    %v3718 = vpack.c.b16 %v3709, %v3708
    %v3719 = vpack.c.b16 %v3711, %v3710
    %3728 = vmatprep.subr.bf16.mxu0 0
    %3729 = vmatpush1.bf16.msra.mxu0 %v3712
    %3730 = vmatprep.subr.bf16.mxu0 0
    %3731 = vmatpush1.bf16.msra.mxu0 %v3713
    %3732 = vmatprep.subr.bf16.mxu0 0
    %3733 = vmatpush1.bf16.msra.mxu0 %v3714
    %3734 = vmatprep.subr.bf16.mxu0 0
    %3735 = vmatpush1.bf16.msra.mxu0 %v3715
    %3736 = vmatprep.subr.bf16.mxu0 0
    %3737 = vmatpush1.bf16.msra.mxu0 %v3716
    %3738 = vmatprep.subr.bf16.mxu0 0
    %3739 = vmatpush1.bf16.msra.mxu0 %v3717
    %3740 = vmatprep.subr.bf16.mxu0 0
    %3741 = vmatpush1.bf16.msra.mxu0 %v3718
    %3742 = vmatprep.subr.bf16.mxu0 0
    %3743 = vmatpush1.bf16.msra.mxu0 %v3719
    %3744 = vmatprep.subr.bf16.mxu0 0
    %3745 = vmatpush1.bf16.msra.mxu0 0
    %3746 = vmatprep.subr.bf16.mxu0 0
    %3747 = vmatpush1.bf16.msra.mxu0 0
    %3748 = vmatprep.subr.bf16.mxu0 0
    %3749 = vmatpush1.bf16.msra.mxu0 0
    %3750 = vmatprep.subr.bf16.mxu0 0
    %3751 = vmatpush1.bf16.msra.mxu0 0
    %3752 = vmatprep.subr.bf16.mxu0 0
    %3753 = vmatpush1.bf16.msra.mxu0 0
    %3754 = vmatprep.subr.bf16.mxu0 0
    %3755 = vmatpush1.bf16.msra.mxu0 0
    %3756 = vmatprep.subr.bf16.mxu0 0
    %3757 = vmatpush1.bf16.msra.mxu0 0
    %3758 = vmatprep.subr.bf16.mxu0 0
    %3759 = vmatpush1.bf16.msra.mxu0 0
    %3760 = vmatprep.mubr.bf16.mxu0 0
    %3761 = vmatmul.mubr.bf16.gmra.mrb[0].mxu0 %v3672
    %v3762 = vpop.f32.mrb[0].mxu0
    %v3763 = vadd.f32 %v3678, %v3762
    %v3764 = vpop.f32.mrb[0].mxu0
    %v3765 = vpop.f32.mrb[0].mxu0
    %v3766 = vadd.f32 %v3678, %v3765
    %v3767 = vpop.f32.mrb[0].mxu0
    %3768 = vdwg.mxu0
    %v3769 = vld [vmem:[#allocation8 + $0x14] sm:$0xff]
    %v3770 = vld [vmem:[#allocation8 + $0x3c] sm:$0xff]
    %v3771 = vld [vmem:[#allocation8 + $0x64] sm:$0xff]
    %v3772 = vld [vmem:[#allocation8 + $0x8c] sm:$0xff]
    %v3773 = vld [vmem:[#allocation8 + $0xb4] sm:$0xff]
    %v3774 = vld [vmem:[#allocation8 + $0xdc] sm:$0xff]
    %v3775 = vld [vmem:[#allocation8 + $0x104] sm:$0xff]
    %v3776 = vld [vmem:[#allocation8 + $0x12c] sm:$0xff]
    %v3777 = vld [vmem:[#allocation8 + $0x154] sm:$0xff]
    %v3778 = vld [vmem:[#allocation8 + $0x17c] sm:$0xff]
    %v3779 = vld [vmem:[#allocation8 + $0x1a4] sm:$0xff]
    %v3780 = vld [vmem:[#allocation8 + $0x1cc] sm:$0xff]
    %v3781 = vld [vmem:[#allocation8 + $0x1f4] sm:$0xff]
    %v3782 = vld [vmem:[#allocation8 + $0x21c] sm:$0xff]
    %v3783 = vld [vmem:[#allocation8 + $0x244] sm:$0xff]
    %v3784 = vld [vmem:[#allocation8 + $0x26c] sm:$0xff]
    %v3785 = vpack.c.bf16 %v110, %v109
    %v3786 = vld [vmem:[%s6 + $0x5] sm:$0x3]
    %v3788 = vlaneseq
    %v3789 = vshrl.u32 %v3788, 7
    %v3790 = vsub.s32 0, %v3789
    %v3791 = vrot.slane %v3786, %v3790
    %v3792 = vlaneseq
    %v3793 = vshrl.u32 %v3792, 7
    %v3794 = vsub.s32 1, %v3793
    %v3795 = vrot.slane %v3786, %v3794
    %v3814 = vunpack.c.l.b16 %v3769
    %v3815 = vunpack.c.h.b16 %v3769
    %v3816 = vunpack.c.l.b16 %v3770
    %v3817 = vunpack.c.h.b16 %v3770
    %v3818 = vunpack.c.l.b16 %v3771
    %v3819 = vunpack.c.h.b16 %v3771
    %v3820 = vunpack.c.l.b16 %v3772
    %v3821 = vunpack.c.h.b16 %v3772
    %v3822 = vunpack.c.l.b16 %v3773
    %v3823 = vunpack.c.h.b16 %v3773
    %v3824 = vunpack.c.l.b16 %v3774
    %v3825 = vunpack.c.h.b16 %v3774
    %v3826 = vunpack.c.l.b16 %v3775
    %v3827 = vunpack.c.h.b16 %v3775
    %v3828 = vunpack.c.l.b16 %v3776
    %v3829 = vunpack.c.h.b16 %v3776
    %v3830 = vunpack.c.l.b16 %v3777
    %v3831 = vunpack.c.h.b16 %v3777
    %v3832 = vunpack.c.l.b16 %v3778
    %v3833 = vunpack.c.h.b16 %v3778
    %v3834 = vunpack.c.l.b16 %v3779
    %v3835 = vunpack.c.h.b16 %v3779
    %v3836 = vunpack.c.l.b16 %v3780
    %v3837 = vunpack.c.h.b16 %v3780
    %v3838 = vunpack.c.l.b16 %v3781
    %v3839 = vunpack.c.h.b16 %v3781
    %v3840 = vunpack.c.l.b16 %v3782
    %v3841 = vunpack.c.h.b16 %v3782
    %v3842 = vunpack.c.l.b16 %v3783
    %v3843 = vunpack.c.h.b16 %v3783
    %v3844 = vunpack.c.l.b16 %v3784
    %v3845 = vunpack.c.h.b16 %v3784
    %v3846 = vpack.c.b16 %v3816, %v3814
    %v3847 = vpack.c.b16 %v3817, %v3815
    %v3848 = vpack.c.b16 %v3820, %v3818
    %v3849 = vpack.c.b16 %v3821, %v3819
    %v3850 = vpack.c.b16 %v3824, %v3822
    %v3851 = vpack.c.b16 %v3825, %v3823
    %v3852 = vpack.c.b16 %v3828, %v3826
    %v3853 = vpack.c.b16 %v3829, %v3827
    %v3854 = vpack.c.b16 %v3832, %v3830
    %v3855 = vpack.c.b16 %v3833, %v3831
    %v3856 = vpack.c.b16 %v3836, %v3834
    %v3857 = vpack.c.b16 %v3837, %v3835
    %v3858 = vpack.c.b16 %v3840, %v3838
    %v3859 = vpack.c.b16 %v3841, %v3839
    %v3860 = vpack.c.b16 %v3844, %v3842
    %v3861 = vpack.c.b16 %v3845, %v3843
    %3878 = vmatprep.subr.bf16.mxu0 %v3847
    %3879 = vmatpush1.bf16.msra.mxu0 %v3846
    %3880 = vmatprep.subr.bf16.mxu0 %v3849
    %3881 = vmatpush1.bf16.msra.mxu0 %v3848
    %3882 = vmatprep.subr.bf16.mxu0 %v3851
    %3883 = vmatpush1.bf16.msra.mxu0 %v3850
    %3884 = vmatprep.subr.bf16.mxu0 %v3853
    %3885 = vmatpush1.bf16.msra.mxu0 %v3852
    %3886 = vmatprep.subr.bf16.mxu0 %v3855
    %3887 = vmatpush1.bf16.msra.mxu0 %v3854
    %3888 = vmatprep.subr.bf16.mxu0 %v3857
    %3889 = vmatpush1.bf16.msra.mxu0 %v3856
    %3890 = vmatprep.subr.bf16.mxu0 %v3859
    %3891 = vmatpush1.bf16.msra.mxu0 %v3858
    %3892 = vmatprep.subr.bf16.mxu0 %v3861
    %3893 = vmatpush1.bf16.msra.mxu0 %v3860
    %3894 = vmatprep.subr.bf16.mxu0 0
    %3895 = vmatpush1.bf16.msra.mxu0 0
    %3896 = vmatprep.subr.bf16.mxu0 0
    %3897 = vmatpush1.bf16.msra.mxu0 0
    %3898 = vmatprep.subr.bf16.mxu0 0
    %3899 = vmatpush1.bf16.msra.mxu0 0
    %3900 = vmatprep.subr.bf16.mxu0 0
    %3901 = vmatpush1.bf16.msra.mxu0 0
    %3902 = vmatprep.subr.bf16.mxu0 0
    %3903 = vmatpush1.bf16.msra.mxu0 0
    %3904 = vmatprep.subr.bf16.mxu0 0
    %3905 = vmatpush1.bf16.msra.mxu0 0
    %3906 = vmatprep.subr.bf16.mxu0 0
    %3907 = vmatpush1.bf16.msra.mxu0 0
    %3908 = vmatprep.subr.bf16.mxu0 0
    %3909 = vmatpush1.bf16.msra.mxu0 0
    %3910 = vmatprep.mubr.bf16.mxu0 0
    %3911 = vmatmul.mubr.bf16.gmra.mrb[0].mxu0 %v3785
    %v3912 = vpop.f32.mrb[0].mxu0
    %v3913 = vadd.f32 %v3791, %v3912
    %v3914 = vpop.f32.mrb[0].mxu0
    %v3915 = vadd.f32 %v3795, %v3914
    %v3916 = vpop.f32.mrb[0].mxu0
    %v3917 = vadd.f32 %v3791, %v3916
    %v3918 = vpop.f32.mrb[0].mxu0
    %v3919 = vadd.f32 %v3795, %v3918
    %3920 = vdwg.mxu0
    %3922 = vrot.lane.b32.xlu0 %v3763, 96
    %v3923 = vpop.permute.xlu0 %3922
    %3924 = vrot.lane.b32.xlu0 %v3763, 64
    %v3925 = vpop.permute.xlu0 %3924
    %3926 = vrot.lane.b32.xlu0 %v3763, 32
    %v3927 = vpop.permute.xlu0 %3926
    %3929 = vrot.lane.b32.xlu0 %v3766, 96
    %v3930 = vpop.permute.xlu0 %3929
    %3931 = vrot.lane.b32.xlu0 %v3766, 64
    %v3932 = vpop.permute.xlu0 %3931
    %3933 = vrot.lane.b32.xlu0 %v3766, 32
    %v3934 = vpop.permute.xlu0 %3933
    %3936 = vrot.lane.b32.xlu0 %v3913, 96
    %v3937 = vpop.permute.xlu0 %3936
    %3938 = vrot.lane.b32.xlu0 %v3913, 64
    %v3939 = vpop.permute.xlu0 %3938
    %3940 = vrot.lane.b32.xlu0 %v3913, 32
    %v3941 = vpop.permute.xlu0 %3940
    %3943 = vrot.lane.b32.xlu0 %v3917, 96
    %v3944 = vpop.permute.xlu0 %3943
    %3945 = vrot.lane.b32.xlu0 %v3917, 64
    %v3946 = vpop.permute.xlu0 %3945
    %3947 = vrot.lane.b32.xlu0 %v3917, 32
    %v3948 = vpop.permute.xlu0 %3947
    %3950 = vrot.lane.b32.xlu0 %v3915, 96
    %v3951 = vpop.permute.xlu0 %3950
    %3953 = vrot.lane.b32.xlu0 %v3915, 64
    %v3954 = vpop.permute.xlu0 %3953
    %3956 = vrot.lane.b32.xlu0 %v3915, 32
    %v3957 = vpop.permute.xlu0 %3956
    %3960 = vrot.lane.b32.xlu0 %v3919, 96
    %v3961 = vpop.permute.xlu0 %3960
    %3963 = vrot.lane.b32.xlu0 %v3919, 64
    %v3964 = vpop.permute.xlu0 %3963
    %3966 = vrot.lane.b32.xlu0 %v3919, 32
    %v3967 = vpop.permute.xlu0 %3966
    %v3969 = vld [vmem:[#allocation8 + $0x1c] sm:$0xf]
    %v3970 = vld [vmem:[#allocation8 + $0x44] sm:$0xf]
    %v3971 = vld [vmem:[#allocation8 + $0x6c] sm:$0xf]
    %v3972 = vld [vmem:[#allocation8 + $0x94] sm:$0xf]
    %v3973 = vld [vmem:[#allocation8 + $0xbc] sm:$0xf]
    %v3974 = vld [vmem:[#allocation8 + $0xe4] sm:$0xf]
    %v3975 = vld [vmem:[#allocation8 + $0x10c] sm:$0xf]
    %v3976 = vld [vmem:[#allocation8 + $0x134] sm:$0xf]
    %v3977 = vld [vmem:[#allocation8 + $0x15c] sm:$0xf]
    %v3978 = vld [vmem:[#allocation8 + $0x184] sm:$0xf]
    %v3979 = vld [vmem:[#allocation8 + $0x1ac] sm:$0xf]
    %v3980 = vld [vmem:[#allocation8 + $0x1d4] sm:$0xf]
    %v3981 = vld [vmem:[#allocation8 + $0x1fc] sm:$0xf]
    %v3982 = vld [vmem:[#allocation8 + $0x224] sm:$0xf]
    %v3983 = vld [vmem:[#allocation8 + $0x24c] sm:$0xf]
    %v3984 = vld [vmem:[#allocation8 + $0x274] sm:$0xf]
    %v3985 = vld [vmem:[%s6 + $0x7] sm:$0x1]
    %v3986 = vsel %vm474, %v3763, 0
    %v3988 = vsel %vm474, %v3913, 0
    %3990 = vmatprep.subr.mxu0 0.0
    %3991 = vmatpush1.xpose.msra.mxu0 %v3988
    %3992 = vmatprep.subr.mxu0 0.0
    %3993 = vmatpush1.xpose.msra.mxu0 0.0
    %3994 = vmatprep.subr.mxu0 0.0
    %3995 = vmatpush1.xpose.msra.mxu0 0.0
    %3996 = vmatprep.subr.mxu0 0.0
    %3997 = vmatpush1.xpose.msra.mxu0 0.0
    %3998 = vmatprep.subr.mxu0 0.0
    %3999 = vmatpush1.xpose.msra.mxu0 0.0
    %4000 = vmatprep.subr.mxu0 0.0
    %4001 = vmatpush1.xpose.msra.mxu0 0.0
    %4002 = vmatprep.subr.mxu0 0.0
    %4003 = vmatpush1.xpose.msra.mxu0 0.0
    %4004 = vmatprep.subr.mxu0 0.0
    %4005 = vmatpush1.xpose.msra.mxu0 0.0
    %4006 = vmatprep.subr.mxu0 0.0
    %4007 = vmatpush1.xpose.msra.mxu0 0.0
    %4008 = vmatprep.subr.mxu0 0.0
    %4009 = vmatpush1.xpose.msra.mxu0 0.0
    %4010 = vmatprep.subr.mxu0 0.0
    %4011 = vmatpush1.xpose.msra.mxu0 0.0
    %4012 = vmatprep.subr.mxu0 0.0
    %4013 = vmatpush1.xpose.msra.mxu0 0.0
    %4014 = vmatprep.subr.mxu0 0.0
    %4015 = vmatpush1.xpose.msra.mxu0 0.0
    %4016 = vmatprep.subr.mxu0 0.0
    %4017 = vmatpush1.xpose.msra.mxu0 0.0
    %4018 = vmatprep.subr.mxu0 0.0
    %4019 = vmatpush1.xpose.msra.mxu0 0.0
    %4020 = vmatprep.subr.mxu0 0.0
    %4021 = vmatpush1.xpose.msra.mxu0 0.0
    %4022 = vmatprep.subr.mxu0 0.0
    %4023 = vmatpush1.xpose.msra.mxu0 0.0
    %4024 = vmatprep.subr.mxu0 0.0
    %4025 = vmatpush1.xpose.msra.mxu0 0.0
    %4026 = vmatprep.subr.mxu0 0.0
    %4027 = vmatpush1.xpose.msra.mxu0 0.0
    %4028 = vmatprep.subr.mxu0 0.0
    %4029 = vmatpush1.xpose.msra.mxu0 0.0
    %4030 = vmatprep.subr.mxu0 0.0
    %4031 = vmatpush1.xpose.msra.mxu0 0.0
    %4032 = vmatprep.subr.mxu0 0.0
    %4033 = vmatpush1.xpose.msra.mxu0 0.0
    %4034 = vmatprep.subr.mxu0 0.0
    %4035 = vmatpush1.xpose.msra.mxu0 0.0
    %4036 = vmatprep.subr.mxu0 0.0
    %4037 = vmatpush1.xpose.msra.mxu0 0.0
    %4038 = vmatprep.subr.mxu0 0.0
    %4039 = vmatpush1.xpose.msra.mxu0 0.0
    %4040 = vmatprep.subr.mxu0 0.0
    %4041 = vmatpush1.xpose.msra.mxu0 0.0
    %4042 = vmatprep.subr.mxu0 0.0
    %4043 = vmatpush1.xpose.msra.mxu0 0.0
    %4044 = vmatprep.subr.mxu0 0.0
    %4045 = vmatpush1.xpose.msra.mxu0 0.0
    %4046 = vmatprep.subr.mxu0 0.0
    %4047 = vmatpush1.xpose.msra.mxu0 0.0
    %4048 = vmatprep.subr.mxu0 0.0
    %4049 = vmatpush1.xpose.msra.mxu0 0.0
    %4050 = vmatprep.subr.mxu0 0.0
    %4051 = vmatpush1.xpose.msra.mxu0 0.0
    %4052 = vmatprep.subr.mxu0 0.0
    %4053 = vmatpush1.xpose.msra.mxu0 0.0
    %4054 = vmatprep.mubr.f32.mxu0 0.0
    %4055 = vmatmul.mubr.f32.gmra.mrb[0].mxu0 %v3986
    %v4056 = vpop.f32.mrb[0].mxu0
    %v4057 = vadd.f32 0.0, %v4056
    %v4058 = vpop.f32.mrb[0].mxu0
    %4059 = vdwg.mxu0
    %v4060 = vsel %vm474, %v3923, 0
    %v4062 = vsel %vm474, %v3937, 0
    %4064 = vmatprep.subr.mxu0 0.0
    %4065 = vmatpush1.xpose.msra.mxu0 %v4062
    %4066 = vmatprep.subr.mxu0 0.0
    %4067 = vmatpush1.xpose.msra.mxu0 0.0
    %4068 = vmatprep.subr.mxu0 0.0
    %4069 = vmatpush1.xpose.msra.mxu0 0.0
    %4070 = vmatprep.subr.mxu0 0.0
    %4071 = vmatpush1.xpose.msra.mxu0 0.0
    %4072 = vmatprep.subr.mxu0 0.0
    %4073 = vmatpush1.xpose.msra.mxu0 0.0
    %4074 = vmatprep.subr.mxu0 0.0
    %4075 = vmatpush1.xpose.msra.mxu0 0.0
    %4076 = vmatprep.subr.mxu0 0.0
    %4077 = vmatpush1.xpose.msra.mxu0 0.0
    %4078 = vmatprep.subr.mxu0 0.0
    %4079 = vmatpush1.xpose.msra.mxu0 0.0
    %4080 = vmatprep.subr.mxu0 0.0
    %4081 = vmatpush1.xpose.msra.mxu0 0.0
    %4082 = vmatprep.subr.mxu0 0.0
    %4083 = vmatpush1.xpose.msra.mxu0 0.0
    %4084 = vmatprep.subr.mxu0 0.0
    %4085 = vmatpush1.xpose.msra.mxu0 0.0
    %4086 = vmatprep.subr.mxu0 0.0
    %4087 = vmatpush1.xpose.msra.mxu0 0.0
    %4088 = vmatprep.subr.mxu0 0.0
    %4089 = vmatpush1.xpose.msra.mxu0 0.0
    %4090 = vmatprep.subr.mxu0 0.0
    %4091 = vmatpush1.xpose.msra.mxu0 0.0
    %4092 = vmatprep.subr.mxu0 0.0
    %4093 = vmatpush1.xpose.msra.mxu0 0.0
    %4094 = vmatprep.subr.mxu0 0.0
    %4095 = vmatpush1.xpose.msra.mxu0 0.0
    %4096 = vmatprep.subr.mxu0 0.0
    %4097 = vmatpush1.xpose.msra.mxu0 0.0
    %4098 = vmatprep.subr.mxu0 0.0
    %4099 = vmatpush1.xpose.msra.mxu0 0.0
    %4100 = vmatprep.subr.mxu0 0.0
    %4101 = vmatpush1.xpose.msra.mxu0 0.0
    %4102 = vmatprep.subr.mxu0 0.0
    %4103 = vmatpush1.xpose.msra.mxu0 0.0
    %4104 = vmatprep.subr.mxu0 0.0
    %4105 = vmatpush1.xpose.msra.mxu0 0.0
    %4106 = vmatprep.subr.mxu0 0.0
    %4107 = vmatpush1.xpose.msra.mxu0 0.0
    %4108 = vmatprep.subr.mxu0 0.0
    %4109 = vmatpush1.xpose.msra.mxu0 0.0
    %4110 = vmatprep.subr.mxu0 0.0
    %4111 = vmatpush1.xpose.msra.mxu0 0.0
    %4112 = vmatprep.subr.mxu0 0.0
    %4113 = vmatpush1.xpose.msra.mxu0 0.0
    %4114 = vmatprep.subr.mxu0 0.0
    %4115 = vmatpush1.xpose.msra.mxu0 0.0
    %4116 = vmatprep.subr.mxu0 0.0
    %4117 = vmatpush1.xpose.msra.mxu0 0.0
    %4118 = vmatprep.subr.mxu0 0.0
    %4119 = vmatpush1.xpose.msra.mxu0 0.0
    %4120 = vmatprep.subr.mxu0 0.0
    %4121 = vmatpush1.xpose.msra.mxu0 0.0
    %4122 = vmatprep.subr.mxu0 0.0
    %4123 = vmatpush1.xpose.msra.mxu0 0.0
    %4124 = vmatprep.subr.mxu0 0.0
    %4125 = vmatpush1.xpose.msra.mxu0 0.0
    %4126 = vmatprep.subr.mxu0 0.0
    %4127 = vmatpush1.xpose.msra.mxu0 0.0
    %4128 = vmatprep.mubr.f32.mxu0 0.0
    %4129 = vmatmul.mubr.f32.gmra.mrb[0].mxu0 %v4060
    %v4130 = vpop.f32.mrb[0].mxu0
    %v4131 = vadd.f32 0.0, %v4130
    %v4132 = vpop.f32.mrb[0].mxu0
    %4133 = vdwg.mxu0
    %v4134 = vsel %vm474, %v3925, 0
    %v4136 = vsel %vm474, %v3939, 0
    %4138 = vmatprep.subr.mxu0 0.0
    %4139 = vmatpush1.xpose.msra.mxu0 %v4136
    %4140 = vmatprep.subr.mxu0 0.0
    %4141 = vmatpush1.xpose.msra.mxu0 0.0
    %4142 = vmatprep.subr.mxu0 0.0
    %4143 = vmatpush1.xpose.msra.mxu0 0.0
    %4144 = vmatprep.subr.mxu0 0.0
    %4145 = vmatpush1.xpose.msra.mxu0 0.0
    %4146 = vmatprep.subr.mxu0 0.0
    %4147 = vmatpush1.xpose.msra.mxu0 0.0
    %4148 = vmatprep.subr.mxu0 0.0
    %4149 = vmatpush1.xpose.msra.mxu0 0.0
    %4150 = vmatprep.subr.mxu0 0.0
    %4151 = vmatpush1.xpose.msra.mxu0 0.0
    %4152 = vmatprep.subr.mxu0 0.0
    %4153 = vmatpush1.xpose.msra.mxu0 0.0
    %4154 = vmatprep.subr.mxu0 0.0
    %4155 = vmatpush1.xpose.msra.mxu0 0.0
    %4156 = vmatprep.subr.mxu0 0.0
    %4157 = vmatpush1.xpose.msra.mxu0 0.0
    %4158 = vmatprep.subr.mxu0 0.0
    %4159 = vmatpush1.xpose.msra.mxu0 0.0
    %4160 = vmatprep.subr.mxu0 0.0
    %4161 = vmatpush1.xpose.msra.mxu0 0.0
    %4162 = vmatprep.subr.mxu0 0.0
    %4163 = vmatpush1.xpose.msra.mxu0 0.0
    %4164 = vmatprep.subr.mxu0 0.0
    %4165 = vmatpush1.xpose.msra.mxu0 0.0
    %4166 = vmatprep.subr.mxu0 0.0
    %4167 = vmatpush1.xpose.msra.mxu0 0.0
    %4168 = vmatprep.subr.mxu0 0.0
    %4169 = vmatpush1.xpose.msra.mxu0 0.0
    %4170 = vmatprep.subr.mxu0 0.0
    %4171 = vmatpush1.xpose.msra.mxu0 0.0
    %4172 = vmatprep.subr.mxu0 0.0
    %4173 = vmatpush1.xpose.msra.mxu0 0.0
    %4174 = vmatprep.subr.mxu0 0.0
    %4175 = vmatpush1.xpose.msra.mxu0 0.0
    %4176 = vmatprep.subr.mxu0 0.0
    %4177 = vmatpush1.xpose.msra.mxu0 0.0
    %4178 = vmatprep.subr.mxu0 0.0
    %4179 = vmatpush1.xpose.msra.mxu0 0.0
    %4180 = vmatprep.subr.mxu0 0.0
    %4181 = vmatpush1.xpose.msra.mxu0 0.0
    %4182 = vmatprep.subr.mxu0 0.0
    %4183 = vmatpush1.xpose.msra.mxu0 0.0
    %4184 = vmatprep.subr.mxu0 0.0
    %4185 = vmatpush1.xpose.msra.mxu0 0.0
    %4186 = vmatprep.subr.mxu0 0.0
    %4187 = vmatpush1.xpose.msra.mxu0 0.0
    %4188 = vmatprep.subr.mxu0 0.0
    %4189 = vmatpush1.xpose.msra.mxu0 0.0
    %4190 = vmatprep.subr.mxu0 0.0
    %4191 = vmatpush1.xpose.msra.mxu0 0.0
    %4192 = vmatprep.subr.mxu0 0.0
    %4193 = vmatpush1.xpose.msra.mxu0 0.0
    %4194 = vmatprep.subr.mxu0 0.0
    %4195 = vmatpush1.xpose.msra.mxu0 0.0
    %4196 = vmatprep.subr.mxu0 0.0
    %4197 = vmatpush1.xpose.msra.mxu0 0.0
    %4198 = vmatprep.subr.mxu0 0.0
    %4199 = vmatpush1.xpose.msra.mxu0 0.0
    %4200 = vmatprep.subr.mxu0 0.0
    %4201 = vmatpush1.xpose.msra.mxu0 0.0
    %4202 = vmatprep.mubr.f32.mxu0 0.0
    %4203 = vmatmul.mubr.f32.gmra.mrb[0].mxu0 %v4134
    %v4204 = vpop.f32.mrb[0].mxu0
    %v4205 = vadd.f32 0.0, %v4204
    %v4206 = vpop.f32.mrb[0].mxu0
    %4207 = vdwg.mxu0
    %v4208 = vsel %vm474, %v3927, 0
    %v4210 = vsel %vm474, %v3941, 0
    %4212 = vmatprep.subr.mxu0 0.0
    %4213 = vmatpush1.xpose.msra.mxu0 %v4210
    %4214 = vmatprep.subr.mxu0 0.0
    %4215 = vmatpush1.xpose.msra.mxu0 0.0
    %4216 = vmatprep.subr.mxu0 0.0
    %4217 = vmatpush1.xpose.msra.mxu0 0.0
    %4218 = vmatprep.subr.mxu0 0.0
    %4219 = vmatpush1.xpose.msra.mxu0 0.0
    %4220 = vmatprep.subr.mxu0 0.0
    %4221 = vmatpush1.xpose.msra.mxu0 0.0
    %4222 = vmatprep.subr.mxu0 0.0
    %4223 = vmatpush1.xpose.msra.mxu0 0.0
    %4224 = vmatprep.subr.mxu0 0.0
    %4225 = vmatpush1.xpose.msra.mxu0 0.0
    %4226 = vmatprep.subr.mxu0 0.0
    %4227 = vmatpush1.xpose.msra.mxu0 0.0
    %4228 = vmatprep.subr.mxu0 0.0
    %4229 = vmatpush1.xpose.msra.mxu0 0.0
    %4230 = vmatprep.subr.mxu0 0.0
    %4231 = vmatpush1.xpose.msra.mxu0 0.0
    %4232 = vmatprep.subr.mxu0 0.0
    %4233 = vmatpush1.xpose.msra.mxu0 0.0
    %4234 = vmatprep.subr.mxu0 0.0
    %4235 = vmatpush1.xpose.msra.mxu0 0.0
    %4236 = vmatprep.subr.mxu0 0.0
    %4237 = vmatpush1.xpose.msra.mxu0 0.0
    %4238 = vmatprep.subr.mxu0 0.0
    %4239 = vmatpush1.xpose.msra.mxu0 0.0
    %4240 = vmatprep.subr.mxu0 0.0
    %4241 = vmatpush1.xpose.msra.mxu0 0.0
    %4242 = vmatprep.subr.mxu0 0.0
    %4243 = vmatpush1.xpose.msra.mxu0 0.0
    %4244 = vmatprep.subr.mxu0 0.0
    %4245 = vmatpush1.xpose.msra.mxu0 0.0
    %4246 = vmatprep.subr.mxu0 0.0
    %4247 = vmatpush1.xpose.msra.mxu0 0.0
    %4248 = vmatprep.subr.mxu0 0.0
    %4249 = vmatpush1.xpose.msra.mxu0 0.0
    %4250 = vmatprep.subr.mxu0 0.0
    %4251 = vmatpush1.xpose.msra.mxu0 0.0
    %4252 = vmatprep.subr.mxu0 0.0
    %4253 = vmatpush1.xpose.msra.mxu0 0.0
    %4254 = vmatprep.subr.mxu0 0.0
    %4255 = vmatpush1.xpose.msra.mxu0 0.0
    %4256 = vmatprep.subr.mxu0 0.0
    %4257 = vmatpush1.xpose.msra.mxu0 0.0
    %4258 = vmatprep.subr.mxu0 0.0
    %4259 = vmatpush1.xpose.msra.mxu0 0.0
    %4260 = vmatprep.subr.mxu0 0.0
    %4261 = vmatpush1.xpose.msra.mxu0 0.0
    %4262 = vmatprep.subr.mxu0 0.0
    %4263 = vmatpush1.xpose.msra.mxu0 0.0
    %4264 = vmatprep.subr.mxu0 0.0
    %4265 = vmatpush1.xpose.msra.mxu0 0.0
    %4266 = vmatprep.subr.mxu0 0.0
    %4267 = vmatpush1.xpose.msra.mxu0 0.0
    %4268 = vmatprep.subr.mxu0 0.0
    %4269 = vmatpush1.xpose.msra.mxu0 0.0
    %4270 = vmatprep.subr.mxu0 0.0
    %4271 = vmatpush1.xpose.msra.mxu0 0.0
    %4272 = vmatprep.subr.mxu0 0.0
    %4273 = vmatpush1.xpose.msra.mxu0 0.0
    %4274 = vmatprep.subr.mxu0 0.0
    %4275 = vmatpush1.xpose.msra.mxu0 0.0
    %4276 = vmatprep.mubr.f32.mxu0 0.0
    %4277 = vmatmul.mubr.f32.gmra.mrb[0].mxu0 %v4208
    %v4278 = vpop.f32.mrb[0].mxu0
    %v4279 = vadd.f32 0.0, %v4278
    %v4280 = vpop.f32.mrb[0].mxu0
    %4281 = vdwg.mxu0
    %v4282 = vsel %vm474, %v3766, 0
    %v4284 = vsel %vm474, %v3917, 0
    %4286 = vmatprep.subr.mxu0 0.0
    %4287 = vmatpush1.xpose.msra.mxu0 %v4284
    %4288 = vmatprep.subr.mxu0 0.0
    %4289 = vmatpush1.xpose.msra.mxu0 0.0
    %4290 = vmatprep.subr.mxu0 0.0
    %4291 = vmatpush1.xpose.msra.mxu0 0.0
    %4292 = vmatprep.subr.mxu0 0.0
    %4293 = vmatpush1.xpose.msra.mxu0 0.0
    %4294 = vmatprep.subr.mxu0 0.0
    %4295 = vmatpush1.xpose.msra.mxu0 0.0
    %4296 = vmatprep.subr.mxu0 0.0
    %4297 = vmatpush1.xpose.msra.mxu0 0.0
    %4298 = vmatprep.subr.mxu0 0.0
    %4299 = vmatpush1.xpose.msra.mxu0 0.0
    %4300 = vmatprep.subr.mxu0 0.0
    %4301 = vmatpush1.xpose.msra.mxu0 0.0
    %4302 = vmatprep.subr.mxu0 0.0
    %4303 = vmatpush1.xpose.msra.mxu0 0.0
    %4304 = vmatprep.subr.mxu0 0.0
    %4305 = vmatpush1.xpose.msra.mxu0 0.0
    %4306 = vmatprep.subr.mxu0 0.0
    %4307 = vmatpush1.xpose.msra.mxu0 0.0
    %4308 = vmatprep.subr.mxu0 0.0
    %4309 = vmatpush1.xpose.msra.mxu0 0.0
    %4310 = vmatprep.subr.mxu0 0.0
    %4311 = vmatpush1.xpose.msra.mxu0 0.0
    %4312 = vmatprep.subr.mxu0 0.0
    %4313 = vmatpush1.xpose.msra.mxu0 0.0
    %4314 = vmatprep.subr.mxu0 0.0
    %4315 = vmatpush1.xpose.msra.mxu0 0.0
    %4316 = vmatprep.subr.mxu0 0.0
    %4317 = vmatpush1.xpose.msra.mxu0 0.0
    %4318 = vmatprep.subr.mxu0 0.0
    %4319 = vmatpush1.xpose.msra.mxu0 0.0
    %4320 = vmatprep.subr.mxu0 0.0
    %4321 = vmatpush1.xpose.msra.mxu0 0.0
    %4322 = vmatprep.subr.mxu0 0.0
    %4323 = vmatpush1.xpose.msra.mxu0 0.0
    %4324 = vmatprep.subr.mxu0 0.0
    %4325 = vmatpush1.xpose.msra.mxu0 0.0
    %4326 = vmatprep.subr.mxu0 0.0
    %4327 = vmatpush1.xpose.msra.mxu0 0.0
    %4328 = vmatprep.subr.mxu0 0.0
    %4329 = vmatpush1.xpose.msra.mxu0 0.0
    %4330 = vmatprep.subr.mxu0 0.0
    %4331 = vmatpush1.xpose.msra.mxu0 0.0
    %4332 = vmatprep.subr.mxu0 0.0
    %4333 = vmatpush1.xpose.msra.mxu0 0.0
    %4334 = vmatprep.subr.mxu0 0.0
    %4335 = vmatpush1.xpose.msra.mxu0 0.0
    %4336 = vmatprep.subr.mxu0 0.0
    %4337 = vmatpush1.xpose.msra.mxu0 0.0
    %4338 = vmatprep.subr.mxu0 0.0
    %4339 = vmatpush1.xpose.msra.mxu0 0.0
    %4340 = vmatprep.subr.mxu0 0.0
    %4341 = vmatpush1.xpose.msra.mxu0 0.0
    %4342 = vmatprep.subr.mxu0 0.0
    %4343 = vmatpush1.xpose.msra.mxu0 0.0
    %4344 = vmatprep.subr.mxu0 0.0
    %4345 = vmatpush1.xpose.msra.mxu0 0.0
    %4346 = vmatprep.subr.mxu0 0.0
    %4347 = vmatpush1.xpose.msra.mxu0 0.0
    %4348 = vmatprep.subr.mxu0 0.0
    %4349 = vmatpush1.xpose.msra.mxu0 0.0
    %4350 = vmatprep.mubr.f32.mxu0 0.0
    %4351 = vmatmul.mubr.f32.gmra.mrb[0].mxu0 %v4282
    %v4352 = vpop.f32.mrb[0].mxu0
    %v4353 = vadd.f32 0.0, %v4352
    %v4354 = vpop.f32.mrb[0].mxu0
    %4355 = vdwg.mxu0
    %v4356 = vsel %vm474, %v3930, 0
    %v4358 = vsel %vm474, %v3944, 0
    %4360 = vmatprep.subr.mxu0 0.0
    %4361 = vmatpush1.xpose.msra.mxu0 %v4358
    %4362 = vmatprep.subr.mxu0 0.0
    %4363 = vmatpush1.xpose.msra.mxu0 0.0
    %4364 = vmatprep.subr.mxu0 0.0
    %4365 = vmatpush1.xpose.msra.mxu0 0.0
    %4366 = vmatprep.subr.mxu0 0.0
    %4367 = vmatpush1.xpose.msra.mxu0 0.0
    %4368 = vmatprep.subr.mxu0 0.0
    %4369 = vmatpush1.xpose.msra.mxu0 0.0
    %4370 = vmatprep.subr.mxu0 0.0
    %4371 = vmatpush1.xpose.msra.mxu0 0.0
    %4372 = vmatprep.subr.mxu0 0.0
    %4373 = vmatpush1.xpose.msra.mxu0 0.0
    %4374 = vmatprep.subr.mxu0 0.0
    %4375 = vmatpush1.xpose.msra.mxu0 0.0
    %4376 = vmatprep.subr.mxu0 0.0
    %4377 = vmatpush1.xpose.msra.mxu0 0.0
    %4378 = vmatprep.subr.mxu0 0.0
    %4379 = vmatpush1.xpose.msra.mxu0 0.0
    %4380 = vmatprep.subr.mxu0 0.0
    %4381 = vmatpush1.xpose.msra.mxu0 0.0
    %4382 = vmatprep.subr.mxu0 0.0
    %4383 = vmatpush1.xpose.msra.mxu0 0.0
    %4384 = vmatprep.subr.mxu0 0.0
    %4385 = vmatpush1.xpose.msra.mxu0 0.0
    %4386 = vmatprep.subr.mxu0 0.0
    %4387 = vmatpush1.xpose.msra.mxu0 0.0
    %4388 = vmatprep.subr.mxu0 0.0
    %4389 = vmatpush1.xpose.msra.mxu0 0.0
    %4390 = vmatprep.subr.mxu0 0.0
    %4391 = vmatpush1.xpose.msra.mxu0 0.0
    %4392 = vmatprep.subr.mxu0 0.0
    %4393 = vmatpush1.xpose.msra.mxu0 0.0
    %4394 = vmatprep.subr.mxu0 0.0
    %4395 = vmatpush1.xpose.msra.mxu0 0.0
    %4396 = vmatprep.subr.mxu0 0.0
    %4397 = vmatpush1.xpose.msra.mxu0 0.0
    %4398 = vmatprep.subr.mxu0 0.0
    %4399 = vmatpush1.xpose.msra.mxu0 0.0
    %4400 = vmatprep.subr.mxu0 0.0
    %4401 = vmatpush1.xpose.msra.mxu0 0.0
    %4402 = vmatprep.subr.mxu0 0.0
    %4403 = vmatpush1.xpose.msra.mxu0 0.0
    %4404 = vmatprep.subr.mxu0 0.0
    %4405 = vmatpush1.xpose.msra.mxu0 0.0
    %4406 = vmatprep.subr.mxu0 0.0
    %4407 = vmatpush1.xpose.msra.mxu0 0.0
    %4408 = vmatprep.subr.mxu0 0.0
    %4409 = vmatpush1.xpose.msra.mxu0 0.0
    %4410 = vmatprep.subr.mxu0 0.0
    %4411 = vmatpush1.xpose.msra.mxu0 0.0
    %4412 = vmatprep.subr.mxu0 0.0
    %4413 = vmatpush1.xpose.msra.mxu0 0.0
    %4414 = vmatprep.subr.mxu0 0.0
    %4415 = vmatpush1.xpose.msra.mxu0 0.0
    %4416 = vmatprep.subr.mxu0 0.0
    %4417 = vmatpush1.xpose.msra.mxu0 0.0
    %4418 = vmatprep.subr.mxu0 0.0
    %4419 = vmatpush1.xpose.msra.mxu0 0.0
    %4420 = vmatprep.subr.mxu0 0.0
    %4421 = vmatpush1.xpose.msra.mxu0 0.0
    %4422 = vmatprep.subr.mxu0 0.0
    %4423 = vmatpush1.xpose.msra.mxu0 0.0
    %4424 = vmatprep.mubr.f32.mxu0 0.0
    %4425 = vmatmul.mubr.f32.gmra.mrb[0].mxu0 %v4356
    %v4426 = vpop.f32.mrb[0].mxu0
    %v4427 = vadd.f32 0.0, %v4426
    %v4428 = vpop.f32.mrb[0].mxu0
    %4429 = vdwg.mxu0
    %v4430 = vsel %vm474, %v3932, 0
    %v4432 = vsel %vm474, %v3946, 0
    %4434 = vmatprep.subr.mxu0 0.0
    %4435 = vmatpush1.xpose.msra.mxu0 %v4432
    %4436 = vmatprep.subr.mxu0 0.0
    %4437 = vmatpush1.xpose.msra.mxu0 0.0
    %4438 = vmatprep.subr.mxu0 0.0
    %4439 = vmatpush1.xpose.msra.mxu0 0.0
    %4440 = vmatprep.subr.mxu0 0.0
    %4441 = vmatpush1.xpose.msra.mxu0 0.0
    %4442 = vmatprep.subr.mxu0 0.0
    %4443 = vmatpush1.xpose.msra.mxu0 0.0
    %4444 = vmatprep.subr.mxu0 0.0
    %4445 = vmatpush1.xpose.msra.mxu0 0.0
    %4446 = vmatprep.subr.mxu0 0.0
    %4447 = vmatpush1.xpose.msra.mxu0 0.0
    %4448 = vmatprep.subr.mxu0 0.0
    %4449 = vmatpush1.xpose.msra.mxu0 0.0
    %4450 = vmatprep.subr.mxu0 0.0
    %4451 = vmatpush1.xpose.msra.mxu0 0.0
    %4452 = vmatprep.subr.mxu0 0.0
    %4453 = vmatpush1.xpose.msra.mxu0 0.0
    %4454 = vmatprep.subr.mxu0 0.0
    %4455 = vmatpush1.xpose.msra.mxu0 0.0
    %4456 = vmatprep.subr.mxu0 0.0
    %4457 = vmatpush1.xpose.msra.mxu0 0.0
    %4458 = vmatprep.subr.mxu0 0.0
    %4459 = vmatpush1.xpose.msra.mxu0 0.0
    %4460 = vmatprep.subr.mxu0 0.0
    %4461 = vmatpush1.xpose.msra.mxu0 0.0
    %4462 = vmatprep.subr.mxu0 0.0
    %4463 = vmatpush1.xpose.msra.mxu0 0.0
    %4464 = vmatprep.subr.mxu0 0.0
    %4465 = vmatpush1.xpose.msra.mxu0 0.0
    %4466 = vmatprep.subr.mxu0 0.0
    %4467 = vmatpush1.xpose.msra.mxu0 0.0
    %4468 = vmatprep.subr.mxu0 0.0
    %4469 = vmatpush1.xpose.msra.mxu0 0.0
    %4470 = vmatprep.subr.mxu0 0.0
    %4471 = vmatpush1.xpose.msra.mxu0 0.0
    %4472 = vmatprep.subr.mxu0 0.0
    %4473 = vmatpush1.xpose.msra.mxu0 0.0
    %4474 = vmatprep.subr.mxu0 0.0
    %4475 = vmatpush1.xpose.msra.mxu0 0.0
    %4476 = vmatprep.subr.mxu0 0.0
    %4477 = vmatpush1.xpose.msra.mxu0 0.0
    %4478 = vmatprep.subr.mxu0 0.0
    %4479 = vmatpush1.xpose.msra.mxu0 0.0
    %4480 = vmatprep.subr.mxu0 0.0
    %4481 = vmatpush1.xpose.msra.mxu0 0.0
    %4482 = vmatprep.subr.mxu0 0.0
    %4483 = vmatpush1.xpose.msra.mxu0 0.0
    %4484 = vmatprep.subr.mxu0 0.0
    %4485 = vmatpush1.xpose.msra.mxu0 0.0
    %4486 = vmatprep.subr.mxu0 0.0
    %4487 = vmatpush1.xpose.msra.mxu0 0.0
    %4488 = vmatprep.subr.mxu0 0.0
    %4489 = vmatpush1.xpose.msra.mxu0 0.0
    %4490 = vmatprep.subr.mxu0 0.0
    %4491 = vmatpush1.xpose.msra.mxu0 0.0
    %4492 = vmatprep.subr.mxu0 0.0
    %4493 = vmatpush1.xpose.msra.mxu0 0.0
    %4494 = vmatprep.subr.mxu0 0.0
    %4495 = vmatpush1.xpose.msra.mxu0 0.0
    %4496 = vmatprep.subr.mxu0 0.0
    %4497 = vmatpush1.xpose.msra.mxu0 0.0
    %4498 = vmatprep.mubr.f32.mxu0 0.0
    %4499 = vmatmul.mubr.f32.gmra.mrb[0].mxu0 %v4430
    %v4500 = vpop.f32.mrb[0].mxu0
    %v4501 = vadd.f32 0.0, %v4500
    %v4502 = vpop.f32.mrb[0].mxu0
    %4503 = vdwg.mxu0
    %v4504 = vsel %vm474, %v3934, 0
    %v4506 = vsel %vm474, %v3948, 0
    %4508 = vmatprep.subr.mxu0 0.0
    %4509 = vmatpush1.xpose.msra.mxu0 %v4506
    %4510 = vmatprep.subr.mxu0 0.0
    %4511 = vmatpush1.xpose.msra.mxu0 0.0
    %4512 = vmatprep.subr.mxu0 0.0
    %4513 = vmatpush1.xpose.msra.mxu0 0.0
    %4514 = vmatprep.subr.mxu0 0.0
    %4515 = vmatpush1.xpose.msra.mxu0 0.0
    %4516 = vmatprep.subr.mxu0 0.0
    %4517 = vmatpush1.xpose.msra.mxu0 0.0
    %4518 = vmatprep.subr.mxu0 0.0
    %4519 = vmatpush1.xpose.msra.mxu0 0.0
    %4520 = vmatprep.subr.mxu0 0.0
    %4521 = vmatpush1.xpose.msra.mxu0 0.0
    %4522 = vmatprep.subr.mxu0 0.0
    %4523 = vmatpush1.xpose.msra.mxu0 0.0
    %4524 = vmatprep.subr.mxu0 0.0
    %4525 = vmatpush1.xpose.msra.mxu0 0.0
    %4526 = vmatprep.subr.mxu0 0.0
    %4527 = vmatpush1.xpose.msra.mxu0 0.0
    %4528 = vmatprep.subr.mxu0 0.0
    %4529 = vmatpush1.xpose.msra.mxu0 0.0
    %4530 = vmatprep.subr.mxu0 0.0
    %4531 = vmatpush1.xpose.msra.mxu0 0.0
    %4532 = vmatprep.subr.mxu0 0.0
    %4533 = vmatpush1.xpose.msra.mxu0 0.0
    %4534 = vmatprep.subr.mxu0 0.0
    %4535 = vmatpush1.xpose.msra.mxu0 0.0
    %4536 = vmatprep.subr.mxu0 0.0
    %4537 = vmatpush1.xpose.msra.mxu0 0.0
    %4538 = vmatprep.subr.mxu0 0.0
    %4539 = vmatpush1.xpose.msra.mxu0 0.0
    %4540 = vmatprep.subr.mxu0 0.0
    %4541 = vmatpush1.xpose.msra.mxu0 0.0
    %4542 = vmatprep.subr.mxu0 0.0
    %4543 = vmatpush1.xpose.msra.mxu0 0.0
    %4544 = vmatprep.subr.mxu0 0.0
    %4545 = vmatpush1.xpose.msra.mxu0 0.0
    %4546 = vmatprep.subr.mxu0 0.0
    %4547 = vmatpush1.xpose.msra.mxu0 0.0
    %4548 = vmatprep.subr.mxu0 0.0
    %4549 = vmatpush1.xpose.msra.mxu0 0.0
    %4550 = vmatprep.subr.mxu0 0.0
    %4551 = vmatpush1.xpose.msra.mxu0 0.0
    %4552 = vmatprep.subr.mxu0 0.0
    %4553 = vmatpush1.xpose.msra.mxu0 0.0
    %4554 = vmatprep.subr.mxu0 0.0
    %4555 = vmatpush1.xpose.msra.mxu0 0.0
    %4556 = vmatprep.subr.mxu0 0.0
    %4557 = vmatpush1.xpose.msra.mxu0 0.0
    %4558 = vmatprep.subr.mxu0 0.0
    %4559 = vmatpush1.xpose.msra.mxu0 0.0
    %4560 = vmatprep.subr.mxu0 0.0
    %4561 = vmatpush1.xpose.msra.mxu0 0.0
    %4562 = vmatprep.subr.mxu0 0.0
    %4563 = vmatpush1.xpose.msra.mxu0 0.0
    %4564 = vmatprep.subr.mxu0 0.0
    %4565 = vmatpush1.xpose.msra.mxu0 0.0
    %4566 = vmatprep.subr.mxu0 0.0
    %4567 = vmatpush1.xpose.msra.mxu0 0.0
    %4568 = vmatprep.subr.mxu0 0.0
    %4569 = vmatpush1.xpose.msra.mxu0 0.0
    %4570 = vmatprep.subr.mxu0 0.0
    %4571 = vmatpush1.xpose.msra.mxu0 0.0
    %4572 = vmatprep.mubr.f32.mxu0 0.0
    %4573 = vmatmul.mubr.f32.gmra.mrb[0].mxu0 %v4504
    %v4574 = vpop.f32.mrb[0].mxu0
    %v4575 = vadd.f32 0.0, %v4574
    %v4576 = vpop.f32.mrb[0].mxu0
    %4577 = vdwg.mxu0
    %v4578 = vmul.f32 %v4057, 0.17677669
    %v4579 = vmul.f32 %v4131, 0.17677669
    %v4580 = vmul.f32 %v4205, 0.17677669
    %v4581 = vmul.f32 %v4279, 0.17677669
    %v4582 = vmul.f32 %v4353, 0.17677669
    %v4583 = vmul.f32 %v4427, 0.17677669
    %v4584 = vmul.f32 %v4501, 0.17677669
    %v4585 = vmul.f32 %v4575, 0.17677669
    %v4586 = vadd.f32 %v4578, %v114
    %v4587 = vadd.f32 %v4579, %v114
    %v4588 = vadd.f32 %v4580, %v114
    %v4589 = vadd.f32 %v4581, %v114
    %v4590 = vadd.f32 %v4582, %v114
    %v4591 = vadd.f32 %v4583, %v114
    %v4592 = vadd.f32 %v4584, %v114
    %v4593 = vadd.f32 %v4585, %v114
    %v4594 = vsel %vm1083, %v4586, -inf
    %4595 = vmax.xlane.f32.xlu0 %v4594
    %v4596 = vpop.xlane.xlu0 %4595
    %v4597 = vsel %vm1083, %v4587, -inf
    %4598 = vmax.xlane.f32.xlu0 %v4597
    %v4599 = vpop.xlane.xlu0 %4598
    %v4600 = vsel %vm1083, %v4588, -inf
    %4601 = vmax.xlane.f32.xlu0 %v4600
    %v4602 = vpop.xlane.xlu0 %4601
    %v4603 = vsel %vm1083, %v4589, -inf
    %4604 = vmax.xlane.f32.xlu0 %v4603
    %v4605 = vpop.xlane.xlu0 %4604
    %v4606 = vsel %vm1083, %v4590, -inf
    %4607 = vmax.xlane.f32.xlu0 %v4606
    %v4608 = vpop.xlane.xlu0 %4607
    %v4609 = vsel %vm1083, %v4591, -inf
    %4610 = vmax.xlane.f32.xlu0 %v4609
    %v4611 = vpop.xlane.xlu0 %4610
    %v4612 = vsel %vm1083, %v4592, -inf
    %4613 = vmax.xlane.f32.xlu0 %v4612
    %v4614 = vpop.xlane.xlu0 %4613
    %v4615 = vsel %vm1083, %v4593, -inf
    %4616 = vmax.xlane.f32.xlu0 %v4615
    %v4617 = vpop.xlane.xlu0 %4616
    %v4618 = vsub.f32 %v4586, %v4596
    %v4619 = vsub.f32 %v4587, %v4599
    %v4620 = vsub.f32 %v4588, %v4602
    %v4621 = vsub.f32 %v4589, %v4605
    %v4622 = vsub.f32 %v4590, %v4608
    %v4623 = vsub.f32 %v4591, %v4611
    %v4624 = vsub.f32 %v4592, %v4614
    %v4625 = vsub.f32 %v4593, %v4617
    %v4626 = vmul.f32 %v4618, 1.442695
    %v4627 = vpow.pop %v4626
    %v4628 = vmul.f32 %v4619, 1.442695
    %v4629 = vpow.pop %v4628
    %v4630 = vmul.f32 %v4620, 1.442695
    %v4631 = vpow.pop %v4630
    %v4632 = vmul.f32 %v4621, 1.442695
    %v4633 = vpow.pop %v4632
    %v4634 = vmul.f32 %v4622, 1.442695
    %v4635 = vpow.pop %v4634
    %v4636 = vmul.f32 %v4623, 1.442695
    %v4637 = vpow.pop %v4636
    %v4638 = vmul.f32 %v4624, 1.442695
    %v4639 = vpow.pop %v4638
    %v4640 = vmul.f32 %v4625, 1.442695
    %v4641 = vpow.pop %v4640
    %v4642 = vsel %vm1083, %v4627, 0.0
    %4643 = vadd.xlane.f32.xlu0 %v4642
    %v4644 = vpop.xlane.xlu0 %4643
    %v4645 = vsel %vm1083, %v4629, 0.0
    %4646 = vadd.xlane.f32.xlu0 %v4645
    %v4647 = vpop.xlane.xlu0 %4646
    %v4648 = vsel %vm1083, %v4631, 0.0
    %4649 = vadd.xlane.f32.xlu0 %v4648
    %v4650 = vpop.xlane.xlu0 %4649
    %v4651 = vsel %vm1083, %v4633, 0.0
    %4652 = vadd.xlane.f32.xlu0 %v4651
    %v4653 = vpop.xlane.xlu0 %4652
    %v4654 = vsel %vm1083, %v4635, 0.0
    %4655 = vadd.xlane.f32.xlu0 %v4654
    %v4656 = vpop.xlane.xlu0 %4655
    %v4657 = vsel %vm1083, %v4637, 0.0
    %4658 = vadd.xlane.f32.xlu0 %v4657
    %v4659 = vpop.xlane.xlu0 %4658
    %v4660 = vsel %vm1083, %v4639, 0.0
    %4661 = vadd.xlane.f32.xlu0 %v4660
    %v4662 = vpop.xlane.xlu0 %4661
    %v4663 = vsel %vm1083, %v4641, 0.0
    %4664 = vadd.xlane.f32.xlu0 %v4663
    %v4665 = vpop.xlane.xlu0 %4664
    %v4666 = vrcp.pop %v4644
    %v4667 = vmul.f32 %v4627, %v4666
    %v4668 = vrcp.pop %v4647
    %v4669 = vmul.f32 %v4629, %v4668
    %v4670 = vrcp.pop %v4650
    %v4671 = vmul.f32 %v4631, %v4670
    %v4672 = vrcp.pop %v4653
    %v4673 = vmul.f32 %v4633, %v4672
    %v4674 = vrcp.pop %v4656
    %v4675 = vmul.f32 %v4635, %v4674
    %v4676 = vrcp.pop %v4659
    %v4677 = vmul.f32 %v4637, %v4676
    %v4678 = vrcp.pop %v4662
    %v4679 = vmul.f32 %v4639, %v4678
    %v4680 = vrcp.pop %v4665
    %v4681 = vmul.f32 %v4641, %v4680
    %v4683 = vsel %vm1083, %v4667, 0
    %4685 = vmatprep.subr.mxu0 0.0
    %4686 = vmatpush1.msra.mxu0 %v3915
    %4687 = vmatprep.subr.mxu0 0.0
    %4688 = vmatpush1.msra.mxu0 0.0
    %4689 = vmatprep.subr.mxu0 0.0
    %4690 = vmatpush1.msra.mxu0 0.0
    %4691 = vmatprep.subr.mxu0 0.0
    %4692 = vmatpush1.msra.mxu0 0.0
    %4693 = vmatprep.subr.mxu0 0.0
    %4694 = vmatpush1.msra.mxu0 0.0
    %4695 = vmatprep.subr.mxu0 0.0
    %4696 = vmatpush1.msra.mxu0 0.0
    %4697 = vmatprep.subr.mxu0 0.0
    %4698 = vmatpush1.msra.mxu0 0.0
    %4699 = vmatprep.subr.mxu0 0.0
    %4700 = vmatpush1.msra.mxu0 0.0
    %4701 = vmatprep.subr.mxu0 0.0
    %4702 = vmatpush1.msra.mxu0 0.0
    %4703 = vmatprep.subr.mxu0 0.0
    %4704 = vmatpush1.msra.mxu0 0.0
    %4705 = vmatprep.subr.mxu0 0.0
    %4706 = vmatpush1.msra.mxu0 0.0
    %4707 = vmatprep.subr.mxu0 0.0
    %4708 = vmatpush1.msra.mxu0 0.0
    %4709 = vmatprep.subr.mxu0 0.0
    %4710 = vmatpush1.msra.mxu0 0.0
    %4711 = vmatprep.subr.mxu0 0.0
    %4712 = vmatpush1.msra.mxu0 0.0
    %4713 = vmatprep.subr.mxu0 0.0
    %4714 = vmatpush1.msra.mxu0 0.0
    %4715 = vmatprep.subr.mxu0 0.0
    %4716 = vmatpush1.msra.mxu0 0.0
    %4717 = vmatprep.subr.mxu0 0.0
    %4718 = vmatpush1.msra.mxu0 0.0
    %4719 = vmatprep.subr.mxu0 0.0
    %4720 = vmatpush1.msra.mxu0 0.0
    %4721 = vmatprep.subr.mxu0 0.0
    %4722 = vmatpush1.msra.mxu0 0.0
    %4723 = vmatprep.subr.mxu0 0.0
    %4724 = vmatpush1.msra.mxu0 0.0
    %4725 = vmatprep.subr.mxu0 0.0
    %4726 = vmatpush1.msra.mxu0 0.0
    %4727 = vmatprep.subr.mxu0 0.0
    %4728 = vmatpush1.msra.mxu0 0.0
    %4729 = vmatprep.subr.mxu0 0.0
    %4730 = vmatpush1.msra.mxu0 0.0
    %4731 = vmatprep.subr.mxu0 0.0
    %4732 = vmatpush1.msra.mxu0 0.0
    %4733 = vmatprep.subr.mxu0 0.0
    %4734 = vmatpush1.msra.mxu0 0.0
    %4735 = vmatprep.subr.mxu0 0.0
    %4736 = vmatpush1.msra.mxu0 0.0
    %4737 = vmatprep.subr.mxu0 0.0
    %4738 = vmatpush1.msra.mxu0 0.0
    %4739 = vmatprep.subr.mxu0 0.0
    %4740 = vmatpush1.msra.mxu0 0.0
    %4741 = vmatprep.subr.mxu0 0.0
    %4742 = vmatpush1.msra.mxu0 0.0
    %4743 = vmatprep.subr.mxu0 0.0
    %4744 = vmatpush1.msra.mxu0 0.0
    %4745 = vmatprep.subr.mxu0 0.0
    %4746 = vmatpush1.msra.mxu0 0.0
    %4747 = vmatprep.subr.mxu0 0.0
    %4748 = vmatpush1.msra.mxu0 0.0
    %4749 = vmatprep.mubr.f32.mxu0 0.0
    %4750 = vmatmul.mubr.f32.gmra.mrb[0].mxu0 %v4683
    %v4751 = vpop.f32.mrb[0].mxu0
    %v4752 = vadd.f32 0.0, %v4751
    %v4753 = vpop.f32.mrb[0].mxu0
    %4754 = vdwg.mxu0
    %v4756 = vsel %vm1083, %v4669, 0
    %4758 = vmatprep.subr.mxu0 0.0
    %4759 = vmatpush1.msra.mxu0 %v3951
    %4760 = vmatprep.subr.mxu0 0.0
    %4761 = vmatpush1.msra.mxu0 0.0
    %4762 = vmatprep.subr.mxu0 0.0
    %4763 = vmatpush1.msra.mxu0 0.0
    %4764 = vmatprep.subr.mxu0 0.0
    %4765 = vmatpush1.msra.mxu0 0.0
    %4766 = vmatprep.subr.mxu0 0.0
    %4767 = vmatpush1.msra.mxu0 0.0
    %4768 = vmatprep.subr.mxu0 0.0
    %4769 = vmatpush1.msra.mxu0 0.0
    %4770 = vmatprep.subr.mxu0 0.0
    %4771 = vmatpush1.msra.mxu0 0.0
    %4772 = vmatprep.subr.mxu0 0.0
    %4773 = vmatpush1.msra.mxu0 0.0
    %4774 = vmatprep.subr.mxu0 0.0
    %4775 = vmatpush1.msra.mxu0 0.0
    %4776 = vmatprep.subr.mxu0 0.0
    %4777 = vmatpush1.msra.mxu0 0.0
    %4778 = vmatprep.subr.mxu0 0.0
    %4779 = vmatpush1.msra.mxu0 0.0
    %4780 = vmatprep.subr.mxu0 0.0
    %4781 = vmatpush1.msra.mxu0 0.0
    %4782 = vmatprep.subr.mxu0 0.0
    %4783 = vmatpush1.msra.mxu0 0.0
    %4784 = vmatprep.subr.mxu0 0.0
    %4785 = vmatpush1.msra.mxu0 0.0
    %4786 = vmatprep.subr.mxu0 0.0
    %4787 = vmatpush1.msra.mxu0 0.0
    %4788 = vmatprep.subr.mxu0 0.0
    %4789 = vmatpush1.msra.mxu0 0.0
    %4790 = vmatprep.subr.mxu0 0.0
    %4791 = vmatpush1.msra.mxu0 0.0
    %4792 = vmatprep.subr.mxu0 0.0
    %4793 = vmatpush1.msra.mxu0 0.0
    %4794 = vmatprep.subr.mxu0 0.0
    %4795 = vmatpush1.msra.mxu0 0.0
    %4796 = vmatprep.subr.mxu0 0.0
    %4797 = vmatpush1.msra.mxu0 0.0
    %4798 = vmatprep.subr.mxu0 0.0
    %4799 = vmatpush1.msra.mxu0 0.0
    %4800 = vmatprep.subr.mxu0 0.0
    %4801 = vmatpush1.msra.mxu0 0.0
    %4802 = vmatprep.subr.mxu0 0.0
    %4803 = vmatpush1.msra.mxu0 0.0
    %4804 = vmatprep.subr.mxu0 0.0
    %4805 = vmatpush1.msra.mxu0 0.0
    %4806 = vmatprep.subr.mxu0 0.0
    %4807 = vmatpush1.msra.mxu0 0.0
    %4808 = vmatprep.subr.mxu0 0.0
    %4809 = vmatpush1.msra.mxu0 0.0
    %4810 = vmatprep.subr.mxu0 0.0
    %4811 = vmatpush1.msra.mxu0 0.0
    %4812 = vmatprep.subr.mxu0 0.0
    %4813 = vmatpush1.msra.mxu0 0.0
    %4814 = vmatprep.subr.mxu0 0.0
    %4815 = vmatpush1.msra.mxu0 0.0
    %4816 = vmatprep.subr.mxu0 0.0
    %4817 = vmatpush1.msra.mxu0 0.0
    %4818 = vmatprep.subr.mxu0 0.0
    %4819 = vmatpush1.msra.mxu0 0.0
    %4820 = vmatprep.subr.mxu0 0.0
    %4821 = vmatpush1.msra.mxu0 0.0
    %4822 = vmatprep.mubr.f32.mxu0 0.0
    %4823 = vmatmul.mubr.f32.gmra.mrb[0].mxu0 %v4756
    %v4824 = vpop.f32.mrb[0].mxu0
    %v4825 = vadd.f32 0.0, %v4824
    %v4826 = vpop.f32.mrb[0].mxu0
    %4827 = vdwg.mxu0
    %v4829 = vsel %vm1083, %v4671, 0
    %4831 = vmatprep.subr.mxu0 0.0
    %4832 = vmatpush1.msra.mxu0 %v3954
    %4833 = vmatprep.subr.mxu0 0.0
    %4834 = vmatpush1.msra.mxu0 0.0
    %4835 = vmatprep.subr.mxu0 0.0
    %4836 = vmatpush1.msra.mxu0 0.0
    %4837 = vmatprep.subr.mxu0 0.0
    %4838 = vmatpush1.msra.mxu0 0.0
    %4839 = vmatprep.subr.mxu0 0.0
    %4840 = vmatpush1.msra.mxu0 0.0
    %4841 = vmatprep.subr.mxu0 0.0
    %4842 = vmatpush1.msra.mxu0 0.0
    %4843 = vmatprep.subr.mxu0 0.0
    %4844 = vmatpush1.msra.mxu0 0.0
    %4845 = vmatprep.subr.mxu0 0.0
    %4846 = vmatpush1.msra.mxu0 0.0
    %4847 = vmatprep.subr.mxu0 0.0
    %4848 = vmatpush1.msra.mxu0 0.0
    %4849 = vmatprep.subr.mxu0 0.0
    %4850 = vmatpush1.msra.mxu0 0.0
    %4851 = vmatprep.subr.mxu0 0.0
    %4852 = vmatpush1.msra.mxu0 0.0
    %4853 = vmatprep.subr.mxu0 0.0
    %4854 = vmatpush1.msra.mxu0 0.0
    %4855 = vmatprep.subr.mxu0 0.0
    %4856 = vmatpush1.msra.mxu0 0.0
    %4857 = vmatprep.subr.mxu0 0.0
    %4858 = vmatpush1.msra.mxu0 0.0
    %4859 = vmatprep.subr.mxu0 0.0
    %4860 = vmatpush1.msra.mxu0 0.0
    %4861 = vmatprep.subr.mxu0 0.0
    %4862 = vmatpush1.msra.mxu0 0.0
    %4863 = vmatprep.subr.mxu0 0.0
    %4864 = vmatpush1.msra.mxu0 0.0
    %4865 = vmatprep.subr.mxu0 0.0
    %4866 = vmatpush1.msra.mxu0 0.0
    %4867 = vmatprep.subr.mxu0 0.0
    %4868 = vmatpush1.msra.mxu0 0.0
    %4869 = vmatprep.subr.mxu0 0.0
    %4870 = vmatpush1.msra.mxu0 0.0
    %4871 = vmatprep.subr.mxu0 0.0
    %4872 = vmatpush1.msra.mxu0 0.0
    %4873 = vmatprep.subr.mxu0 0.0
    %4874 = vmatpush1.msra.mxu0 0.0
    %4875 = vmatprep.subr.mxu0 0.0
    %4876 = vmatpush1.msra.mxu0 0.0
    %4877 = vmatprep.subr.mxu0 0.0
    %4878 = vmatpush1.msra.mxu0 0.0
    %4879 = vmatprep.subr.mxu0 0.0
    %4880 = vmatpush1.msra.mxu0 0.0
    %4881 = vmatprep.subr.mxu0 0.0
    %4882 = vmatpush1.msra.mxu0 0.0
    %4883 = vmatprep.subr.mxu0 0.0
    %4884 = vmatpush1.msra.mxu0 0.0
    %4885 = vmatprep.subr.mxu0 0.0
    %4886 = vmatpush1.msra.mxu0 0.0
    %4887 = vmatprep.subr.mxu0 0.0
    %4888 = vmatpush1.msra.mxu0 0.0
    %4889 = vmatprep.subr.mxu0 0.0
    %4890 = vmatpush1.msra.mxu0 0.0
    %4891 = vmatprep.subr.mxu0 0.0
    %4892 = vmatpush1.msra.mxu0 0.0
    %4893 = vmatprep.subr.mxu0 0.0
    %4894 = vmatpush1.msra.mxu0 0.0
    %4895 = vmatprep.mubr.f32.mxu0 0.0
    %4896 = vmatmul.mubr.f32.gmra.mrb[0].mxu0 %v4829
    %v4897 = vpop.f32.mrb[0].mxu0
    %v4898 = vadd.f32 0.0, %v4897
    %v4899 = vpop.f32.mrb[0].mxu0
    %4900 = vdwg.mxu0
    %v4902 = vsel %vm1083, %v4673, 0
    %4904 = vmatprep.subr.mxu0 0.0
    %4905 = vmatpush1.msra.mxu0 %v3957
    %4906 = vmatprep.subr.mxu0 0.0
    %4907 = vmatpush1.msra.mxu0 0.0
    %4908 = vmatprep.subr.mxu0 0.0
    %4909 = vmatpush1.msra.mxu0 0.0
    %4910 = vmatprep.subr.mxu0 0.0
    %4911 = vmatpush1.msra.mxu0 0.0
    %4912 = vmatprep.subr.mxu0 0.0
    %4913 = vmatpush1.msra.mxu0 0.0
    %4914 = vmatprep.subr.mxu0 0.0
    %4915 = vmatpush1.msra.mxu0 0.0
    %4916 = vmatprep.subr.mxu0 0.0
    %4917 = vmatpush1.msra.mxu0 0.0
    %4918 = vmatprep.subr.mxu0 0.0
    %4919 = vmatpush1.msra.mxu0 0.0
    %4920 = vmatprep.subr.mxu0 0.0
    %4921 = vmatpush1.msra.mxu0 0.0
    %4922 = vmatprep.subr.mxu0 0.0
    %4923 = vmatpush1.msra.mxu0 0.0
    %4924 = vmatprep.subr.mxu0 0.0
    %4925 = vmatpush1.msra.mxu0 0.0
    %4926 = vmatprep.subr.mxu0 0.0
    %4927 = vmatpush1.msra.mxu0 0.0
    %4928 = vmatprep.subr.mxu0 0.0
    %4929 = vmatpush1.msra.mxu0 0.0
    %4930 = vmatprep.subr.mxu0 0.0
    %4931 = vmatpush1.msra.mxu0 0.0
    %4932 = vmatprep.subr.mxu0 0.0
    %4933 = vmatpush1.msra.mxu0 0.0
    %4934 = vmatprep.subr.mxu0 0.0
    %4935 = vmatpush1.msra.mxu0 0.0
    %4936 = vmatprep.subr.mxu0 0.0
    %4937 = vmatpush1.msra.mxu0 0.0
    %4938 = vmatprep.subr.mxu0 0.0
    %4939 = vmatpush1.msra.mxu0 0.0
    %4940 = vmatprep.subr.mxu0 0.0
    %4941 = vmatpush1.msra.mxu0 0.0
    %4942 = vmatprep.subr.mxu0 0.0
    %4943 = vmatpush1.msra.mxu0 0.0
    %4944 = vmatprep.subr.mxu0 0.0
    %4945 = vmatpush1.msra.mxu0 0.0
    %4946 = vmatprep.subr.mxu0 0.0
    %4947 = vmatpush1.msra.mxu0 0.0
    %4948 = vmatprep.subr.mxu0 0.0
    %4949 = vmatpush1.msra.mxu0 0.0
    %4950 = vmatprep.subr.mxu0 0.0
    %4951 = vmatpush1.msra.mxu0 0.0
    %4952 = vmatprep.subr.mxu0 0.0
    %4953 = vmatpush1.msra.mxu0 0.0
    %4954 = vmatprep.subr.mxu0 0.0
    %4955 = vmatpush1.msra.mxu0 0.0
    %4956 = vmatprep.subr.mxu0 0.0
    %4957 = vmatpush1.msra.mxu0 0.0
    %4958 = vmatprep.subr.mxu0 0.0
    %4959 = vmatpush1.msra.mxu0 0.0
    %4960 = vmatprep.subr.mxu0 0.0
    %4961 = vmatpush1.msra.mxu0 0.0
    %4962 = vmatprep.subr.mxu0 0.0
    %4963 = vmatpush1.msra.mxu0 0.0
    %4964 = vmatprep.subr.mxu0 0.0
    %4965 = vmatpush1.msra.mxu0 0.0
    %4966 = vmatprep.subr.mxu0 0.0
    %4967 = vmatpush1.msra.mxu0 0.0
    %4968 = vmatprep.mubr.f32.mxu0 0.0
    %4969 = vmatmul.mubr.f32.gmra.mrb[0].mxu0 %v4902
    %v4970 = vpop.f32.mrb[0].mxu0
    %v4971 = vadd.f32 0.0, %v4970
    %v4972 = vpop.f32.mrb[0].mxu0
    %4973 = vdwg.mxu0
    %v4975 = vsel %vm1083, %v4675, 0
    %4977 = vmatprep.subr.mxu0 0.0
    %4978 = vmatpush1.msra.mxu0 %v3919
    %4979 = vmatprep.subr.mxu0 0.0
    %4980 = vmatpush1.msra.mxu0 0.0
    %4981 = vmatprep.subr.mxu0 0.0
    %4982 = vmatpush1.msra.mxu0 0.0
    %4983 = vmatprep.subr.mxu0 0.0
    %4984 = vmatpush1.msra.mxu0 0.0
    %4985 = vmatprep.subr.mxu0 0.0
    %4986 = vmatpush1.msra.mxu0 0.0
    %4987 = vmatprep.subr.mxu0 0.0
    %4988 = vmatpush1.msra.mxu0 0.0
    %4989 = vmatprep.subr.mxu0 0.0
    %4990 = vmatpush1.msra.mxu0 0.0
    %4991 = vmatprep.subr.mxu0 0.0
    %4992 = vmatpush1.msra.mxu0 0.0
    %4993 = vmatprep.subr.mxu0 0.0
    %4994 = vmatpush1.msra.mxu0 0.0
    %4995 = vmatprep.subr.mxu0 0.0
    %4996 = vmatpush1.msra.mxu0 0.0
    %4997 = vmatprep.subr.mxu0 0.0
    %4998 = vmatpush1.msra.mxu0 0.0
    %4999 = vmatprep.subr.mxu0 0.0
    %5000 = vmatpush1.msra.mxu0 0.0
    %5001 = vmatprep.subr.mxu0 0.0
    %5002 = vmatpush1.msra.mxu0 0.0
    %5003 = vmatprep.subr.mxu0 0.0
    %5004 = vmatpush1.msra.mxu0 0.0
    %5005 = vmatprep.subr.mxu0 0.0
    %5006 = vmatpush1.msra.mxu0 0.0
    %5007 = vmatprep.subr.mxu0 0.0
    %5008 = vmatpush1.msra.mxu0 0.0
    %5009 = vmatprep.subr.mxu0 0.0
    %5010 = vmatpush1.msra.mxu0 0.0
    %5011 = vmatprep.subr.mxu0 0.0
    %5012 = vmatpush1.msra.mxu0 0.0
    %5013 = vmatprep.subr.mxu0 0.0
    %5014 = vmatpush1.msra.mxu0 0.0
    %5015 = vmatprep.subr.mxu0 0.0
    %5016 = vmatpush1.msra.mxu0 0.0
    %5017 = vmatprep.subr.mxu0 0.0
    %5018 = vmatpush1.msra.mxu0 0.0
    %5019 = vmatprep.subr.mxu0 0.0
    %5020 = vmatpush1.msra.mxu0 0.0
    %5021 = vmatprep.subr.mxu0 0.0
    %5022 = vmatpush1.msra.mxu0 0.0
    %5023 = vmatprep.subr.mxu0 0.0
    %5024 = vmatpush1.msra.mxu0 0.0
    %5025 = vmatprep.subr.mxu0 0.0
    %5026 = vmatpush1.msra.mxu0 0.0
    %5027 = vmatprep.subr.mxu0 0.0
    %5028 = vmatpush1.msra.mxu0 0.0
    %5029 = vmatprep.subr.mxu0 0.0
    %5030 = vmatpush1.msra.mxu0 0.0
    %5031 = vmatprep.subr.mxu0 0.0
    %5032 = vmatpush1.msra.mxu0 0.0
    %5033 = vmatprep.subr.mxu0 0.0
    %5034 = vmatpush1.msra.mxu0 0.0
    %5035 = vmatprep.subr.mxu0 0.0
    %5036 = vmatpush1.msra.mxu0 0.0
    %5037 = vmatprep.subr.mxu0 0.0
    %5038 = vmatpush1.msra.mxu0 0.0
    %5039 = vmatprep.subr.mxu0 0.0
    %5040 = vmatpush1.msra.mxu0 0.0
    %5041 = vmatprep.mubr.f32.mxu0 0.0
    %5042 = vmatmul.mubr.f32.gmra.mrb[0].mxu0 %v4975
    %v5043 = vpop.f32.mrb[0].mxu0
    %v5044 = vadd.f32 0.0, %v5043
    %v5045 = vpop.f32.mrb[0].mxu0
    %5046 = vdwg.mxu0
    %v5048 = vsel %vm1083, %v4677, 0
    %5050 = vmatprep.subr.mxu0 0.0
    %5051 = vmatpush1.msra.mxu0 %v3961
    %5052 = vmatprep.subr.mxu0 0.0
    %5053 = vmatpush1.msra.mxu0 0.0
    %5054 = vmatprep.subr.mxu0 0.0
    %5055 = vmatpush1.msra.mxu0 0.0
    %5056 = vmatprep.subr.mxu0 0.0
    %5057 = vmatpush1.msra.mxu0 0.0
    %5058 = vmatprep.subr.mxu0 0.0
    %5059 = vmatpush1.msra.mxu0 0.0
    %5060 = vmatprep.subr.mxu0 0.0
    %5061 = vmatpush1.msra.mxu0 0.0
    %5062 = vmatprep.subr.mxu0 0.0
    %5063 = vmatpush1.msra.mxu0 0.0
    %5064 = vmatprep.subr.mxu0 0.0
    %5065 = vmatpush1.msra.mxu0 0.0
    %5066 = vmatprep.subr.mxu0 0.0
    %5067 = vmatpush1.msra.mxu0 0.0
    %5068 = vmatprep.subr.mxu0 0.0
    %5069 = vmatpush1.msra.mxu0 0.0
    %5070 = vmatprep.subr.mxu0 0.0
    %5071 = vmatpush1.msra.mxu0 0.0
    %5072 = vmatprep.subr.mxu0 0.0
    %5073 = vmatpush1.msra.mxu0 0.0
    %5074 = vmatprep.subr.mxu0 0.0
    %5075 = vmatpush1.msra.mxu0 0.0
    %5076 = vmatprep.subr.mxu0 0.0
    %5077 = vmatpush1.msra.mxu0 0.0
    %5078 = vmatprep.subr.mxu0 0.0
    %5079 = vmatpush1.msra.mxu0 0.0
    %5080 = vmatprep.subr.mxu0 0.0
    %5081 = vmatpush1.msra.mxu0 0.0
    %5082 = vmatprep.subr.mxu0 0.0
    %5083 = vmatpush1.msra.mxu0 0.0
    %5084 = vmatprep.subr.mxu0 0.0
    %5085 = vmatpush1.msra.mxu0 0.0
    %5086 = vmatprep.subr.mxu0 0.0
    %5087 = vmatpush1.msra.mxu0 0.0
    %5088 = vmatprep.subr.mxu0 0.0
    %5089 = vmatpush1.msra.mxu0 0.0
    %5090 = vmatprep.subr.mxu0 0.0
    %5091 = vmatpush1.msra.mxu0 0.0
    %5092 = vmatprep.subr.mxu0 0.0
    %5093 = vmatpush1.msra.mxu0 0.0
    %5094 = vmatprep.subr.mxu0 0.0
    %5095 = vmatpush1.msra.mxu0 0.0
    %5096 = vmatprep.subr.mxu0 0.0
    %5097 = vmatpush1.msra.mxu0 0.0
    %5098 = vmatprep.subr.mxu0 0.0
    %5099 = vmatpush1.msra.mxu0 0.0
    %5100 = vmatprep.subr.mxu0 0.0
    %5101 = vmatpush1.msra.mxu0 0.0
    %5102 = vmatprep.subr.mxu0 0.0
    %5103 = vmatpush1.msra.mxu0 0.0
    %5104 = vmatprep.subr.mxu0 0.0
    %5105 = vmatpush1.msra.mxu0 0.0
    %5106 = vmatprep.subr.mxu0 0.0
    %5107 = vmatpush1.msra.mxu0 0.0
    %5108 = vmatprep.subr.mxu0 0.0
    %5109 = vmatpush1.msra.mxu0 0.0
    %5110 = vmatprep.subr.mxu0 0.0
    %5111 = vmatpush1.msra.mxu0 0.0
    %5112 = vmatprep.subr.mxu0 0.0
    %5113 = vmatpush1.msra.mxu0 0.0
    %5114 = vmatprep.mubr.f32.mxu0 0.0
    %5115 = vmatmul.mubr.f32.gmra.mrb[0].mxu0 %v5048
    %v5116 = vpop.f32.mrb[0].mxu0
    %v5117 = vadd.f32 0.0, %v5116
    %v5118 = vpop.f32.mrb[0].mxu0
    %5119 = vdwg.mxu0
    %v5121 = vsel %vm1083, %v4679, 0
    %5123 = vmatprep.subr.mxu0 0.0
    %5124 = vmatpush1.msra.mxu0 %v3964
    %5125 = vmatprep.subr.mxu0 0.0
    %5126 = vmatpush1.msra.mxu0 0.0
    %5127 = vmatprep.subr.mxu0 0.0
    %5128 = vmatpush1.msra.mxu0 0.0
    %5129 = vmatprep.subr.mxu0 0.0
    %5130 = vmatpush1.msra.mxu0 0.0
    %5131 = vmatprep.subr.mxu0 0.0
    %5132 = vmatpush1.msra.mxu0 0.0
    %5133 = vmatprep.subr.mxu0 0.0
    %5134 = vmatpush1.msra.mxu0 0.0
    %5135 = vmatprep.subr.mxu0 0.0
    %5136 = vmatpush1.msra.mxu0 0.0
    %5137 = vmatprep.subr.mxu0 0.0
    %5138 = vmatpush1.msra.mxu0 0.0
    %5139 = vmatprep.subr.mxu0 0.0
    %5140 = vmatpush1.msra.mxu0 0.0
    %5141 = vmatprep.subr.mxu0 0.0
    %5142 = vmatpush1.msra.mxu0 0.0
    %5143 = vmatprep.subr.mxu0 0.0
    %5144 = vmatpush1.msra.mxu0 0.0
    %5145 = vmatprep.subr.mxu0 0.0
    %5146 = vmatpush1.msra.mxu0 0.0
    %5147 = vmatprep.subr.mxu0 0.0
    %5148 = vmatpush1.msra.mxu0 0.0
    %5149 = vmatprep.subr.mxu0 0.0
    %5150 = vmatpush1.msra.mxu0 0.0
    %5151 = vmatprep.subr.mxu0 0.0
    %5152 = vmatpush1.msra.mxu0 0.0
    %5153 = vmatprep.subr.mxu0 0.0
    %5154 = vmatpush1.msra.mxu0 0.0
    %5155 = vmatprep.subr.mxu0 0.0
    %5156 = vmatpush1.msra.mxu0 0.0
    %5157 = vmatprep.subr.mxu0 0.0
    %5158 = vmatpush1.msra.mxu0 0.0
    %5159 = vmatprep.subr.mxu0 0.0
    %5160 = vmatpush1.msra.mxu0 0.0
    %5161 = vmatprep.subr.mxu0 0.0
    %5162 = vmatpush1.msra.mxu0 0.0
    %5163 = vmatprep.subr.mxu0 0.0
    %5164 = vmatpush1.msra.mxu0 0.0
    %5165 = vmatprep.subr.mxu0 0.0
    %5166 = vmatpush1.msra.mxu0 0.0
    %5167 = vmatprep.subr.mxu0 0.0
    %5168 = vmatpush1.msra.mxu0 0.0
    %5169 = vmatprep.subr.mxu0 0.0
    %5170 = vmatpush1.msra.mxu0 0.0
    %5171 = vmatprep.subr.mxu0 0.0
    %5172 = vmatpush1.msra.mxu0 0.0
    %5173 = vmatprep.subr.mxu0 0.0
    %5174 = vmatpush1.msra.mxu0 0.0
    %5175 = vmatprep.subr.mxu0 0.0
    %5176 = vmatpush1.msra.mxu0 0.0
    %5177 = vmatprep.subr.mxu0 0.0
    %5178 = vmatpush1.msra.mxu0 0.0
    %5179 = vmatprep.subr.mxu0 0.0
    %5180 = vmatpush1.msra.mxu0 0.0
    %5181 = vmatprep.subr.mxu0 0.0
    %5182 = vmatpush1.msra.mxu0 0.0
    %5183 = vmatprep.subr.mxu0 0.0
    %5184 = vmatpush1.msra.mxu0 0.0
    %5185 = vmatprep.subr.mxu0 0.0
    %5186 = vmatpush1.msra.mxu0 0.0
    %5187 = vmatprep.mubr.f32.mxu0 0.0
    %5188 = vmatmul.mubr.f32.gmra.mrb[0].mxu0 %v5121
    %v5189 = vpop.f32.mrb[0].mxu0
    %v5190 = vadd.f32 0.0, %v5189
    %v5191 = vpop.f32.mrb[0].mxu0
    %5192 = vdwg.mxu0
    %v5194 = vsel %vm1083, %v4681, 0
    %5196 = vmatprep.subr.mxu0 0.0
    %5197 = vmatpush1.msra.mxu0 %v3967
    %5198 = vmatprep.subr.mxu0 0.0
    %5199 = vmatpush1.msra.mxu0 0.0
    %5200 = vmatprep.subr.mxu0 0.0
    %5201 = vmatpush1.msra.mxu0 0.0
    %5202 = vmatprep.subr.mxu0 0.0
    %5203 = vmatpush1.msra.mxu0 0.0
    %5204 = vmatprep.subr.mxu0 0.0
    %5205 = vmatpush1.msra.mxu0 0.0
    %5206 = vmatprep.subr.mxu0 0.0
    %5207 = vmatpush1.msra.mxu0 0.0
    %5208 = vmatprep.subr.mxu0 0.0
    %5209 = vmatpush1.msra.mxu0 0.0
    %5210 = vmatprep.subr.mxu0 0.0
    %5211 = vmatpush1.msra.mxu0 0.0
    %5212 = vmatprep.subr.mxu0 0.0
    %5213 = vmatpush1.msra.mxu0 0.0
    %5214 = vmatprep.subr.mxu0 0.0
    %5215 = vmatpush1.msra.mxu0 0.0
    %5216 = vmatprep.subr.mxu0 0.0
    %5217 = vmatpush1.msra.mxu0 0.0
    %5218 = vmatprep.subr.mxu0 0.0
    %5219 = vmatpush1.msra.mxu0 0.0
    %5220 = vmatprep.subr.mxu0 0.0
    %5221 = vmatpush1.msra.mxu0 0.0
    %5222 = vmatprep.subr.mxu0 0.0
    %5223 = vmatpush1.msra.mxu0 0.0
    %5224 = vmatprep.subr.mxu0 0.0
    %5225 = vmatpush1.msra.mxu0 0.0
    %5226 = vmatprep.subr.mxu0 0.0
    %5227 = vmatpush1.msra.mxu0 0.0
    %5228 = vmatprep.subr.mxu0 0.0
    %5229 = vmatpush1.msra.mxu0 0.0
    %5230 = vmatprep.subr.mxu0 0.0
    %5231 = vmatpush1.msra.mxu0 0.0
    %5232 = vmatprep.subr.mxu0 0.0
    %5233 = vmatpush1.msra.mxu0 0.0
    %5234 = vmatprep.subr.mxu0 0.0
    %5235 = vmatpush1.msra.mxu0 0.0
    %5236 = vmatprep.subr.mxu0 0.0
    %5237 = vmatpush1.msra.mxu0 0.0
    %5238 = vmatprep.subr.mxu0 0.0
    %5239 = vmatpush1.msra.mxu0 0.0
    %5240 = vmatprep.subr.mxu0 0.0
    %5241 = vmatpush1.msra.mxu0 0.0
    %5242 = vmatprep.subr.mxu0 0.0
    %5243 = vmatpush1.msra.mxu0 0.0
    %5244 = vmatprep.subr.mxu0 0.0
    %5245 = vmatpush1.msra.mxu0 0.0
    %5246 = vmatprep.subr.mxu0 0.0
    %5247 = vmatpush1.msra.mxu0 0.0
    %5248 = vmatprep.subr.mxu0 0.0
    %5249 = vmatpush1.msra.mxu0 0.0
    %5250 = vmatprep.subr.mxu0 0.0
    %5251 = vmatpush1.msra.mxu0 0.0
    %5252 = vmatprep.subr.mxu0 0.0
    %5253 = vmatpush1.msra.mxu0 0.0
    %5254 = vmatprep.subr.mxu0 0.0
    %5255 = vmatpush1.msra.mxu0 0.0
    %5256 = vmatprep.subr.mxu0 0.0
    %5257 = vmatpush1.msra.mxu0 0.0
    %5258 = vmatprep.subr.mxu0 0.0
    %5259 = vmatpush1.msra.mxu0 0.0
    %5260 = vmatprep.mubr.f32.mxu0 0.0
    %5261 = vmatmul.mubr.f32.gmra.mrb[0].mxu0 %v5194
    %v5262 = vpop.f32.mrb[0].mxu0
    %v5263 = vadd.f32 0.0, %v5262
    %v5264 = vpop.f32.mrb[0].mxu0
    %5265 = vdwg.mxu0
    %5267 = vrot.lane.b32.xlu0 %v4825, 32
    %v5268 = vpop.permute.xlu0 %5267
    %5271 = vrot.lane.b32.xlu0 %v4898, 64
    %v5272 = vpop.permute.xlu0 %5271
    %5275 = vrot.lane.b32.xlu0 %v4971, 96
    %v5276 = vpop.permute.xlu0 %5275
    %v5278 = vsel %vm474, %v4752, %v5268
    %v5279 = vsel %vm1769, %v5278, %v5272
    %v5280 = vsel %vm1771, %v5279, %v5276
    %5282 = vrot.lane.b32.xlu0 %v5117, 32
    %v5283 = vpop.permute.xlu0 %5282
    %5286 = vrot.lane.b32.xlu0 %v5190, 64
    %v5287 = vpop.permute.xlu0 %5286
    %5290 = vrot.lane.b32.xlu0 %v5263, 96
    %v5291 = vpop.permute.xlu0 %5290
    %v5293 = vsel %vm474, %v5044, %v5283
    %v5294 = vsel %vm1769, %v5293, %v5287
    %v5295 = vsel %vm1771, %v5294, %v5291
    %v5296 = vpack.c.bf16 %v5295, %v5280
    %v5298 = vlaneseq
    %v5299 = vshrl.u32 %v5298, 7
    %v5300 = vsub.s32 0, %v5299
    %v5301 = vrot.slane %v3985, %v5300
    %v5319 = vunpack.c.l.b16 %v3969
    %v5320 = vunpack.c.l.b16 %v3970
    %v5321 = vunpack.c.l.b16 %v3971
    %v5322 = vunpack.c.l.b16 %v3972
    %v5323 = vunpack.c.l.b16 %v3973
    %v5324 = vunpack.c.l.b16 %v3974
    %v5325 = vunpack.c.l.b16 %v3975
    %v5326 = vunpack.c.l.b16 %v3976
    %v5327 = vunpack.c.l.b16 %v3977
    %v5328 = vunpack.c.l.b16 %v3978
    %v5329 = vunpack.c.l.b16 %v3979
    %v5330 = vunpack.c.l.b16 %v3980
    %v5331 = vunpack.c.l.b16 %v3981
    %v5332 = vunpack.c.l.b16 %v3982
    %v5333 = vunpack.c.l.b16 %v3983
    %v5334 = vunpack.c.l.b16 %v3984
    %v5335 = vpack.c.b16 %v5320, %v5319
    %v5336 = vpack.c.b16 %v5322, %v5321
    %v5337 = vpack.c.b16 %v5324, %v5323
    %v5338 = vpack.c.b16 %v5326, %v5325
    %v5339 = vpack.c.b16 %v5328, %v5327
    %v5340 = vpack.c.b16 %v5330, %v5329
    %v5341 = vpack.c.b16 %v5332, %v5331
    %v5342 = vpack.c.b16 %v5334, %v5333
    %5351 = vmatprep.subr.bf16.mxu0 0
    %5352 = vmatpush1.bf16.msra.mxu0 %v5335
    %5353 = vmatprep.subr.bf16.mxu0 0
    %5354 = vmatpush1.bf16.msra.mxu0 %v5336
    %5355 = vmatprep.subr.bf16.mxu0 0
    %5356 = vmatpush1.bf16.msra.mxu0 %v5337
    %5357 = vmatprep.subr.bf16.mxu0 0
    %5358 = vmatpush1.bf16.msra.mxu0 %v5338
    %5359 = vmatprep.subr.bf16.mxu0 0
    %5360 = vmatpush1.bf16.msra.mxu0 %v5339
    %5361 = vmatprep.subr.bf16.mxu0 0
    %5362 = vmatpush1.bf16.msra.mxu0 %v5340
    %5363 = vmatprep.subr.bf16.mxu0 0
    %5364 = vmatpush1.bf16.msra.mxu0 %v5341
    %5365 = vmatprep.subr.bf16.mxu0 0
    %5366 = vmatpush1.bf16.msra.mxu0 %v5342
    %5367 = vmatprep.subr.bf16.mxu0 0
    %5368 = vmatpush1.bf16.msra.mxu0 0
    %5369 = vmatprep.subr.bf16.mxu0 0
    %5370 = vmatpush1.bf16.msra.mxu0 0
    %5371 = vmatprep.subr.bf16.mxu0 0
    %5372 = vmatpush1.bf16.msra.mxu0 0
    %5373 = vmatprep.subr.bf16.mxu0 0
    %5374 = vmatpush1.bf16.msra.mxu0 0
    %5375 = vmatprep.subr.bf16.mxu0 0
    %5376 = vmatpush1.bf16.msra.mxu0 0
    %5377 = vmatprep.subr.bf16.mxu0 0
    %5378 = vmatpush1.bf16.msra.mxu0 0
    %5379 = vmatprep.subr.bf16.mxu0 0
    %5380 = vmatpush1.bf16.msra.mxu0 0
    %5381 = vmatprep.subr.bf16.mxu0 0
    %5382 = vmatpush1.bf16.msra.mxu0 0
    %5383 = vmatprep.mubr.bf16.mxu0 0
    %5384 = vmatmul.mubr.bf16.gmra.mrb[0].mxu0 %v5296
    %v5385 = vpop.f32.mrb[0].mxu0
    %v5386 = vadd.f32 %v5301, %v5385
    %v5387 = vpop.f32.mrb[0].mxu0
    %v5388 = vpop.f32.mrb[0].mxu0
    %v5389 = vadd.f32 %v5301, %v5388
    %v5390 = vpop.f32.mrb[0].mxu0
    %5391 = vdwg.mxu0
    %v5392 = vadd.f32 %v5386, %v3654
    %v5393 = vadd.f32 %v5389, %v3655
    %v5394 = vld [vmem:[#allocation11 + $0x2] sm:$0x1]
    %v5395 = vld [vmem:[#allocation11 + $0x3] sm:$0x1]
    %5396 = vadd.xlane.f32.xlu0 %v5392
    %v5397 = vpop.xlane.xlu0 %5396
    %5398 = vadd.xlane.f32.xlu0 %v5393
    %v5399 = vpop.xlane.xlu0 %5398
    %v5400 = vmul.f32 %v5397, %v3625
    %v5401 = vmul.f32 %v5399, %v3625
    %v5402 = vsub.f32 %v5392, %v5400
    %v5403 = vsub.f32 %v5393, %v5401
    %v5404 = vmul.f32 %v5402, %v5402
    %v5405 = vmul.f32 %v5403, %v5403
    %5406 = vadd.xlane.f32.xlu0 %v5404
    %v5407 = vpop.xlane.xlu0 %5406
    %5408 = vadd.xlane.f32.xlu0 %v5405
    %v5409 = vpop.xlane.xlu0 %5408
    %v5410 = vmul.f32 %v5407, %v3625
    %v5411 = vmul.f32 %v5409, %v3625
    %v5412 = vadd.f32 %v5410, 1e-05
    %v5413 = vadd.f32 %v5411, 1e-05
    %v5414 = vrsqrt.pop %v5412
    %v5415 = vrsqrt.pop %v5413
    %v5416 = vmul.f32 %v5402, %v5414
    %v5417 = vmul.f32 %v5403, %v5415
    %v5418 = vlaneseq
    %v5419 = vshrl.u32 %v5418, 7
    %v5420 = vsub.s32 0, %v5419
    %v5421 = vrot.slane %v5394, %v5420
    %v5422 = vmul.f32 %v5421, %v5416
    %v5423 = vmul.f32 %v5421, %v5417
    %v5424 = vlaneseq
    %v5425 = vshrl.u32 %v5424, 7
    %v5426 = vsub.s32 0, %v5425
    %v5427 = vrot.slane %v5395, %v5426
    %v5428 = vadd.f32 %v5422, %v5427
    %v5429 = vadd.f32 %v5423, %v5427
    %v5430 = vld [vmem:[#allocation8 + $0x20] sm:$0xff]
    %v5431 = vld [vmem:[#allocation8 + $0x48] sm:$0xff]
    %v5432 = vld [vmem:[#allocation8 + $0x70] sm:$0xff]
    %v5433 = vld [vmem:[#allocation8 + $0x98] sm:$0xff]
    %v5434 = vld [vmem:[#allocation8 + $0xc0] sm:$0xff]
    %v5435 = vld [vmem:[#allocation8 + $0xe8] sm:$0xff]
    %v5436 = vld [vmem:[#allocation8 + $0x110] sm:$0xff]
    %v5437 = vld [vmem:[#allocation8 + $0x138] sm:$0xff]
    %v5438 = vld [vmem:[#allocation8 + $0x160] sm:$0xff]
    %v5439 = vld [vmem:[#allocation8 + $0x188] sm:$0xff]
    %v5440 = vld [vmem:[#allocation8 + $0x1b0] sm:$0xff]
    %v5441 = vld [vmem:[#allocation8 + $0x1d8] sm:$0xff]
    %v5442 = vld [vmem:[#allocation8 + $0x200] sm:$0xff]
    %v5443 = vld [vmem:[#allocation8 + $0x228] sm:$0xff]
    %v5444 = vld [vmem:[#allocation8 + $0x250] sm:$0xff]
    %v5445 = vld [vmem:[#allocation8 + $0x278] sm:$0xff]
    %v5446 = vpack.c.bf16 %v5429, %v5428
    %v5447 = vld [vmem:[%s6 + $0x8] sm:$0x3]
    %v5449 = vlaneseq
    %v5450 = vshrl.u32 %v5449, 7
    %v5451 = vsub.s32 0, %v5450
    %v5452 = vrot.slane %v5447, %v5451
    %v5453 = vlaneseq
    %v5454 = vshrl.u32 %v5453, 7
    %v5455 = vsub.s32 1, %v5454
    %v5456 = vrot.slane %v5447, %v5455
    %v5475 = vunpack.c.l.b16 %v5430
    %v5476 = vunpack.c.h.b16 %v5430
    %v5477 = vunpack.c.l.b16 %v5431
    %v5478 = vunpack.c.h.b16 %v5431
    %v5479 = vunpack.c.l.b16 %v5432
    %v5480 = vunpack.c.h.b16 %v5432
    %v5481 = vunpack.c.l.b16 %v5433
    %v5482 = vunpack.c.h.b16 %v5433
    %v5483 = vunpack.c.l.b16 %v5434
    %v5484 = vunpack.c.h.b16 %v5434
    %v5485 = vunpack.c.l.b16 %v5435
    %v5486 = vunpack.c.h.b16 %v5435
    %v5487 = vunpack.c.l.b16 %v5436
    %v5488 = vunpack.c.h.b16 %v5436
    %v5489 = vunpack.c.l.b16 %v5437
    %v5490 = vunpack.c.h.b16 %v5437
    %v5491 = vunpack.c.l.b16 %v5438
    %v5492 = vunpack.c.h.b16 %v5438
    %v5493 = vunpack.c.l.b16 %v5439
    %v5494 = vunpack.c.h.b16 %v5439
    %v5495 = vunpack.c.l.b16 %v5440
    %v5496 = vunpack.c.h.b16 %v5440
    %v5497 = vunpack.c.l.b16 %v5441
    %v5498 = vunpack.c.h.b16 %v5441
    %v5499 = vunpack.c.l.b16 %v5442
    %v5500 = vunpack.c.h.b16 %v5442
    %v5501 = vunpack.c.l.b16 %v5443
    %v5502 = vunpack.c.h.b16 %v5443
    %v5503 = vunpack.c.l.b16 %v5444
    %v5504 = vunpack.c.h.b16 %v5444
    %v5505 = vunpack.c.l.b16 %v5445
    %v5506 = vunpack.c.h.b16 %v5445
    %v5507 = vpack.c.b16 %v5477, %v5475
    %v5508 = vpack.c.b16 %v5478, %v5476
    %v5509 = vpack.c.b16 %v5481, %v5479
    %v5510 = vpack.c.b16 %v5482, %v5480
    %v5511 = vpack.c.b16 %v5485, %v5483
    %v5512 = vpack.c.b16 %v5486, %v5484
    %v5513 = vpack.c.b16 %v5489, %v5487
    %v5514 = vpack.c.b16 %v5490, %v5488
    %v5515 = vpack.c.b16 %v5493, %v5491
    %v5516 = vpack.c.b16 %v5494, %v5492
    %v5517 = vpack.c.b16 %v5497, %v5495
    %v5518 = vpack.c.b16 %v5498, %v5496
    %v5519 = vpack.c.b16 %v5501, %v5499
    %v5520 = vpack.c.b16 %v5502, %v5500
    %v5521 = vpack.c.b16 %v5505, %v5503
    %v5522 = vpack.c.b16 %v5506, %v5504
    %5539 = vmatprep.subr.bf16.mxu0 %v5508
    %5540 = vmatpush1.bf16.msra.mxu0 %v5507
    %5541 = vmatprep.subr.bf16.mxu0 %v5510
    %5542 = vmatpush1.bf16.msra.mxu0 %v5509
    %5543 = vmatprep.subr.bf16.mxu0 %v5512
    %5544 = vmatpush1.bf16.msra.mxu0 %v5511
    %5545 = vmatprep.subr.bf16.mxu0 %v5514
    %5546 = vmatpush1.bf16.msra.mxu0 %v5513
    %5547 = vmatprep.subr.bf16.mxu0 %v5516
    %5548 = vmatpush1.bf16.msra.mxu0 %v5515
    %5549 = vmatprep.subr.bf16.mxu0 %v5518
    %5550 = vmatpush1.bf16.msra.mxu0 %v5517
    %5551 = vmatprep.subr.bf16.mxu0 %v5520
    %5552 = vmatpush1.bf16.msra.mxu0 %v5519
    %5553 = vmatprep.subr.bf16.mxu0 %v5522
    %5554 = vmatpush1.bf16.msra.mxu0 %v5521
    %5555 = vmatprep.subr.bf16.mxu0 0
    %5556 = vmatpush1.bf16.msra.mxu0 0
    %5557 = vmatprep.subr.bf16.mxu0 0
    %5558 = vmatpush1.bf16.msra.mxu0 0
    %5559 = vmatprep.subr.bf16.mxu0 0
    %5560 = vmatpush1.bf16.msra.mxu0 0
    %5561 = vmatprep.subr.bf16.mxu0 0
    %5562 = vmatpush1.bf16.msra.mxu0 0
    %5563 = vmatprep.subr.bf16.mxu0 0
    %5564 = vmatpush1.bf16.msra.mxu0 0
    %5565 = vmatprep.subr.bf16.mxu0 0
    %5566 = vmatpush1.bf16.msra.mxu0 0
    %5567 = vmatprep.subr.bf16.mxu0 0
    %5568 = vmatpush1.bf16.msra.mxu0 0
    %5569 = vmatprep.subr.bf16.mxu0 0
    %5570 = vmatpush1.bf16.msra.mxu0 0
    %5571 = vmatprep.mubr.bf16.mxu0 0
    %5572 = vmatmul.mubr.bf16.gmra.mrb[0].mxu0 %v5446
    %v5573 = vpop.f32.mrb[0].mxu0
    %v5574 = vadd.f32 %v5452, %v5573
    %v5575 = vpop.f32.mrb[0].mxu0
    %v5576 = vadd.f32 %v5456, %v5575
    %v5577 = vpop.f32.mrb[0].mxu0
    %v5578 = vadd.f32 %v5452, %v5577
    %v5579 = vpop.f32.mrb[0].mxu0
    %v5580 = vadd.f32 %v5456, %v5579
    %5581 = vdwg.mxu0
    %v5582 = vmax.f32 %v5574, 0.0
    %v5583 = vmax.f32 %v5576, 0.0
    %v5584 = vmax.f32 %v5578, 0.0
    %v5585 = vmax.f32 %v5580, 0.0
    %v5586 = vpack.c.bf16 %v5584, %v5582
    %v5587 = vpack.c.bf16 %v5585, %v5583
    %v5588 = vld [vmem:[%s6 + $0xa] sm:$0x1]
    %v5590 = vlaneseq
    %v5591 = vshrl.u32 %v5590, 7
    %v5592 = vsub.s32 0, %v5591
    %v5593 = vrot.slane %v5588, %v5592
    %v5627 = vunpack.c.l.b16 %v115
    %v5628 = vunpack.c.l.b16 %v116
    %v5629 = vunpack.c.l.b16 %v117
    %v5630 = vunpack.c.l.b16 %v118
    %v5631 = vunpack.c.l.b16 %v119
    %v5632 = vunpack.c.l.b16 %v120
    %v5633 = vunpack.c.l.b16 %v121
    %v5634 = vunpack.c.l.b16 %v122
    %v5635 = vunpack.c.l.b16 %v123
    %v5636 = vunpack.c.l.b16 %v124
    %v5637 = vunpack.c.l.b16 %v125
    %v5638 = vunpack.c.l.b16 %v126
    %v5639 = vunpack.c.l.b16 %v127
    %v5640 = vunpack.c.l.b16 %v128
    %v5641 = vunpack.c.l.b16 %v129
    %v5642 = vunpack.c.l.b16 %v130
    %v5643 = vunpack.c.l.b16 %v131
    %v5644 = vunpack.c.l.b16 %v132
    %v5645 = vunpack.c.l.b16 %v133
    %v5646 = vunpack.c.l.b16 %v134
    %v5647 = vunpack.c.l.b16 %v135
    %v5648 = vunpack.c.l.b16 %v136
    %v5649 = vunpack.c.l.b16 %v137
    %v5650 = vunpack.c.l.b16 %v138
    %v5651 = vunpack.c.l.b16 %v139
    %v5652 = vunpack.c.l.b16 %v140
    %v5653 = vunpack.c.l.b16 %v141
    %v5654 = vunpack.c.l.b16 %v142
    %v5655 = vunpack.c.l.b16 %v143
    %v5656 = vunpack.c.l.b16 %v144
    %v5657 = vunpack.c.l.b16 %v145
    %v5658 = vunpack.c.l.b16 %v146
    %v5659 = vpack.c.b16 %v5628, %v5627
    %v5660 = vpack.c.b16 %v5630, %v5629
    %v5661 = vpack.c.b16 %v5632, %v5631
    %v5662 = vpack.c.b16 %v5634, %v5633
    %v5663 = vpack.c.b16 %v5636, %v5635
    %v5664 = vpack.c.b16 %v5638, %v5637
    %v5665 = vpack.c.b16 %v5640, %v5639
    %v5666 = vpack.c.b16 %v5642, %v5641
    %v5667 = vpack.c.b16 %v5644, %v5643
    %v5668 = vpack.c.b16 %v5646, %v5645
    %v5669 = vpack.c.b16 %v5648, %v5647
    %v5670 = vpack.c.b16 %v5650, %v5649
    %v5671 = vpack.c.b16 %v5652, %v5651
    %v5672 = vpack.c.b16 %v5654, %v5653
    %v5673 = vpack.c.b16 %v5656, %v5655
    %v5674 = vpack.c.b16 %v5658, %v5657
    %5691 = vmatprep.subr.bf16.mxu0 0
    %5692 = vmatpush1.bf16.msra.mxu0 %v5659
    %5693 = vmatprep.subr.bf16.mxu0 0
    %5694 = vmatpush1.bf16.msra.mxu0 %v5660
    %5695 = vmatprep.subr.bf16.mxu0 0
    %5696 = vmatpush1.bf16.msra.mxu0 %v5661
    %5697 = vmatprep.subr.bf16.mxu0 0
    %5698 = vmatpush1.bf16.msra.mxu0 %v5662
    %5699 = vmatprep.subr.bf16.mxu0 0
    %5700 = vmatpush1.bf16.msra.mxu0 %v5663
    %5701 = vmatprep.subr.bf16.mxu0 0
    %5702 = vmatpush1.bf16.msra.mxu0 %v5664
    %5703 = vmatprep.subr.bf16.mxu0 0
    %5704 = vmatpush1.bf16.msra.mxu0 %v5665
    %5705 = vmatprep.subr.bf16.mxu0 0
    %5706 = vmatpush1.bf16.msra.mxu0 %v5666
    %5707 = vmatprep.subr.bf16.mxu0 0
    %5708 = vmatpush1.bf16.msra.mxu0 %v5667
    %5709 = vmatprep.subr.bf16.mxu0 0
    %5710 = vmatpush1.bf16.msra.mxu0 %v5668
    %5711 = vmatprep.subr.bf16.mxu0 0
    %5712 = vmatpush1.bf16.msra.mxu0 %v5669
    %5713 = vmatprep.subr.bf16.mxu0 0
    %5714 = vmatpush1.bf16.msra.mxu0 %v5670
    %5715 = vmatprep.subr.bf16.mxu0 0
    %5716 = vmatpush1.bf16.msra.mxu0 %v5671
    %5717 = vmatprep.subr.bf16.mxu0 0
    %5718 = vmatpush1.bf16.msra.mxu0 %v5672
    %5719 = vmatprep.subr.bf16.mxu0 0
    %5720 = vmatpush1.bf16.msra.mxu0 %v5673
    %5721 = vmatprep.subr.bf16.mxu0 0
    %5722 = vmatpush1.bf16.msra.mxu0 %v5674
    %5723 = vmatprep.mubr.bf16.mxu0 %v5587
    %5724 = vmatmul.mubr.bf16.gmra.mrb[0].mxu0 %v5586
    %v5725 = vpop.f32.mrb[0].mxu0
    %v5726 = vadd.f32 %v5593, %v5725
    %v5727 = vpop.f32.mrb[0].mxu0
    %v5728 = vpop.f32.mrb[0].mxu0
    %v5729 = vadd.f32 %v5593, %v5728
    %v5730 = vpop.f32.mrb[0].mxu0
    %5731 = vdwg.mxu0
    %v5732 = vadd.f32 %v5726, %v5428
    %v5733 = vadd.f32 %v5729, %v5429
    %v5734 = vld [vmem:[#allocation11 + $0x4] sm:$0x1]
    %v5735 = vld [vmem:[#allocation11 + $0x5] sm:$0x1]
    %5736 = vadd.xlane.f32.xlu0 %v5732
    %v5737 = vpop.xlane.xlu0 %5736
    %5738 = vadd.xlane.f32.xlu0 %v5733
    %v5739 = vpop.xlane.xlu0 %5738
    %v5740 = vmul.f32 %v5737, %v3625
    %v5741 = vmul.f32 %v5739, %v3625
    %v5742 = vsub.f32 %v5732, %v5740
    %v5743 = vsub.f32 %v5733, %v5741
    %v5744 = vmul.f32 %v5742, %v5742
    %v5745 = vmul.f32 %v5743, %v5743
    %5746 = vadd.xlane.f32.xlu0 %v5744
    %v5747 = vpop.xlane.xlu0 %5746
    %5748 = vadd.xlane.f32.xlu0 %v5745
    %v5749 = vpop.xlane.xlu0 %5748
    %v5750 = vmul.f32 %v5747, %v3625
    %v5751 = vmul.f32 %v5749, %v3625
    %v5752 = vadd.f32 %v5750, 1e-05
    %v5753 = vadd.f32 %v5751, 1e-05
    %v5754 = vrsqrt.pop %v5752
    %v5755 = vrsqrt.pop %v5753
    %v5756 = vmul.f32 %v5742, %v5754
    %v5757 = vmul.f32 %v5743, %v5755
    %v5758 = vlaneseq
    %v5759 = vshrl.u32 %v5758, 7
    %v5760 = vsub.s32 0, %v5759
    %v5761 = vrot.slane %v5734, %v5760
    %v5762 = vmul.f32 %v5761, %v5756
    %v5763 = vmul.f32 %v5761, %v5757
    %v5764 = vlaneseq
    %v5765 = vshrl.u32 %v5764, 7
    %v5766 = vsub.s32 0, %v5765
    %v5767 = vrot.slane %v5735, %v5766
    %v5768 = vadd.f32 %v5762, %v5767
    %v5769 = vadd.f32 %v5763, %v5767
    %5770 = vst [vmem:[#allocation13] sm:$0xff] %v5768
    %5771 = vst [vmem:[#allocation13 + $0x8] sm:$0xff] %v5769
    // Predicated region
    $region58: #{tpu_custom_call.1} parent=1 // pred_check
      _
    $region59: #{tpu_custom_call.1} parent=1 // pred_check_branch
      %5773 = sbr.rel (0) target = $region61
    $region60: #{tpu_custom_call.1} parent=1 // pred_region
      %s5775 = ssub.s32 256, 256
      %5776 = vsyncadd [#allocation4], %s5775
      %s5777 = sshll.u32 [#allocation13], 4
      %s5778 = int_to_ptr.vmem [resolvable:$true] %s5777
      %5783 = dma.vmem_to_hbm [thread:$0]  %s5778, 256, %s8, [#allocation4], 128, 128, 8
    $region61: #{tpu_custom_call.1} parent=1 // pred_fallthru
      _
    // Predicated region
    $region62: #{tpu_custom_call.1} parent=1 // pred_check
      _
    $region63: #{tpu_custom_call.1} parent=1 // pred_check_branch
      %5785 = sbr.rel (0) target = $region65
    $region64: #{tpu_custom_call.1} parent=1 // pred_region
      %5786 = dma.done [#allocation4], 256
    $region65: #{tpu_custom_call.1} parent=1 // pred_fallthru
      _
    %5787 = vsyncpa [#allocation3], 1
    %5788 = vsyncpa [#allocation6], 1
    %5789 = vsyncpa [#allocation9], 1
    %5790 = vsyncpa [#allocation12], 1
    %5791 = vsyncpa [#allocation4], 1

</llo_original>
